<compile_context>
chip_gen: v7x
topology: tpu7x:2x2x1
jax: 0.10.0
libtpu: 0.0.40
codegen_flags: <defaults>
</compile_context>

<pallas_src>
import functools

import jax
import jax.numpy as jnp
from jax.experimental import pallas as pl
from jax.experimental.pallas import tpu as pltpu


_LANES = 128  # packed (lane-dense) block width


# ----------------------------------------------------------------------------
# Edge kernel: kappa MLP + kappa@h_src contraction + EGNN coord-weight MLP.
# ----------------------------------------------------------------------------
def _edge_kernel(ea_ref, hs_ref, cdp_ref,
                 k0w_ref, k0b_ref, k1w_ref, k1b_ref,
                 rc_ref, ri_ref, w2p_ref, b2p_ref,
                 c0w_ref, c0b_ref, c1w_ref, c1b_ref,
                 out_ref):
    ea = ea_ref[...]                                      # (TE, ker_in) bf16
    hs = hs_ref[...]                                      # (TE, W)      bf16

    # DenseNet kappa MLP hidden layers (bf16 operands, f32 accumulation).
    t0 = jnp.maximum(
        jnp.dot(ea, k0w_ref[...], preferred_element_type=jnp.float32)
        + k0b_ref[...], 0.0)                              # (TE, KW//2)
    t1 = jnp.maximum(
        jnp.dot(t0.astype(jnp.bfloat16), k1w_ref[...],
                preferred_element_type=jnp.float32)
        + k1b_ref[...], 0.0)                              # (TE, KW)

    # Outer product p[e, c*W+i] = t1[e,c] * hs[e,i] built with two 0/1
    # replication matmuls (MXU) + one VPU multiply: no lane slicing, no
    # reshapes, no serial accumulate chain.
    t1rep = jnp.dot(t1.astype(jnp.bfloat16), rc_ref[...],
                    preferred_element_type=jnp.float32)   # (TE, KW*W)
    hsrep = jnp.dot(hs, ri_ref[...],
                    preferred_element_type=jnp.float32)   # (TE, KW*W)
    p = (t1rep * hsrep).astype(jnp.bfloat16)

    # msg = p @ ker2_w.reshape(KW*W, W) + hs @ ker2_b.reshape(W, W)
    # Weights are zero-padded to 128 output lanes, so msg sits in lanes [0,W)
    # of a lane-dense block and lanes >= W are exactly zero.
    msg_p = (jnp.dot(p, w2p_ref[...], preferred_element_type=jnp.float32)
             + jnp.dot(hs, b2p_ref[...], preferred_element_type=jnp.float32))

    # EGNN coordinate-weight MLP; c0w is row-padded so it consumes the padded
    # msg directly.  Final layer = VPU multiply + lane reduce (no N=1 matmul).
    e0 = jnp.maximum(
        jnp.dot(msg_p.astype(jnp.bfloat16), c0w_ref[...],
                preferred_element_type=jnp.float32)
        + c0b_ref[...], 0.0)                              # (TE, W)
    ew = jnp.sum(e0 * c1w_ref[...], axis=-1, keepdims=True) + c1b_ref[...]
    # TODO(synk): reference may apply tanh/clamp on the coord MLP output;
    # clawINO_lps_cir.py E_GCL_GKN source not provided.

    # coord_diff is pre-placed in lanes [W, W+2) of cdp -> trans lands there.
    out_ref[...] = (msg_p + cdp_ref[...] * ew).astype(jnp.bfloat16)


def egkn_edge_fused(edge_attr16, h_src16, cd_pad, cc, *, tile_e=512):
    e, ker_in = edge_attr16.shape
    te = min(e, tile_e)
    kwh = cc["k0w"].shape[1]
    kw = cc["k1w"].shape[1]
    width = cc["c0w"].shape[1]

    def cst(shape):
        return pl.BlockSpec(shape, lambda i: (0, 0))

    return pl.pallas_call(
        _edge_kernel,
        out_shape=jax.ShapeDtypeStruct((e, _LANES), jnp.bfloat16),
        grid=(pl.cdiv(e, te),),
        in_specs=[
            pl.BlockSpec((te, ker_in), lambda i: (i, 0)),
            pl.BlockSpec((te, width), lambda i: (i, 0)),
            pl.BlockSpec((te, _LANES), lambda i: (i, 0)),
            cst((ker_in, kwh)), cst((1, kwh)),
            cst((kwh, kw)), cst((1, kw)),
            cst((kw, kw * width)), cst((width, kw * width)),
            cst((kw * width, _LANES)), cst((width, _LANES)),
            cst((_LANES, width)), cst((1, width)),
            cst((1, width)), cst((1, 1)),
        ],
        out_specs=pl.BlockSpec((te, _LANES), lambda i: (i, 0)),
        compiler_params=pltpu.CompilerParams(
            dimension_semantics=("parallel",),
            vmem_limit_bytes=32 * 1024 * 1024),
    )(edge_attr16, h_src16, cd_pad,
      cc["k0w"], cc["k0b"], cc["k1w"], cc["k1b"],
      cc["rc"], cc["ri"], cc["w2p"], cc["b2p"],
      cc["c0w"], cc["c0b"], cc["c1w"], cc["c1b"])


# ----------------------------------------------------------------------------
# Node kernel: mean aggregation over E (reduction grid axis) + node update +
# coordinate update, emitted as one packed lane-dense block.
# ----------------------------------------------------------------------------
def _node_kernel(h_ref, wn_ref, r_ref, invd_ref, ep_ref, cpad_ref,
                 out_ref, acc_ref, *, width):
    j = pl.program_id(1)

    @pl.when(j == 0)
    def _init():
        acc_ref[...] = jnp.zeros_like(acc_ref)

    # single aggregation matmul over the packed [msg | trans] edge block
    acc_ref[...] += jnp.dot(r_ref[...], ep_ref[...],
                            preferred_element_type=jnp.float32)

    @pl.when(j == pl.num_programs(1) - 1)
    def _finalize():
        agg = acc_ref[...] * invd_ref[...]                # mean aggregation
        lin = jnp.dot(h_ref[...], wn_ref[...],
                      preferred_element_type=jnp.float32)  # (TN, 128), 0 past W
        lane = jax.lax.broadcasted_iota(jnp.int32, agg.shape, 1)
        out_ref[...] = jnp.where(lane < width,
                                 jnp.maximum(lin + agg, 0.0),   # h update
                                 cpad_ref[...] + agg)           # coord update


def egkn_node_fused(h16, wn_pad, r16, inv_deg, edge_packed, cpad, *,
                    tile_n=256, tile_e=512):
    n, width = h16.shape
    e = edge_packed.shape[0]
    tn = min(n, tile_n)
    te = min(e, tile_e)

    # The E axis is a true reduction: zero-pad so partial tiles contribute 0.
    pad = (-e) % te
    if pad:
        edge_packed = jnp.pad(edge_packed, ((0, pad), (0, 0)))
        r16 = jnp.pad(r16, ((0, 0), (0, pad)))
        e = e + pad

    return pl.pallas_call(
        functools.partial(_node_kernel, width=width),
        out_shape=jax.ShapeDtypeStruct((n, _LANES), jnp.float32),
        grid=(pl.cdiv(n, tn), e // te),
        in_specs=[
            pl.BlockSpec((tn, width), lambda i, j: (i, 0)),
            pl.BlockSpec((width, _LANES), lambda i, j: (0, 0)),
            pl.BlockSpec((tn, te), lambda i, j: (i, j)),
            pl.BlockSpec((tn, 1), lambda i, j: (i, 0)),
            pl.BlockSpec((te, _LANES), lambda i, j: (j, 0)),
            pl.BlockSpec((tn, _LANES), lambda i, j: (i, 0)),
        ],
        out_specs=pl.BlockSpec((tn, _LANES), lambda i, j: (i, 0)),
        scratch_shapes=[pltpu.VMEM((tn, _LANES), jnp.float32)],
        compiler_params=pltpu.CompilerParams(
            dimension_semantics=("parallel", "arbitrary"),
            vmem_limit_bytes=32 * 1024 * 1024),
    )(h16, wn_pad, r16, inv_deg, edge_packed, cpad)


# ----------------------------------------------------------------------------
# model glue (parameter init + forward)
# ----------------------------------------------------------------------------
def _init_linear(key, fan_in, fan_out):
    kw, _ = jax.random.split(key)
    w = jax.random.normal(kw, (fan_in, fan_out), jnp.float32) / jnp.sqrt(
        jnp.float32(fan_in))
    b = jnp.zeros((fan_out,), jnp.float32)
    return w, b


def init_egkn_params(key, width, ker_width, ker_in, in_width, out_width):
    keys = jax.random.split(key, 10)
    p = {}
    p["fc1"] = _init_linear(keys[0], in_width, width)
    # DenseNet kernel: [ker_in, ker_width//2, ker_width, width**2]
    p["ker0"] = _init_linear(keys[1], ker_in, ker_width // 2)
    p["ker1"] = _init_linear(keys[2], ker_width // 2, ker_width)
    p["ker2"] = _init_linear(keys[3], ker_width, width * width)
    # E_GCL_GKN node weight + coordinate MLP
    p["node_w"] = jax.random.normal(keys[4], (width, width), jnp.float32) / jnp.sqrt(
        jnp.float32(width))
    p["coord0"] = _init_linear(keys[5], width, width)
    p["coord1"] = _init_linear(keys[6], width, 1)
    # fc2: Linear(width, 2*width), ReLU, Linear(2*width, out_width)
    p["fc2a"] = _init_linear(keys[7], width, 2 * width)
    p["fc2b"] = _init_linear(keys[8], 2 * width, out_width)
    return p


def _prepare_conv_weights(params, width, ker_width):
    """Loop-invariant re-layout / zero-padding / bf16 cast of conv weights."""
    kw, w, bf = ker_width, width, jnp.bfloat16

    # 0/1 replication matrices for the per-edge outer product (exact in bf16)
    cols = jnp.arange(kw * w)
    rc = (jnp.arange(kw)[:, None] == cols[None, :] // w).astype(bf)   # (kw, kw*w)
    ri = (jnp.arange(w)[:, None] == cols[None, :] % w).astype(bf)     # (w,  kw*w)

    w2flat = params["ker2"][0].reshape(kw * w, w)
    w2p = jnp.pad(w2flat, ((0, 0), (0, _LANES - w))).astype(bf)       # (kw*w, 128)
    b2r = params["ker2"][1].reshape(w, w)
    b2p = jnp.pad(b2r, ((0, 0), (0, _LANES - w))).astype(bf)          # (w, 128)

    c0w = jnp.pad(params["coord0"][0], ((0, _LANES - w), (0, 0))).astype(bf)
    wn_pad = jnp.pad(params["node_w"], ((0, 0), (0, _LANES - w))).astype(bf)

    return {
        "k0w": params["ker0"][0].astype(bf),
        "k0b": params["ker0"][1].reshape(1, -1),
        "k1w": params["ker1"][0].astype(bf),
        "k1b": params["ker1"][1].reshape(1, -1),
        "rc": rc, "ri": ri, "w2p": w2p, "b2p": b2p,
        "c0w": c0w,
        "c0b": params["coord0"][1].reshape(1, -1),
        "c1w": params["coord1"][0].reshape(1, -1),
        "c1b": params["coord1"][1].reshape(1, 1),
        "wn_pad": wn_pad,
    }


def egkn_conv(cc, pk, row, col, r16, inv_deg, edge_attr16, *, width):
    h16 = pk[:, :width].astype(jnp.bfloat16)
    coords = pk[:, width:width + 2]
    # TODO(synk): move these gathers into the edge kernel with a scalar-prefetch
    # DMA gather so they overlap the kappa-MLP compute in the pipeline.
    h_src16 = jnp.take(h16, col, axis=0)                              # (E, W)
    cdiff = jnp.take(coords, row, axis=0) - jnp.take(coords, col, axis=0)
    cd_pad = jnp.pad(cdiff, ((0, 0), (width, _LANES - width - 2)))    # (E, 128)

    edge_packed = egkn_edge_fused(edge_attr16, h_src16, cd_pad, cc)
    pk_new = egkn_node_fused(h16, cc["wn_pad"], r16, inv_deg, edge_packed, pk)
    return pk_new


def egkn_forward(params, x, edge_index, edge_attr, coords_init, depth, width):
    ker_width = params["ker1"][0].shape[1]
    n = x.shape[0]
    row, col = edge_index[0], edge_index[1]       # row = receiver, col = sender

    # hoisted, loop-invariant: receiver one-hot (exact 0/1 in bf16) + 1/deg.
    # TODO(synk): at realistic E replace the dense one-hot aggregation with a
    # sorted-edge segment-sum using PrefetchScalarGridSpec scalar prefetch.
    r_onehot = row[None, :] == jnp.arange(n)[:, None]
    deg = jnp.maximum(
        jnp.sum(r_onehot.astype(jnp.float32), axis=1, keepdims=True), 1.0)
    inv_deg = 1.0 / deg
    r16 = r_onehot.astype(jnp.bfloat16)
    edge_attr16 = edge_attr.astype(jnp.bfloat16)
    cc = _prepare_conv_weights(params, width, ker_width)

    # fc1 / fc2 stay in XLA: at these widths a pallas_call is pure dispatch
    # overhead compared to sub-microsecond matmuls (perf-review item).
    h0 = x @ params["fc1"][0] + params["fc1"][1]

    # packed node state: lanes [0,W) = h, [W,W+2) = coords, rest zero.
    pk = jnp.concatenate(
        [h0, coords_init, jnp.zeros((n, _LANES - width - 2), jnp.float32)],
        axis=1)

    for _ in range(depth):
        pk = egkn_conv(cc, pk, row, col, r16, inv_deg, edge_attr16, width=width)

    h = pk[:, :width]
    coords = pk[:, width:width + 2]
    h = jnp.maximum(h @ params["fc2a"][0] + params["fc2a"][1], 0.0)
    h = h @ params["fc2b"][0] + params["fc2b"][1]
    return h, coords


# ----------------------------------------------------------------------------
if __name__ == "__main__":
    width = 32
    ker_width = 32
    ker_in = 6
    in_width = 1
    out_width = 1
    depth = 2
    n_nodes = 64
    n_edges = 512

    key = jax.random.PRNGKey(0)
    kp, kx, ke, ka, kc = jax.random.split(key, 5)

    params = init_egkn_params(kp, width, ker_width, ker_in, in_width, out_width)

    x = jax.random.normal(kx, (n_nodes, in_width), jnp.float32)
    edge_index = jax.random.randint(ke, (2, n_edges), 0, n_nodes, jnp.int32)
    edge_attr = jax.random.normal(ka, (n_edges, ker_in), jnp.float32)
    coords_init = jax.random.normal(kc, (n_nodes, 2), jnp.float32)

    # OBM spectral differentiation matrices (deterministic placeholders).
    # TODO(synk): OBM.build_matrix source not provided; smdx/smdy are carried
    # by the reference module but their use inside E_GCL_GKN is unspecified.
    smdx = jnp.eye(n_nodes, dtype=jnp.float32)
    smdy = jnp.eye(n_nodes, dtype=jnp.float32)
    _ = (smdx, smdy)

    fwd = jax.jit(functools.partial(egkn_forward, depth=depth, width=width))
    h_out, coords_out = fwd(params, x, edge_index, edge_attr, coords_init)
    jax.block_until_ready((h_out, coords_out))

    assert h_out.shape == (n_nodes, out_width)
    assert coords_out.shape == (n_nodes, 2)
    assert bool(jnp.all(jnp.isfinite(h_out)))
    assert bool(jnp.all(jnp.isfinite(coords_out)))
    print("KERNEL_OK")
</pallas_src>

<mosaic_0001>
module attributes {stable_mosaic.version = 11 : i64} {
  func.func @_edge_kernel(%arg0: i32, %arg1: memref<512x6xbf16, #tpu.memory_space<vmem>>, %arg2: memref<512x32xbf16, #tpu.memory_space<vmem>>, %arg3: memref<512x128xf32, #tpu.memory_space<vmem>>, %arg4: memref<6x16xbf16, #tpu.memory_space<vmem>>, %arg5: memref<1x16xf32, #tpu.memory_space<vmem>>, %arg6: memref<16x32xbf16, #tpu.memory_space<vmem>>, %arg7: memref<1x32xf32, #tpu.memory_space<vmem>>, %arg8: memref<32x1024xbf16, #tpu.memory_space<vmem>>, %arg9: memref<32x1024xbf16, #tpu.memory_space<vmem>>, %arg10: memref<1024x128xbf16, #tpu.memory_space<vmem>>, %arg11: memref<32x128xbf16, #tpu.memory_space<vmem>>, %arg12: memref<128x32xbf16, #tpu.memory_space<vmem>>, %arg13: memref<1x32xf32, #tpu.memory_space<vmem>>, %arg14: memref<1x32xf32, #tpu.memory_space<vmem>>, %arg15: memref<1x1xf32, #tpu.memory_space<vmem>>, %arg16: memref<512x128xbf16, #tpu.memory_space<vmem>>) attributes {dimension_semantics = [#tpu.dimension_semantics<parallel>], iteration_bounds = array<i64: 1>, scalar_prefetch = 0 : i64, scratch_operands = 0 : i64, tpu.core_type = #tpu.core_type<tc>, window_params = [{transform_indices = @transform_0, window_bounds = array<i64: 512, 6>}, {transform_indices = @transform_1, window_bounds = array<i64: 512, 32>}, {transform_indices = @transform_2, window_bounds = array<i64: 512, 128>}, {pipeline_mode = #tpu.pipeline_mode<synchronous>, transform_indices = @transform_3, window_bounds = array<i64: 6, 16>}, {pipeline_mode = #tpu.pipeline_mode<synchronous>, transform_indices = @transform_4, window_bounds = array<i64: 1, 16>}, {pipeline_mode = #tpu.pipeline_mode<synchronous>, transform_indices = @transform_5, window_bounds = array<i64: 16, 32>}, {pipeline_mode = #tpu.pipeline_mode<synchronous>, transform_indices = @transform_6, window_bounds = array<i64: 1, 32>}, {pipeline_mode = #tpu.pipeline_mode<synchronous>, transform_indices = @transform_7, window_bounds = array<i64: 32, 1024>}, {pipeline_mode = #tpu.pipeline_mode<synchronous>, transform_indices = @transform_8, window_bounds = array<i64: 32, 1024>}, {pipeline_mode = #tpu.pipeline_mode<synchronous>, transform_indices = @transform_9, window_bounds = array<i64: 1024, 128>}, {pipeline_mode = #tpu.pipeline_mode<synchronous>, transform_indices = @transform_10, window_bounds = array<i64: 32, 128>}, {pipeline_mode = #tpu.pipeline_mode<synchronous>, transform_indices = @transform_11, window_bounds = array<i64: 128, 32>}, {pipeline_mode = #tpu.pipeline_mode<synchronous>, transform_indices = @transform_12, window_bounds = array<i64: 1, 32>}, {pipeline_mode = #tpu.pipeline_mode<synchronous>, transform_indices = @transform_13, window_bounds = array<i64: 1, 32>}, {pipeline_mode = #tpu.pipeline_mode<synchronous>, transform_indices = @transform_14, window_bounds = array<i64: 1, 1>}, {transform_indices = @transform_15, window_bounds = array<i64: 512, 128>}]} {
    %c0 = arith.constant 0 : index
    %c0_0 = arith.constant 0 : index
    %0 = vector.load %arg1[%c0, %c0_0] : memref<512x6xbf16, #tpu.memory_space<vmem>>, vector<512x6xbf16>
    %c0_1 = arith.constant 0 : index
    %c0_2 = arith.constant 0 : index
    %1 = vector.load %arg2[%c0_1, %c0_2] : memref<512x32xbf16, #tpu.memory_space<vmem>>, vector<512x32xbf16>
    %c0_3 = arith.constant 0 : index
    %c0_4 = arith.constant 0 : index
    %2 = vector.load %arg4[%c0_3, %c0_4] : memref<6x16xbf16, #tpu.memory_space<vmem>>, vector<6x16xbf16>
    %cst = arith.constant dense<0.000000e+00> : vector<512x16xf32>
    %3 = tpu.matmul %0, %2, %cst {dimension_numbers = #tpu.dot_dimension_numbers<[1], [0], [0], [1], [0, 0, 1, 1], [], []>} : vector<512x6xbf16>, vector<6x16xbf16>, vector<512x16xf32> -> vector<512x16xf32>
    %c0_5 = arith.constant 0 : index
    %c0_6 = arith.constant 0 : index
    %4 = vector.load %arg5[%c0_5, %c0_6] : memref<1x16xf32, #tpu.memory_space<vmem>>, vector<1x16xf32>
    %5 = vector.broadcast %4 : vector<1x16xf32> to vector<512x16xf32>
    %6 = arith.addf %3, %5 : vector<512x16xf32>
    %cst_7 = arith.constant 0.000000e+00 : f32
    %7 = vector.broadcast %cst_7 : f32 to vector<512x16xf32>
    %8 = arith.maximumf %6, %7 : vector<512x16xf32>
    %9 = arith.truncf %8 : vector<512x16xf32> to vector<512x16xbf16>
    %c0_8 = arith.constant 0 : index
    %c0_9 = arith.constant 0 : index
    %10 = vector.load %arg6[%c0_8, %c0_9] : memref<16x32xbf16, #tpu.memory_space<vmem>>, vector<16x32xbf16>
    %cst_10 = arith.constant dense<0.000000e+00> : vector<512x32xf32>
    %11 = tpu.matmul %9, %10, %cst_10 {dimension_numbers = #tpu.dot_dimension_numbers<[1], [0], [0], [1], [0, 0, 1, 1], [], []>} : vector<512x16xbf16>, vector<16x32xbf16>, vector<512x32xf32> -> vector<512x32xf32>
    %c0_11 = arith.constant 0 : index
    %c0_12 = arith.constant 0 : index
    %12 = vector.load %arg7[%c0_11, %c0_12] : memref<1x32xf32, #tpu.memory_space<vmem>>, vector<1x32xf32>
    %13 = vector.broadcast %12 : vector<1x32xf32> to vector<512x32xf32>
    %14 = arith.addf %11, %13 : vector<512x32xf32>
    %cst_13 = arith.constant 0.000000e+00 : f32
    %15 = vector.broadcast %cst_13 : f32 to vector<512x32xf32>
    %16 = arith.maximumf %14, %15 : vector<512x32xf32>
    %17 = arith.truncf %16 : vector<512x32xf32> to vector<512x32xbf16>
    %c0_14 = arith.constant 0 : index
    %c0_15 = arith.constant 0 : index
    %18 = vector.load %arg8[%c0_14, %c0_15] : memref<32x1024xbf16, #tpu.memory_space<vmem>>, vector<32x1024xbf16>
    %cst_16 = arith.constant dense<0.000000e+00> : vector<512x1024xf32>
    %19 = tpu.matmul %17, %18, %cst_16 {dimension_numbers = #tpu.dot_dimension_numbers<[1], [0], [0], [1], [0, 0, 1, 1], [], []>} : vector<512x32xbf16>, vector<32x1024xbf16>, vector<512x1024xf32> -> vector<512x1024xf32>
    %c0_17 = arith.constant 0 : index
    %c0_18 = arith.constant 0 : index
    %20 = vector.load %arg9[%c0_17, %c0_18] : memref<32x1024xbf16, #tpu.memory_space<vmem>>, vector<32x1024xbf16>
    %cst_19 = arith.constant dense<0.000000e+00> : vector<512x1024xf32>
    %21 = tpu.matmul %1, %20, %cst_19 {dimension_numbers = #tpu.dot_dimension_numbers<[1], [0], [0], [1], [0, 0, 1, 1], [], []>} : vector<512x32xbf16>, vector<32x1024xbf16>, vector<512x1024xf32> -> vector<512x1024xf32>
    %22 = arith.mulf %19, %21 : vector<512x1024xf32>
    %23 = arith.truncf %22 : vector<512x1024xf32> to vector<512x1024xbf16>
    %c0_20 = arith.constant 0 : index
    %c0_21 = arith.constant 0 : index
    %24 = vector.load %arg10[%c0_20, %c0_21] : memref<1024x128xbf16, #tpu.memory_space<vmem>>, vector<1024x128xbf16>
    %cst_22 = arith.constant dense<0.000000e+00> : vector<512x128xf32>
    %25 = tpu.matmul %23, %24, %cst_22 {dimension_numbers = #tpu.dot_dimension_numbers<[1], [0], [0], [1], [0, 0, 1, 1], [], []>} : vector<512x1024xbf16>, vector<1024x128xbf16>, vector<512x128xf32> -> vector<512x128xf32>
    %c0_23 = arith.constant 0 : index
    %c0_24 = arith.constant 0 : index
    %26 = vector.load %arg11[%c0_23, %c0_24] : memref<32x128xbf16, #tpu.memory_space<vmem>>, vector<32x128xbf16>
    %cst_25 = arith.constant dense<0.000000e+00> : vector<512x128xf32>
    %27 = tpu.matmul %1, %26, %cst_25 {dimension_numbers = #tpu.dot_dimension_numbers<[1], [0], [0], [1], [0, 0, 1, 1], [], []>} : vector<512x32xbf16>, vector<32x128xbf16>, vector<512x128xf32> -> vector<512x128xf32>
    %28 = arith.addf %25, %27 : vector<512x128xf32>
    %29 = arith.truncf %28 : vector<512x128xf32> to vector<512x128xbf16>
    %c0_26 = arith.constant 0 : index
    %c0_27 = arith.constant 0 : index
    %30 = vector.load %arg12[%c0_26, %c0_27] : memref<128x32xbf16, #tpu.memory_space<vmem>>, vector<128x32xbf16>
    %cst_28 = arith.constant dense<0.000000e+00> : vector<512x32xf32>
    %31 = tpu.matmul %29, %30, %cst_28 {dimension_numbers = #tpu.dot_dimension_numbers<[1], [0], [0], [1], [0, 0, 1, 1], [], []>} : vector<512x128xbf16>, vector<128x32xbf16>, vector<512x32xf32> -> vector<512x32xf32>
    %c0_29 = arith.constant 0 : index
    %c0_30 = arith.constant 0 : index
    %32 = vector.load %arg13[%c0_29, %c0_30] : memref<1x32xf32, #tpu.memory_space<vmem>>, vector<1x32xf32>
    %33 = vector.broadcast %32 : vector<1x32xf32> to vector<512x32xf32>
    %34 = arith.addf %31, %33 : vector<512x32xf32>
    %cst_31 = arith.constant 0.000000e+00 : f32
    %35 = vector.broadcast %cst_31 : f32 to vector<512x32xf32>
    %36 = arith.maximumf %34, %35 : vector<512x32xf32>
    %c0_32 = arith.constant 0 : index
    %c0_33 = arith.constant 0 : index
    %37 = vector.load %arg14[%c0_32, %c0_33] : memref<1x32xf32, #tpu.memory_space<vmem>>, vector<1x32xf32>
    %38 = vector.broadcast %37 : vector<1x32xf32> to vector<512x32xf32>
    %39 = arith.mulf %36, %38 : vector<512x32xf32>
    %cst_34 = arith.constant dense<0.000000e+00> : vector<512xf32>
    %40 = vector.multi_reduction <add>, %39, %cst_34 [1] : vector<512x32xf32> to vector<512xf32>
    %41 = vector.shape_cast %40 : vector<512xf32> to vector<512x1xf32>
    %c0_35 = arith.constant 0 : index
    %c0_36 = arith.constant 0 : index
    %42 = vector.load %arg15[%c0_35, %c0_36] : memref<1x1xf32, #tpu.memory_space<vmem>>, vector<1x1xf32>
    %43 = vector.broadcast %42 : vector<1x1xf32> to vector<512x1xf32>
    %44 = arith.addf %41, %43 : vector<512x1xf32>
    %c0_37 = arith.constant 0 : index
    %c0_38 = arith.constant 0 : index
    %45 = vector.load %arg3[%c0_37, %c0_38] : memref<512x128xf32, #tpu.memory_space<vmem>>, vector<512x128xf32>
    %46 = vector.broadcast %44 : vector<512x1xf32> to vector<512x128xf32>
    %47 = arith.mulf %45, %46 : vector<512x128xf32>
    %48 = arith.addf %28, %47 : vector<512x128xf32>
    %49 = arith.truncf %48 : vector<512x128xf32> to vector<512x128xbf16>
    %c0_39 = arith.constant 0 : index
    %c0_40 = arith.constant 0 : index
    %50 = vector.load %arg16[%c0_39, %c0_40] : memref<512x128xbf16, #tpu.memory_space<vmem>>, vector<512x128xbf16>
    tpu.vector_store %arg16[%c0_39, %c0_40], %49 {strides = array<i32>} : memref<512x128xbf16, #tpu.memory_space<vmem>>, vector<512x128xbf16>,
    return
  }
  func.func @transform_0(%arg0: i32) -> (i32, i32) {
    %c0_i32 = arith.constant 0 : i32
    %c0_i32_0 = arith.constant 0 : i32
    return %arg0, %c0_i32 : i32, i32
  }
  func.func @transform_1(%arg0: i32) -> (i32, i32) {
    %c0_i32 = arith.constant 0 : i32
    %c0_i32_0 = arith.constant 0 : i32
    return %arg0, %c0_i32 : i32, i32
  }
  func.func @transform_2(%arg0: i32) -> (i32, i32) {
    %c0_i32 = arith.constant 0 : i32
    %c0_i32_0 = arith.constant 0 : i32
    return %arg0, %c0_i32 : i32, i32
  }
  func.func @transform_3(%arg0: i32) -> (i32, i32) {
    %c0_i32 = arith.constant 0 : i32
    %c0_i32_0 = arith.constant 0 : i32
    %c0_i32_1 = arith.constant 0 : i32
    return %c0_i32, %c0_i32_0 : i32, i32
  }
  func.func @transform_4(%arg0: i32) -> (i32, i32) {
    %c0_i32 = arith.constant 0 : i32
    %c0_i32_0 = arith.constant 0 : i32
    %c0_i32_1 = arith.constant 0 : i32
    return %c0_i32, %c0_i32_0 : i32, i32
  }
  func.func @transform_5(%arg0: i32) -> (i32, i32) {
    %c0_i32 = arith.constant 0 : i32
    %c0_i32_0 = arith.constant 0 : i32
    %c0_i32_1 = arith.constant 0 : i32
    return %c0_i32, %c0_i32_0 : i32, i32
  }
  func.func @transform_6(%arg0: i32) -> (i32, i32) {
    %c0_i32 = arith.constant 0 : i32
    %c0_i32_0 = arith.constant 0 : i32
    %c0_i32_1 = arith.constant 0 : i32
    return %c0_i32, %c0_i32_0 : i32, i32
  }
  func.func @transform_7(%arg0: i32) -> (i32, i32) {
    %c0_i32 = arith.constant 0 : i32
    %c0_i32_0 = arith.constant 0 : i32
    %c0_i32_1 = arith.constant 0 : i32
    return %c0_i32, %c0_i32_0 : i32, i32
  }
  func.func @transform_8(%arg0: i32) -> (i32, i32) {
    %c0_i32 = arith.constant 0 : i32
    %c0_i32_0 = arith.constant 0 : i32
    %c0_i32_1 = arith.constant 0 : i32
    return %c0_i32, %c0_i32_0 : i32, i32
  }
  func.func @transform_9(%arg0: i32) -> (i32, i32) {
    %c0_i32 = arith.constant 0 : i32
    %c0_i32_0 = arith.constant 0 : i32
    %c0_i32_1 = arith.constant 0 : i32
    return %c0_i32, %c0_i32_0 : i32, i32
  }
  func.func @transform_10(%arg0: i32) -> (i32, i32) {
    %c0_i32 = arith.constant 0 : i32
    %c0_i32_0 = arith.constant 0 : i32
    %c0_i32_1 = arith.constant 0 : i32
    return %c0_i32, %c0_i32_0 : i32, i32
  }
  func.func @transform_11(%arg0: i32) -> (i32, i32) {
    %c0_i32 = arith.constant 0 : i32
    %c0_i32_0 = arith.constant 0 : i32
    %c0_i32_1 = arith.constant 0 : i32
    return %c0_i32, %c0_i32_0 : i32, i32
  }
  func.func @transform_12(%arg0: i32) -> (i32, i32) {
    %c0_i32 = arith.constant 0 : i32
    %c0_i32_0 = arith.constant 0 : i32
    %c0_i32_1 = arith.constant 0 : i32
    return %c0_i32, %c0_i32_0 : i32, i32
  }
  func.func @transform_13(%arg0: i32) -> (i32, i32) {
    %c0_i32 = arith.constant 0 : i32
    %c0_i32_0 = arith.constant 0 : i32
    %c0_i32_1 = arith.constant 0 : i32
    return %c0_i32, %c0_i32_0 : i32, i32
  }
  func.func @transform_14(%arg0: i32) -> (i32, i32) {
    %c0_i32 = arith.constant 0 : i32
    %c0_i32_0 = arith.constant 0 : i32
    %c0_i32_1 = arith.constant 0 : i32
    return %c0_i32, %c0_i32_0 : i32, i32
  }
  func.func @transform_15(%arg0: i32) -> (i32, i32) {
    %c0_i32 = arith.constant 0 : i32
    %c0_i32_0 = arith.constant 0 : i32
    return %arg0, %c0_i32 : i32, i32
  }
}

module attributes {stable_mosaic.version = 11 : i64} {
  func.func @_node_kernel(%arg0: i32, %arg1: i32, %arg2: memref<64x32xbf16, #tpu.memory_space<vmem>>, %arg3: memref<32x128xbf16, #tpu.memory_space<vmem>>, %arg4: memref<64x512xbf16, #tpu.memory_space<vmem>>, %arg5: memref<64x1xf32, #tpu.memory_space<vmem>>, %arg6: memref<512x128xbf16, #tpu.memory_space<vmem>>, %arg7: memref<64x128xf32, #tpu.memory_space<vmem>>, %arg8: memref<64x128xf32, #tpu.memory_space<vmem>>, %arg9: memref<64x128xf32, #tpu.memory_space<vmem>>) attributes {dimension_semantics = [#tpu.dimension_semantics<parallel>, #tpu.dimension_semantics<arbitrary>], iteration_bounds = array<i64: 1, 1>, scalar_prefetch = 0 : i64, scratch_operands = 1 : i64, tpu.core_type = #tpu.core_type<tc>, window_params = [{transform_indices = @transform_0, window_bounds = array<i64: 64, 32>}, {pipeline_mode = #tpu.pipeline_mode<synchronous>, transform_indices = @transform_1, window_bounds = array<i64: 32, 128>}, {transform_indices = @transform_2, window_bounds = array<i64: 64, 512>}, {transform_indices = @transform_3, window_bounds = array<i64: 64, 1>}, {transform_indices = @transform_4, window_bounds = array<i64: 512, 128>}, {transform_indices = @transform_5, window_bounds = array<i64: 64, 128>}, {transform_indices = @transform_6, window_bounds = array<i64: 64, 128>}]} {
    %c0_i32 = arith.constant 0 : i32
    %0 = arith.cmpi eq, %arg1, %c0_i32 : i32
    %1 = arith.extui %0 : i1 to i32
    %c0_i32_0 = arith.constant 0 : i32
    %2 = arith.cmpi ne, %1, %c0_i32_0 : i32
    scf.if %2 {
      %cst_10 = arith.constant 0.000000e+00 : f32
      %12 = vector.broadcast %cst_10 : f32 to vector<64x128xf32>
      %c0_11 = arith.constant 0 : index
      %c0_12 = arith.constant 0 : index
      %13 = vector.load %arg9[%c0_11, %c0_12] : memref<64x128xf32, #tpu.memory_space<vmem>>, vector<64x128xf32>
      tpu.vector_store %arg9[%c0_11, %c0_12], %12 {strides = array<i32>} : memref<64x128xf32, #tpu.memory_space<vmem>>, vector<64x128xf32>,
    } else {
    }
    %c0 = arith.constant 0 : index
    %c0_1 = arith.constant 0 : index
    %3 = vector.load %arg9[%c0, %c0_1] : memref<64x128xf32, #tpu.memory_space<vmem>>, vector<64x128xf32>
    %c0_2 = arith.constant 0 : index
    %c0_3 = arith.constant 0 : index
    %4 = vector.load %arg4[%c0_2, %c0_3] : memref<64x512xbf16, #tpu.memory_space<vmem>>, vector<64x512xbf16>
    %c0_4 = arith.constant 0 : index
    %c0_5 = arith.constant 0 : index
    %5 = vector.load %arg6[%c0_4, %c0_5] : memref<512x128xbf16, #tpu.memory_space<vmem>>, vector<512x128xbf16>
    %cst = arith.constant dense<0.000000e+00> : vector<64x128xf32>
    %6 = tpu.matmul %4, %5, %cst {dimension_numbers = #tpu.dot_dimension_numbers<[1], [0], [0], [1], [0, 0, 1, 1], [], []>} : vector<64x512xbf16>, vector<512x128xbf16>, vector<64x128xf32> -> vector<64x128xf32>
    %7 = arith.addf %3, %6 : vector<64x128xf32>
    %c0_6 = arith.constant 0 : index
    %c0_7 = arith.constant 0 : index
    %8 = vector.load %arg9[%c0_6, %c0_7] : memref<64x128xf32, #tpu.memory_space<vmem>>, vector<64x128xf32>
    tpu.vector_store %arg9[%c0_6, %c0_7], %7 {strides = array<i32>} : memref<64x128xf32, #tpu.memory_space<vmem>>, vector<64x128xf32>,
    %c0_i32_8 = arith.constant 0 : i32
    %9 = arith.cmpi eq, %arg1, %c0_i32_8 : i32
    %10 = arith.extui %9 : i1 to i32
    %c0_i32_9 = arith.constant 0 : i32
    %11 = arith.cmpi ne, %10, %c0_i32_9 : i32
    scf.if %11 {
      %c0_10 = arith.constant 0 : index
      %c0_11 = arith.constant 0 : index
      %12 = vector.load %arg9[%c0_10, %c0_11] : memref<64x128xf32, #tpu.memory_space<vmem>>, vector<64x128xf32>
      %c0_12 = arith.constant 0 : index
      %c0_13 = arith.constant 0 : index
      %13 = vector.load %arg5[%c0_12, %c0_13] : memref<64x1xf32, #tpu.memory_space<vmem>>, vector<64x1xf32>
      %14 = vector.broadcast %13 : vector<64x1xf32> to vector<64x128xf32>
      %15 = arith.mulf %12, %14 : vector<64x128xf32>
      %c0_14 = arith.constant 0 : index
      %c0_15 = arith.constant 0 : index
      %16 = vector.load %arg2[%c0_14, %c0_15] : memref<64x32xbf16, #tpu.memory_space<vmem>>, vector<64x32xbf16>
      %c0_16 = arith.constant 0 : index
      %c0_17 = arith.constant 0 : index
      %17 = vector.load %arg3[%c0_16, %c0_17] : memref<32x128xbf16, #tpu.memory_space<vmem>>, vector<32x128xbf16>
      %cst_18 = arith.constant dense<0.000000e+00> : vector<64x128xf32>
      %18 = tpu.matmul %16, %17, %cst_18 {dimension_numbers = #tpu.dot_dimension_numbers<[1], [0], [0], [1], [0, 0, 1, 1], [], []>} : vector<64x32xbf16>, vector<32x128xbf16>, vector<64x128xf32> -> vector<64x128xf32>
      %19 = tpu.iota {dimensions = array<i32: 1>} : vector<64x128xi32>
      %c32_i32 = arith.constant 32 : i32
      %20 = vector.broadcast %c32_i32 : i32 to vector<64x128xi32>
      %21 = arith.cmpi slt, %19, %20 : vector<64x128xi32>
      %22 = arith.addf %18, %15 : vector<64x128xf32>
      %cst_19 = arith.constant 0.000000e+00 : f32
      %23 = vector.broadcast %cst_19 : f32 to vector<64x128xf32>
      %24 = arith.maximumf %22, %23 : vector<64x128xf32>
      %c0_20 = arith.constant 0 : index
      %c0_21 = arith.constant 0 : index
      %25 = vector.load %arg7[%c0_20, %c0_21] : memref<64x128xf32, #tpu.memory_space<vmem>>, vector<64x128xf32>
      %26 = arith.addf %25, %15 : vector<64x128xf32>
      %27 = arith.select %21, %24, %26 : vector<64x128xi1>, vector<64x128xf32>
      %c0_22 = arith.constant 0 : index
      %c0_23 = arith.constant 0 : index
      %28 = vector.load %arg8[%c0_22, %c0_23] : memref<64x128xf32, #tpu.memory_space<vmem>>, vector<64x128xf32>
      tpu.vector_store %arg8[%c0_22, %c0_23], %27 {strides = array<i32>} : memref<64x128xf32, #tpu.memory_space<vmem>>, vector<64x128xf32>,
    } else {
    }
    return
  }
  func.func @transform_0(%arg0: i32, %arg1: i32) -> (i32, i32) {
    %c0_i32 = arith.constant 0 : i32
    %c0_i32_0 = arith.constant 0 : i32
    return %arg0, %c0_i32 : i32, i32
  }
  func.func @transform_1(%arg0: i32, %arg1: i32) -> (i32, i32) {
    %c0_i32 = arith.constant 0 : i32
    %c0_i32_0 = arith.constant 0 : i32
    %c0_i32_1 = arith.constant 0 : i32
    return %c0_i32, %c0_i32_0 : i32, i32
  }
  func.func @transform_2(%arg0: i32, %arg1: i32) -> (i32, i32) {
    %c0_i32 = arith.constant 0 : i32
    return %arg0, %arg1 : i32, i32
  }
  func.func @transform_3(%arg0: i32, %arg1: i32) -> (i32, i32) {
    %c0_i32 = arith.constant 0 : i32
    %c0_i32_0 = arith.constant 0 : i32
    return %arg0, %c0_i32 : i32, i32
  }
  func.func @transform_4(%arg0: i32, %arg1: i32) -> (i32, i32) {
    %c0_i32 = arith.constant 0 : i32
    %c0_i32_0 = arith.constant 0 : i32
    return %arg1, %c0_i32 : i32, i32
  }
  func.func @transform_5(%arg0: i32, %arg1: i32) -> (i32, i32) {
    %c0_i32 = arith.constant 0 : i32
    %c0_i32_0 = arith.constant 0 : i32
    return %arg0, %c0_i32 : i32, i32
  }
  func.func @transform_6(%arg0: i32, %arg1: i32) -> (i32, i32) {
    %c0_i32 = arith.constant 0 : i32
    %c0_i32_0 = arith.constant 0 : i32
    return %arg0, %c0_i32 : i32, i32
  }
}

</mosaic_0001>

<llo_original>
// kernel: egkn_forward.5
$region0: #{egkn_forward.5}
  #allocation0 [shape = 'u32[]', space=smem, size = 0x4, offset = 0x4, fixed_abs, tag = 'smem constant byte address 0x4 - core index']
  #allocation1 [shape = 'u32[144,128]{1,0:T(1,128)}', space=vmem, size = 0x12000, scoped, tag = 'internal scratch']
  #allocation2 [shape = 'f32[64,128]{1,0:T(8,128)}', space=vmem, size = 0x8000, scoped, tag = 'scratch operand']
  %s0 = inlined_call_operand.vmem [shape: bf16[64,32], index: 0, kind: input, shape index: {}]
  %s1 = inlined_call_operand.vmem [shape: bf16[32,128], index: 1, kind: input, shape index: {}]
  %s2 = inlined_call_operand.vmem [shape: bf16[64,512], index: 2, kind: input, shape index: {}]
  %s3 = inlined_call_operand.vmem [shape: f32[64,1], index: 3, kind: input, shape index: {}]
  %s4 = inlined_call_operand.vmem [shape: bf16[512,128], index: 4, kind: input, shape index: {}]
  %s5 = inlined_call_operand.vmem [shape: f32[64,128], index: 5, kind: input, shape index: {}]
  %s6 = inlined_call_operand.vmem [shape: f32[64,128], index: 6, kind: output, shape index: {}]
  %s7 = sld [smem:[#allocation0]]
  $region42: #{egkn_forward.5} parent=0
    _
  %s9 = ssub.s32 1, %s7
  %s10 = scalar_select 0, %s9, %s7
  // Predicated region
  $region2: #{egkn_forward.5} parent=0 // pred_check
    _
  $region3: #{egkn_forward.5} parent=0 // pred_check_branch
    %12 = sbr.rel (0) target = $region5
  $region4: #{egkn_forward.5} parent=0 // pred_region
    _
  $region5: #{egkn_forward.5} parent=0 // pred_fallthru
    _
  // Predicated region
  $region6: #{egkn_forward.5} parent=0 // pred_check
    _
  $region7: #{egkn_forward.5} parent=0 // pred_check_branch
    %14 = sbr.rel (0) target = $region9
  $region8: #{egkn_forward.5} parent=0 // pred_region
    _
  $region9: #{egkn_forward.5} parent=0 // pred_fallthru
    _
  // Predicated region
  $region10: #{egkn_forward.5} parent=0 // pred_check
    _
  $region11: #{egkn_forward.5} parent=0 // pred_check_branch
    %16 = sbr.rel (0) target = $region13
  $region12: #{egkn_forward.5} parent=0 // pred_region
    _
  $region13: #{egkn_forward.5} parent=0 // pred_fallthru
    _
  // Predicated region
  $region14: #{egkn_forward.5} parent=0 // pred_check
    _
  $region15: #{egkn_forward.5} parent=0 // pred_check_branch
    %18 = sbr.rel (0) target = $region17
  $region16: #{egkn_forward.5} parent=0 // pred_region
    _
  $region17: #{egkn_forward.5} parent=0 // pred_fallthru
    _
  // Predicated region
  $region18: #{egkn_forward.5} parent=0 // pred_check
    _
  $region19: #{egkn_forward.5} parent=0 // pred_check_branch
    %20 = sbr.rel (0) target = $region21
  $region20: #{egkn_forward.5} parent=0 // pred_region
    _
  $region21: #{egkn_forward.5} parent=0 // pred_fallthru
    _
  // Predicated region
  $region22: #{egkn_forward.5} parent=0 // pred_check
    _
  $region23: #{egkn_forward.5} parent=0 // pred_check_branch
    %22 = sbr.rel (0) target = $region25
  $region24: #{egkn_forward.5} parent=0 // pred_region
    _
  $region25: #{egkn_forward.5} parent=0 // pred_fallthru
    _
  %p24 = scmp.eq.s32.totalorder 0, 0
  // Predicated region
  $region26: #{egkn_forward.5} parent=0 // pred_check
    %p25 = pneg %p24
  $region27: #{egkn_forward.5} parent=0 // pred_check_branch
    %27 = sbr.rel (%p25) target = $region29
  $region28: #{egkn_forward.5} parent=0 // pred_region
    %28 = vst [vmem:[#allocation2] sm:$0xff] 0.0
    %29 = vst [vmem:[#allocation2 + $0x8] sm:$0xff] 0.0
    %30 = vst [vmem:[#allocation2 + $0x10] sm:$0xff] 0.0
    %31 = vst [vmem:[#allocation2 + $0x18] sm:$0xff] 0.0
    %32 = vst [vmem:[#allocation2 + $0x20] sm:$0xff] 0.0
    %33 = vst [vmem:[#allocation2 + $0x28] sm:$0xff] 0.0
    %34 = vst [vmem:[#allocation2 + $0x30] sm:$0xff] 0.0
    %35 = vst [vmem:[#allocation2 + $0x38] sm:$0xff] 0.0
  $region29: #{egkn_forward.5} parent=0 // pred_fallthru
    _
  %v36 = vld [vmem:[#allocation2] sm:$0xff]
  %v37 = vld [vmem:[#allocation2 + $0x8] sm:$0xff]
  %v38 = vld [vmem:[#allocation2 + $0x10] sm:$0xff]
  %v39 = vld [vmem:[#allocation2 + $0x18] sm:$0xff]
  %v40 = vld [vmem:[#allocation2 + $0x20] sm:$0xff]
  %v41 = vld [vmem:[#allocation2 + $0x28] sm:$0xff]
  %v42 = vld [vmem:[#allocation2 + $0x30] sm:$0xff]
  %v43 = vld [vmem:[#allocation2 + $0x38] sm:$0xff]
  %v44 = vld [vmem:[%s2] sm:$0xff]
  %v45 = vld [vmem:[%s2 + $0x8] sm:$0xff]
  %v46 = vld [vmem:[%s2 + $0x10] sm:$0xff]
  %v47 = vld [vmem:[%s2 + $0x18] sm:$0xff]
  %v48 = vld [vmem:[%s2 + $0x20] sm:$0xff]
  %v49 = vld [vmem:[%s2 + $0x28] sm:$0xff]
  %v50 = vld [vmem:[%s2 + $0x30] sm:$0xff]
  %v51 = vld [vmem:[%s2 + $0x38] sm:$0xff]
  %v52 = vld [vmem:[%s2 + $0x40] sm:$0xff]
  %v53 = vld [vmem:[%s2 + $0x48] sm:$0xff]
  %v54 = vld [vmem:[%s2 + $0x50] sm:$0xff]
  %v55 = vld [vmem:[%s2 + $0x58] sm:$0xff]
  %v56 = vld [vmem:[%s2 + $0x60] sm:$0xff]
  %v57 = vld [vmem:[%s2 + $0x68] sm:$0xff]
  %v58 = vld [vmem:[%s2 + $0x70] sm:$0xff]
  %v59 = vld [vmem:[%s2 + $0x78] sm:$0xff]
  %v60 = vld [vmem:[%s4] sm:$0xf]
  %v61 = vld [vmem:[%s4 + $0x4] sm:$0xf]
  %v62 = vld [vmem:[%s4 + $0x8] sm:$0xf]
  %v63 = vld [vmem:[%s4 + $0xc] sm:$0xf]
  %v64 = vld [vmem:[%s4 + $0x10] sm:$0xf]
  %v65 = vld [vmem:[%s4 + $0x14] sm:$0xf]
  %v66 = vld [vmem:[%s4 + $0x18] sm:$0xf]
  %v67 = vld [vmem:[%s4 + $0x1c] sm:$0xf]
  %v68 = vld [vmem:[%s4 + $0x20] sm:$0xf]
  %v69 = vld [vmem:[%s4 + $0x24] sm:$0xf]
  %v70 = vld [vmem:[%s4 + $0x28] sm:$0xf]
  %v71 = vld [vmem:[%s4 + $0x2c] sm:$0xf]
  %v72 = vld [vmem:[%s4 + $0x30] sm:$0xf]
  %v73 = vld [vmem:[%s4 + $0x34] sm:$0xf]
  %v74 = vld [vmem:[%s4 + $0x38] sm:$0xf]
  %v75 = vld [vmem:[%s4 + $0x3c] sm:$0xf]
  %v76 = vld [vmem:[%s4 + $0x40] sm:$0xf]
  %v77 = vld [vmem:[%s4 + $0x44] sm:$0xf]
  %v78 = vld [vmem:[%s4 + $0x48] sm:$0xf]
  %v79 = vld [vmem:[%s4 + $0x4c] sm:$0xf]
  %v80 = vld [vmem:[%s4 + $0x50] sm:$0xf]
  %v81 = vld [vmem:[%s4 + $0x54] sm:$0xf]
  %v82 = vld [vmem:[%s4 + $0x58] sm:$0xf]
  %v83 = vld [vmem:[%s4 + $0x5c] sm:$0xf]
  %v84 = vld [vmem:[%s4 + $0x60] sm:$0xf]
  %v85 = vld [vmem:[%s4 + $0x64] sm:$0xf]
  %v86 = vld [vmem:[%s4 + $0x68] sm:$0xf]
  %v87 = vld [vmem:[%s4 + $0x6c] sm:$0xf]
  %v88 = vld [vmem:[%s4 + $0x70] sm:$0xf]
  %v89 = vld [vmem:[%s4 + $0x74] sm:$0xf]
  %v90 = vld [vmem:[%s4 + $0x78] sm:$0xf]
  %v91 = vld [vmem:[%s4 + $0x7c] sm:$0xf]
  %v92 = vld [vmem:[%s4 + $0x80] sm:$0xf]
  %v93 = vld [vmem:[%s4 + $0x84] sm:$0xf]
  %v94 = vld [vmem:[%s4 + $0x88] sm:$0xf]
  %v95 = vld [vmem:[%s4 + $0x8c] sm:$0xf]
  %v96 = vld [vmem:[%s4 + $0x90] sm:$0xf]
  %v97 = vld [vmem:[%s4 + $0x94] sm:$0xf]
  %v98 = vld [vmem:[%s4 + $0x98] sm:$0xf]
  %v99 = vld [vmem:[%s4 + $0x9c] sm:$0xf]
  %v100 = vld [vmem:[%s4 + $0xa0] sm:$0xf]
  %v101 = vld [vmem:[%s4 + $0xa4] sm:$0xf]
  %v102 = vld [vmem:[%s4 + $0xa8] sm:$0xf]
  %v103 = vld [vmem:[%s4 + $0xac] sm:$0xf]
  %v104 = vld [vmem:[%s4 + $0xb0] sm:$0xf]
  %v105 = vld [vmem:[%s4 + $0xb4] sm:$0xf]
  %v106 = vld [vmem:[%s4 + $0xb8] sm:$0xf]
  %v107 = vld [vmem:[%s4 + $0xbc] sm:$0xf]
  %v108 = vld [vmem:[%s4 + $0xc0] sm:$0xf]
  %v109 = vld [vmem:[%s4 + $0xc4] sm:$0xf]
  %v110 = vld [vmem:[%s4 + $0xc8] sm:$0xf]
  %v111 = vld [vmem:[%s4 + $0xcc] sm:$0xf]
  %v112 = vld [vmem:[%s4 + $0xd0] sm:$0xf]
  %v113 = vld [vmem:[%s4 + $0xd4] sm:$0xf]
  %v114 = vld [vmem:[%s4 + $0xd8] sm:$0xf]
  %v115 = vld [vmem:[%s4 + $0xdc] sm:$0xf]
  %v116 = vld [vmem:[%s4 + $0xe0] sm:$0xf]
  %v117 = vld [vmem:[%s4 + $0xe4] sm:$0xf]
  %v118 = vld [vmem:[%s4 + $0xe8] sm:$0xf]
  %v119 = vld [vmem:[%s4 + $0xec] sm:$0xf]
  %v120 = vld [vmem:[%s4 + $0xf0] sm:$0xf]
  %v121 = vld [vmem:[%s4 + $0xf4] sm:$0xf]
  %v122 = vld [vmem:[%s4 + $0xf8] sm:$0xf]
  %v123 = vld [vmem:[%s4 + $0xfc] sm:$0xf]
  %v140 = vunpack.c.l.b16 %v44
  %v141 = vunpack.c.h.b16 %v44
  %v142 = vunpack.c.l.b16 %v45
  %v143 = vunpack.c.h.b16 %v45
  %v144 = vunpack.c.l.b16 %v46
  %v145 = vunpack.c.h.b16 %v46
  %v146 = vunpack.c.l.b16 %v47
  %v147 = vunpack.c.h.b16 %v47
  %v148 = vunpack.c.l.b16 %v48
  %v149 = vunpack.c.h.b16 %v48
  %v150 = vunpack.c.l.b16 %v49
  %v151 = vunpack.c.h.b16 %v49
  %v152 = vunpack.c.l.b16 %v50
  %v153 = vunpack.c.h.b16 %v50
  %v154 = vunpack.c.l.b16 %v51
  %v155 = vunpack.c.h.b16 %v51
  %v156 = vunpack.c.l.b16 %v52
  %v157 = vunpack.c.h.b16 %v52
  %v158 = vunpack.c.l.b16 %v53
  %v159 = vunpack.c.h.b16 %v53
  %v160 = vunpack.c.l.b16 %v54
  %v161 = vunpack.c.h.b16 %v54
  %v162 = vunpack.c.l.b16 %v55
  %v163 = vunpack.c.h.b16 %v55
  %v164 = vunpack.c.l.b16 %v56
  %v165 = vunpack.c.h.b16 %v56
  %v166 = vunpack.c.l.b16 %v57
  %v167 = vunpack.c.h.b16 %v57
  %v168 = vunpack.c.l.b16 %v58
  %v169 = vunpack.c.h.b16 %v58
  %v170 = vunpack.c.l.b16 %v59
  %v171 = vunpack.c.h.b16 %v59
  %v172 = vpack.c.b16 %v144, %v140
  %v173 = vpack.c.b16 %v145, %v141
  %v174 = vpack.c.b16 %v146, %v142
  %v175 = vpack.c.b16 %v147, %v143
  %v176 = vpack.c.b16 %v152, %v148
  %v177 = vpack.c.b16 %v153, %v149
  %v178 = vpack.c.b16 %v154, %v150
  %v179 = vpack.c.b16 %v155, %v151
  %v180 = vpack.c.b16 %v160, %v156
  %v181 = vpack.c.b16 %v161, %v157
  %v182 = vpack.c.b16 %v162, %v158
  %v183 = vpack.c.b16 %v163, %v159
  %v184 = vpack.c.b16 %v168, %v164
  %v185 = vpack.c.b16 %v169, %v165
  %v186 = vpack.c.b16 %v170, %v166
  %v187 = vpack.c.b16 %v171, %v167
  %v268 = vunpack.c.l.b16 %v60
  %v269 = vunpack.c.l.b16 %v61
  %v270 = vunpack.c.l.b16 %v62
  %v271 = vunpack.c.l.b16 %v63
  %v272 = vunpack.c.l.b16 %v64
  %v273 = vunpack.c.l.b16 %v65
  %v274 = vunpack.c.l.b16 %v66
  %v275 = vunpack.c.l.b16 %v67
  %v276 = vunpack.c.l.b16 %v68
  %v277 = vunpack.c.l.b16 %v69
  %v278 = vunpack.c.l.b16 %v70
  %v279 = vunpack.c.l.b16 %v71
  %v280 = vunpack.c.l.b16 %v72
  %v281 = vunpack.c.l.b16 %v73
  %v282 = vunpack.c.l.b16 %v74
  %v283 = vunpack.c.l.b16 %v75
  %v284 = vunpack.c.l.b16 %v76
  %v285 = vunpack.c.l.b16 %v77
  %v286 = vunpack.c.l.b16 %v78
  %v287 = vunpack.c.l.b16 %v79
  %v288 = vunpack.c.l.b16 %v80
  %v289 = vunpack.c.l.b16 %v81
  %v290 = vunpack.c.l.b16 %v82
  %v291 = vunpack.c.l.b16 %v83
  %v292 = vunpack.c.l.b16 %v84
  %v293 = vunpack.c.l.b16 %v85
  %v294 = vunpack.c.l.b16 %v86
  %v295 = vunpack.c.l.b16 %v87
  %v296 = vunpack.c.l.b16 %v88
  %v297 = vunpack.c.l.b16 %v89
  %v298 = vunpack.c.l.b16 %v90
  %v299 = vunpack.c.l.b16 %v91
  %v300 = vunpack.c.l.b16 %v92
  %v301 = vunpack.c.l.b16 %v93
  %v302 = vunpack.c.l.b16 %v94
  %v303 = vunpack.c.l.b16 %v95
  %v304 = vunpack.c.l.b16 %v96
  %v305 = vunpack.c.l.b16 %v97
  %v306 = vunpack.c.l.b16 %v98
  %v307 = vunpack.c.l.b16 %v99
  %v308 = vunpack.c.l.b16 %v100
  %v309 = vunpack.c.l.b16 %v101
  %v310 = vunpack.c.l.b16 %v102
  %v311 = vunpack.c.l.b16 %v103
  %v312 = vunpack.c.l.b16 %v104
  %v313 = vunpack.c.l.b16 %v105
  %v314 = vunpack.c.l.b16 %v106
  %v315 = vunpack.c.l.b16 %v107
  %v316 = vunpack.c.l.b16 %v108
  %v317 = vunpack.c.l.b16 %v109
  %v318 = vunpack.c.l.b16 %v110
  %v319 = vunpack.c.l.b16 %v111
  %v320 = vunpack.c.l.b16 %v112
  %v321 = vunpack.c.l.b16 %v113
  %v322 = vunpack.c.l.b16 %v114
  %v323 = vunpack.c.l.b16 %v115
  %v324 = vunpack.c.l.b16 %v116
  %v325 = vunpack.c.l.b16 %v117
  %v326 = vunpack.c.l.b16 %v118
  %v327 = vunpack.c.l.b16 %v119
  %v328 = vunpack.c.l.b16 %v120
  %v329 = vunpack.c.l.b16 %v121
  %v330 = vunpack.c.l.b16 %v122
  %v331 = vunpack.c.l.b16 %v123
  %v332 = vpack.c.b16 %v269, %v268
  %v333 = vpack.c.b16 %v271, %v270
  %v334 = vpack.c.b16 %v273, %v272
  %v335 = vpack.c.b16 %v275, %v274
  %v336 = vpack.c.b16 %v277, %v276
  %v337 = vpack.c.b16 %v279, %v278
  %v338 = vpack.c.b16 %v281, %v280
  %v339 = vpack.c.b16 %v283, %v282
  %v340 = vpack.c.b16 %v285, %v284
  %v341 = vpack.c.b16 %v287, %v286
  %v342 = vpack.c.b16 %v289, %v288
  %v343 = vpack.c.b16 %v291, %v290
  %v344 = vpack.c.b16 %v293, %v292
  %v345 = vpack.c.b16 %v295, %v294
  %v346 = vpack.c.b16 %v297, %v296
  %v347 = vpack.c.b16 %v299, %v298
  %v348 = vpack.c.b16 %v301, %v300
  %v349 = vpack.c.b16 %v303, %v302
  %v350 = vpack.c.b16 %v305, %v304
  %v351 = vpack.c.b16 %v307, %v306
  %v352 = vpack.c.b16 %v309, %v308
  %v353 = vpack.c.b16 %v311, %v310
  %v354 = vpack.c.b16 %v313, %v312
  %v355 = vpack.c.b16 %v315, %v314
  %v356 = vpack.c.b16 %v317, %v316
  %v357 = vpack.c.b16 %v319, %v318
  %v358 = vpack.c.b16 %v321, %v320
  %v359 = vpack.c.b16 %v323, %v322
  %v360 = vpack.c.b16 %v325, %v324
  %v361 = vpack.c.b16 %v327, %v326
  %v362 = vpack.c.b16 %v329, %v328
  %v363 = vpack.c.b16 %v331, %v330
  %396 = vmatprep.subr.bf16.mxu0 0
  %397 = vmatpush1.bf16.msra.mxu0 %v332
  %398 = vmatprep.subr.bf16.mxu0 0
  %399 = vmatpush1.bf16.msra.mxu0 %v333
  %400 = vmatprep.subr.bf16.mxu0 0
  %401 = vmatpush1.bf16.msra.mxu0 %v334
  %402 = vmatprep.subr.bf16.mxu0 0
  %403 = vmatpush1.bf16.msra.mxu0 %v335
  %404 = vmatprep.subr.bf16.mxu0 0
  %405 = vmatpush1.bf16.msra.mxu0 %v336
  %406 = vmatprep.subr.bf16.mxu0 0
  %407 = vmatpush1.bf16.msra.mxu0 %v337
  %408 = vmatprep.subr.bf16.mxu0 0
  %409 = vmatpush1.bf16.msra.mxu0 %v338
  %410 = vmatprep.subr.bf16.mxu0 0
  %411 = vmatpush1.bf16.msra.mxu0 %v339
  %412 = vmatprep.subr.bf16.mxu0 0
  %413 = vmatpush1.bf16.msra.mxu0 %v340
  %414 = vmatprep.subr.bf16.mxu0 0
  %415 = vmatpush1.bf16.msra.mxu0 %v341
  %416 = vmatprep.subr.bf16.mxu0 0
  %417 = vmatpush1.bf16.msra.mxu0 %v342
  %418 = vmatprep.subr.bf16.mxu0 0
  %419 = vmatpush1.bf16.msra.mxu0 %v343
  %420 = vmatprep.subr.bf16.mxu0 0
  %421 = vmatpush1.bf16.msra.mxu0 %v344
  %422 = vmatprep.subr.bf16.mxu0 0
  %423 = vmatpush1.bf16.msra.mxu0 %v345
  %424 = vmatprep.subr.bf16.mxu0 0
  %425 = vmatpush1.bf16.msra.mxu0 %v346
  %426 = vmatprep.subr.bf16.mxu0 0
  %427 = vmatpush1.bf16.msra.mxu0 %v347
  %428 = vmatprep.mubr.bf16.mxu0 %v173
  %429 = vmatmul.mubr.bf16.gmra.mrb[0].mxu0 %v172
  %v430 = vpop.f32.mrb[0].mxu0
  %v431 = vadd.f32 0.0, %v430
  %v432 = vpop.f32.mrb[0].mxu0
  %v433 = vpop.f32.mrb[0].mxu0
  %v434 = vadd.f32 0.0, %v433
  %v435 = vpop.f32.mrb[0].mxu0
  %436 = vmatprep.mubr.bf16.mxu0 %v177
  %437 = vmatmul.mubr.bf16.gmra.mrb[0].mxu0 %v176
  %v438 = vpop.f32.mrb[0].mxu0
  %v439 = vadd.f32 0.0, %v438
  %v440 = vpop.f32.mrb[0].mxu0
  %v441 = vpop.f32.mrb[0].mxu0
  %v442 = vadd.f32 0.0, %v441
  %v443 = vpop.f32.mrb[0].mxu0
  %444 = vmatprep.mubr.bf16.mxu0 %v181
  %445 = vmatmul.mubr.bf16.gmra.mrb[0].mxu0 %v180
  %v446 = vpop.f32.mrb[0].mxu0
  %v447 = vadd.f32 0.0, %v446
  %v448 = vpop.f32.mrb[0].mxu0
  %v449 = vpop.f32.mrb[0].mxu0
  %v450 = vadd.f32 0.0, %v449
  %v451 = vpop.f32.mrb[0].mxu0
  %452 = vmatprep.mubr.bf16.mxu0 %v185
  %453 = vmatmul.mubr.bf16.gmra.mrb[0].mxu0 %v184
  %v454 = vpop.f32.mrb[0].mxu0
  %v455 = vadd.f32 0.0, %v454
  %v456 = vpop.f32.mrb[0].mxu0
  %v457 = vpop.f32.mrb[0].mxu0
  %v458 = vadd.f32 0.0, %v457
  %v459 = vpop.f32.mrb[0].mxu0
  %460 = vdwg.mxu0
  %461 = vmatprep.subr.bf16.mxu0 0
  %462 = vmatpush1.bf16.msra.mxu0 %v348
  %463 = vmatprep.subr.bf16.mxu0 0
  %464 = vmatpush1.bf16.msra.mxu0 %v349
  %465 = vmatprep.subr.bf16.mxu0 0
  %466 = vmatpush1.bf16.msra.mxu0 %v350
  %467 = vmatprep.subr.bf16.mxu0 0
  %468 = vmatpush1.bf16.msra.mxu0 %v351
  %469 = vmatprep.subr.bf16.mxu0 0
  %470 = vmatpush1.bf16.msra.mxu0 %v352
  %471 = vmatprep.subr.bf16.mxu0 0
  %472 = vmatpush1.bf16.msra.mxu0 %v353
  %473 = vmatprep.subr.bf16.mxu0 0
  %474 = vmatpush1.bf16.msra.mxu0 %v354
  %475 = vmatprep.subr.bf16.mxu0 0
  %476 = vmatpush1.bf16.msra.mxu0 %v355
  %477 = vmatprep.subr.bf16.mxu0 0
  %478 = vmatpush1.bf16.msra.mxu0 %v356
  %479 = vmatprep.subr.bf16.mxu0 0
  %480 = vmatpush1.bf16.msra.mxu0 %v357
  %481 = vmatprep.subr.bf16.mxu0 0
  %482 = vmatpush1.bf16.msra.mxu0 %v358
  %483 = vmatprep.subr.bf16.mxu0 0
  %484 = vmatpush1.bf16.msra.mxu0 %v359
  %485 = vmatprep.subr.bf16.mxu0 0
  %486 = vmatpush1.bf16.msra.mxu0 %v360
  %487 = vmatprep.subr.bf16.mxu0 0
  %488 = vmatpush1.bf16.msra.mxu0 %v361
  %489 = vmatprep.subr.bf16.mxu0 0
  %490 = vmatpush1.bf16.msra.mxu0 %v362
  %491 = vmatprep.subr.bf16.mxu0 0
  %492 = vmatpush1.bf16.msra.mxu0 %v363
  %493 = vmatprep.mubr.bf16.mxu0 %v175
  %494 = vmatmul.mubr.bf16.gmra.mrb[0].mxu0 %v174
  %v495 = vpop.f32.mrb[0].mxu0
  %v496 = vadd.f32 %v431, %v495
  %v497 = vpop.f32.mrb[0].mxu0
  %v498 = vpop.f32.mrb[0].mxu0
  %v499 = vadd.f32 %v434, %v498
  %v500 = vpop.f32.mrb[0].mxu0
  %501 = vmatprep.mubr.bf16.mxu0 %v179
  %502 = vmatmul.mubr.bf16.gmra.mrb[0].mxu0 %v178
  %v503 = vpop.f32.mrb[0].mxu0
  %v504 = vadd.f32 %v439, %v503
  %v505 = vpop.f32.mrb[0].mxu0
  %v506 = vpop.f32.mrb[0].mxu0
  %v507 = vadd.f32 %v442, %v506
  %v508 = vpop.f32.mrb[0].mxu0
  %509 = vmatprep.mubr.bf16.mxu0 %v183
  %510 = vmatmul.mubr.bf16.gmra.mrb[0].mxu0 %v182
  %v511 = vpop.f32.mrb[0].mxu0
  %v512 = vadd.f32 %v447, %v511
  %v513 = vpop.f32.mrb[0].mxu0
  %v514 = vpop.f32.mrb[0].mxu0
  %v515 = vadd.f32 %v450, %v514
  %v516 = vpop.f32.mrb[0].mxu0
  %517 = vmatprep.mubr.bf16.mxu0 %v187
  %518 = vmatmul.mubr.bf16.gmra.mrb[0].mxu0 %v186
  %v519 = vpop.f32.mrb[0].mxu0
  %v520 = vadd.f32 %v455, %v519
  %v521 = vpop.f32.mrb[0].mxu0
  %v522 = vpop.f32.mrb[0].mxu0
  %v523 = vadd.f32 %v458, %v522
  %v524 = vpop.f32.mrb[0].mxu0
  %525 = vdwg.mxu0
  %v526 = vadd.f32 %v36, %v496
  %v527 = vadd.f32 %v37, %v499
  %v528 = vadd.f32 %v38, %v504
  %v529 = vadd.f32 %v39, %v507
  %v530 = vadd.f32 %v40, %v512
  %v531 = vadd.f32 %v41, %v515
  %v532 = vadd.f32 %v42, %v520
  %v533 = vadd.f32 %v43, %v523
  %534 = vst [vmem:[#allocation2] sm:$0xff] %v526
  %535 = vst [vmem:[#allocation2 + $0x8] sm:$0xff] %v527
  %536 = vst [vmem:[#allocation2 + $0x10] sm:$0xff] %v528
  %537 = vst [vmem:[#allocation2 + $0x18] sm:$0xff] %v529
  %538 = vst [vmem:[#allocation2 + $0x20] sm:$0xff] %v530
  %539 = vst [vmem:[#allocation2 + $0x28] sm:$0xff] %v531
  %540 = vst [vmem:[#allocation2 + $0x30] sm:$0xff] %v532
  %541 = vst [vmem:[#allocation2 + $0x38] sm:$0xff] %v533
  // Predicated region
  $region30: #{egkn_forward.5} parent=0 // pred_check
    %p542 = pneg %p24
  $region31: #{egkn_forward.5} parent=0 // pred_check_branch
    %544 = sbr.rel (%p542) target = $region33
  $region32: #{egkn_forward.5} parent=0 // pred_region
    %v545 = vld [vmem:[#allocation2] sm:$0xff]
    %v546 = vld [vmem:[#allocation2 + $0x8] sm:$0xff]
    %v547 = vld [vmem:[#allocation2 + $0x10] sm:$0xff]
    %v548 = vld [vmem:[#allocation2 + $0x18] sm:$0xff]
    %v549 = vld [vmem:[#allocation2 + $0x20] sm:$0xff]
    %v550 = vld [vmem:[#allocation2 + $0x28] sm:$0xff]
    %v551 = vld [vmem:[#allocation2 + $0x30] sm:$0xff]
    %v552 = vld [vmem:[#allocation2 + $0x38] sm:$0xff]
    %v553 = vld [vmem:[%s3] sm:$0xff]
    %v554 = vld [vmem:[%s3 + $0x8] sm:$0xff]
    %v555 = vld [vmem:[%s3 + $0x10] sm:$0xff]
    %v556 = vld [vmem:[%s3 + $0x18] sm:$0xff]
    %v557 = vld [vmem:[%s3 + $0x20] sm:$0xff]
    %v558 = vld [vmem:[%s3 + $0x28] sm:$0xff]
    %v559 = vld [vmem:[%s3 + $0x30] sm:$0xff]
    %v560 = vld [vmem:[%s3 + $0x38] sm:$0xff]
    %562 = vset.pattern.permute.xlu0 0
    %563 = vperm.xlu0 %562, %v553
    %v564 = vpop.permute.xlu0 %563
    %567 = vset.pattern.permute.xlu0 0
    %568 = vperm.xlu0 %567, %v554
    %v569 = vpop.permute.xlu0 %568
    %572 = vset.pattern.permute.xlu0 0
    %573 = vperm.xlu0 %572, %v555
    %v574 = vpop.permute.xlu0 %573
    %577 = vset.pattern.permute.xlu0 0
    %578 = vperm.xlu0 %577, %v556
    %v579 = vpop.permute.xlu0 %578
    %582 = vset.pattern.permute.xlu0 0
    %583 = vperm.xlu0 %582, %v557
    %v584 = vpop.permute.xlu0 %583
    %587 = vset.pattern.permute.xlu0 0
    %588 = vperm.xlu0 %587, %v558
    %v589 = vpop.permute.xlu0 %588
    %592 = vset.pattern.permute.xlu0 0
    %593 = vperm.xlu0 %592, %v559
    %v594 = vpop.permute.xlu0 %593
    %597 = vset.pattern.permute.xlu0 0
    %598 = vperm.xlu0 %597, %v560
    %v599 = vpop.permute.xlu0 %598
    %v601 = vmul.f32 %v545, %v564
    %v602 = vmul.f32 %v546, %v569
    %v603 = vmul.f32 %v547, %v574
    %v604 = vmul.f32 %v548, %v579
    %v605 = vmul.f32 %v549, %v584
    %v606 = vmul.f32 %v550, %v589
    %v607 = vmul.f32 %v551, %v594
    %v608 = vmul.f32 %v552, %v599
    %v609 = vld [vmem:[%s0] sm:$0xf]
    %v610 = vld [vmem:[%s0 + $0x4] sm:$0xf]
    %v611 = vld [vmem:[%s0 + $0x8] sm:$0xf]
    %v612 = vld [vmem:[%s0 + $0xc] sm:$0xf]
    %v613 = vld [vmem:[%s0 + $0x10] sm:$0xf]
    %v614 = vld [vmem:[%s0 + $0x14] sm:$0xf]
    %v615 = vld [vmem:[%s0 + $0x18] sm:$0xf]
    %v616 = vld [vmem:[%s0 + $0x1c] sm:$0xf]
    %v617 = vld [vmem:[%s1] sm:$0xf]
    %v618 = vld [vmem:[%s1 + $0x4] sm:$0xf]
    %v619 = vld [vmem:[%s1 + $0x8] sm:$0xf]
    %v620 = vld [vmem:[%s1 + $0xc] sm:$0xf]
    %v621 = vlaneseq
    %v622 = vand.u32 %v621, 127
    %vm623 = vcmp.lt.s32.totalorder %v622, 32
    %v632 = vunpack.c.l.b16 %v609
    %v633 = vunpack.c.l.b16 %v610
    %v634 = vunpack.c.l.b16 %v611
    %v635 = vunpack.c.l.b16 %v612
    %v636 = vunpack.c.l.b16 %v613
    %v637 = vunpack.c.l.b16 %v614
    %v638 = vunpack.c.l.b16 %v615
    %v639 = vunpack.c.l.b16 %v616
    %v640 = vpack.c.b16 %v633, %v632
    %v641 = vpack.c.b16 %v635, %v634
    %v642 = vpack.c.b16 %v637, %v636
    %v643 = vpack.c.b16 %v639, %v638
    %v648 = vunpack.c.l.b16 %v617
    %v649 = vunpack.c.l.b16 %v618
    %v650 = vunpack.c.l.b16 %v619
    %v651 = vunpack.c.l.b16 %v620
    %v652 = vpack.c.b16 %v649, %v648
    %v653 = vpack.c.b16 %v651, %v650
    %vm656 = vcmask 261120
    %v658 = vsel %vm656, %v640, 0
    %v661 = vsel %vm656, %v641, 0
    %v664 = vsel %vm656, %v642, 0
    %v667 = vsel %vm656, %v643, 0
    %669 = vmatprep.subr.bf16.mxu0 0
    %670 = vmatpush1.bf16.msra.mxu0 %v652
    %671 = vmatprep.subr.bf16.mxu0 0
    %672 = vmatpush1.bf16.msra.mxu0 %v653
    %673 = vmatprep.subr.bf16.mxu0 0
    %674 = vmatpush1.bf16.msra.mxu0 0
    %675 = vmatprep.subr.bf16.mxu0 0
    %676 = vmatpush1.bf16.msra.mxu0 0
    %677 = vmatprep.subr.bf16.mxu0 0
    %678 = vmatpush1.bf16.msra.mxu0 0
    %679 = vmatprep.subr.bf16.mxu0 0
    %680 = vmatpush1.bf16.msra.mxu0 0
    %681 = vmatprep.subr.bf16.mxu0 0
    %682 = vmatpush1.bf16.msra.mxu0 0
    %683 = vmatprep.subr.bf16.mxu0 0
    %684 = vmatpush1.bf16.msra.mxu0 0
    %685 = vmatprep.subr.bf16.mxu0 0
    %686 = vmatpush1.bf16.msra.mxu0 0
    %687 = vmatprep.subr.bf16.mxu0 0
    %688 = vmatpush1.bf16.msra.mxu0 0
    %689 = vmatprep.subr.bf16.mxu0 0
    %690 = vmatpush1.bf16.msra.mxu0 0
    %691 = vmatprep.subr.bf16.mxu0 0
    %692 = vmatpush1.bf16.msra.mxu0 0
    %693 = vmatprep.subr.bf16.mxu0 0
    %694 = vmatpush1.bf16.msra.mxu0 0
    %695 = vmatprep.subr.bf16.mxu0 0
    %696 = vmatpush1.bf16.msra.mxu0 0
    %697 = vmatprep.subr.bf16.mxu0 0
    %698 = vmatpush1.bf16.msra.mxu0 0
    %699 = vmatprep.subr.bf16.mxu0 0
    %700 = vmatpush1.bf16.msra.mxu0 0
    %701 = vmatprep.mubr.bf16.mxu0 0
    %702 = vmatmul.mubr.bf16.gmra.mrb[0].mxu0 %v658
    %v703 = vpop.f32.mrb[0].mxu0
    %v704 = vadd.f32 %v601, %v703
    %v705 = vpop.f32.mrb[0].mxu0
    %v706 = vpop.f32.mrb[0].mxu0
    %v707 = vadd.f32 %v602, %v706
    %v708 = vpop.f32.mrb[0].mxu0
    %709 = vmatprep.mubr.bf16.mxu0 0
    %710 = vmatmul.mubr.bf16.gmra.mrb[0].mxu0 %v661
    %v711 = vpop.f32.mrb[0].mxu0
    %v712 = vadd.f32 %v603, %v711
    %v713 = vpop.f32.mrb[0].mxu0
    %v714 = vpop.f32.mrb[0].mxu0
    %v715 = vadd.f32 %v604, %v714
    %v716 = vpop.f32.mrb[0].mxu0
    %717 = vmatprep.mubr.bf16.mxu0 0
    %718 = vmatmul.mubr.bf16.gmra.mrb[0].mxu0 %v664
    %v719 = vpop.f32.mrb[0].mxu0
    %v720 = vadd.f32 %v605, %v719
    %v721 = vpop.f32.mrb[0].mxu0
    %v722 = vpop.f32.mrb[0].mxu0
    %v723 = vadd.f32 %v606, %v722
    %v724 = vpop.f32.mrb[0].mxu0
    %725 = vmatprep.mubr.bf16.mxu0 0
    %726 = vmatmul.mubr.bf16.gmra.mrb[0].mxu0 %v667
    %v727 = vpop.f32.mrb[0].mxu0
    %v728 = vadd.f32 %v607, %v727
    %v729 = vpop.f32.mrb[0].mxu0
    %v730 = vpop.f32.mrb[0].mxu0
    %v731 = vadd.f32 %v608, %v730
    %v732 = vpop.f32.mrb[0].mxu0
    %733 = vdwg.mxu0
    %v734 = vmax.f32 %v704, 0.0
    %v735 = vmax.f32 %v707, 0.0
    %v736 = vmax.f32 %v712, 0.0
    %v737 = vmax.f32 %v715, 0.0
    %v738 = vmax.f32 %v720, 0.0
    %v739 = vmax.f32 %v723, 0.0
    %v740 = vmax.f32 %v728, 0.0
    %v741 = vmax.f32 %v731, 0.0
    %v742 = vld [vmem:[%s5] sm:$0xff]
    %v743 = vld [vmem:[%s5 + $0x8] sm:$0xff]
    %v744 = vld [vmem:[%s5 + $0x10] sm:$0xff]
    %v745 = vld [vmem:[%s5 + $0x18] sm:$0xff]
    %v746 = vld [vmem:[%s5 + $0x20] sm:$0xff]
    %v747 = vld [vmem:[%s5 + $0x28] sm:$0xff]
    %v748 = vld [vmem:[%s5 + $0x30] sm:$0xff]
    %v749 = vld [vmem:[%s5 + $0x38] sm:$0xff]
    %v750 = vadd.f32 %v742, %v601
    %v751 = vadd.f32 %v743, %v602
    %v752 = vadd.f32 %v744, %v603
    %v753 = vadd.f32 %v745, %v604
    %v754 = vadd.f32 %v746, %v605
    %v755 = vadd.f32 %v747, %v606
    %v756 = vadd.f32 %v748, %v607
    %v757 = vadd.f32 %v749, %v608
    %v758 = vsel %vm623, %v734, %v750
    %v759 = vsel %vm623, %v735, %v751
    %v760 = vsel %vm623, %v736, %v752
    %v761 = vsel %vm623, %v737, %v753
    %v762 = vsel %vm623, %v738, %v754
    %v763 = vsel %vm623, %v739, %v755
    %v764 = vsel %vm623, %v740, %v756
    %v765 = vsel %vm623, %v741, %v757
    %766 = vst [vmem:[%s6] sm:$0xff] %v758
    %767 = vst [vmem:[%s6 + $0x8] sm:$0xff] %v759
    %768 = vst [vmem:[%s6 + $0x10] sm:$0xff] %v760
    %769 = vst [vmem:[%s6 + $0x18] sm:$0xff] %v761
    %770 = vst [vmem:[%s6 + $0x20] sm:$0xff] %v762
    %771 = vst [vmem:[%s6 + $0x28] sm:$0xff] %v763
    %772 = vst [vmem:[%s6 + $0x30] sm:$0xff] %v764
    %773 = vst [vmem:[%s6 + $0x38] sm:$0xff] %v765
  $region33: #{egkn_forward.5} parent=0 // pred_fallthru
    _
  // Predicated region
  $region34: #{egkn_forward.5} parent=0 // pred_check
    _
  $region35: #{egkn_forward.5} parent=0 // pred_check_branch
    %775 = sbr.rel (0) target = $region37
  $region36: #{egkn_forward.5} parent=0 // pred_region
    _
  $region37: #{egkn_forward.5} parent=0 // pred_fallthru
    _
  // Predicated region
  $region38: #{egkn_forward.5} parent=0 // pred_check
    _
  $region39: #{egkn_forward.5} parent=0 // pred_check_branch
    %777 = sbr.rel (0) target = $region41
  $region40: #{egkn_forward.5} parent=0 // pred_region
    _
  $region41: #{egkn_forward.5} parent=0 // pred_fallthru
    _

// kernel: egkn_forward.4
$region0: #{egkn_forward.4}
  #allocation0 [shape = 'u32[]', space=smem, size = 0x4, offset = 0x4, fixed_abs, tag = 'smem constant byte address 0x4 - core index']
  #allocation1 [shape = 'u32[144,128]{1,0:T(1,128)}', space=vmem, size = 0x12000, scoped, tag = 'internal scratch']
  #allocation2 [shape = 'f32[1,1]{1,0:T(1,128)S(1)}', space=vmem, size = 0x200, scoped, tag = 'scoped memory for egkn_forward.4']
  %s0 = inlined_call_operand.vmem [shape: bf16[512,6], index: 0, kind: input, shape index: {}]
  %s1 = inlined_call_operand.vmem [shape: bf16[512,32], index: 1, kind: input, shape index: {}]
  %s2 = inlined_call_operand.vmem [shape: f32[512,128], index: 2, kind: input, shape index: {}]
  %s3 = inlined_call_operand.vmem [shape: bf16[6,16], index: 3, kind: input, shape index: {}]
  %s4 = inlined_call_operand.vmem [shape: f32[1,16], index: 4, kind: input, shape index: {}]
  %s5 = inlined_call_operand.vmem [shape: bf16[16,32], index: 5, kind: input, shape index: {}]
  %s6 = inlined_call_operand.vmem [shape: f32[1,32], index: 6, kind: input, shape index: {}]
  %s7 = inlined_call_operand.vmem [shape: bf16[32,1024], index: 7, kind: input, shape index: {}]
  %s8 = inlined_call_operand.vmem [shape: bf16[32,1024], index: 8, kind: input, shape index: {}]
  %s9 = inlined_call_operand.vmem [shape: bf16[1024,128], index: 9, kind: input, shape index: {}]
  %s10 = inlined_call_operand.vmem [shape: bf16[32,128], index: 10, kind: input, shape index: {}]
  %s11 = inlined_call_operand.vmem [shape: bf16[128,32], index: 11, kind: input, shape index: {}]
  %s12 = inlined_call_operand.vmem [shape: f32[1,32], index: 12, kind: input, shape index: {}]
  %s13 = inlined_call_operand.vmem [shape: f32[1,32], index: 13, kind: input, shape index: {}]
  %s14 = inlined_call_operand.<no memory space> [shape: f32[1,1], index: 14, kind: input, shape index: {}]
  %s15 = inlined_call_operand.vmem [shape: bf16[512,128], index: 15, kind: output, shape index: {}]
  %s16 = sld [smem:[#allocation0]]
  $region70: #{egkn_forward.4} parent=0
    _
  %s18 = ssub.s32 1, %s16
  %s19 = scalar_select 0, %s18, %s16
  %v20 = vstv %s14
  %21 = vst [vmem:[#allocation2] sm:$0x1] %v20
  // Predicated region
  $region2: #{egkn_forward.4} parent=0 // pred_check
    _
  $region3: #{egkn_forward.4} parent=0 // pred_check_branch
    %23 = sbr.rel (0) target = $region5
  $region4: #{egkn_forward.4} parent=0 // pred_region
    _
  $region5: #{egkn_forward.4} parent=0 // pred_fallthru
    _
  // Predicated region
  $region6: #{egkn_forward.4} parent=0 // pred_check
    _
  $region7: #{egkn_forward.4} parent=0 // pred_check_branch
    %25 = sbr.rel (0) target = $region9
  $region8: #{egkn_forward.4} parent=0 // pred_region
    _
  $region9: #{egkn_forward.4} parent=0 // pred_fallthru
    _
  // Predicated region
  $region10: #{egkn_forward.4} parent=0 // pred_check
    _
  $region11: #{egkn_forward.4} parent=0 // pred_check_branch
    %27 = sbr.rel (0) target = $region13
  $region12: #{egkn_forward.4} parent=0 // pred_region
    _
  $region13: #{egkn_forward.4} parent=0 // pred_fallthru
    _
  // Predicated region
  $region14: #{egkn_forward.4} parent=0 // pred_check
    _
  $region15: #{egkn_forward.4} parent=0 // pred_check_branch
    %29 = sbr.rel (0) target = $region17
  $region16: #{egkn_forward.4} parent=0 // pred_region
    _
  $region17: #{egkn_forward.4} parent=0 // pred_fallthru
    _
  // Predicated region
  $region18: #{egkn_forward.4} parent=0 // pred_check
    _
  $region19: #{egkn_forward.4} parent=0 // pred_check_branch
    %31 = sbr.rel (0) target = $region21
  $region20: #{egkn_forward.4} parent=0 // pred_region
    _
  $region21: #{egkn_forward.4} parent=0 // pred_fallthru
    _
  // Predicated region
  $region22: #{egkn_forward.4} parent=0 // pred_check
    _
  $region23: #{egkn_forward.4} parent=0 // pred_check_branch
    %33 = sbr.rel (0) target = $region25
  $region24: #{egkn_forward.4} parent=0 // pred_region
    _
  $region25: #{egkn_forward.4} parent=0 // pred_fallthru
    _
  // Predicated region
  $region26: #{egkn_forward.4} parent=0 // pred_check
    _
  $region27: #{egkn_forward.4} parent=0 // pred_check_branch
    %35 = sbr.rel (0) target = $region29
  $region28: #{egkn_forward.4} parent=0 // pred_region
    _
  $region29: #{egkn_forward.4} parent=0 // pred_fallthru
    _
  // Predicated region
  $region30: #{egkn_forward.4} parent=0 // pred_check
    _
  $region31: #{egkn_forward.4} parent=0 // pred_check_branch
    %37 = sbr.rel (0) target = $region33
  $region32: #{egkn_forward.4} parent=0 // pred_region
    _
  $region33: #{egkn_forward.4} parent=0 // pred_fallthru
    _
  // Predicated region
  $region34: #{egkn_forward.4} parent=0 // pred_check
    _
  $region35: #{egkn_forward.4} parent=0 // pred_check_branch
    %39 = sbr.rel (0) target = $region37
  $region36: #{egkn_forward.4} parent=0 // pred_region
    _
  $region37: #{egkn_forward.4} parent=0 // pred_fallthru
    _
  // Predicated region
  $region38: #{egkn_forward.4} parent=0 // pred_check
    _
  $region39: #{egkn_forward.4} parent=0 // pred_check_branch
    %41 = sbr.rel (0) target = $region41
  $region40: #{egkn_forward.4} parent=0 // pred_region
    _
  $region41: #{egkn_forward.4} parent=0 // pred_fallthru
    _
  // Predicated region
  $region42: #{egkn_forward.4} parent=0 // pred_check
    _
  $region43: #{egkn_forward.4} parent=0 // pred_check_branch
    %43 = sbr.rel (0) target = $region45
  $region44: #{egkn_forward.4} parent=0 // pred_region
    _
  $region45: #{egkn_forward.4} parent=0 // pred_fallthru
    _
  // Predicated region
  $region46: #{egkn_forward.4} parent=0 // pred_check
    _
  $region47: #{egkn_forward.4} parent=0 // pred_check_branch
    %45 = sbr.rel (0) target = $region49
  $region48: #{egkn_forward.4} parent=0 // pred_region
    _
  $region49: #{egkn_forward.4} parent=0 // pred_fallthru
    _
  // Predicated region
  $region50: #{egkn_forward.4} parent=0 // pred_check
    _
  $region51: #{egkn_forward.4} parent=0 // pred_check_branch
    %47 = sbr.rel (0) target = $region53
  $region52: #{egkn_forward.4} parent=0 // pred_region
    _
  $region53: #{egkn_forward.4} parent=0 // pred_fallthru
    _
  // Predicated region
  $region54: #{egkn_forward.4} parent=0 // pred_check
    _
  $region55: #{egkn_forward.4} parent=0 // pred_check_branch
    %49 = sbr.rel (0) target = $region57
  $region56: #{egkn_forward.4} parent=0 // pred_region
    _
  $region57: #{egkn_forward.4} parent=0 // pred_fallthru
    _
  // Predicated region
  $region58: #{egkn_forward.4} parent=0 // pred_check
    _
  $region59: #{egkn_forward.4} parent=0 // pred_check_branch
    %51 = sbr.rel (0) target = $region61
  $region60: #{egkn_forward.4} parent=0 // pred_region
    _
  $region61: #{egkn_forward.4} parent=0 // pred_fallthru
    _
  %v53 = vld [vmem:[%s0] sm:$0xf]
  %v54 = vld [vmem:[%s0 + $0x4] sm:$0xf]
  %v55 = vld [vmem:[%s0 + $0x8] sm:$0xf]
  %v56 = vld [vmem:[%s0 + $0xc] sm:$0xf]
  %v57 = vld [vmem:[%s0 + $0x10] sm:$0xf]
  %v58 = vld [vmem:[%s0 + $0x14] sm:$0xf]
  %v59 = vld [vmem:[%s0 + $0x18] sm:$0xf]
  %v60 = vld [vmem:[%s0 + $0x1c] sm:$0xf]
  %v61 = vld [vmem:[%s0 + $0x20] sm:$0xf]
  %v62 = vld [vmem:[%s0 + $0x24] sm:$0xf]
  %v63 = vld [vmem:[%s0 + $0x28] sm:$0xf]
  %v64 = vld [vmem:[%s0 + $0x2c] sm:$0xf]
  %v65 = vld [vmem:[%s0 + $0x30] sm:$0xf]
  %v66 = vld [vmem:[%s0 + $0x34] sm:$0xf]
  %v67 = vld [vmem:[%s0 + $0x38] sm:$0xf]
  %v68 = vld [vmem:[%s0 + $0x3c] sm:$0xf]
  %v69 = vld [vmem:[%s0 + $0x40] sm:$0xf]
  %v70 = vld [vmem:[%s0 + $0x44] sm:$0xf]
  %v71 = vld [vmem:[%s0 + $0x48] sm:$0xf]
  %v72 = vld [vmem:[%s0 + $0x4c] sm:$0xf]
  %v73 = vld [vmem:[%s0 + $0x50] sm:$0xf]
  %v74 = vld [vmem:[%s0 + $0x54] sm:$0xf]
  %v75 = vld [vmem:[%s0 + $0x58] sm:$0xf]
  %v76 = vld [vmem:[%s0 + $0x5c] sm:$0xf]
  %v77 = vld [vmem:[%s0 + $0x60] sm:$0xf]
  %v78 = vld [vmem:[%s0 + $0x64] sm:$0xf]
  %v79 = vld [vmem:[%s0 + $0x68] sm:$0xf]
  %v80 = vld [vmem:[%s0 + $0x6c] sm:$0xf]
  %v81 = vld [vmem:[%s0 + $0x70] sm:$0xf]
  %v82 = vld [vmem:[%s0 + $0x74] sm:$0xf]
  %v83 = vld [vmem:[%s0 + $0x78] sm:$0xf]
  %v84 = vld [vmem:[%s0 + $0x7c] sm:$0xf]
  %v85 = vld [vmem:[%s0 + $0x80] sm:$0xf]
  %v86 = vld [vmem:[%s0 + $0x84] sm:$0xf]
  %v87 = vld [vmem:[%s0 + $0x88] sm:$0xf]
  %v88 = vld [vmem:[%s0 + $0x8c] sm:$0xf]
  %v89 = vld [vmem:[%s0 + $0x90] sm:$0xf]
  %v90 = vld [vmem:[%s0 + $0x94] sm:$0xf]
  %v91 = vld [vmem:[%s0 + $0x98] sm:$0xf]
  %v92 = vld [vmem:[%s0 + $0x9c] sm:$0xf]
  %v93 = vld [vmem:[%s0 + $0xa0] sm:$0xf]
  %v94 = vld [vmem:[%s0 + $0xa4] sm:$0xf]
  %v95 = vld [vmem:[%s0 + $0xa8] sm:$0xf]
  %v96 = vld [vmem:[%s0 + $0xac] sm:$0xf]
  %v97 = vld [vmem:[%s0 + $0xb0] sm:$0xf]
  %v98 = vld [vmem:[%s0 + $0xb4] sm:$0xf]
  %v99 = vld [vmem:[%s0 + $0xb8] sm:$0xf]
  %v100 = vld [vmem:[%s0 + $0xbc] sm:$0xf]
  %v101 = vld [vmem:[%s0 + $0xc0] sm:$0xf]
  %v102 = vld [vmem:[%s0 + $0xc4] sm:$0xf]
  %v103 = vld [vmem:[%s0 + $0xc8] sm:$0xf]
  %v104 = vld [vmem:[%s0 + $0xcc] sm:$0xf]
  %v105 = vld [vmem:[%s0 + $0xd0] sm:$0xf]
  %v106 = vld [vmem:[%s0 + $0xd4] sm:$0xf]
  %v107 = vld [vmem:[%s0 + $0xd8] sm:$0xf]
  %v108 = vld [vmem:[%s0 + $0xdc] sm:$0xf]
  %v109 = vld [vmem:[%s0 + $0xe0] sm:$0xf]
  %v110 = vld [vmem:[%s0 + $0xe4] sm:$0xf]
  %v111 = vld [vmem:[%s0 + $0xe8] sm:$0xf]
  %v112 = vld [vmem:[%s0 + $0xec] sm:$0xf]
  %v113 = vld [vmem:[%s0 + $0xf0] sm:$0xf]
  %v114 = vld [vmem:[%s0 + $0xf4] sm:$0xf]
  %v115 = vld [vmem:[%s0 + $0xf8] sm:$0xf]
  %v116 = vld [vmem:[%s0 + $0xfc] sm:$0xf]
  %v117 = vld [vmem:[%s1] sm:$0xf]
  %v118 = vld [vmem:[%s1 + $0x4] sm:$0xf]
  %v119 = vld [vmem:[%s1 + $0x8] sm:$0xf]
  %v120 = vld [vmem:[%s1 + $0xc] sm:$0xf]
  %v121 = vld [vmem:[%s1 + $0x10] sm:$0xf]
  %v122 = vld [vmem:[%s1 + $0x14] sm:$0xf]
  %v123 = vld [vmem:[%s1 + $0x18] sm:$0xf]
  %v124 = vld [vmem:[%s1 + $0x1c] sm:$0xf]
  %v125 = vld [vmem:[%s1 + $0x20] sm:$0xf]
  %v126 = vld [vmem:[%s1 + $0x24] sm:$0xf]
  %v127 = vld [vmem:[%s1 + $0x28] sm:$0xf]
  %v128 = vld [vmem:[%s1 + $0x2c] sm:$0xf]
  %v129 = vld [vmem:[%s1 + $0x30] sm:$0xf]
  %v130 = vld [vmem:[%s1 + $0x34] sm:$0xf]
  %v131 = vld [vmem:[%s1 + $0x38] sm:$0xf]
  %v132 = vld [vmem:[%s1 + $0x3c] sm:$0xf]
  %v133 = vld [vmem:[%s1 + $0x40] sm:$0xf]
  %v134 = vld [vmem:[%s1 + $0x44] sm:$0xf]
  %v135 = vld [vmem:[%s1 + $0x48] sm:$0xf]
  %v136 = vld [vmem:[%s1 + $0x4c] sm:$0xf]
  %v137 = vld [vmem:[%s1 + $0x50] sm:$0xf]
  %v138 = vld [vmem:[%s1 + $0x54] sm:$0xf]
  %v139 = vld [vmem:[%s1 + $0x58] sm:$0xf]
  %v140 = vld [vmem:[%s1 + $0x5c] sm:$0xf]
  %v141 = vld [vmem:[%s1 + $0x60] sm:$0xf]
  %v142 = vld [vmem:[%s1 + $0x64] sm:$0xf]
  %v143 = vld [vmem:[%s1 + $0x68] sm:$0xf]
  %v144 = vld [vmem:[%s1 + $0x6c] sm:$0xf]
  %v145 = vld [vmem:[%s1 + $0x70] sm:$0xf]
  %v146 = vld [vmem:[%s1 + $0x74] sm:$0xf]
  %v147 = vld [vmem:[%s1 + $0x78] sm:$0xf]
  %v148 = vld [vmem:[%s1 + $0x7c] sm:$0xf]
  %v149 = vld [vmem:[%s1 + $0x80] sm:$0xf]
  %v150 = vld [vmem:[%s1 + $0x84] sm:$0xf]
  %v151 = vld [vmem:[%s1 + $0x88] sm:$0xf]
  %v152 = vld [vmem:[%s1 + $0x8c] sm:$0xf]
  %v153 = vld [vmem:[%s1 + $0x90] sm:$0xf]
  %v154 = vld [vmem:[%s1 + $0x94] sm:$0xf]
  %v155 = vld [vmem:[%s1 + $0x98] sm:$0xf]
  %v156 = vld [vmem:[%s1 + $0x9c] sm:$0xf]
  %v157 = vld [vmem:[%s1 + $0xa0] sm:$0xf]
  %v158 = vld [vmem:[%s1 + $0xa4] sm:$0xf]
  %v159 = vld [vmem:[%s1 + $0xa8] sm:$0xf]
  %v160 = vld [vmem:[%s1 + $0xac] sm:$0xf]
  %v161 = vld [vmem:[%s1 + $0xb0] sm:$0xf]
  %v162 = vld [vmem:[%s1 + $0xb4] sm:$0xf]
  %v163 = vld [vmem:[%s1 + $0xb8] sm:$0xf]
  %v164 = vld [vmem:[%s1 + $0xbc] sm:$0xf]
  %v165 = vld [vmem:[%s1 + $0xc0] sm:$0xf]
  %v166 = vld [vmem:[%s1 + $0xc4] sm:$0xf]
  %v167 = vld [vmem:[%s1 + $0xc8] sm:$0xf]
  %v168 = vld [vmem:[%s1 + $0xcc] sm:$0xf]
  %v169 = vld [vmem:[%s1 + $0xd0] sm:$0xf]
  %v170 = vld [vmem:[%s1 + $0xd4] sm:$0xf]
  %v171 = vld [vmem:[%s1 + $0xd8] sm:$0xf]
  %v172 = vld [vmem:[%s1 + $0xdc] sm:$0xf]
  %v173 = vld [vmem:[%s1 + $0xe0] sm:$0xf]
  %v174 = vld [vmem:[%s1 + $0xe4] sm:$0xf]
  %v175 = vld [vmem:[%s1 + $0xe8] sm:$0xf]
  %v176 = vld [vmem:[%s1 + $0xec] sm:$0xf]
  %v177 = vld [vmem:[%s1 + $0xf0] sm:$0xf]
  %v178 = vld [vmem:[%s1 + $0xf4] sm:$0xf]
  %v179 = vld [vmem:[%s1 + $0xf8] sm:$0xf]
  %v180 = vld [vmem:[%s1 + $0xfc] sm:$0xf]
  %v181 = vld [vmem:[%s3] sm:$0x7]
  %v182 = vld [vmem:[%s4] sm:$0x1]
  %v184 = vlaneseq
  %v185 = vshrl.u32 %v184, 7
  %v186 = vsub.s32 0, %v185
  %v187 = vrot.slane %v182, %v186
  %v253 = vunpack.c.l.b16 %v53
  %v254 = vunpack.c.l.b16 %v54
  %v255 = vunpack.c.l.b16 %v55
  %v256 = vunpack.c.l.b16 %v56
  %v257 = vunpack.c.l.b16 %v57
  %v258 = vunpack.c.l.b16 %v58
  %v259 = vunpack.c.l.b16 %v59
  %v260 = vunpack.c.l.b16 %v60
  %v261 = vunpack.c.l.b16 %v61
  %v262 = vunpack.c.l.b16 %v62
  %v263 = vunpack.c.l.b16 %v63
  %v264 = vunpack.c.l.b16 %v64
  %v265 = vunpack.c.l.b16 %v65
  %v266 = vunpack.c.l.b16 %v66
  %v267 = vunpack.c.l.b16 %v67
  %v268 = vunpack.c.l.b16 %v68
  %v269 = vunpack.c.l.b16 %v69
  %v270 = vunpack.c.l.b16 %v70
  %v271 = vunpack.c.l.b16 %v71
  %v272 = vunpack.c.l.b16 %v72
  %v273 = vunpack.c.l.b16 %v73
  %v274 = vunpack.c.l.b16 %v74
  %v275 = vunpack.c.l.b16 %v75
  %v276 = vunpack.c.l.b16 %v76
  %v277 = vunpack.c.l.b16 %v77
  %v278 = vunpack.c.l.b16 %v78
  %v279 = vunpack.c.l.b16 %v79
  %v280 = vunpack.c.l.b16 %v80
  %v281 = vunpack.c.l.b16 %v81
  %v282 = vunpack.c.l.b16 %v82
  %v283 = vunpack.c.l.b16 %v83
  %v284 = vunpack.c.l.b16 %v84
  %v285 = vunpack.c.l.b16 %v85
  %v286 = vunpack.c.l.b16 %v86
  %v287 = vunpack.c.l.b16 %v87
  %v288 = vunpack.c.l.b16 %v88
  %v289 = vunpack.c.l.b16 %v89
  %v290 = vunpack.c.l.b16 %v90
  %v291 = vunpack.c.l.b16 %v91
  %v292 = vunpack.c.l.b16 %v92
  %v293 = vunpack.c.l.b16 %v93
  %v294 = vunpack.c.l.b16 %v94
  %v295 = vunpack.c.l.b16 %v95
  %v296 = vunpack.c.l.b16 %v96
  %v297 = vunpack.c.l.b16 %v97
  %v298 = vunpack.c.l.b16 %v98
  %v299 = vunpack.c.l.b16 %v99
  %v300 = vunpack.c.l.b16 %v100
  %v301 = vunpack.c.l.b16 %v101
  %v302 = vunpack.c.l.b16 %v102
  %v303 = vunpack.c.l.b16 %v103
  %v304 = vunpack.c.l.b16 %v104
  %v305 = vunpack.c.l.b16 %v105
  %v306 = vunpack.c.l.b16 %v106
  %v307 = vunpack.c.l.b16 %v107
  %v308 = vunpack.c.l.b16 %v108
  %v309 = vunpack.c.l.b16 %v109
  %v310 = vunpack.c.l.b16 %v110
  %v311 = vunpack.c.l.b16 %v111
  %v312 = vunpack.c.l.b16 %v112
  %v313 = vunpack.c.l.b16 %v113
  %v314 = vunpack.c.l.b16 %v114
  %v315 = vunpack.c.l.b16 %v115
  %v316 = vunpack.c.l.b16 %v116
  %v317 = vpack.c.b16 %v254, %v253
  %v318 = vpack.c.b16 %v256, %v255
  %v319 = vpack.c.b16 %v258, %v257
  %v320 = vpack.c.b16 %v260, %v259
  %v321 = vpack.c.b16 %v262, %v261
  %v322 = vpack.c.b16 %v264, %v263
  %v323 = vpack.c.b16 %v266, %v265
  %v324 = vpack.c.b16 %v268, %v267
  %v325 = vpack.c.b16 %v270, %v269
  %v326 = vpack.c.b16 %v272, %v271
  %v327 = vpack.c.b16 %v274, %v273
  %v328 = vpack.c.b16 %v276, %v275
  %v329 = vpack.c.b16 %v278, %v277
  %v330 = vpack.c.b16 %v280, %v279
  %v331 = vpack.c.b16 %v282, %v281
  %v332 = vpack.c.b16 %v284, %v283
  %v333 = vpack.c.b16 %v286, %v285
  %v334 = vpack.c.b16 %v288, %v287
  %v335 = vpack.c.b16 %v290, %v289
  %v336 = vpack.c.b16 %v292, %v291
  %v337 = vpack.c.b16 %v294, %v293
  %v338 = vpack.c.b16 %v296, %v295
  %v339 = vpack.c.b16 %v298, %v297
  %v340 = vpack.c.b16 %v300, %v299
  %v341 = vpack.c.b16 %v302, %v301
  %v342 = vpack.c.b16 %v304, %v303
  %v343 = vpack.c.b16 %v306, %v305
  %v344 = vpack.c.b16 %v308, %v307
  %v345 = vpack.c.b16 %v310, %v309
  %v346 = vpack.c.b16 %v312, %v311
  %v347 = vpack.c.b16 %v314, %v313
  %v348 = vpack.c.b16 %v316, %v315
  %vm349 = vcmask 48128
  %v351 = vsel %vm349, %v317, 0
  %v354 = vsel %vm349, %v318, 0
  %v357 = vsel %vm349, %v319, 0
  %v360 = vsel %vm349, %v320, 0
  %v363 = vsel %vm349, %v321, 0
  %v366 = vsel %vm349, %v322, 0
  %v369 = vsel %vm349, %v323, 0
  %v372 = vsel %vm349, %v324, 0
  %v375 = vsel %vm349, %v325, 0
  %v378 = vsel %vm349, %v326, 0
  %v381 = vsel %vm349, %v327, 0
  %v384 = vsel %vm349, %v328, 0
  %v387 = vsel %vm349, %v329, 0
  %v390 = vsel %vm349, %v330, 0
  %v393 = vsel %vm349, %v331, 0
  %v396 = vsel %vm349, %v332, 0
  %v399 = vsel %vm349, %v333, 0
  %v402 = vsel %vm349, %v334, 0
  %v405 = vsel %vm349, %v335, 0
  %v408 = vsel %vm349, %v336, 0
  %v411 = vsel %vm349, %v337, 0
  %v414 = vsel %vm349, %v338, 0
  %v417 = vsel %vm349, %v339, 0
  %v420 = vsel %vm349, %v340, 0
  %v423 = vsel %vm349, %v341, 0
  %v426 = vsel %vm349, %v342, 0
  %v429 = vsel %vm349, %v343, 0
  %v432 = vsel %vm349, %v344, 0
  %v435 = vsel %vm349, %v345, 0
  %v438 = vsel %vm349, %v346, 0
  %v441 = vsel %vm349, %v347, 0
  %v444 = vsel %vm349, %v348, 0
  %vm446 = vcmask 1042432
  %v448 = vsel %vm446, %v181, 0
  %450 = vmatprep.subr.bf16.mxu0 0
  %451 = vmatpush1.bf16.msra.mxu0 %v448
  %452 = vmatprep.subr.bf16.mxu0 0
  %453 = vmatpush1.bf16.msra.mxu0 0
  %454 = vmatprep.subr.bf16.mxu0 0
  %455 = vmatpush1.bf16.msra.mxu0 0
  %456 = vmatprep.subr.bf16.mxu0 0
  %457 = vmatpush1.bf16.msra.mxu0 0
  %458 = vmatprep.subr.bf16.mxu0 0
  %459 = vmatpush1.bf16.msra.mxu0 0
  %460 = vmatprep.subr.bf16.mxu0 0
  %461 = vmatpush1.bf16.msra.mxu0 0
  %462 = vmatprep.subr.bf16.mxu0 0
  %463 = vmatpush1.bf16.msra.mxu0 0
  %464 = vmatprep.subr.bf16.mxu0 0
  %465 = vmatpush1.bf16.msra.mxu0 0
  %466 = vmatprep.subr.bf16.mxu0 0
  %467 = vmatpush1.bf16.msra.mxu0 0
  %468 = vmatprep.subr.bf16.mxu0 0
  %469 = vmatpush1.bf16.msra.mxu0 0
  %470 = vmatprep.subr.bf16.mxu0 0
  %471 = vmatpush1.bf16.msra.mxu0 0
  %472 = vmatprep.subr.bf16.mxu0 0
  %473 = vmatpush1.bf16.msra.mxu0 0
  %474 = vmatprep.subr.bf16.mxu0 0
  %475 = vmatpush1.bf16.msra.mxu0 0
  %476 = vmatprep.subr.bf16.mxu0 0
  %477 = vmatpush1.bf16.msra.mxu0 0
  %478 = vmatprep.subr.bf16.mxu0 0
  %479 = vmatpush1.bf16.msra.mxu0 0
  %480 = vmatprep.subr.bf16.mxu0 0
  %481 = vmatpush1.bf16.msra.mxu0 0
  %482 = vmatprep.mubr.bf16.mxu0 0
  %483 = vmatmul.mubr.bf16.gmra.mrb[0].mxu0 %v351
  %v484 = vpop.f32.mrb[0].mxu0
  %v485 = vadd.f32 %v187, %v484
  %v486 = vpop.f32.mrb[0].mxu0
  %v487 = vpop.f32.mrb[0].mxu0
  %v488 = vadd.f32 %v187, %v487
  %v489 = vpop.f32.mrb[0].mxu0
  %490 = vmatprep.mubr.bf16.mxu0 0
  %491 = vmatmul.mubr.bf16.gmra.mrb[0].mxu0 %v354
  %v492 = vpop.f32.mrb[0].mxu0
  %v493 = vadd.f32 %v187, %v492
  %v494 = vpop.f32.mrb[0].mxu0
  %v495 = vpop.f32.mrb[0].mxu0
  %v496 = vadd.f32 %v187, %v495
  %v497 = vpop.f32.mrb[0].mxu0
  %498 = vmatprep.mubr.bf16.mxu0 0
  %499 = vmatmul.mubr.bf16.gmra.mrb[0].mxu0 %v357
  %v500 = vpop.f32.mrb[0].mxu0
  %v501 = vadd.f32 %v187, %v500
  %v502 = vpop.f32.mrb[0].mxu0
  %v503 = vpop.f32.mrb[0].mxu0
  %v504 = vadd.f32 %v187, %v503
  %v505 = vpop.f32.mrb[0].mxu0
  %506 = vmatprep.mubr.bf16.mxu0 0
  %507 = vmatmul.mubr.bf16.gmra.mrb[0].mxu0 %v360
  %v508 = vpop.f32.mrb[0].mxu0
  %v509 = vadd.f32 %v187, %v508
  %v510 = vpop.f32.mrb[0].mxu0
  %v511 = vpop.f32.mrb[0].mxu0
  %v512 = vadd.f32 %v187, %v511
  %v513 = vpop.f32.mrb[0].mxu0
  %514 = vmatprep.mubr.bf16.mxu0 0
  %515 = vmatmul.mubr.bf16.gmra.mrb[0].mxu0 %v363
  %v516 = vpop.f32.mrb[0].mxu0
  %v517 = vadd.f32 %v187, %v516
  %v518 = vpop.f32.mrb[0].mxu0
  %v519 = vpop.f32.mrb[0].mxu0
  %v520 = vadd.f32 %v187, %v519
  %v521 = vpop.f32.mrb[0].mxu0
  %522 = vmatprep.mubr.bf16.mxu0 0
  %523 = vmatmul.mubr.bf16.gmra.mrb[0].mxu0 %v366
  %v524 = vpop.f32.mrb[0].mxu0
  %v525 = vadd.f32 %v187, %v524
  %v526 = vpop.f32.mrb[0].mxu0
  %v527 = vpop.f32.mrb[0].mxu0
  %v528 = vadd.f32 %v187, %v527
  %v529 = vpop.f32.mrb[0].mxu0
  %530 = vmatprep.mubr.bf16.mxu0 0
  %531 = vmatmul.mubr.bf16.gmra.mrb[0].mxu0 %v369
  %v532 = vpop.f32.mrb[0].mxu0
  %v533 = vadd.f32 %v187, %v532
  %v534 = vpop.f32.mrb[0].mxu0
  %v535 = vpop.f32.mrb[0].mxu0
  %v536 = vadd.f32 %v187, %v535
  %v537 = vpop.f32.mrb[0].mxu0
  %538 = vmatprep.mubr.bf16.mxu0 0
  %539 = vmatmul.mubr.bf16.gmra.mrb[0].mxu0 %v372
  %v540 = vpop.f32.mrb[0].mxu0
  %v541 = vadd.f32 %v187, %v540
  %v542 = vpop.f32.mrb[0].mxu0
  %v543 = vpop.f32.mrb[0].mxu0
  %v544 = vadd.f32 %v187, %v543
  %v545 = vpop.f32.mrb[0].mxu0
  %546 = vmatprep.mubr.bf16.mxu0 0
  %547 = vmatmul.mubr.bf16.gmra.mrb[0].mxu0 %v375
  %v548 = vpop.f32.mrb[0].mxu0
  %v549 = vadd.f32 %v187, %v548
  %v550 = vpop.f32.mrb[0].mxu0
  %v551 = vpop.f32.mrb[0].mxu0
  %v552 = vadd.f32 %v187, %v551
  %v553 = vpop.f32.mrb[0].mxu0
  %554 = vmatprep.mubr.bf16.mxu0 0
  %555 = vmatmul.mubr.bf16.gmra.mrb[0].mxu0 %v378
  %v556 = vpop.f32.mrb[0].mxu0
  %v557 = vadd.f32 %v187, %v556
  %v558 = vpop.f32.mrb[0].mxu0
  %v559 = vpop.f32.mrb[0].mxu0
  %v560 = vadd.f32 %v187, %v559
  %v561 = vpop.f32.mrb[0].mxu0
  %562 = vmatprep.mubr.bf16.mxu0 0
  %563 = vmatmul.mubr.bf16.gmra.mrb[0].mxu0 %v381
  %v564 = vpop.f32.mrb[0].mxu0
  %v565 = vadd.f32 %v187, %v564
  %v566 = vpop.f32.mrb[0].mxu0
  %v567 = vpop.f32.mrb[0].mxu0
  %v568 = vadd.f32 %v187, %v567
  %v569 = vpop.f32.mrb[0].mxu0
  %570 = vmatprep.mubr.bf16.mxu0 0
  %571 = vmatmul.mubr.bf16.gmra.mrb[0].mxu0 %v384
  %v572 = vpop.f32.mrb[0].mxu0
  %v573 = vadd.f32 %v187, %v572
  %v574 = vpop.f32.mrb[0].mxu0
  %v575 = vpop.f32.mrb[0].mxu0
  %v576 = vadd.f32 %v187, %v575
  %v577 = vpop.f32.mrb[0].mxu0
  %578 = vmatprep.mubr.bf16.mxu0 0
  %579 = vmatmul.mubr.bf16.gmra.mrb[0].mxu0 %v387
  %v580 = vpop.f32.mrb[0].mxu0
  %v581 = vadd.f32 %v187, %v580
  %v582 = vpop.f32.mrb[0].mxu0
  %v583 = vpop.f32.mrb[0].mxu0
  %v584 = vadd.f32 %v187, %v583
  %v585 = vpop.f32.mrb[0].mxu0
  %586 = vmatprep.mubr.bf16.mxu0 0
  %587 = vmatmul.mubr.bf16.gmra.mrb[0].mxu0 %v390
  %v588 = vpop.f32.mrb[0].mxu0
  %v589 = vadd.f32 %v187, %v588
  %v590 = vpop.f32.mrb[0].mxu0
  %v591 = vpop.f32.mrb[0].mxu0
  %v592 = vadd.f32 %v187, %v591
  %v593 = vpop.f32.mrb[0].mxu0
  %594 = vmatprep.mubr.bf16.mxu0 0
  %595 = vmatmul.mubr.bf16.gmra.mrb[0].mxu0 %v393
  %v596 = vpop.f32.mrb[0].mxu0
  %v597 = vadd.f32 %v187, %v596
  %v598 = vpop.f32.mrb[0].mxu0
  %v599 = vpop.f32.mrb[0].mxu0
  %v600 = vadd.f32 %v187, %v599
  %v601 = vpop.f32.mrb[0].mxu0
  %602 = vmatprep.mubr.bf16.mxu0 0
  %603 = vmatmul.mubr.bf16.gmra.mrb[0].mxu0 %v396
  %v604 = vpop.f32.mrb[0].mxu0
  %v605 = vadd.f32 %v187, %v604
  %v606 = vpop.f32.mrb[0].mxu0
  %v607 = vpop.f32.mrb[0].mxu0
  %v608 = vadd.f32 %v187, %v607
  %v609 = vpop.f32.mrb[0].mxu0
  %610 = vmatprep.mubr.bf16.mxu0 0
  %611 = vmatmul.mubr.bf16.gmra.mrb[0].mxu0 %v399
  %v612 = vpop.f32.mrb[0].mxu0
  %v613 = vadd.f32 %v187, %v612
  %v614 = vpop.f32.mrb[0].mxu0
  %v615 = vpop.f32.mrb[0].mxu0
  %v616 = vadd.f32 %v187, %v615
  %v617 = vpop.f32.mrb[0].mxu0
  %618 = vmatprep.mubr.bf16.mxu0 0
  %619 = vmatmul.mubr.bf16.gmra.mrb[0].mxu0 %v402
  %v620 = vpop.f32.mrb[0].mxu0
  %v621 = vadd.f32 %v187, %v620
  %v622 = vpop.f32.mrb[0].mxu0
  %v623 = vpop.f32.mrb[0].mxu0
  %v624 = vadd.f32 %v187, %v623
  %v625 = vpop.f32.mrb[0].mxu0
  %626 = vmatprep.mubr.bf16.mxu0 0
  %627 = vmatmul.mubr.bf16.gmra.mrb[0].mxu0 %v405
  %v628 = vpop.f32.mrb[0].mxu0
  %v629 = vadd.f32 %v187, %v628
  %v630 = vpop.f32.mrb[0].mxu0
  %v631 = vpop.f32.mrb[0].mxu0
  %v632 = vadd.f32 %v187, %v631
  %v633 = vpop.f32.mrb[0].mxu0
  %634 = vmatprep.mubr.bf16.mxu0 0
  %635 = vmatmul.mubr.bf16.gmra.mrb[0].mxu0 %v408
  %v636 = vpop.f32.mrb[0].mxu0
  %v637 = vadd.f32 %v187, %v636
  %v638 = vpop.f32.mrb[0].mxu0
  %v639 = vpop.f32.mrb[0].mxu0
  %v640 = vadd.f32 %v187, %v639
  %v641 = vpop.f32.mrb[0].mxu0
  %642 = vmatprep.mubr.bf16.mxu0 0
  %643 = vmatmul.mubr.bf16.gmra.mrb[0].mxu0 %v411
  %v644 = vpop.f32.mrb[0].mxu0
  %v645 = vadd.f32 %v187, %v644
  %v646 = vpop.f32.mrb[0].mxu0
  %v647 = vpop.f32.mrb[0].mxu0
  %v648 = vadd.f32 %v187, %v647
  %v649 = vpop.f32.mrb[0].mxu0
  %650 = vmatprep.mubr.bf16.mxu0 0
  %651 = vmatmul.mubr.bf16.gmra.mrb[0].mxu0 %v414
  %v652 = vpop.f32.mrb[0].mxu0
  %v653 = vadd.f32 %v187, %v652
  %v654 = vpop.f32.mrb[0].mxu0
  %v655 = vpop.f32.mrb[0].mxu0
  %v656 = vadd.f32 %v187, %v655
  %v657 = vpop.f32.mrb[0].mxu0
  %658 = vmatprep.mubr.bf16.mxu0 0
  %659 = vmatmul.mubr.bf16.gmra.mrb[0].mxu0 %v417
  %v660 = vpop.f32.mrb[0].mxu0
  %v661 = vadd.f32 %v187, %v660
  %v662 = vpop.f32.mrb[0].mxu0
  %v663 = vpop.f32.mrb[0].mxu0
  %v664 = vadd.f32 %v187, %v663
  %v665 = vpop.f32.mrb[0].mxu0
  %666 = vmatprep.mubr.bf16.mxu0 0
  %667 = vmatmul.mubr.bf16.gmra.mrb[0].mxu0 %v420
  %v668 = vpop.f32.mrb[0].mxu0
  %v669 = vadd.f32 %v187, %v668
  %v670 = vpop.f32.mrb[0].mxu0
  %v671 = vpop.f32.mrb[0].mxu0
  %v672 = vadd.f32 %v187, %v671
  %v673 = vpop.f32.mrb[0].mxu0
  %674 = vmatprep.mubr.bf16.mxu0 0
  %675 = vmatmul.mubr.bf16.gmra.mrb[0].mxu0 %v423
  %v676 = vpop.f32.mrb[0].mxu0
  %v677 = vadd.f32 %v187, %v676
  %v678 = vpop.f32.mrb[0].mxu0
  %v679 = vpop.f32.mrb[0].mxu0
  %v680 = vadd.f32 %v187, %v679
  %v681 = vpop.f32.mrb[0].mxu0
  %682 = vmatprep.mubr.bf16.mxu0 0
  %683 = vmatmul.mubr.bf16.gmra.mrb[0].mxu0 %v426
  %v684 = vpop.f32.mrb[0].mxu0
  %v685 = vadd.f32 %v187, %v684
  %v686 = vpop.f32.mrb[0].mxu0
  %v687 = vpop.f32.mrb[0].mxu0
  %v688 = vadd.f32 %v187, %v687
  %v689 = vpop.f32.mrb[0].mxu0
  %690 = vmatprep.mubr.bf16.mxu0 0
  %691 = vmatmul.mubr.bf16.gmra.mrb[0].mxu0 %v429
  %v692 = vpop.f32.mrb[0].mxu0
  %v693 = vadd.f32 %v187, %v692
  %v694 = vpop.f32.mrb[0].mxu0
  %v695 = vpop.f32.mrb[0].mxu0
  %v696 = vadd.f32 %v187, %v695
  %v697 = vpop.f32.mrb[0].mxu0
  %698 = vmatprep.mubr.bf16.mxu0 0
  %699 = vmatmul.mubr.bf16.gmra.mrb[0].mxu0 %v432
  %v700 = vpop.f32.mrb[0].mxu0
  %v701 = vadd.f32 %v187, %v700
  %v702 = vpop.f32.mrb[0].mxu0
  %v703 = vpop.f32.mrb[0].mxu0
  %v704 = vadd.f32 %v187, %v703
  %v705 = vpop.f32.mrb[0].mxu0
  %706 = vmatprep.mubr.bf16.mxu0 0
  %707 = vmatmul.mubr.bf16.gmra.mrb[0].mxu0 %v435
  %v708 = vpop.f32.mrb[0].mxu0
  %v709 = vadd.f32 %v187, %v708
  %v710 = vpop.f32.mrb[0].mxu0
  %v711 = vpop.f32.mrb[0].mxu0
  %v712 = vadd.f32 %v187, %v711
  %v713 = vpop.f32.mrb[0].mxu0
  %714 = vmatprep.mubr.bf16.mxu0 0
  %715 = vmatmul.mubr.bf16.gmra.mrb[0].mxu0 %v438
  %v716 = vpop.f32.mrb[0].mxu0
  %v717 = vadd.f32 %v187, %v716
  %v718 = vpop.f32.mrb[0].mxu0
  %v719 = vpop.f32.mrb[0].mxu0
  %v720 = vadd.f32 %v187, %v719
  %v721 = vpop.f32.mrb[0].mxu0
  %722 = vmatprep.mubr.bf16.mxu0 0
  %723 = vmatmul.mubr.bf16.gmra.mrb[0].mxu0 %v441
  %v724 = vpop.f32.mrb[0].mxu0
  %v725 = vadd.f32 %v187, %v724
  %v726 = vpop.f32.mrb[0].mxu0
  %v727 = vpop.f32.mrb[0].mxu0
  %v728 = vadd.f32 %v187, %v727
  %v729 = vpop.f32.mrb[0].mxu0
  %730 = vmatprep.mubr.bf16.mxu0 0
  %731 = vmatmul.mubr.bf16.gmra.mrb[0].mxu0 %v444
  %v732 = vpop.f32.mrb[0].mxu0
  %v733 = vadd.f32 %v187, %v732
  %v734 = vpop.f32.mrb[0].mxu0
  %v735 = vpop.f32.mrb[0].mxu0
  %v736 = vadd.f32 %v187, %v735
  %v737 = vpop.f32.mrb[0].mxu0
  %738 = vdwg.mxu0
  %v739 = vmax.f32 %v485, 0.0
  %v740 = vmax.f32 %v488, 0.0
  %v741 = vmax.f32 %v493, 0.0
  %v742 = vmax.f32 %v496, 0.0
  %v743 = vmax.f32 %v501, 0.0
  %v744 = vmax.f32 %v504, 0.0
  %v745 = vmax.f32 %v509, 0.0
  %v746 = vmax.f32 %v512, 0.0
  %v747 = vmax.f32 %v517, 0.0
  %v748 = vmax.f32 %v520, 0.0
  %v749 = vmax.f32 %v525, 0.0
  %v750 = vmax.f32 %v528, 0.0
  %v751 = vmax.f32 %v533, 0.0
  %v752 = vmax.f32 %v536, 0.0
  %v753 = vmax.f32 %v541, 0.0
  %v754 = vmax.f32 %v544, 0.0
  %v755 = vmax.f32 %v549, 0.0
  %v756 = vmax.f32 %v552, 0.0
  %v757 = vmax.f32 %v557, 0.0
  %v758 = vmax.f32 %v560, 0.0
  %v759 = vmax.f32 %v565, 0.0
  %v760 = vmax.f32 %v568, 0.0
  %v761 = vmax.f32 %v573, 0.0
  %v762 = vmax.f32 %v576, 0.0
  %v763 = vmax.f32 %v581, 0.0
  %v764 = vmax.f32 %v584, 0.0
  %v765 = vmax.f32 %v589, 0.0
  %v766 = vmax.f32 %v592, 0.0
  %v767 = vmax.f32 %v597, 0.0
  %v768 = vmax.f32 %v600, 0.0
  %v769 = vmax.f32 %v605, 0.0
  %v770 = vmax.f32 %v608, 0.0
  %v771 = vmax.f32 %v613, 0.0
  %v772 = vmax.f32 %v616, 0.0
  %v773 = vmax.f32 %v621, 0.0
  %v774 = vmax.f32 %v624, 0.0
  %v775 = vmax.f32 %v629, 0.0
  %v776 = vmax.f32 %v632, 0.0
  %v777 = vmax.f32 %v637, 0.0
  %v778 = vmax.f32 %v640, 0.0
  %v779 = vmax.f32 %v645, 0.0
  %v780 = vmax.f32 %v648, 0.0
  %v781 = vmax.f32 %v653, 0.0
  %v782 = vmax.f32 %v656, 0.0
  %v783 = vmax.f32 %v661, 0.0
  %v784 = vmax.f32 %v664, 0.0
  %v785 = vmax.f32 %v669, 0.0
  %v786 = vmax.f32 %v672, 0.0
  %v787 = vmax.f32 %v677, 0.0
  %v788 = vmax.f32 %v680, 0.0
  %v789 = vmax.f32 %v685, 0.0
  %v790 = vmax.f32 %v688, 0.0
  %v791 = vmax.f32 %v693, 0.0
  %v792 = vmax.f32 %v696, 0.0
  %v793 = vmax.f32 %v701, 0.0
  %v794 = vmax.f32 %v704, 0.0
  %v795 = vmax.f32 %v709, 0.0
  %v796 = vmax.f32 %v712, 0.0
  %v797 = vmax.f32 %v717, 0.0
  %v798 = vmax.f32 %v720, 0.0
  %v799 = vmax.f32 %v725, 0.0
  %v800 = vmax.f32 %v728, 0.0
  %v801 = vmax.f32 %v733, 0.0
  %v802 = vmax.f32 %v736, 0.0
  %v803 = vpack.c.bf16 %v740, %v739
  %v804 = vpack.c.bf16 %v742, %v741
  %v805 = vpack.c.bf16 %v744, %v743
  %v806 = vpack.c.bf16 %v746, %v745
  %v807 = vpack.c.bf16 %v748, %v747
  %v808 = vpack.c.bf16 %v750, %v749
  %v809 = vpack.c.bf16 %v752, %v751
  %v810 = vpack.c.bf16 %v754, %v753
  %v811 = vpack.c.bf16 %v756, %v755
  %v812 = vpack.c.bf16 %v758, %v757
  %v813 = vpack.c.bf16 %v760, %v759
  %v814 = vpack.c.bf16 %v762, %v761
  %v815 = vpack.c.bf16 %v764, %v763
  %v816 = vpack.c.bf16 %v766, %v765
  %v817 = vpack.c.bf16 %v768, %v767
  %v818 = vpack.c.bf16 %v770, %v769
  %v819 = vpack.c.bf16 %v772, %v771
  %v820 = vpack.c.bf16 %v774, %v773
  %v821 = vpack.c.bf16 %v776, %v775
  %v822 = vpack.c.bf16 %v778, %v777
  %v823 = vpack.c.bf16 %v780, %v779
  %v824 = vpack.c.bf16 %v782, %v781
  %v825 = vpack.c.bf16 %v784, %v783
  %v826 = vpack.c.bf16 %v786, %v785
  %v827 = vpack.c.bf16 %v788, %v787
  %v828 = vpack.c.bf16 %v790, %v789
  %v829 = vpack.c.bf16 %v792, %v791
  %v830 = vpack.c.bf16 %v794, %v793
  %v831 = vpack.c.bf16 %v796, %v795
  %v832 = vpack.c.bf16 %v798, %v797
  %v833 = vpack.c.bf16 %v800, %v799
  %v834 = vpack.c.bf16 %v802, %v801
  %v835 = vld [vmem:[%s5] sm:$0xf]
  %v836 = vld [vmem:[%s5 + $0x4] sm:$0xf]
  %v837 = vld [vmem:[%s6] sm:$0x1]
  %v839 = vlaneseq
  %v840 = vshrl.u32 %v839, 7
  %v841 = vsub.s32 0, %v840
  %v842 = vrot.slane %v837, %v841
  %v846 = vunpack.c.l.b16 %v835
  %v847 = vunpack.c.l.b16 %v836
  %v848 = vpack.c.b16 %v847, %v846
  %vm850 = vcmask 130048
  %v852 = vsel %vm850, %v803, 0
  %v855 = vsel %vm850, %v804, 0
  %v858 = vsel %vm850, %v805, 0
  %v861 = vsel %vm850, %v806, 0
  %v864 = vsel %vm850, %v807, 0
  %v867 = vsel %vm850, %v808, 0
  %v870 = vsel %vm850, %v809, 0
  %v873 = vsel %vm850, %v810, 0
  %v876 = vsel %vm850, %v811, 0
  %v879 = vsel %vm850, %v812, 0
  %v882 = vsel %vm850, %v813, 0
  %v885 = vsel %vm850, %v814, 0
  %v888 = vsel %vm850, %v815, 0
  %v891 = vsel %vm850, %v816, 0
  %v894 = vsel %vm850, %v817, 0
  %v897 = vsel %vm850, %v818, 0
  %v900 = vsel %vm850, %v819, 0
  %v903 = vsel %vm850, %v820, 0
  %v906 = vsel %vm850, %v821, 0
  %v909 = vsel %vm850, %v822, 0
  %v912 = vsel %vm850, %v823, 0
  %v915 = vsel %vm850, %v824, 0
  %v918 = vsel %vm850, %v825, 0
  %v921 = vsel %vm850, %v826, 0
  %v924 = vsel %vm850, %v827, 0
  %v927 = vsel %vm850, %v828, 0
  %v930 = vsel %vm850, %v829, 0
  %v933 = vsel %vm850, %v830, 0
  %v936 = vsel %vm850, %v831, 0
  %v939 = vsel %vm850, %v832, 0
  %v942 = vsel %vm850, %v833, 0
  %v945 = vsel %vm850, %v834, 0
  %947 = vmatprep.subr.bf16.mxu0 0
  %948 = vmatpush1.bf16.msra.mxu0 %v848
  %949 = vmatprep.subr.bf16.mxu0 0
  %950 = vmatpush1.bf16.msra.mxu0 0
  %951 = vmatprep.subr.bf16.mxu0 0
  %952 = vmatpush1.bf16.msra.mxu0 0
  %953 = vmatprep.subr.bf16.mxu0 0
  %954 = vmatpush1.bf16.msra.mxu0 0
  %955 = vmatprep.subr.bf16.mxu0 0
  %956 = vmatpush1.bf16.msra.mxu0 0
  %957 = vmatprep.subr.bf16.mxu0 0
  %958 = vmatpush1.bf16.msra.mxu0 0
  %959 = vmatprep.subr.bf16.mxu0 0
  %960 = vmatpush1.bf16.msra.mxu0 0
  %961 = vmatprep.subr.bf16.mxu0 0
  %962 = vmatpush1.bf16.msra.mxu0 0
  %963 = vmatprep.subr.bf16.mxu0 0
  %964 = vmatpush1.bf16.msra.mxu0 0
  %965 = vmatprep.subr.bf16.mxu0 0
  %966 = vmatpush1.bf16.msra.mxu0 0
  %967 = vmatprep.subr.bf16.mxu0 0
  %968 = vmatpush1.bf16.msra.mxu0 0
  %969 = vmatprep.subr.bf16.mxu0 0
  %970 = vmatpush1.bf16.msra.mxu0 0
  %971 = vmatprep.subr.bf16.mxu0 0
  %972 = vmatpush1.bf16.msra.mxu0 0
  %973 = vmatprep.subr.bf16.mxu0 0
  %974 = vmatpush1.bf16.msra.mxu0 0
  %975 = vmatprep.subr.bf16.mxu0 0
  %976 = vmatpush1.bf16.msra.mxu0 0
  %977 = vmatprep.subr.bf16.mxu0 0
  %978 = vmatpush1.bf16.msra.mxu0 0
  %979 = vmatprep.mubr.bf16.mxu0 0
  %980 = vmatmul.mubr.bf16.gmra.mrb[0].mxu0 %v852
  %v981 = vpop.f32.mrb[0].mxu0
  %v982 = vadd.f32 %v842, %v981
  %v983 = vpop.f32.mrb[0].mxu0
  %v984 = vpop.f32.mrb[0].mxu0
  %v985 = vadd.f32 %v842, %v984
  %v986 = vpop.f32.mrb[0].mxu0
  %987 = vmatprep.mubr.bf16.mxu0 0
  %988 = vmatmul.mubr.bf16.gmra.mrb[0].mxu0 %v855
  %v989 = vpop.f32.mrb[0].mxu0
  %v990 = vadd.f32 %v842, %v989
  %v991 = vpop.f32.mrb[0].mxu0
  %v992 = vpop.f32.mrb[0].mxu0
  %v993 = vadd.f32 %v842, %v992
  %v994 = vpop.f32.mrb[0].mxu0
  %995 = vmatprep.mubr.bf16.mxu0 0
  %996 = vmatmul.mubr.bf16.gmra.mrb[0].mxu0 %v858
  %v997 = vpop.f32.mrb[0].mxu0
  %v998 = vadd.f32 %v842, %v997
  %v999 = vpop.f32.mrb[0].mxu0
  %v1000 = vpop.f32.mrb[0].mxu0
  %v1001 = vadd.f32 %v842, %v1000
  %v1002 = vpop.f32.mrb[0].mxu0
  %1003 = vmatprep.mubr.bf16.mxu0 0
  %1004 = vmatmul.mubr.bf16.gmra.mrb[0].mxu0 %v861
  %v1005 = vpop.f32.mrb[0].mxu0
  %v1006 = vadd.f32 %v842, %v1005
  %v1007 = vpop.f32.mrb[0].mxu0
  %v1008 = vpop.f32.mrb[0].mxu0
  %v1009 = vadd.f32 %v842, %v1008
  %v1010 = vpop.f32.mrb[0].mxu0
  %1011 = vmatprep.mubr.bf16.mxu0 0
  %1012 = vmatmul.mubr.bf16.gmra.mrb[0].mxu0 %v864
  %v1013 = vpop.f32.mrb[0].mxu0
  %v1014 = vadd.f32 %v842, %v1013
  %v1015 = vpop.f32.mrb[0].mxu0
  %v1016 = vpop.f32.mrb[0].mxu0
  %v1017 = vadd.f32 %v842, %v1016
  %v1018 = vpop.f32.mrb[0].mxu0
  %1019 = vmatprep.mubr.bf16.mxu0 0
  %1020 = vmatmul.mubr.bf16.gmra.mrb[0].mxu0 %v867
  %v1021 = vpop.f32.mrb[0].mxu0
  %v1022 = vadd.f32 %v842, %v1021
  %v1023 = vpop.f32.mrb[0].mxu0
  %v1024 = vpop.f32.mrb[0].mxu0
  %v1025 = vadd.f32 %v842, %v1024
  %v1026 = vpop.f32.mrb[0].mxu0
  %1027 = vmatprep.mubr.bf16.mxu0 0
  %1028 = vmatmul.mubr.bf16.gmra.mrb[0].mxu0 %v870
  %v1029 = vpop.f32.mrb[0].mxu0
  %v1030 = vadd.f32 %v842, %v1029
  %v1031 = vpop.f32.mrb[0].mxu0
  %v1032 = vpop.f32.mrb[0].mxu0
  %v1033 = vadd.f32 %v842, %v1032
  %v1034 = vpop.f32.mrb[0].mxu0
  %1035 = vmatprep.mubr.bf16.mxu0 0
  %1036 = vmatmul.mubr.bf16.gmra.mrb[0].mxu0 %v873
  %v1037 = vpop.f32.mrb[0].mxu0
  %v1038 = vadd.f32 %v842, %v1037
  %v1039 = vpop.f32.mrb[0].mxu0
  %v1040 = vpop.f32.mrb[0].mxu0
  %v1041 = vadd.f32 %v842, %v1040
  %v1042 = vpop.f32.mrb[0].mxu0
  %1043 = vmatprep.mubr.bf16.mxu0 0
  %1044 = vmatmul.mubr.bf16.gmra.mrb[0].mxu0 %v876
  %v1045 = vpop.f32.mrb[0].mxu0
  %v1046 = vadd.f32 %v842, %v1045
  %v1047 = vpop.f32.mrb[0].mxu0
  %v1048 = vpop.f32.mrb[0].mxu0
  %v1049 = vadd.f32 %v842, %v1048
  %v1050 = vpop.f32.mrb[0].mxu0
  %1051 = vmatprep.mubr.bf16.mxu0 0
  %1052 = vmatmul.mubr.bf16.gmra.mrb[0].mxu0 %v879
  %v1053 = vpop.f32.mrb[0].mxu0
  %v1054 = vadd.f32 %v842, %v1053
  %v1055 = vpop.f32.mrb[0].mxu0
  %v1056 = vpop.f32.mrb[0].mxu0
  %v1057 = vadd.f32 %v842, %v1056
  %v1058 = vpop.f32.mrb[0].mxu0
  %1059 = vmatprep.mubr.bf16.mxu0 0
  %1060 = vmatmul.mubr.bf16.gmra.mrb[0].mxu0 %v882
  %v1061 = vpop.f32.mrb[0].mxu0
  %v1062 = vadd.f32 %v842, %v1061
  %v1063 = vpop.f32.mrb[0].mxu0
  %v1064 = vpop.f32.mrb[0].mxu0
  %v1065 = vadd.f32 %v842, %v1064
  %v1066 = vpop.f32.mrb[0].mxu0
  %1067 = vmatprep.mubr.bf16.mxu0 0
  %1068 = vmatmul.mubr.bf16.gmra.mrb[0].mxu0 %v885
  %v1069 = vpop.f32.mrb[0].mxu0
  %v1070 = vadd.f32 %v842, %v1069
  %v1071 = vpop.f32.mrb[0].mxu0
  %v1072 = vpop.f32.mrb[0].mxu0
  %v1073 = vadd.f32 %v842, %v1072
  %v1074 = vpop.f32.mrb[0].mxu0
  %1075 = vmatprep.mubr.bf16.mxu0 0
  %1076 = vmatmul.mubr.bf16.gmra.mrb[0].mxu0 %v888
  %v1077 = vpop.f32.mrb[0].mxu0
  %v1078 = vadd.f32 %v842, %v1077
  %v1079 = vpop.f32.mrb[0].mxu0
  %v1080 = vpop.f32.mrb[0].mxu0
  %v1081 = vadd.f32 %v842, %v1080
  %v1082 = vpop.f32.mrb[0].mxu0
  %1083 = vmatprep.mubr.bf16.mxu0 0
  %1084 = vmatmul.mubr.bf16.gmra.mrb[0].mxu0 %v891
  %v1085 = vpop.f32.mrb[0].mxu0
  %v1086 = vadd.f32 %v842, %v1085
  %v1087 = vpop.f32.mrb[0].mxu0
  %v1088 = vpop.f32.mrb[0].mxu0
  %v1089 = vadd.f32 %v842, %v1088
  %v1090 = vpop.f32.mrb[0].mxu0
  %1091 = vmatprep.mubr.bf16.mxu0 0
  %1092 = vmatmul.mubr.bf16.gmra.mrb[0].mxu0 %v894
  %v1093 = vpop.f32.mrb[0].mxu0
  %v1094 = vadd.f32 %v842, %v1093
  %v1095 = vpop.f32.mrb[0].mxu0
  %v1096 = vpop.f32.mrb[0].mxu0
  %v1097 = vadd.f32 %v842, %v1096
  %v1098 = vpop.f32.mrb[0].mxu0
  %1099 = vmatprep.mubr.bf16.mxu0 0
  %1100 = vmatmul.mubr.bf16.gmra.mrb[0].mxu0 %v897
  %v1101 = vpop.f32.mrb[0].mxu0
  %v1102 = vadd.f32 %v842, %v1101
  %v1103 = vpop.f32.mrb[0].mxu0
  %v1104 = vpop.f32.mrb[0].mxu0
  %v1105 = vadd.f32 %v842, %v1104
  %v1106 = vpop.f32.mrb[0].mxu0
  %1107 = vmatprep.mubr.bf16.mxu0 0
  %1108 = vmatmul.mubr.bf16.gmra.mrb[0].mxu0 %v900
  %v1109 = vpop.f32.mrb[0].mxu0
  %v1110 = vadd.f32 %v842, %v1109
  %v1111 = vpop.f32.mrb[0].mxu0
  %v1112 = vpop.f32.mrb[0].mxu0
  %v1113 = vadd.f32 %v842, %v1112
  %v1114 = vpop.f32.mrb[0].mxu0
  %1115 = vmatprep.mubr.bf16.mxu0 0
  %1116 = vmatmul.mubr.bf16.gmra.mrb[0].mxu0 %v903
  %v1117 = vpop.f32.mrb[0].mxu0
  %v1118 = vadd.f32 %v842, %v1117
  %v1119 = vpop.f32.mrb[0].mxu0
  %v1120 = vpop.f32.mrb[0].mxu0
  %v1121 = vadd.f32 %v842, %v1120
  %v1122 = vpop.f32.mrb[0].mxu0
  %1123 = vmatprep.mubr.bf16.mxu0 0
  %1124 = vmatmul.mubr.bf16.gmra.mrb[0].mxu0 %v906
  %v1125 = vpop.f32.mrb[0].mxu0
  %v1126 = vadd.f32 %v842, %v1125
  %v1127 = vpop.f32.mrb[0].mxu0
  %v1128 = vpop.f32.mrb[0].mxu0
  %v1129 = vadd.f32 %v842, %v1128
  %v1130 = vpop.f32.mrb[0].mxu0
  %1131 = vmatprep.mubr.bf16.mxu0 0
  %1132 = vmatmul.mubr.bf16.gmra.mrb[0].mxu0 %v909
  %v1133 = vpop.f32.mrb[0].mxu0
  %v1134 = vadd.f32 %v842, %v1133
  %v1135 = vpop.f32.mrb[0].mxu0
  %v1136 = vpop.f32.mrb[0].mxu0
  %v1137 = vadd.f32 %v842, %v1136
  %v1138 = vpop.f32.mrb[0].mxu0
  %1139 = vmatprep.mubr.bf16.mxu0 0
  %1140 = vmatmul.mubr.bf16.gmra.mrb[0].mxu0 %v912
  %v1141 = vpop.f32.mrb[0].mxu0
  %v1142 = vadd.f32 %v842, %v1141
  %v1143 = vpop.f32.mrb[0].mxu0
  %v1144 = vpop.f32.mrb[0].mxu0
  %v1145 = vadd.f32 %v842, %v1144
  %v1146 = vpop.f32.mrb[0].mxu0
  %1147 = vmatprep.mubr.bf16.mxu0 0
  %1148 = vmatmul.mubr.bf16.gmra.mrb[0].mxu0 %v915
  %v1149 = vpop.f32.mrb[0].mxu0
  %v1150 = vadd.f32 %v842, %v1149
  %v1151 = vpop.f32.mrb[0].mxu0
  %v1152 = vpop.f32.mrb[0].mxu0
  %v1153 = vadd.f32 %v842, %v1152
  %v1154 = vpop.f32.mrb[0].mxu0
  %1155 = vmatprep.mubr.bf16.mxu0 0
  %1156 = vmatmul.mubr.bf16.gmra.mrb[0].mxu0 %v918
  %v1157 = vpop.f32.mrb[0].mxu0
  %v1158 = vadd.f32 %v842, %v1157
  %v1159 = vpop.f32.mrb[0].mxu0
  %v1160 = vpop.f32.mrb[0].mxu0
  %v1161 = vadd.f32 %v842, %v1160
  %v1162 = vpop.f32.mrb[0].mxu0
  %1163 = vmatprep.mubr.bf16.mxu0 0
  %1164 = vmatmul.mubr.bf16.gmra.mrb[0].mxu0 %v921
  %v1165 = vpop.f32.mrb[0].mxu0
  %v1166 = vadd.f32 %v842, %v1165
  %v1167 = vpop.f32.mrb[0].mxu0
  %v1168 = vpop.f32.mrb[0].mxu0
  %v1169 = vadd.f32 %v842, %v1168
  %v1170 = vpop.f32.mrb[0].mxu0
  %1171 = vmatprep.mubr.bf16.mxu0 0
  %1172 = vmatmul.mubr.bf16.gmra.mrb[0].mxu0 %v924
  %v1173 = vpop.f32.mrb[0].mxu0
  %v1174 = vadd.f32 %v842, %v1173
  %v1175 = vpop.f32.mrb[0].mxu0
  %v1176 = vpop.f32.mrb[0].mxu0
  %v1177 = vadd.f32 %v842, %v1176
  %v1178 = vpop.f32.mrb[0].mxu0
  %1179 = vmatprep.mubr.bf16.mxu0 0
  %1180 = vmatmul.mubr.bf16.gmra.mrb[0].mxu0 %v927
  %v1181 = vpop.f32.mrb[0].mxu0
  %v1182 = vadd.f32 %v842, %v1181
  %v1183 = vpop.f32.mrb[0].mxu0
  %v1184 = vpop.f32.mrb[0].mxu0
  %v1185 = vadd.f32 %v842, %v1184
  %v1186 = vpop.f32.mrb[0].mxu0
  %1187 = vmatprep.mubr.bf16.mxu0 0
  %1188 = vmatmul.mubr.bf16.gmra.mrb[0].mxu0 %v930
  %v1189 = vpop.f32.mrb[0].mxu0
  %v1190 = vadd.f32 %v842, %v1189
  %v1191 = vpop.f32.mrb[0].mxu0
  %v1192 = vpop.f32.mrb[0].mxu0
  %v1193 = vadd.f32 %v842, %v1192
  %v1194 = vpop.f32.mrb[0].mxu0
  %1195 = vmatprep.mubr.bf16.mxu0 0
  %1196 = vmatmul.mubr.bf16.gmra.mrb[0].mxu0 %v933
  %v1197 = vpop.f32.mrb[0].mxu0
  %v1198 = vadd.f32 %v842, %v1197
  %v1199 = vpop.f32.mrb[0].mxu0
  %v1200 = vpop.f32.mrb[0].mxu0
  %v1201 = vadd.f32 %v842, %v1200
  %v1202 = vpop.f32.mrb[0].mxu0
  %1203 = vmatprep.mubr.bf16.mxu0 0
  %1204 = vmatmul.mubr.bf16.gmra.mrb[0].mxu0 %v936
  %v1205 = vpop.f32.mrb[0].mxu0
  %v1206 = vadd.f32 %v842, %v1205
  %v1207 = vpop.f32.mrb[0].mxu0
  %v1208 = vpop.f32.mrb[0].mxu0
  %v1209 = vadd.f32 %v842, %v1208
  %v1210 = vpop.f32.mrb[0].mxu0
  %1211 = vmatprep.mubr.bf16.mxu0 0
  %1212 = vmatmul.mubr.bf16.gmra.mrb[0].mxu0 %v939
  %v1213 = vpop.f32.mrb[0].mxu0
  %v1214 = vadd.f32 %v842, %v1213
  %v1215 = vpop.f32.mrb[0].mxu0
  %v1216 = vpop.f32.mrb[0].mxu0
  %v1217 = vadd.f32 %v842, %v1216
  %v1218 = vpop.f32.mrb[0].mxu0
  %1219 = vmatprep.mubr.bf16.mxu0 0
  %1220 = vmatmul.mubr.bf16.gmra.mrb[0].mxu0 %v942
  %v1221 = vpop.f32.mrb[0].mxu0
  %v1222 = vadd.f32 %v842, %v1221
  %v1223 = vpop.f32.mrb[0].mxu0
  %v1224 = vpop.f32.mrb[0].mxu0
  %v1225 = vadd.f32 %v842, %v1224
  %v1226 = vpop.f32.mrb[0].mxu0
  %1227 = vmatprep.mubr.bf16.mxu0 0
  %1228 = vmatmul.mubr.bf16.gmra.mrb[0].mxu0 %v945
  %v1229 = vpop.f32.mrb[0].mxu0
  %v1230 = vadd.f32 %v842, %v1229
  %v1231 = vpop.f32.mrb[0].mxu0
  %v1232 = vpop.f32.mrb[0].mxu0
  %v1233 = vadd.f32 %v842, %v1232
  %v1234 = vpop.f32.mrb[0].mxu0
  %1235 = vdwg.mxu0
  %v1236 = vmax.f32 %v982, 0.0
  %v1237 = vmax.f32 %v985, 0.0
  %v1238 = vmax.f32 %v990, 0.0
  %v1239 = vmax.f32 %v993, 0.0
  %v1240 = vmax.f32 %v998, 0.0
  %v1241 = vmax.f32 %v1001, 0.0
  %v1242 = vmax.f32 %v1006, 0.0
  %v1243 = vmax.f32 %v1009, 0.0
  %v1244 = vmax.f32 %v1014, 0.0
  %v1245 = vmax.f32 %v1017, 0.0
  %v1246 = vmax.f32 %v1022, 0.0
  %v1247 = vmax.f32 %v1025, 0.0
  %v1248 = vmax.f32 %v1030, 0.0
  %v1249 = vmax.f32 %v1033, 0.0
  %v1250 = vmax.f32 %v1038, 0.0
  %v1251 = vmax.f32 %v1041, 0.0
  %v1252 = vmax.f32 %v1046, 0.0
  %v1253 = vmax.f32 %v1049, 0.0
  %v1254 = vmax.f32 %v1054, 0.0
  %v1255 = vmax.f32 %v1057, 0.0
  %v1256 = vmax.f32 %v1062, 0.0
  %v1257 = vmax.f32 %v1065, 0.0
  %v1258 = vmax.f32 %v1070, 0.0
  %v1259 = vmax.f32 %v1073, 0.0
  %v1260 = vmax.f32 %v1078, 0.0
  %v1261 = vmax.f32 %v1081, 0.0
  %v1262 = vmax.f32 %v1086, 0.0
  %v1263 = vmax.f32 %v1089, 0.0
  %v1264 = vmax.f32 %v1094, 0.0
  %v1265 = vmax.f32 %v1097, 0.0
  %v1266 = vmax.f32 %v1102, 0.0
  %v1267 = vmax.f32 %v1105, 0.0
  %v1268 = vmax.f32 %v1110, 0.0
  %v1269 = vmax.f32 %v1113, 0.0
  %v1270 = vmax.f32 %v1118, 0.0
  %v1271 = vmax.f32 %v1121, 0.0
  %v1272 = vmax.f32 %v1126, 0.0
  %v1273 = vmax.f32 %v1129, 0.0
  %v1274 = vmax.f32 %v1134, 0.0
  %v1275 = vmax.f32 %v1137, 0.0
  %v1276 = vmax.f32 %v1142, 0.0
  %v1277 = vmax.f32 %v1145, 0.0
  %v1278 = vmax.f32 %v1150, 0.0
  %v1279 = vmax.f32 %v1153, 0.0
  %v1280 = vmax.f32 %v1158, 0.0
  %v1281 = vmax.f32 %v1161, 0.0
  %v1282 = vmax.f32 %v1166, 0.0
  %v1283 = vmax.f32 %v1169, 0.0
  %v1284 = vmax.f32 %v1174, 0.0
  %v1285 = vmax.f32 %v1177, 0.0
  %v1286 = vmax.f32 %v1182, 0.0
  %v1287 = vmax.f32 %v1185, 0.0
  %v1288 = vmax.f32 %v1190, 0.0
  %v1289 = vmax.f32 %v1193, 0.0
  %v1290 = vmax.f32 %v1198, 0.0
  %v1291 = vmax.f32 %v1201, 0.0
  %v1292 = vmax.f32 %v1206, 0.0
  %v1293 = vmax.f32 %v1209, 0.0
  %v1294 = vmax.f32 %v1214, 0.0
  %v1295 = vmax.f32 %v1217, 0.0
  %v1296 = vmax.f32 %v1222, 0.0
  %v1297 = vmax.f32 %v1225, 0.0
  %v1298 = vmax.f32 %v1230, 0.0
  %v1299 = vmax.f32 %v1233, 0.0
  %v1300 = vpack.c.bf16 %v1237, %v1236
  %v1301 = vpack.c.bf16 %v1239, %v1238
  %v1302 = vpack.c.bf16 %v1241, %v1240
  %v1303 = vpack.c.bf16 %v1243, %v1242
  %v1304 = vpack.c.bf16 %v1245, %v1244
  %v1305 = vpack.c.bf16 %v1247, %v1246
  %v1306 = vpack.c.bf16 %v1249, %v1248
  %v1307 = vpack.c.bf16 %v1251, %v1250
  %v1308 = vpack.c.bf16 %v1253, %v1252
  %v1309 = vpack.c.bf16 %v1255, %v1254
  %v1310 = vpack.c.bf16 %v1257, %v1256
  %v1311 = vpack.c.bf16 %v1259, %v1258
  %v1312 = vpack.c.bf16 %v1261, %v1260
  %v1313 = vpack.c.bf16 %v1263, %v1262
  %v1314 = vpack.c.bf16 %v1265, %v1264
  %v1315 = vpack.c.bf16 %v1267, %v1266
  %v1316 = vpack.c.bf16 %v1269, %v1268
  %v1317 = vpack.c.bf16 %v1271, %v1270
  %v1318 = vpack.c.bf16 %v1273, %v1272
  %v1319 = vpack.c.bf16 %v1275, %v1274
  %v1320 = vpack.c.bf16 %v1277, %v1276
  %v1321 = vpack.c.bf16 %v1279, %v1278
  %v1322 = vpack.c.bf16 %v1281, %v1280
  %v1323 = vpack.c.bf16 %v1283, %v1282
  %v1324 = vpack.c.bf16 %v1285, %v1284
  %v1325 = vpack.c.bf16 %v1287, %v1286
  %v1326 = vpack.c.bf16 %v1289, %v1288
  %v1327 = vpack.c.bf16 %v1291, %v1290
  %v1328 = vpack.c.bf16 %v1293, %v1292
  %v1329 = vpack.c.bf16 %v1295, %v1294
  %v1330 = vpack.c.bf16 %v1297, %v1296
  %v1331 = vpack.c.bf16 %v1299, %v1298
  %v1332 = vld [vmem:[%s7] sm:$0xff]
  %v1333 = vld [vmem:[%s7 + $0x8] sm:$0xff]
  %v1334 = vld [vmem:[%s7 + $0x10] sm:$0xff]
  %v1335 = vld [vmem:[%s7 + $0x18] sm:$0xff]
  %v1336 = vld [vmem:[%s7 + $0x20] sm:$0xff]
  %v1337 = vld [vmem:[%s7 + $0x28] sm:$0xff]
  %v1338 = vld [vmem:[%s7 + $0x30] sm:$0xff]
  %v1339 = vld [vmem:[%s7 + $0x38] sm:$0xff]
  %v1340 = vld [vmem:[%s7 + $0x40] sm:$0xff]
  %v1341 = vld [vmem:[%s7 + $0x48] sm:$0xff]
  %v1342 = vld [vmem:[%s7 + $0x50] sm:$0xff]
  %v1343 = vld [vmem:[%s7 + $0x58] sm:$0xff]
  %v1344 = vld [vmem:[%s7 + $0x60] sm:$0xff]
  %v1345 = vld [vmem:[%s7 + $0x68] sm:$0xff]
  %v1346 = vld [vmem:[%s7 + $0x70] sm:$0xff]
  %v1347 = vld [vmem:[%s7 + $0x78] sm:$0xff]
  %v1364 = vunpack.c.l.b16 %v1332
  %v1365 = vunpack.c.h.b16 %v1332
  %v1366 = vunpack.c.l.b16 %v1333
  %v1367 = vunpack.c.h.b16 %v1333
  %v1368 = vunpack.c.l.b16 %v1334
  %v1369 = vunpack.c.h.b16 %v1334
  %v1370 = vunpack.c.l.b16 %v1335
  %v1371 = vunpack.c.h.b16 %v1335
  %v1372 = vunpack.c.l.b16 %v1336
  %v1373 = vunpack.c.h.b16 %v1336
  %v1374 = vunpack.c.l.b16 %v1337
  %v1375 = vunpack.c.h.b16 %v1337
  %v1376 = vunpack.c.l.b16 %v1338
  %v1377 = vunpack.c.h.b16 %v1338
  %v1378 = vunpack.c.l.b16 %v1339
  %v1379 = vunpack.c.h.b16 %v1339
  %v1380 = vunpack.c.l.b16 %v1340
  %v1381 = vunpack.c.h.b16 %v1340
  %v1382 = vunpack.c.l.b16 %v1341
  %v1383 = vunpack.c.h.b16 %v1341
  %v1384 = vunpack.c.l.b16 %v1342
  %v1385 = vunpack.c.h.b16 %v1342
  %v1386 = vunpack.c.l.b16 %v1343
  %v1387 = vunpack.c.h.b16 %v1343
  %v1388 = vunpack.c.l.b16 %v1344
  %v1389 = vunpack.c.h.b16 %v1344
  %v1390 = vunpack.c.l.b16 %v1345
  %v1391 = vunpack.c.h.b16 %v1345
  %v1392 = vunpack.c.l.b16 %v1346
  %v1393 = vunpack.c.h.b16 %v1346
  %v1394 = vunpack.c.l.b16 %v1347
  %v1395 = vunpack.c.h.b16 %v1347
  %v1396 = vpack.c.b16 %v1372, %v1364
  %v1397 = vpack.c.b16 %v1373, %v1365
  %v1398 = vpack.c.b16 %v1374, %v1366
  %v1399 = vpack.c.b16 %v1375, %v1367
  %v1400 = vpack.c.b16 %v1376, %v1368
  %v1401 = vpack.c.b16 %v1377, %v1369
  %v1402 = vpack.c.b16 %v1378, %v1370
  %v1403 = vpack.c.b16 %v1379, %v1371
  %v1404 = vpack.c.b16 %v1388, %v1380
  %v1405 = vpack.c.b16 %v1389, %v1381
  %v1406 = vpack.c.b16 %v1390, %v1382
  %v1407 = vpack.c.b16 %v1391, %v1383
  %v1408 = vpack.c.b16 %v1392, %v1384
  %v1409 = vpack.c.b16 %v1393, %v1385
  %v1410 = vpack.c.b16 %v1394, %v1386
  %v1411 = vpack.c.b16 %v1395, %v1387
  %vm1428 = vcmask 261120
  %v1430 = vsel %vm1428, %v1300, 0
  %v1433 = vsel %vm1428, %v1301, 0
  %v1436 = vsel %vm1428, %v1302, 0
  %v1439 = vsel %vm1428, %v1303, 0
  %v1442 = vsel %vm1428, %v1304, 0
  %v1445 = vsel %vm1428, %v1305, 0
  %v1448 = vsel %vm1428, %v1306, 0
  %v1451 = vsel %vm1428, %v1307, 0
  %v1454 = vsel %vm1428, %v1308, 0
  %v1457 = vsel %vm1428, %v1309, 0
  %v1460 = vsel %vm1428, %v1310, 0
  %v1463 = vsel %vm1428, %v1311, 0
  %v1466 = vsel %vm1428, %v1312, 0
  %v1469 = vsel %vm1428, %v1313, 0
  %v1472 = vsel %vm1428, %v1314, 0
  %v1475 = vsel %vm1428, %v1315, 0
  %v1478 = vsel %vm1428, %v1316, 0
  %v1481 = vsel %vm1428, %v1317, 0
  %v1484 = vsel %vm1428, %v1318, 0
  %v1487 = vsel %vm1428, %v1319, 0
  %v1490 = vsel %vm1428, %v1320, 0
  %v1493 = vsel %vm1428, %v1321, 0
  %v1496 = vsel %vm1428, %v1322, 0
  %v1499 = vsel %vm1428, %v1323, 0
  %v1502 = vsel %vm1428, %v1324, 0
  %v1505 = vsel %vm1428, %v1325, 0
  %v1508 = vsel %vm1428, %v1326, 0
  %v1511 = vsel %vm1428, %v1327, 0
  %v1514 = vsel %vm1428, %v1328, 0
  %v1517 = vsel %vm1428, %v1329, 0
  %v1520 = vsel %vm1428, %v1330, 0
  %v1523 = vsel %vm1428, %v1331, 0
  %1525 = vmatprep.subr.bf16.mxu0 %v1397
  %1526 = vmatpush1.bf16.msra.mxu0 %v1396
  %1527 = vmatprep.subr.bf16.mxu0 %v1405
  %1528 = vmatpush1.bf16.msra.mxu0 %v1404
  %1529 = vmatprep.subr.bf16.mxu0 0
  %1530 = vmatpush1.bf16.msra.mxu0 0
  %1531 = vmatprep.subr.bf16.mxu0 0
  %1532 = vmatpush1.bf16.msra.mxu0 0
  %1533 = vmatprep.subr.bf16.mxu0 0
  %1534 = vmatpush1.bf16.msra.mxu0 0
  %1535 = vmatprep.subr.bf16.mxu0 0
  %1536 = vmatpush1.bf16.msra.mxu0 0
  %1537 = vmatprep.subr.bf16.mxu0 0
  %1538 = vmatpush1.bf16.msra.mxu0 0
  %1539 = vmatprep.subr.bf16.mxu0 0
  %1540 = vmatpush1.bf16.msra.mxu0 0
  %1541 = vmatprep.subr.bf16.mxu0 0
  %1542 = vmatpush1.bf16.msra.mxu0 0
  %1543 = vmatprep.subr.bf16.mxu0 0
  %1544 = vmatpush1.bf16.msra.mxu0 0
  %1545 = vmatprep.subr.bf16.mxu0 0
  %1546 = vmatpush1.bf16.msra.mxu0 0
  %1547 = vmatprep.subr.bf16.mxu0 0
  %1548 = vmatpush1.bf16.msra.mxu0 0
  %1549 = vmatprep.subr.bf16.mxu0 0
  %1550 = vmatpush1.bf16.msra.mxu0 0
  %1551 = vmatprep.subr.bf16.mxu0 0
  %1552 = vmatpush1.bf16.msra.mxu0 0
  %1553 = vmatprep.subr.bf16.mxu0 0
  %1554 = vmatpush1.bf16.msra.mxu0 0
  %1555 = vmatprep.subr.bf16.mxu0 0
  %1556 = vmatpush1.bf16.msra.mxu0 0
  %1557 = vmatprep.mubr.bf16.mxu0 0
  %1558 = vmatmul.mubr.bf16.gmra.mrb[0].mxu0 %v1430
  %v1559 = vpop.f32.mrb[0].mxu0
  %v1560 = vadd.f32 0.0, %v1559
  %v1561 = vpop.f32.mrb[0].mxu0
  %v1562 = vadd.f32 0.0, %v1561
  %v1563 = vpop.f32.mrb[0].mxu0
  %v1564 = vadd.f32 0.0, %v1563
  %v1565 = vpop.f32.mrb[0].mxu0
  %v1566 = vadd.f32 0.0, %v1565
  %1567 = vmatprep.mubr.bf16.mxu0 0
  %1568 = vmatmul.mubr.bf16.gmra.mrb[0].mxu0 %v1433
  %v1569 = vpop.f32.mrb[0].mxu0
  %v1570 = vadd.f32 0.0, %v1569
  %v1571 = vpop.f32.mrb[0].mxu0
  %v1572 = vadd.f32 0.0, %v1571
  %v1573 = vpop.f32.mrb[0].mxu0
  %v1574 = vadd.f32 0.0, %v1573
  %v1575 = vpop.f32.mrb[0].mxu0
  %v1576 = vadd.f32 0.0, %v1575
  %1577 = vmatprep.mubr.bf16.mxu0 0
  %1578 = vmatmul.mubr.bf16.gmra.mrb[0].mxu0 %v1436
  %v1579 = vpop.f32.mrb[0].mxu0
  %v1580 = vadd.f32 0.0, %v1579
  %v1581 = vpop.f32.mrb[0].mxu0
  %v1582 = vadd.f32 0.0, %v1581
  %v1583 = vpop.f32.mrb[0].mxu0
  %v1584 = vadd.f32 0.0, %v1583
  %v1585 = vpop.f32.mrb[0].mxu0
  %v1586 = vadd.f32 0.0, %v1585
  %1587 = vmatprep.mubr.bf16.mxu0 0
  %1588 = vmatmul.mubr.bf16.gmra.mrb[0].mxu0 %v1439
  %v1589 = vpop.f32.mrb[0].mxu0
  %v1590 = vadd.f32 0.0, %v1589
  %v1591 = vpop.f32.mrb[0].mxu0
  %v1592 = vadd.f32 0.0, %v1591
  %v1593 = vpop.f32.mrb[0].mxu0
  %v1594 = vadd.f32 0.0, %v1593
  %v1595 = vpop.f32.mrb[0].mxu0
  %v1596 = vadd.f32 0.0, %v1595
  %1597 = vmatprep.mubr.bf16.mxu0 0
  %1598 = vmatmul.mubr.bf16.gmra.mrb[0].mxu0 %v1442
  %v1599 = vpop.f32.mrb[0].mxu0
  %v1600 = vadd.f32 0.0, %v1599
  %v1601 = vpop.f32.mrb[0].mxu0
  %v1602 = vadd.f32 0.0, %v1601
  %v1603 = vpop.f32.mrb[0].mxu0
  %v1604 = vadd.f32 0.0, %v1603
  %v1605 = vpop.f32.mrb[0].mxu0
  %v1606 = vadd.f32 0.0, %v1605
  %1607 = vmatprep.mubr.bf16.mxu0 0
  %1608 = vmatmul.mubr.bf16.gmra.mrb[0].mxu0 %v1445
  %v1609 = vpop.f32.mrb[0].mxu0
  %v1610 = vadd.f32 0.0, %v1609
  %v1611 = vpop.f32.mrb[0].mxu0
  %v1612 = vadd.f32 0.0, %v1611
  %v1613 = vpop.f32.mrb[0].mxu0
  %v1614 = vadd.f32 0.0, %v1613
  %v1615 = vpop.f32.mrb[0].mxu0
  %v1616 = vadd.f32 0.0, %v1615
  %1617 = vmatprep.mubr.bf16.mxu0 0
  %1618 = vmatmul.mubr.bf16.gmra.mrb[0].mxu0 %v1448
  %v1619 = vpop.f32.mrb[0].mxu0
  %v1620 = vadd.f32 0.0, %v1619
  %v1621 = vpop.f32.mrb[0].mxu0
  %v1622 = vadd.f32 0.0, %v1621
  %v1623 = vpop.f32.mrb[0].mxu0
  %v1624 = vadd.f32 0.0, %v1623
  %v1625 = vpop.f32.mrb[0].mxu0
  %v1626 = vadd.f32 0.0, %v1625
  %1627 = vmatprep.mubr.bf16.mxu0 0
  %1628 = vmatmul.mubr.bf16.gmra.mrb[0].mxu0 %v1451
  %v1629 = vpop.f32.mrb[0].mxu0
  %v1630 = vadd.f32 0.0, %v1629
  %v1631 = vpop.f32.mrb[0].mxu0
  %v1632 = vadd.f32 0.0, %v1631
  %v1633 = vpop.f32.mrb[0].mxu0
  %v1634 = vadd.f32 0.0, %v1633
  %v1635 = vpop.f32.mrb[0].mxu0
  %v1636 = vadd.f32 0.0, %v1635
  %1637 = vmatprep.mubr.bf16.mxu0 0
  %1638 = vmatmul.mubr.bf16.gmra.mrb[0].mxu0 %v1454
  %v1639 = vpop.f32.mrb[0].mxu0
  %v1640 = vadd.f32 0.0, %v1639
  %v1641 = vpop.f32.mrb[0].mxu0
  %v1642 = vadd.f32 0.0, %v1641
  %v1643 = vpop.f32.mrb[0].mxu0
  %v1644 = vadd.f32 0.0, %v1643
  %v1645 = vpop.f32.mrb[0].mxu0
  %v1646 = vadd.f32 0.0, %v1645
  %1647 = vmatprep.mubr.bf16.mxu0 0
  %1648 = vmatmul.mubr.bf16.gmra.mrb[0].mxu0 %v1457
  %v1649 = vpop.f32.mrb[0].mxu0
  %v1650 = vadd.f32 0.0, %v1649
  %v1651 = vpop.f32.mrb[0].mxu0
  %v1652 = vadd.f32 0.0, %v1651
  %v1653 = vpop.f32.mrb[0].mxu0
  %v1654 = vadd.f32 0.0, %v1653
  %v1655 = vpop.f32.mrb[0].mxu0
  %v1656 = vadd.f32 0.0, %v1655
  %1657 = vmatprep.mubr.bf16.mxu0 0
  %1658 = vmatmul.mubr.bf16.gmra.mrb[0].mxu0 %v1460
  %v1659 = vpop.f32.mrb[0].mxu0
  %v1660 = vadd.f32 0.0, %v1659
  %v1661 = vpop.f32.mrb[0].mxu0
  %v1662 = vadd.f32 0.0, %v1661
  %v1663 = vpop.f32.mrb[0].mxu0
  %v1664 = vadd.f32 0.0, %v1663
  %v1665 = vpop.f32.mrb[0].mxu0
  %v1666 = vadd.f32 0.0, %v1665
  %1667 = vmatprep.mubr.bf16.mxu0 0
  %1668 = vmatmul.mubr.bf16.gmra.mrb[0].mxu0 %v1463
  %v1669 = vpop.f32.mrb[0].mxu0
  %v1670 = vadd.f32 0.0, %v1669
  %v1671 = vpop.f32.mrb[0].mxu0
  %v1672 = vadd.f32 0.0, %v1671
  %v1673 = vpop.f32.mrb[0].mxu0
  %v1674 = vadd.f32 0.0, %v1673
  %v1675 = vpop.f32.mrb[0].mxu0
  %v1676 = vadd.f32 0.0, %v1675
  %1677 = vmatprep.mubr.bf16.mxu0 0
  %1678 = vmatmul.mubr.bf16.gmra.mrb[0].mxu0 %v1466
  %v1679 = vpop.f32.mrb[0].mxu0
  %v1680 = vadd.f32 0.0, %v1679
  %v1681 = vpop.f32.mrb[0].mxu0
  %v1682 = vadd.f32 0.0, %v1681
  %v1683 = vpop.f32.mrb[0].mxu0
  %v1684 = vadd.f32 0.0, %v1683
  %v1685 = vpop.f32.mrb[0].mxu0
  %v1686 = vadd.f32 0.0, %v1685
  %1687 = vmatprep.mubr.bf16.mxu0 0
  %1688 = vmatmul.mubr.bf16.gmra.mrb[0].mxu0 %v1469
  %v1689 = vpop.f32.mrb[0].mxu0
  %v1690 = vadd.f32 0.0, %v1689
  %v1691 = vpop.f32.mrb[0].mxu0
  %v1692 = vadd.f32 0.0, %v1691
  %v1693 = vpop.f32.mrb[0].mxu0
  %v1694 = vadd.f32 0.0, %v1693
  %v1695 = vpop.f32.mrb[0].mxu0
  %v1696 = vadd.f32 0.0, %v1695
  %1697 = vmatprep.mubr.bf16.mxu0 0
  %1698 = vmatmul.mubr.bf16.gmra.mrb[0].mxu0 %v1472
  %v1699 = vpop.f32.mrb[0].mxu0
  %v1700 = vadd.f32 0.0, %v1699
  %v1701 = vpop.f32.mrb[0].mxu0
  %v1702 = vadd.f32 0.0, %v1701
  %v1703 = vpop.f32.mrb[0].mxu0
  %v1704 = vadd.f32 0.0, %v1703
  %v1705 = vpop.f32.mrb[0].mxu0
  %v1706 = vadd.f32 0.0, %v1705
  %1707 = vmatprep.mubr.bf16.mxu0 0
  %1708 = vmatmul.mubr.bf16.gmra.mrb[0].mxu0 %v1475
  %v1709 = vpop.f32.mrb[0].mxu0
  %v1710 = vadd.f32 0.0, %v1709
  %v1711 = vpop.f32.mrb[0].mxu0
  %v1712 = vadd.f32 0.0, %v1711
  %v1713 = vpop.f32.mrb[0].mxu0
  %v1714 = vadd.f32 0.0, %v1713
  %v1715 = vpop.f32.mrb[0].mxu0
  %v1716 = vadd.f32 0.0, %v1715
  %1717 = vmatprep.mubr.bf16.mxu0 0
  %1718 = vmatmul.mubr.bf16.gmra.mrb[0].mxu0 %v1478
  %v1719 = vpop.f32.mrb[0].mxu0
  %v1720 = vadd.f32 0.0, %v1719
  %v1721 = vpop.f32.mrb[0].mxu0
  %v1722 = vadd.f32 0.0, %v1721
  %v1723 = vpop.f32.mrb[0].mxu0
  %v1724 = vadd.f32 0.0, %v1723
  %v1725 = vpop.f32.mrb[0].mxu0
  %v1726 = vadd.f32 0.0, %v1725
  %1727 = vmatprep.mubr.bf16.mxu0 0
  %1728 = vmatmul.mubr.bf16.gmra.mrb[0].mxu0 %v1481
  %v1729 = vpop.f32.mrb[0].mxu0
  %v1730 = vadd.f32 0.0, %v1729
  %v1731 = vpop.f32.mrb[0].mxu0
  %v1732 = vadd.f32 0.0, %v1731
  %v1733 = vpop.f32.mrb[0].mxu0
  %v1734 = vadd.f32 0.0, %v1733
  %v1735 = vpop.f32.mrb[0].mxu0
  %v1736 = vadd.f32 0.0, %v1735
  %1737 = vmatprep.mubr.bf16.mxu0 0
  %1738 = vmatmul.mubr.bf16.gmra.mrb[0].mxu0 %v1484
  %v1739 = vpop.f32.mrb[0].mxu0
  %v1740 = vadd.f32 0.0, %v1739
  %v1741 = vpop.f32.mrb[0].mxu0
  %v1742 = vadd.f32 0.0, %v1741
  %v1743 = vpop.f32.mrb[0].mxu0
  %v1744 = vadd.f32 0.0, %v1743
  %v1745 = vpop.f32.mrb[0].mxu0
  %v1746 = vadd.f32 0.0, %v1745
  %1747 = vmatprep.mubr.bf16.mxu0 0
  %1748 = vmatmul.mubr.bf16.gmra.mrb[0].mxu0 %v1487
  %v1749 = vpop.f32.mrb[0].mxu0
  %v1750 = vadd.f32 0.0, %v1749
  %v1751 = vpop.f32.mrb[0].mxu0
  %v1752 = vadd.f32 0.0, %v1751
  %v1753 = vpop.f32.mrb[0].mxu0
  %v1754 = vadd.f32 0.0, %v1753
  %v1755 = vpop.f32.mrb[0].mxu0
  %v1756 = vadd.f32 0.0, %v1755
  %1757 = vmatprep.mubr.bf16.mxu0 0
  %1758 = vmatmul.mubr.bf16.gmra.mrb[0].mxu0 %v1490
  %v1759 = vpop.f32.mrb[0].mxu0
  %v1760 = vadd.f32 0.0, %v1759
  %v1761 = vpop.f32.mrb[0].mxu0
  %v1762 = vadd.f32 0.0, %v1761
  %v1763 = vpop.f32.mrb[0].mxu0
  %v1764 = vadd.f32 0.0, %v1763
  %v1765 = vpop.f32.mrb[0].mxu0
  %v1766 = vadd.f32 0.0, %v1765
  %1767 = vmatprep.mubr.bf16.mxu0 0
  %1768 = vmatmul.mubr.bf16.gmra.mrb[0].mxu0 %v1493
  %v1769 = vpop.f32.mrb[0].mxu0
  %v1770 = vadd.f32 0.0, %v1769
  %v1771 = vpop.f32.mrb[0].mxu0
  %v1772 = vadd.f32 0.0, %v1771
  %v1773 = vpop.f32.mrb[0].mxu0
  %v1774 = vadd.f32 0.0, %v1773
  %v1775 = vpop.f32.mrb[0].mxu0
  %v1776 = vadd.f32 0.0, %v1775
  %1777 = vmatprep.mubr.bf16.mxu0 0
  %1778 = vmatmul.mubr.bf16.gmra.mrb[0].mxu0 %v1496
  %v1779 = vpop.f32.mrb[0].mxu0
  %v1780 = vadd.f32 0.0, %v1779
  %v1781 = vpop.f32.mrb[0].mxu0
  %v1782 = vadd.f32 0.0, %v1781
  %v1783 = vpop.f32.mrb[0].mxu0
  %v1784 = vadd.f32 0.0, %v1783
  %v1785 = vpop.f32.mrb[0].mxu0
  %v1786 = vadd.f32 0.0, %v1785
  %1787 = vmatprep.mubr.bf16.mxu0 0
  %1788 = vmatmul.mubr.bf16.gmra.mrb[0].mxu0 %v1499
  %v1789 = vpop.f32.mrb[0].mxu0
  %v1790 = vadd.f32 0.0, %v1789
  %v1791 = vpop.f32.mrb[0].mxu0
  %v1792 = vadd.f32 0.0, %v1791
  %v1793 = vpop.f32.mrb[0].mxu0
  %v1794 = vadd.f32 0.0, %v1793
  %v1795 = vpop.f32.mrb[0].mxu0
  %v1796 = vadd.f32 0.0, %v1795
  %1797 = vmatprep.mubr.bf16.mxu0 0
  %1798 = vmatmul.mubr.bf16.gmra.mrb[0].mxu0 %v1502
  %v1799 = vpop.f32.mrb[0].mxu0
  %v1800 = vadd.f32 0.0, %v1799
  %v1801 = vpop.f32.mrb[0].mxu0
  %v1802 = vadd.f32 0.0, %v1801
  %v1803 = vpop.f32.mrb[0].mxu0
  %v1804 = vadd.f32 0.0, %v1803
  %v1805 = vpop.f32.mrb[0].mxu0
  %v1806 = vadd.f32 0.0, %v1805
  %1807 = vmatprep.mubr.bf16.mxu0 0
  %1808 = vmatmul.mubr.bf16.gmra.mrb[0].mxu0 %v1505
  %v1809 = vpop.f32.mrb[0].mxu0
  %v1810 = vadd.f32 0.0, %v1809
  %v1811 = vpop.f32.mrb[0].mxu0
  %v1812 = vadd.f32 0.0, %v1811
  %v1813 = vpop.f32.mrb[0].mxu0
  %v1814 = vadd.f32 0.0, %v1813
  %v1815 = vpop.f32.mrb[0].mxu0
  %v1816 = vadd.f32 0.0, %v1815
  %1817 = vmatprep.mubr.bf16.mxu0 0
  %1818 = vmatmul.mubr.bf16.gmra.mrb[0].mxu0 %v1508
  %v1819 = vpop.f32.mrb[0].mxu0
  %v1820 = vadd.f32 0.0, %v1819
  %v1821 = vpop.f32.mrb[0].mxu0
  %v1822 = vadd.f32 0.0, %v1821
  %v1823 = vpop.f32.mrb[0].mxu0
  %v1824 = vadd.f32 0.0, %v1823
  %v1825 = vpop.f32.mrb[0].mxu0
  %v1826 = vadd.f32 0.0, %v1825
  %1827 = vmatprep.mubr.bf16.mxu0 0
  %1828 = vmatmul.mubr.bf16.gmra.mrb[0].mxu0 %v1511
  %v1829 = vpop.f32.mrb[0].mxu0
  %v1830 = vadd.f32 0.0, %v1829
  %v1831 = vpop.f32.mrb[0].mxu0
  %v1832 = vadd.f32 0.0, %v1831
  %v1833 = vpop.f32.mrb[0].mxu0
  %v1834 = vadd.f32 0.0, %v1833
  %v1835 = vpop.f32.mrb[0].mxu0
  %v1836 = vadd.f32 0.0, %v1835
  %1837 = vmatprep.mubr.bf16.mxu0 0
  %1838 = vmatmul.mubr.bf16.gmra.mrb[0].mxu0 %v1514
  %v1839 = vpop.f32.mrb[0].mxu0
  %v1840 = vadd.f32 0.0, %v1839
  %v1841 = vpop.f32.mrb[0].mxu0
  %v1842 = vadd.f32 0.0, %v1841
  %v1843 = vpop.f32.mrb[0].mxu0
  %v1844 = vadd.f32 0.0, %v1843
  %v1845 = vpop.f32.mrb[0].mxu0
  %v1846 = vadd.f32 0.0, %v1845
  %1847 = vmatprep.mubr.bf16.mxu0 0
  %1848 = vmatmul.mubr.bf16.gmra.mrb[0].mxu0 %v1517
  %v1849 = vpop.f32.mrb[0].mxu0
  %v1850 = vadd.f32 0.0, %v1849
  %v1851 = vpop.f32.mrb[0].mxu0
  %v1852 = vadd.f32 0.0, %v1851
  %v1853 = vpop.f32.mrb[0].mxu0
  %v1854 = vadd.f32 0.0, %v1853
  %v1855 = vpop.f32.mrb[0].mxu0
  %v1856 = vadd.f32 0.0, %v1855
  %1857 = vmatprep.mubr.bf16.mxu0 0
  %1858 = vmatmul.mubr.bf16.gmra.mrb[0].mxu0 %v1520
  %v1859 = vpop.f32.mrb[0].mxu0
  %v1860 = vadd.f32 0.0, %v1859
  %v1861 = vpop.f32.mrb[0].mxu0
  %v1862 = vadd.f32 0.0, %v1861
  %v1863 = vpop.f32.mrb[0].mxu0
  %v1864 = vadd.f32 0.0, %v1863
  %v1865 = vpop.f32.mrb[0].mxu0
  %v1866 = vadd.f32 0.0, %v1865
  %1867 = vmatprep.mubr.bf16.mxu0 0
  %1868 = vmatmul.mubr.bf16.gmra.mrb[0].mxu0 %v1523
  %v1869 = vpop.f32.mrb[0].mxu0
  %v1870 = vadd.f32 0.0, %v1869
  %v1871 = vpop.f32.mrb[0].mxu0
  %v1872 = vadd.f32 0.0, %v1871
  %v1873 = vpop.f32.mrb[0].mxu0
  %v1874 = vadd.f32 0.0, %v1873
  %v1875 = vpop.f32.mrb[0].mxu0
  %v1876 = vadd.f32 0.0, %v1875
  %1877 = vdwg.mxu0
  %1878 = vmatprep.subr.bf16.mxu0 %v1399
  %1879 = vmatpush1.bf16.msra.mxu0 %v1398
  %1880 = vmatprep.subr.bf16.mxu0 %v1407
  %1881 = vmatpush1.bf16.msra.mxu0 %v1406
  %1882 = vmatprep.subr.bf16.mxu0 0
  %1883 = vmatpush1.bf16.msra.mxu0 0
  %1884 = vmatprep.subr.bf16.mxu0 0
  %1885 = vmatpush1.bf16.msra.mxu0 0
  %1886 = vmatprep.subr.bf16.mxu0 0
  %1887 = vmatpush1.bf16.msra.mxu0 0
  %1888 = vmatprep.subr.bf16.mxu0 0
  %1889 = vmatpush1.bf16.msra.mxu0 0
  %1890 = vmatprep.subr.bf16.mxu0 0
  %1891 = vmatpush1.bf16.msra.mxu0 0
  %1892 = vmatprep.subr.bf16.mxu0 0
  %1893 = vmatpush1.bf16.msra.mxu0 0
  %1894 = vmatprep.subr.bf16.mxu0 0
  %1895 = vmatpush1.bf16.msra.mxu0 0
  %1896 = vmatprep.subr.bf16.mxu0 0
  %1897 = vmatpush1.bf16.msra.mxu0 0
  %1898 = vmatprep.subr.bf16.mxu0 0
  %1899 = vmatpush1.bf16.msra.mxu0 0
  %1900 = vmatprep.subr.bf16.mxu0 0
  %1901 = vmatpush1.bf16.msra.mxu0 0
  %1902 = vmatprep.subr.bf16.mxu0 0
  %1903 = vmatpush1.bf16.msra.mxu0 0
  %1904 = vmatprep.subr.bf16.mxu0 0
  %1905 = vmatpush1.bf16.msra.mxu0 0
  %1906 = vmatprep.subr.bf16.mxu0 0
  %1907 = vmatpush1.bf16.msra.mxu0 0
  %1908 = vmatprep.subr.bf16.mxu0 0
  %1909 = vmatpush1.bf16.msra.mxu0 0
  %1910 = vmatprep.mubr.bf16.mxu0 0
  %1911 = vmatmul.mubr.bf16.gmra.mrb[0].mxu0 %v1430
  %v1912 = vpop.f32.mrb[0].mxu0
  %v1913 = vadd.f32 0.0, %v1912
  %v1914 = vpop.f32.mrb[0].mxu0
  %v1915 = vadd.f32 0.0, %v1914
  %v1916 = vpop.f32.mrb[0].mxu0
  %v1917 = vadd.f32 0.0, %v1916
  %v1918 = vpop.f32.mrb[0].mxu0
  %v1919 = vadd.f32 0.0, %v1918
  %1920 = vmatprep.mubr.bf16.mxu0 0
  %1921 = vmatmul.mubr.bf16.gmra.mrb[0].mxu0 %v1433
  %v1922 = vpop.f32.mrb[0].mxu0
  %v1923 = vadd.f32 0.0, %v1922
  %v1924 = vpop.f32.mrb[0].mxu0
  %v1925 = vadd.f32 0.0, %v1924
  %v1926 = vpop.f32.mrb[0].mxu0
  %v1927 = vadd.f32 0.0, %v1926
  %v1928 = vpop.f32.mrb[0].mxu0
  %v1929 = vadd.f32 0.0, %v1928
  %1930 = vmatprep.mubr.bf16.mxu0 0
  %1931 = vmatmul.mubr.bf16.gmra.mrb[0].mxu0 %v1436
  %v1932 = vpop.f32.mrb[0].mxu0
  %v1933 = vadd.f32 0.0, %v1932
  %v1934 = vpop.f32.mrb[0].mxu0
  %v1935 = vadd.f32 0.0, %v1934
  %v1936 = vpop.f32.mrb[0].mxu0
  %v1937 = vadd.f32 0.0, %v1936
  %v1938 = vpop.f32.mrb[0].mxu0
  %v1939 = vadd.f32 0.0, %v1938
  %1940 = vmatprep.mubr.bf16.mxu0 0
  %1941 = vmatmul.mubr.bf16.gmra.mrb[0].mxu0 %v1439
  %v1942 = vpop.f32.mrb[0].mxu0
  %v1943 = vadd.f32 0.0, %v1942
  %v1944 = vpop.f32.mrb[0].mxu0
  %v1945 = vadd.f32 0.0, %v1944
  %v1946 = vpop.f32.mrb[0].mxu0
  %v1947 = vadd.f32 0.0, %v1946
  %v1948 = vpop.f32.mrb[0].mxu0
  %v1949 = vadd.f32 0.0, %v1948
  %1950 = vmatprep.mubr.bf16.mxu0 0
  %1951 = vmatmul.mubr.bf16.gmra.mrb[0].mxu0 %v1442
  %v1952 = vpop.f32.mrb[0].mxu0
  %v1953 = vadd.f32 0.0, %v1952
  %v1954 = vpop.f32.mrb[0].mxu0
  %v1955 = vadd.f32 0.0, %v1954
  %v1956 = vpop.f32.mrb[0].mxu0
  %v1957 = vadd.f32 0.0, %v1956
  %v1958 = vpop.f32.mrb[0].mxu0
  %v1959 = vadd.f32 0.0, %v1958
  %1960 = vmatprep.mubr.bf16.mxu0 0
  %1961 = vmatmul.mubr.bf16.gmra.mrb[0].mxu0 %v1445
  %v1962 = vpop.f32.mrb[0].mxu0
  %v1963 = vadd.f32 0.0, %v1962
  %v1964 = vpop.f32.mrb[0].mxu0
  %v1965 = vadd.f32 0.0, %v1964
  %v1966 = vpop.f32.mrb[0].mxu0
  %v1967 = vadd.f32 0.0, %v1966
  %v1968 = vpop.f32.mrb[0].mxu0
  %v1969 = vadd.f32 0.0, %v1968
  %1970 = vmatprep.mubr.bf16.mxu0 0
  %1971 = vmatmul.mubr.bf16.gmra.mrb[0].mxu0 %v1448
  %v1972 = vpop.f32.mrb[0].mxu0
  %v1973 = vadd.f32 0.0, %v1972
  %v1974 = vpop.f32.mrb[0].mxu0
  %v1975 = vadd.f32 0.0, %v1974
  %v1976 = vpop.f32.mrb[0].mxu0
  %v1977 = vadd.f32 0.0, %v1976
  %v1978 = vpop.f32.mrb[0].mxu0
  %v1979 = vadd.f32 0.0, %v1978
  %1980 = vmatprep.mubr.bf16.mxu0 0
  %1981 = vmatmul.mubr.bf16.gmra.mrb[0].mxu0 %v1451
  %v1982 = vpop.f32.mrb[0].mxu0
  %v1983 = vadd.f32 0.0, %v1982
  %v1984 = vpop.f32.mrb[0].mxu0
  %v1985 = vadd.f32 0.0, %v1984
  %v1986 = vpop.f32.mrb[0].mxu0
  %v1987 = vadd.f32 0.0, %v1986
  %v1988 = vpop.f32.mrb[0].mxu0
  %v1989 = vadd.f32 0.0, %v1988
  %1990 = vmatprep.mubr.bf16.mxu0 0
  %1991 = vmatmul.mubr.bf16.gmra.mrb[0].mxu0 %v1454
  %v1992 = vpop.f32.mrb[0].mxu0
  %v1993 = vadd.f32 0.0, %v1992
  %v1994 = vpop.f32.mrb[0].mxu0
  %v1995 = vadd.f32 0.0, %v1994
  %v1996 = vpop.f32.mrb[0].mxu0
  %v1997 = vadd.f32 0.0, %v1996
  %v1998 = vpop.f32.mrb[0].mxu0
  %v1999 = vadd.f32 0.0, %v1998
  %2000 = vmatprep.mubr.bf16.mxu0 0
  %2001 = vmatmul.mubr.bf16.gmra.mrb[0].mxu0 %v1457
  %v2002 = vpop.f32.mrb[0].mxu0
  %v2003 = vadd.f32 0.0, %v2002
  %v2004 = vpop.f32.mrb[0].mxu0
  %v2005 = vadd.f32 0.0, %v2004
  %v2006 = vpop.f32.mrb[0].mxu0
  %v2007 = vadd.f32 0.0, %v2006
  %v2008 = vpop.f32.mrb[0].mxu0
  %v2009 = vadd.f32 0.0, %v2008
  %2010 = vmatprep.mubr.bf16.mxu0 0
  %2011 = vmatmul.mubr.bf16.gmra.mrb[0].mxu0 %v1460
  %v2012 = vpop.f32.mrb[0].mxu0
  %v2013 = vadd.f32 0.0, %v2012
  %v2014 = vpop.f32.mrb[0].mxu0
  %v2015 = vadd.f32 0.0, %v2014
  %v2016 = vpop.f32.mrb[0].mxu0
  %v2017 = vadd.f32 0.0, %v2016
  %v2018 = vpop.f32.mrb[0].mxu0
  %v2019 = vadd.f32 0.0, %v2018
  %2020 = vmatprep.mubr.bf16.mxu0 0
  %2021 = vmatmul.mubr.bf16.gmra.mrb[0].mxu0 %v1463
  %v2022 = vpop.f32.mrb[0].mxu0
  %v2023 = vadd.f32 0.0, %v2022
  %v2024 = vpop.f32.mrb[0].mxu0
  %v2025 = vadd.f32 0.0, %v2024
  %v2026 = vpop.f32.mrb[0].mxu0
  %v2027 = vadd.f32 0.0, %v2026
  %v2028 = vpop.f32.mrb[0].mxu0
  %v2029 = vadd.f32 0.0, %v2028
  %2030 = vmatprep.mubr.bf16.mxu0 0
  %2031 = vmatmul.mubr.bf16.gmra.mrb[0].mxu0 %v1466
  %v2032 = vpop.f32.mrb[0].mxu0
  %v2033 = vadd.f32 0.0, %v2032
  %v2034 = vpop.f32.mrb[0].mxu0
  %v2035 = vadd.f32 0.0, %v2034
  %v2036 = vpop.f32.mrb[0].mxu0
  %v2037 = vadd.f32 0.0, %v2036
  %v2038 = vpop.f32.mrb[0].mxu0
  %v2039 = vadd.f32 0.0, %v2038
  %2040 = vmatprep.mubr.bf16.mxu0 0
  %2041 = vmatmul.mubr.bf16.gmra.mrb[0].mxu0 %v1469
  %v2042 = vpop.f32.mrb[0].mxu0
  %v2043 = vadd.f32 0.0, %v2042
  %v2044 = vpop.f32.mrb[0].mxu0
  %v2045 = vadd.f32 0.0, %v2044
  %v2046 = vpop.f32.mrb[0].mxu0
  %v2047 = vadd.f32 0.0, %v2046
  %v2048 = vpop.f32.mrb[0].mxu0
  %v2049 = vadd.f32 0.0, %v2048
  %2050 = vmatprep.mubr.bf16.mxu0 0
  %2051 = vmatmul.mubr.bf16.gmra.mrb[0].mxu0 %v1472
  %v2052 = vpop.f32.mrb[0].mxu0
  %v2053 = vadd.f32 0.0, %v2052
  %v2054 = vpop.f32.mrb[0].mxu0
  %v2055 = vadd.f32 0.0, %v2054
  %v2056 = vpop.f32.mrb[0].mxu0
  %v2057 = vadd.f32 0.0, %v2056
  %v2058 = vpop.f32.mrb[0].mxu0
  %v2059 = vadd.f32 0.0, %v2058
  %2060 = vmatprep.mubr.bf16.mxu0 0
  %2061 = vmatmul.mubr.bf16.gmra.mrb[0].mxu0 %v1475
  %v2062 = vpop.f32.mrb[0].mxu0
  %v2063 = vadd.f32 0.0, %v2062
  %v2064 = vpop.f32.mrb[0].mxu0
  %v2065 = vadd.f32 0.0, %v2064
  %v2066 = vpop.f32.mrb[0].mxu0
  %v2067 = vadd.f32 0.0, %v2066
  %v2068 = vpop.f32.mrb[0].mxu0
  %v2069 = vadd.f32 0.0, %v2068
  %2070 = vmatprep.mubr.bf16.mxu0 0
  %2071 = vmatmul.mubr.bf16.gmra.mrb[0].mxu0 %v1478
  %v2072 = vpop.f32.mrb[0].mxu0
  %v2073 = vadd.f32 0.0, %v2072
  %v2074 = vpop.f32.mrb[0].mxu0
  %v2075 = vadd.f32 0.0, %v2074
  %v2076 = vpop.f32.mrb[0].mxu0
  %v2077 = vadd.f32 0.0, %v2076
  %v2078 = vpop.f32.mrb[0].mxu0
  %v2079 = vadd.f32 0.0, %v2078
  %2080 = vmatprep.mubr.bf16.mxu0 0
  %2081 = vmatmul.mubr.bf16.gmra.mrb[0].mxu0 %v1481
  %v2082 = vpop.f32.mrb[0].mxu0
  %v2083 = vadd.f32 0.0, %v2082
  %v2084 = vpop.f32.mrb[0].mxu0
  %v2085 = vadd.f32 0.0, %v2084
  %v2086 = vpop.f32.mrb[0].mxu0
  %v2087 = vadd.f32 0.0, %v2086
  %v2088 = vpop.f32.mrb[0].mxu0
  %v2089 = vadd.f32 0.0, %v2088
  %2090 = vmatprep.mubr.bf16.mxu0 0
  %2091 = vmatmul.mubr.bf16.gmra.mrb[0].mxu0 %v1484
  %v2092 = vpop.f32.mrb[0].mxu0
  %v2093 = vadd.f32 0.0, %v2092
  %v2094 = vpop.f32.mrb[0].mxu0
  %v2095 = vadd.f32 0.0, %v2094
  %v2096 = vpop.f32.mrb[0].mxu0
  %v2097 = vadd.f32 0.0, %v2096
  %v2098 = vpop.f32.mrb[0].mxu0
  %v2099 = vadd.f32 0.0, %v2098
  %2100 = vmatprep.mubr.bf16.mxu0 0
  %2101 = vmatmul.mubr.bf16.gmra.mrb[0].mxu0 %v1487
  %v2102 = vpop.f32.mrb[0].mxu0
  %v2103 = vadd.f32 0.0, %v2102
  %v2104 = vpop.f32.mrb[0].mxu0
  %v2105 = vadd.f32 0.0, %v2104
  %v2106 = vpop.f32.mrb[0].mxu0
  %v2107 = vadd.f32 0.0, %v2106
  %v2108 = vpop.f32.mrb[0].mxu0
  %v2109 = vadd.f32 0.0, %v2108
  %2110 = vmatprep.mubr.bf16.mxu0 0
  %2111 = vmatmul.mubr.bf16.gmra.mrb[0].mxu0 %v1490
  %v2112 = vpop.f32.mrb[0].mxu0
  %v2113 = vadd.f32 0.0, %v2112
  %v2114 = vpop.f32.mrb[0].mxu0
  %v2115 = vadd.f32 0.0, %v2114
  %v2116 = vpop.f32.mrb[0].mxu0
  %v2117 = vadd.f32 0.0, %v2116
  %v2118 = vpop.f32.mrb[0].mxu0
  %v2119 = vadd.f32 0.0, %v2118
  %2120 = vmatprep.mubr.bf16.mxu0 0
  %2121 = vmatmul.mubr.bf16.gmra.mrb[0].mxu0 %v1493
  %v2122 = vpop.f32.mrb[0].mxu0
  %v2123 = vadd.f32 0.0, %v2122
  %v2124 = vpop.f32.mrb[0].mxu0
  %v2125 = vadd.f32 0.0, %v2124
  %v2126 = vpop.f32.mrb[0].mxu0
  %v2127 = vadd.f32 0.0, %v2126
  %v2128 = vpop.f32.mrb[0].mxu0
  %v2129 = vadd.f32 0.0, %v2128
  %2130 = vmatprep.mubr.bf16.mxu0 0
  %2131 = vmatmul.mubr.bf16.gmra.mrb[0].mxu0 %v1496
  %v2132 = vpop.f32.mrb[0].mxu0
  %v2133 = vadd.f32 0.0, %v2132
  %v2134 = vpop.f32.mrb[0].mxu0
  %v2135 = vadd.f32 0.0, %v2134
  %v2136 = vpop.f32.mrb[0].mxu0
  %v2137 = vadd.f32 0.0, %v2136
  %v2138 = vpop.f32.mrb[0].mxu0
  %v2139 = vadd.f32 0.0, %v2138
  %2140 = vmatprep.mubr.bf16.mxu0 0
  %2141 = vmatmul.mubr.bf16.gmra.mrb[0].mxu0 %v1499
  %v2142 = vpop.f32.mrb[0].mxu0
  %v2143 = vadd.f32 0.0, %v2142
  %v2144 = vpop.f32.mrb[0].mxu0
  %v2145 = vadd.f32 0.0, %v2144
  %v2146 = vpop.f32.mrb[0].mxu0
  %v2147 = vadd.f32 0.0, %v2146
  %v2148 = vpop.f32.mrb[0].mxu0
  %v2149 = vadd.f32 0.0, %v2148
  %2150 = vmatprep.mubr.bf16.mxu0 0
  %2151 = vmatmul.mubr.bf16.gmra.mrb[0].mxu0 %v1502
  %v2152 = vpop.f32.mrb[0].mxu0
  %v2153 = vadd.f32 0.0, %v2152
  %v2154 = vpop.f32.mrb[0].mxu0
  %v2155 = vadd.f32 0.0, %v2154
  %v2156 = vpop.f32.mrb[0].mxu0
  %v2157 = vadd.f32 0.0, %v2156
  %v2158 = vpop.f32.mrb[0].mxu0
  %v2159 = vadd.f32 0.0, %v2158
  %2160 = vmatprep.mubr.bf16.mxu0 0
  %2161 = vmatmul.mubr.bf16.gmra.mrb[0].mxu0 %v1505
  %v2162 = vpop.f32.mrb[0].mxu0
  %v2163 = vadd.f32 0.0, %v2162
  %v2164 = vpop.f32.mrb[0].mxu0
  %v2165 = vadd.f32 0.0, %v2164
  %v2166 = vpop.f32.mrb[0].mxu0
  %v2167 = vadd.f32 0.0, %v2166
  %v2168 = vpop.f32.mrb[0].mxu0
  %v2169 = vadd.f32 0.0, %v2168
  %2170 = vmatprep.mubr.bf16.mxu0 0
  %2171 = vmatmul.mubr.bf16.gmra.mrb[0].mxu0 %v1508
  %v2172 = vpop.f32.mrb[0].mxu0
  %v2173 = vadd.f32 0.0, %v2172
  %v2174 = vpop.f32.mrb[0].mxu0
  %v2175 = vadd.f32 0.0, %v2174
  %v2176 = vpop.f32.mrb[0].mxu0
  %v2177 = vadd.f32 0.0, %v2176
  %v2178 = vpop.f32.mrb[0].mxu0
  %v2179 = vadd.f32 0.0, %v2178
  %2180 = vmatprep.mubr.bf16.mxu0 0
  %2181 = vmatmul.mubr.bf16.gmra.mrb[0].mxu0 %v1511
  %v2182 = vpop.f32.mrb[0].mxu0
  %v2183 = vadd.f32 0.0, %v2182
  %v2184 = vpop.f32.mrb[0].mxu0
  %v2185 = vadd.f32 0.0, %v2184
  %v2186 = vpop.f32.mrb[0].mxu0
  %v2187 = vadd.f32 0.0, %v2186
  %v2188 = vpop.f32.mrb[0].mxu0
  %v2189 = vadd.f32 0.0, %v2188
  %2190 = vmatprep.mubr.bf16.mxu0 0
  %2191 = vmatmul.mubr.bf16.gmra.mrb[0].mxu0 %v1514
  %v2192 = vpop.f32.mrb[0].mxu0
  %v2193 = vadd.f32 0.0, %v2192
  %v2194 = vpop.f32.mrb[0].mxu0
  %v2195 = vadd.f32 0.0, %v2194
  %v2196 = vpop.f32.mrb[0].mxu0
  %v2197 = vadd.f32 0.0, %v2196
  %v2198 = vpop.f32.mrb[0].mxu0
  %v2199 = vadd.f32 0.0, %v2198
  %2200 = vmatprep.mubr.bf16.mxu0 0
  %2201 = vmatmul.mubr.bf16.gmra.mrb[0].mxu0 %v1517
  %v2202 = vpop.f32.mrb[0].mxu0
  %v2203 = vadd.f32 0.0, %v2202
  %v2204 = vpop.f32.mrb[0].mxu0
  %v2205 = vadd.f32 0.0, %v2204
  %v2206 = vpop.f32.mrb[0].mxu0
  %v2207 = vadd.f32 0.0, %v2206
  %v2208 = vpop.f32.mrb[0].mxu0
  %v2209 = vadd.f32 0.0, %v2208
  %2210 = vmatprep.mubr.bf16.mxu0 0
  %2211 = vmatmul.mubr.bf16.gmra.mrb[0].mxu0 %v1520
  %v2212 = vpop.f32.mrb[0].mxu0
  %v2213 = vadd.f32 0.0, %v2212
  %v2214 = vpop.f32.mrb[0].mxu0
  %v2215 = vadd.f32 0.0, %v2214
  %v2216 = vpop.f32.mrb[0].mxu0
  %v2217 = vadd.f32 0.0, %v2216
  %v2218 = vpop.f32.mrb[0].mxu0
  %v2219 = vadd.f32 0.0, %v2218
  %2220 = vmatprep.mubr.bf16.mxu0 0
  %2221 = vmatmul.mubr.bf16.gmra.mrb[0].mxu0 %v1523
  %v2222 = vpop.f32.mrb[0].mxu0
  %v2223 = vadd.f32 0.0, %v2222
  %v2224 = vpop.f32.mrb[0].mxu0
  %v2225 = vadd.f32 0.0, %v2224
  %v2226 = vpop.f32.mrb[0].mxu0
  %v2227 = vadd.f32 0.0, %v2226
  %v2228 = vpop.f32.mrb[0].mxu0
  %v2229 = vadd.f32 0.0, %v2228
  %2230 = vdwg.mxu0
  %2231 = vmatprep.subr.bf16.mxu0 %v1401
  %2232 = vmatpush1.bf16.msra.mxu0 %v1400
  %2233 = vmatprep.subr.bf16.mxu0 %v1409
  %2234 = vmatpush1.bf16.msra.mxu0 %v1408
  %2235 = vmatprep.subr.bf16.mxu0 0
  %2236 = vmatpush1.bf16.msra.mxu0 0
  %2237 = vmatprep.subr.bf16.mxu0 0
  %2238 = vmatpush1.bf16.msra.mxu0 0
  %2239 = vmatprep.subr.bf16.mxu0 0
  %2240 = vmatpush1.bf16.msra.mxu0 0
  %2241 = vmatprep.subr.bf16.mxu0 0
  %2242 = vmatpush1.bf16.msra.mxu0 0
  %2243 = vmatprep.subr.bf16.mxu0 0
  %2244 = vmatpush1.bf16.msra.mxu0 0
  %2245 = vmatprep.subr.bf16.mxu0 0
  %2246 = vmatpush1.bf16.msra.mxu0 0
  %2247 = vmatprep.subr.bf16.mxu0 0
  %2248 = vmatpush1.bf16.msra.mxu0 0
  %2249 = vmatprep.subr.bf16.mxu0 0
  %2250 = vmatpush1.bf16.msra.mxu0 0
  %2251 = vmatprep.subr.bf16.mxu0 0
  %2252 = vmatpush1.bf16.msra.mxu0 0
  %2253 = vmatprep.subr.bf16.mxu0 0
  %2254 = vmatpush1.bf16.msra.mxu0 0
  %2255 = vmatprep.subr.bf16.mxu0 0
  %2256 = vmatpush1.bf16.msra.mxu0 0
  %2257 = vmatprep.subr.bf16.mxu0 0
  %2258 = vmatpush1.bf16.msra.mxu0 0
  %2259 = vmatprep.subr.bf16.mxu0 0
  %2260 = vmatpush1.bf16.msra.mxu0 0
  %2261 = vmatprep.subr.bf16.mxu0 0
  %2262 = vmatpush1.bf16.msra.mxu0 0
  %2263 = vmatprep.mubr.bf16.mxu0 0
  %2264 = vmatmul.mubr.bf16.gmra.mrb[0].mxu0 %v1430
  %v2265 = vpop.f32.mrb[0].mxu0
  %v2266 = vadd.f32 0.0, %v2265
  %v2267 = vpop.f32.mrb[0].mxu0
  %v2268 = vadd.f32 0.0, %v2267
  %v2269 = vpop.f32.mrb[0].mxu0
  %v2270 = vadd.f32 0.0, %v2269
  %v2271 = vpop.f32.mrb[0].mxu0
  %v2272 = vadd.f32 0.0, %v2271
  %2273 = vmatprep.mubr.bf16.mxu0 0
  %2274 = vmatmul.mubr.bf16.gmra.mrb[0].mxu0 %v1433
  %v2275 = vpop.f32.mrb[0].mxu0
  %v2276 = vadd.f32 0.0, %v2275
  %v2277 = vpop.f32.mrb[0].mxu0
  %v2278 = vadd.f32 0.0, %v2277
  %v2279 = vpop.f32.mrb[0].mxu0
  %v2280 = vadd.f32 0.0, %v2279
  %v2281 = vpop.f32.mrb[0].mxu0
  %v2282 = vadd.f32 0.0, %v2281
  %2283 = vmatprep.mubr.bf16.mxu0 0
  %2284 = vmatmul.mubr.bf16.gmra.mrb[0].mxu0 %v1436
  %v2285 = vpop.f32.mrb[0].mxu0
  %v2286 = vadd.f32 0.0, %v2285
  %v2287 = vpop.f32.mrb[0].mxu0
  %v2288 = vadd.f32 0.0, %v2287
  %v2289 = vpop.f32.mrb[0].mxu0
  %v2290 = vadd.f32 0.0, %v2289
  %v2291 = vpop.f32.mrb[0].mxu0
  %v2292 = vadd.f32 0.0, %v2291
  %2293 = vmatprep.mubr.bf16.mxu0 0
  %2294 = vmatmul.mubr.bf16.gmra.mrb[0].mxu0 %v1439
  %v2295 = vpop.f32.mrb[0].mxu0
  %v2296 = vadd.f32 0.0, %v2295
  %v2297 = vpop.f32.mrb[0].mxu0
  %v2298 = vadd.f32 0.0, %v2297
  %v2299 = vpop.f32.mrb[0].mxu0
  %v2300 = vadd.f32 0.0, %v2299
  %v2301 = vpop.f32.mrb[0].mxu0
  %v2302 = vadd.f32 0.0, %v2301
  %2303 = vmatprep.mubr.bf16.mxu0 0
  %2304 = vmatmul.mubr.bf16.gmra.mrb[0].mxu0 %v1442
  %v2305 = vpop.f32.mrb[0].mxu0
  %v2306 = vadd.f32 0.0, %v2305
  %v2307 = vpop.f32.mrb[0].mxu0
  %v2308 = vadd.f32 0.0, %v2307
  %v2309 = vpop.f32.mrb[0].mxu0
  %v2310 = vadd.f32 0.0, %v2309
  %v2311 = vpop.f32.mrb[0].mxu0
  %v2312 = vadd.f32 0.0, %v2311
  %2313 = vmatprep.mubr.bf16.mxu0 0
  %2314 = vmatmul.mubr.bf16.gmra.mrb[0].mxu0 %v1445
  %v2315 = vpop.f32.mrb[0].mxu0
  %v2316 = vadd.f32 0.0, %v2315
  %v2317 = vpop.f32.mrb[0].mxu0
  %v2318 = vadd.f32 0.0, %v2317
  %v2319 = vpop.f32.mrb[0].mxu0
  %v2320 = vadd.f32 0.0, %v2319
  %v2321 = vpop.f32.mrb[0].mxu0
  %v2322 = vadd.f32 0.0, %v2321
  %2323 = vmatprep.mubr.bf16.mxu0 0
  %2324 = vmatmul.mubr.bf16.gmra.mrb[0].mxu0 %v1448
  %v2325 = vpop.f32.mrb[0].mxu0
  %v2326 = vadd.f32 0.0, %v2325
  %v2327 = vpop.f32.mrb[0].mxu0
  %v2328 = vadd.f32 0.0, %v2327
  %v2329 = vpop.f32.mrb[0].mxu0
  %v2330 = vadd.f32 0.0, %v2329
  %v2331 = vpop.f32.mrb[0].mxu0
  %v2332 = vadd.f32 0.0, %v2331
  %2333 = vmatprep.mubr.bf16.mxu0 0
  %2334 = vmatmul.mubr.bf16.gmra.mrb[0].mxu0 %v1451
  %v2335 = vpop.f32.mrb[0].mxu0
  %v2336 = vadd.f32 0.0, %v2335
  %v2337 = vpop.f32.mrb[0].mxu0
  %v2338 = vadd.f32 0.0, %v2337
  %v2339 = vpop.f32.mrb[0].mxu0
  %v2340 = vadd.f32 0.0, %v2339
  %v2341 = vpop.f32.mrb[0].mxu0
  %v2342 = vadd.f32 0.0, %v2341
  %2343 = vmatprep.mubr.bf16.mxu0 0
  %2344 = vmatmul.mubr.bf16.gmra.mrb[0].mxu0 %v1454
  %v2345 = vpop.f32.mrb[0].mxu0
  %v2346 = vadd.f32 0.0, %v2345
  %v2347 = vpop.f32.mrb[0].mxu0
  %v2348 = vadd.f32 0.0, %v2347
  %v2349 = vpop.f32.mrb[0].mxu0
  %v2350 = vadd.f32 0.0, %v2349
  %v2351 = vpop.f32.mrb[0].mxu0
  %v2352 = vadd.f32 0.0, %v2351
  %2353 = vmatprep.mubr.bf16.mxu0 0
  %2354 = vmatmul.mubr.bf16.gmra.mrb[0].mxu0 %v1457
  %v2355 = vpop.f32.mrb[0].mxu0
  %v2356 = vadd.f32 0.0, %v2355
  %v2357 = vpop.f32.mrb[0].mxu0
  %v2358 = vadd.f32 0.0, %v2357
  %v2359 = vpop.f32.mrb[0].mxu0
  %v2360 = vadd.f32 0.0, %v2359
  %v2361 = vpop.f32.mrb[0].mxu0
  %v2362 = vadd.f32 0.0, %v2361
  %2363 = vmatprep.mubr.bf16.mxu0 0
  %2364 = vmatmul.mubr.bf16.gmra.mrb[0].mxu0 %v1460
  %v2365 = vpop.f32.mrb[0].mxu0
  %v2366 = vadd.f32 0.0, %v2365
  %v2367 = vpop.f32.mrb[0].mxu0
  %v2368 = vadd.f32 0.0, %v2367
  %v2369 = vpop.f32.mrb[0].mxu0
  %v2370 = vadd.f32 0.0, %v2369
  %v2371 = vpop.f32.mrb[0].mxu0
  %v2372 = vadd.f32 0.0, %v2371
  %2373 = vmatprep.mubr.bf16.mxu0 0
  %2374 = vmatmul.mubr.bf16.gmra.mrb[0].mxu0 %v1463
  %v2375 = vpop.f32.mrb[0].mxu0
  %v2376 = vadd.f32 0.0, %v2375
  %v2377 = vpop.f32.mrb[0].mxu0
  %v2378 = vadd.f32 0.0, %v2377
  %v2379 = vpop.f32.mrb[0].mxu0
  %v2380 = vadd.f32 0.0, %v2379
  %v2381 = vpop.f32.mrb[0].mxu0
  %v2382 = vadd.f32 0.0, %v2381
  %2383 = vmatprep.mubr.bf16.mxu0 0
  %2384 = vmatmul.mubr.bf16.gmra.mrb[0].mxu0 %v1466
  %v2385 = vpop.f32.mrb[0].mxu0
  %v2386 = vadd.f32 0.0, %v2385
  %v2387 = vpop.f32.mrb[0].mxu0
  %v2388 = vadd.f32 0.0, %v2387
  %v2389 = vpop.f32.mrb[0].mxu0
  %v2390 = vadd.f32 0.0, %v2389
  %v2391 = vpop.f32.mrb[0].mxu0
  %v2392 = vadd.f32 0.0, %v2391
  %2393 = vmatprep.mubr.bf16.mxu0 0
  %2394 = vmatmul.mubr.bf16.gmra.mrb[0].mxu0 %v1469
  %v2395 = vpop.f32.mrb[0].mxu0
  %v2396 = vadd.f32 0.0, %v2395
  %v2397 = vpop.f32.mrb[0].mxu0
  %v2398 = vadd.f32 0.0, %v2397
  %v2399 = vpop.f32.mrb[0].mxu0
  %v2400 = vadd.f32 0.0, %v2399
  %v2401 = vpop.f32.mrb[0].mxu0
  %v2402 = vadd.f32 0.0, %v2401
  %2403 = vmatprep.mubr.bf16.mxu0 0
  %2404 = vmatmul.mubr.bf16.gmra.mrb[0].mxu0 %v1472
  %v2405 = vpop.f32.mrb[0].mxu0
  %v2406 = vadd.f32 0.0, %v2405
  %v2407 = vpop.f32.mrb[0].mxu0
  %v2408 = vadd.f32 0.0, %v2407
  %v2409 = vpop.f32.mrb[0].mxu0
  %v2410 = vadd.f32 0.0, %v2409
  %v2411 = vpop.f32.mrb[0].mxu0
  %v2412 = vadd.f32 0.0, %v2411
  %2413 = vmatprep.mubr.bf16.mxu0 0
  %2414 = vmatmul.mubr.bf16.gmra.mrb[0].mxu0 %v1475
  %v2415 = vpop.f32.mrb[0].mxu0
  %v2416 = vadd.f32 0.0, %v2415
  %v2417 = vpop.f32.mrb[0].mxu0
  %v2418 = vadd.f32 0.0, %v2417
  %v2419 = vpop.f32.mrb[0].mxu0
  %v2420 = vadd.f32 0.0, %v2419
  %v2421 = vpop.f32.mrb[0].mxu0
  %v2422 = vadd.f32 0.0, %v2421
  %2423 = vmatprep.mubr.bf16.mxu0 0
  %2424 = vmatmul.mubr.bf16.gmra.mrb[0].mxu0 %v1478
  %v2425 = vpop.f32.mrb[0].mxu0
  %v2426 = vadd.f32 0.0, %v2425
  %v2427 = vpop.f32.mrb[0].mxu0
  %v2428 = vadd.f32 0.0, %v2427
  %v2429 = vpop.f32.mrb[0].mxu0
  %v2430 = vadd.f32 0.0, %v2429
  %v2431 = vpop.f32.mrb[0].mxu0
  %v2432 = vadd.f32 0.0, %v2431
  %2433 = vmatprep.mubr.bf16.mxu0 0
  %2434 = vmatmul.mubr.bf16.gmra.mrb[0].mxu0 %v1481
  %v2435 = vpop.f32.mrb[0].mxu0
  %v2436 = vadd.f32 0.0, %v2435
  %v2437 = vpop.f32.mrb[0].mxu0
  %v2438 = vadd.f32 0.0, %v2437
  %v2439 = vpop.f32.mrb[0].mxu0
  %v2440 = vadd.f32 0.0, %v2439
  %v2441 = vpop.f32.mrb[0].mxu0
  %v2442 = vadd.f32 0.0, %v2441
  %2443 = vmatprep.mubr.bf16.mxu0 0
  %2444 = vmatmul.mubr.bf16.gmra.mrb[0].mxu0 %v1484
  %v2445 = vpop.f32.mrb[0].mxu0
  %v2446 = vadd.f32 0.0, %v2445
  %v2447 = vpop.f32.mrb[0].mxu0
  %v2448 = vadd.f32 0.0, %v2447
  %v2449 = vpop.f32.mrb[0].mxu0
  %v2450 = vadd.f32 0.0, %v2449
  %v2451 = vpop.f32.mrb[0].mxu0
  %v2452 = vadd.f32 0.0, %v2451
  %2453 = vmatprep.mubr.bf16.mxu0 0
  %2454 = vmatmul.mubr.bf16.gmra.mrb[0].mxu0 %v1487
  %v2455 = vpop.f32.mrb[0].mxu0
  %v2456 = vadd.f32 0.0, %v2455
  %v2457 = vpop.f32.mrb[0].mxu0
  %v2458 = vadd.f32 0.0, %v2457
  %v2459 = vpop.f32.mrb[0].mxu0
  %v2460 = vadd.f32 0.0, %v2459
  %v2461 = vpop.f32.mrb[0].mxu0
  %v2462 = vadd.f32 0.0, %v2461
  %2463 = vmatprep.mubr.bf16.mxu0 0
  %2464 = vmatmul.mubr.bf16.gmra.mrb[0].mxu0 %v1490
  %v2465 = vpop.f32.mrb[0].mxu0
  %v2466 = vadd.f32 0.0, %v2465
  %v2467 = vpop.f32.mrb[0].mxu0
  %v2468 = vadd.f32 0.0, %v2467
  %v2469 = vpop.f32.mrb[0].mxu0
  %v2470 = vadd.f32 0.0, %v2469
  %v2471 = vpop.f32.mrb[0].mxu0
  %v2472 = vadd.f32 0.0, %v2471
  %2473 = vmatprep.mubr.bf16.mxu0 0
  %2474 = vmatmul.mubr.bf16.gmra.mrb[0].mxu0 %v1493
  %v2475 = vpop.f32.mrb[0].mxu0
  %v2476 = vadd.f32 0.0, %v2475
  %v2477 = vpop.f32.mrb[0].mxu0
  %v2478 = vadd.f32 0.0, %v2477
  %v2479 = vpop.f32.mrb[0].mxu0
  %v2480 = vadd.f32 0.0, %v2479
  %v2481 = vpop.f32.mrb[0].mxu0
  %v2482 = vadd.f32 0.0, %v2481
  %2483 = vmatprep.mubr.bf16.mxu0 0
  %2484 = vmatmul.mubr.bf16.gmra.mrb[0].mxu0 %v1496
  %v2485 = vpop.f32.mrb[0].mxu0
  %v2486 = vadd.f32 0.0, %v2485
  %v2487 = vpop.f32.mrb[0].mxu0
  %v2488 = vadd.f32 0.0, %v2487
  %v2489 = vpop.f32.mrb[0].mxu0
  %v2490 = vadd.f32 0.0, %v2489
  %v2491 = vpop.f32.mrb[0].mxu0
  %v2492 = vadd.f32 0.0, %v2491
  %2493 = vmatprep.mubr.bf16.mxu0 0
  %2494 = vmatmul.mubr.bf16.gmra.mrb[0].mxu0 %v1499
  %v2495 = vpop.f32.mrb[0].mxu0
  %v2496 = vadd.f32 0.0, %v2495
  %v2497 = vpop.f32.mrb[0].mxu0
  %v2498 = vadd.f32 0.0, %v2497
  %v2499 = vpop.f32.mrb[0].mxu0
  %v2500 = vadd.f32 0.0, %v2499
  %v2501 = vpop.f32.mrb[0].mxu0
  %v2502 = vadd.f32 0.0, %v2501
  %2503 = vmatprep.mubr.bf16.mxu0 0
  %2504 = vmatmul.mubr.bf16.gmra.mrb[0].mxu0 %v1502
  %v2505 = vpop.f32.mrb[0].mxu0
  %v2506 = vadd.f32 0.0, %v2505
  %v2507 = vpop.f32.mrb[0].mxu0
  %v2508 = vadd.f32 0.0, %v2507
  %v2509 = vpop.f32.mrb[0].mxu0
  %v2510 = vadd.f32 0.0, %v2509
  %v2511 = vpop.f32.mrb[0].mxu0
  %v2512 = vadd.f32 0.0, %v2511
  %2513 = vmatprep.mubr.bf16.mxu0 0
  %2514 = vmatmul.mubr.bf16.gmra.mrb[0].mxu0 %v1505
  %v2515 = vpop.f32.mrb[0].mxu0
  %v2516 = vadd.f32 0.0, %v2515
  %v2517 = vpop.f32.mrb[0].mxu0
  %v2518 = vadd.f32 0.0, %v2517
  %v2519 = vpop.f32.mrb[0].mxu0
  %v2520 = vadd.f32 0.0, %v2519
  %v2521 = vpop.f32.mrb[0].mxu0
  %v2522 = vadd.f32 0.0, %v2521
  %2523 = vmatprep.mubr.bf16.mxu0 0
  %2524 = vmatmul.mubr.bf16.gmra.mrb[0].mxu0 %v1508
  %v2525 = vpop.f32.mrb[0].mxu0
  %v2526 = vadd.f32 0.0, %v2525
  %v2527 = vpop.f32.mrb[0].mxu0
  %v2528 = vadd.f32 0.0, %v2527
  %v2529 = vpop.f32.mrb[0].mxu0
  %v2530 = vadd.f32 0.0, %v2529
  %v2531 = vpop.f32.mrb[0].mxu0
  %v2532 = vadd.f32 0.0, %v2531
  %2533 = vmatprep.mubr.bf16.mxu0 0
  %2534 = vmatmul.mubr.bf16.gmra.mrb[0].mxu0 %v1511
  %v2535 = vpop.f32.mrb[0].mxu0
  %v2536 = vadd.f32 0.0, %v2535
  %v2537 = vpop.f32.mrb[0].mxu0
  %v2538 = vadd.f32 0.0, %v2537
  %v2539 = vpop.f32.mrb[0].mxu0
  %v2540 = vadd.f32 0.0, %v2539
  %v2541 = vpop.f32.mrb[0].mxu0
  %v2542 = vadd.f32 0.0, %v2541
  %2543 = vmatprep.mubr.bf16.mxu0 0
  %2544 = vmatmul.mubr.bf16.gmra.mrb[0].mxu0 %v1514
  %v2545 = vpop.f32.mrb[0].mxu0
  %v2546 = vadd.f32 0.0, %v2545
  %v2547 = vpop.f32.mrb[0].mxu0
  %v2548 = vadd.f32 0.0, %v2547
  %v2549 = vpop.f32.mrb[0].mxu0
  %v2550 = vadd.f32 0.0, %v2549
  %v2551 = vpop.f32.mrb[0].mxu0
  %v2552 = vadd.f32 0.0, %v2551
  %2553 = vmatprep.mubr.bf16.mxu0 0
  %2554 = vmatmul.mubr.bf16.gmra.mrb[0].mxu0 %v1517
  %v2555 = vpop.f32.mrb[0].mxu0
  %v2556 = vadd.f32 0.0, %v2555
  %v2557 = vpop.f32.mrb[0].mxu0
  %v2558 = vadd.f32 0.0, %v2557
  %v2559 = vpop.f32.mrb[0].mxu0
  %v2560 = vadd.f32 0.0, %v2559
  %v2561 = vpop.f32.mrb[0].mxu0
  %v2562 = vadd.f32 0.0, %v2561
  %2563 = vmatprep.mubr.bf16.mxu0 0
  %2564 = vmatmul.mubr.bf16.gmra.mrb[0].mxu0 %v1520
  %v2565 = vpop.f32.mrb[0].mxu0
  %v2566 = vadd.f32 0.0, %v2565
  %v2567 = vpop.f32.mrb[0].mxu0
  %v2568 = vadd.f32 0.0, %v2567
  %v2569 = vpop.f32.mrb[0].mxu0
  %v2570 = vadd.f32 0.0, %v2569
  %v2571 = vpop.f32.mrb[0].mxu0
  %v2572 = vadd.f32 0.0, %v2571
  %2573 = vmatprep.mubr.bf16.mxu0 0
  %2574 = vmatmul.mubr.bf16.gmra.mrb[0].mxu0 %v1523
  %v2575 = vpop.f32.mrb[0].mxu0
  %v2576 = vadd.f32 0.0, %v2575
  %v2577 = vpop.f32.mrb[0].mxu0
  %v2578 = vadd.f32 0.0, %v2577
  %v2579 = vpop.f32.mrb[0].mxu0
  %v2580 = vadd.f32 0.0, %v2579
  %v2581 = vpop.f32.mrb[0].mxu0
  %v2582 = vadd.f32 0.0, %v2581
  %2583 = vdwg.mxu0
  %2584 = vmatprep.subr.bf16.mxu0 %v1403
  %2585 = vmatpush1.bf16.msra.mxu0 %v1402
  %2586 = vmatprep.subr.bf16.mxu0 %v1411
  %2587 = vmatpush1.bf16.msra.mxu0 %v1410
  %2588 = vmatprep.subr.bf16.mxu0 0
  %2589 = vmatpush1.bf16.msra.mxu0 0
  %2590 = vmatprep.subr.bf16.mxu0 0
  %2591 = vmatpush1.bf16.msra.mxu0 0
  %2592 = vmatprep.subr.bf16.mxu0 0
  %2593 = vmatpush1.bf16.msra.mxu0 0
  %2594 = vmatprep.subr.bf16.mxu0 0
  %2595 = vmatpush1.bf16.msra.mxu0 0
  %2596 = vmatprep.subr.bf16.mxu0 0
  %2597 = vmatpush1.bf16.msra.mxu0 0
  %2598 = vmatprep.subr.bf16.mxu0 0
  %2599 = vmatpush1.bf16.msra.mxu0 0
  %2600 = vmatprep.subr.bf16.mxu0 0
  %2601 = vmatpush1.bf16.msra.mxu0 0
  %2602 = vmatprep.subr.bf16.mxu0 0
  %2603 = vmatpush1.bf16.msra.mxu0 0
  %2604 = vmatprep.subr.bf16.mxu0 0
  %2605 = vmatpush1.bf16.msra.mxu0 0
  %2606 = vmatprep.subr.bf16.mxu0 0
  %2607 = vmatpush1.bf16.msra.mxu0 0
  %2608 = vmatprep.subr.bf16.mxu0 0
  %2609 = vmatpush1.bf16.msra.mxu0 0
  %2610 = vmatprep.subr.bf16.mxu0 0
  %2611 = vmatpush1.bf16.msra.mxu0 0
  %2612 = vmatprep.subr.bf16.mxu0 0
  %2613 = vmatpush1.bf16.msra.mxu0 0
  %2614 = vmatprep.subr.bf16.mxu0 0
  %2615 = vmatpush1.bf16.msra.mxu0 0
  %2616 = vmatprep.mubr.bf16.mxu0 0
  %2617 = vmatmul.mubr.bf16.gmra.mrb[0].mxu0 %v1430
  %v2618 = vpop.f32.mrb[0].mxu0
  %v2619 = vadd.f32 0.0, %v2618
  %v2620 = vpop.f32.mrb[0].mxu0
  %v2621 = vadd.f32 0.0, %v2620
  %v2622 = vpop.f32.mrb[0].mxu0
  %v2623 = vadd.f32 0.0, %v2622
  %v2624 = vpop.f32.mrb[0].mxu0
  %v2625 = vadd.f32 0.0, %v2624
  %2626 = vmatprep.mubr.bf16.mxu0 0
  %2627 = vmatmul.mubr.bf16.gmra.mrb[0].mxu0 %v1433
  %v2628 = vpop.f32.mrb[0].mxu0
  %v2629 = vadd.f32 0.0, %v2628
  %v2630 = vpop.f32.mrb[0].mxu0
  %v2631 = vadd.f32 0.0, %v2630
  %v2632 = vpop.f32.mrb[0].mxu0
  %v2633 = vadd.f32 0.0, %v2632
  %v2634 = vpop.f32.mrb[0].mxu0
  %v2635 = vadd.f32 0.0, %v2634
  %2636 = vmatprep.mubr.bf16.mxu0 0
  %2637 = vmatmul.mubr.bf16.gmra.mrb[0].mxu0 %v1436
  %v2638 = vpop.f32.mrb[0].mxu0
  %v2639 = vadd.f32 0.0, %v2638
  %v2640 = vpop.f32.mrb[0].mxu0
  %v2641 = vadd.f32 0.0, %v2640
  %v2642 = vpop.f32.mrb[0].mxu0
  %v2643 = vadd.f32 0.0, %v2642
  %v2644 = vpop.f32.mrb[0].mxu0
  %v2645 = vadd.f32 0.0, %v2644
  %2646 = vmatprep.mubr.bf16.mxu0 0
  %2647 = vmatmul.mubr.bf16.gmra.mrb[0].mxu0 %v1439
  %v2648 = vpop.f32.mrb[0].mxu0
  %v2649 = vadd.f32 0.0, %v2648
  %v2650 = vpop.f32.mrb[0].mxu0
  %v2651 = vadd.f32 0.0, %v2650
  %v2652 = vpop.f32.mrb[0].mxu0
  %v2653 = vadd.f32 0.0, %v2652
  %v2654 = vpop.f32.mrb[0].mxu0
  %v2655 = vadd.f32 0.0, %v2654
  %2656 = vmatprep.mubr.bf16.mxu0 0
  %2657 = vmatmul.mubr.bf16.gmra.mrb[0].mxu0 %v1442
  %v2658 = vpop.f32.mrb[0].mxu0
  %v2659 = vadd.f32 0.0, %v2658
  %v2660 = vpop.f32.mrb[0].mxu0
  %v2661 = vadd.f32 0.0, %v2660
  %v2662 = vpop.f32.mrb[0].mxu0
  %v2663 = vadd.f32 0.0, %v2662
  %v2664 = vpop.f32.mrb[0].mxu0
  %v2665 = vadd.f32 0.0, %v2664
  %2666 = vmatprep.mubr.bf16.mxu0 0
  %2667 = vmatmul.mubr.bf16.gmra.mrb[0].mxu0 %v1445
  %v2668 = vpop.f32.mrb[0].mxu0
  %v2669 = vadd.f32 0.0, %v2668
  %v2670 = vpop.f32.mrb[0].mxu0
  %v2671 = vadd.f32 0.0, %v2670
  %v2672 = vpop.f32.mrb[0].mxu0
  %v2673 = vadd.f32 0.0, %v2672
  %v2674 = vpop.f32.mrb[0].mxu0
  %v2675 = vadd.f32 0.0, %v2674
  %2676 = vmatprep.mubr.bf16.mxu0 0
  %2677 = vmatmul.mubr.bf16.gmra.mrb[0].mxu0 %v1448
  %v2678 = vpop.f32.mrb[0].mxu0
  %v2679 = vadd.f32 0.0, %v2678
  %v2680 = vpop.f32.mrb[0].mxu0
  %v2681 = vadd.f32 0.0, %v2680
  %v2682 = vpop.f32.mrb[0].mxu0
  %v2683 = vadd.f32 0.0, %v2682
  %v2684 = vpop.f32.mrb[0].mxu0
  %v2685 = vadd.f32 0.0, %v2684
  %2686 = vmatprep.mubr.bf16.mxu0 0
  %2687 = vmatmul.mubr.bf16.gmra.mrb[0].mxu0 %v1451
  %v2688 = vpop.f32.mrb[0].mxu0
  %v2689 = vadd.f32 0.0, %v2688
  %v2690 = vpop.f32.mrb[0].mxu0
  %v2691 = vadd.f32 0.0, %v2690
  %v2692 = vpop.f32.mrb[0].mxu0
  %v2693 = vadd.f32 0.0, %v2692
  %v2694 = vpop.f32.mrb[0].mxu0
  %v2695 = vadd.f32 0.0, %v2694
  %2696 = vmatprep.mubr.bf16.mxu0 0
  %2697 = vmatmul.mubr.bf16.gmra.mrb[0].mxu0 %v1454
  %v2698 = vpop.f32.mrb[0].mxu0
  %v2699 = vadd.f32 0.0, %v2698
  %v2700 = vpop.f32.mrb[0].mxu0
  %v2701 = vadd.f32 0.0, %v2700
  %v2702 = vpop.f32.mrb[0].mxu0
  %v2703 = vadd.f32 0.0, %v2702
  %v2704 = vpop.f32.mrb[0].mxu0
  %v2705 = vadd.f32 0.0, %v2704
  %2706 = vmatprep.mubr.bf16.mxu0 0
  %2707 = vmatmul.mubr.bf16.gmra.mrb[0].mxu0 %v1457
  %v2708 = vpop.f32.mrb[0].mxu0
  %v2709 = vadd.f32 0.0, %v2708
  %v2710 = vpop.f32.mrb[0].mxu0
  %v2711 = vadd.f32 0.0, %v2710
  %v2712 = vpop.f32.mrb[0].mxu0
  %v2713 = vadd.f32 0.0, %v2712
  %v2714 = vpop.f32.mrb[0].mxu0
  %v2715 = vadd.f32 0.0, %v2714
  %2716 = vmatprep.mubr.bf16.mxu0 0
  %2717 = vmatmul.mubr.bf16.gmra.mrb[0].mxu0 %v1460
  %v2718 = vpop.f32.mrb[0].mxu0
  %v2719 = vadd.f32 0.0, %v2718
  %v2720 = vpop.f32.mrb[0].mxu0
  %v2721 = vadd.f32 0.0, %v2720
  %v2722 = vpop.f32.mrb[0].mxu0
  %v2723 = vadd.f32 0.0, %v2722
  %v2724 = vpop.f32.mrb[0].mxu0
  %v2725 = vadd.f32 0.0, %v2724
  %2726 = vmatprep.mubr.bf16.mxu0 0
  %2727 = vmatmul.mubr.bf16.gmra.mrb[0].mxu0 %v1463
  %v2728 = vpop.f32.mrb[0].mxu0
  %v2729 = vadd.f32 0.0, %v2728
  %v2730 = vpop.f32.mrb[0].mxu0
  %v2731 = vadd.f32 0.0, %v2730
  %v2732 = vpop.f32.mrb[0].mxu0
  %v2733 = vadd.f32 0.0, %v2732
  %v2734 = vpop.f32.mrb[0].mxu0
  %v2735 = vadd.f32 0.0, %v2734
  %2736 = vmatprep.mubr.bf16.mxu0 0
  %2737 = vmatmul.mubr.bf16.gmra.mrb[0].mxu0 %v1466
  %v2738 = vpop.f32.mrb[0].mxu0
  %v2739 = vadd.f32 0.0, %v2738
  %v2740 = vpop.f32.mrb[0].mxu0
  %v2741 = vadd.f32 0.0, %v2740
  %v2742 = vpop.f32.mrb[0].mxu0
  %v2743 = vadd.f32 0.0, %v2742
  %v2744 = vpop.f32.mrb[0].mxu0
  %v2745 = vadd.f32 0.0, %v2744
  %2746 = vmatprep.mubr.bf16.mxu0 0
  %2747 = vmatmul.mubr.bf16.gmra.mrb[0].mxu0 %v1469
  %v2748 = vpop.f32.mrb[0].mxu0
  %v2749 = vadd.f32 0.0, %v2748
  %v2750 = vpop.f32.mrb[0].mxu0
  %v2751 = vadd.f32 0.0, %v2750
  %v2752 = vpop.f32.mrb[0].mxu0
  %v2753 = vadd.f32 0.0, %v2752
  %v2754 = vpop.f32.mrb[0].mxu0
  %v2755 = vadd.f32 0.0, %v2754
  %2756 = vmatprep.mubr.bf16.mxu0 0
  %2757 = vmatmul.mubr.bf16.gmra.mrb[0].mxu0 %v1472
  %v2758 = vpop.f32.mrb[0].mxu0
  %v2759 = vadd.f32 0.0, %v2758
  %v2760 = vpop.f32.mrb[0].mxu0
  %v2761 = vadd.f32 0.0, %v2760
  %v2762 = vpop.f32.mrb[0].mxu0
  %v2763 = vadd.f32 0.0, %v2762
  %v2764 = vpop.f32.mrb[0].mxu0
  %v2765 = vadd.f32 0.0, %v2764
  %2766 = vmatprep.mubr.bf16.mxu0 0
  %2767 = vmatmul.mubr.bf16.gmra.mrb[0].mxu0 %v1475
  %v2768 = vpop.f32.mrb[0].mxu0
  %v2769 = vadd.f32 0.0, %v2768
  %v2770 = vpop.f32.mrb[0].mxu0
  %v2771 = vadd.f32 0.0, %v2770
  %v2772 = vpop.f32.mrb[0].mxu0
  %v2773 = vadd.f32 0.0, %v2772
  %v2774 = vpop.f32.mrb[0].mxu0
  %v2775 = vadd.f32 0.0, %v2774
  %2776 = vmatprep.mubr.bf16.mxu0 0
  %2777 = vmatmul.mubr.bf16.gmra.mrb[0].mxu0 %v1478
  %v2778 = vpop.f32.mrb[0].mxu0
  %v2779 = vadd.f32 0.0, %v2778
  %v2780 = vpop.f32.mrb[0].mxu0
  %v2781 = vadd.f32 0.0, %v2780
  %v2782 = vpop.f32.mrb[0].mxu0
  %v2783 = vadd.f32 0.0, %v2782
  %v2784 = vpop.f32.mrb[0].mxu0
  %v2785 = vadd.f32 0.0, %v2784
  %2786 = vmatprep.mubr.bf16.mxu0 0
  %2787 = vmatmul.mubr.bf16.gmra.mrb[0].mxu0 %v1481
  %v2788 = vpop.f32.mrb[0].mxu0
  %v2789 = vadd.f32 0.0, %v2788
  %v2790 = vpop.f32.mrb[0].mxu0
  %v2791 = vadd.f32 0.0, %v2790
  %v2792 = vpop.f32.mrb[0].mxu0
  %v2793 = vadd.f32 0.0, %v2792
  %v2794 = vpop.f32.mrb[0].mxu0
  %v2795 = vadd.f32 0.0, %v2794
  %2796 = vmatprep.mubr.bf16.mxu0 0
  %2797 = vmatmul.mubr.bf16.gmra.mrb[0].mxu0 %v1484
  %v2798 = vpop.f32.mrb[0].mxu0
  %v2799 = vadd.f32 0.0, %v2798
  %v2800 = vpop.f32.mrb[0].mxu0
  %v2801 = vadd.f32 0.0, %v2800
  %v2802 = vpop.f32.mrb[0].mxu0
  %v2803 = vadd.f32 0.0, %v2802
  %v2804 = vpop.f32.mrb[0].mxu0
  %v2805 = vadd.f32 0.0, %v2804
  %2806 = vmatprep.mubr.bf16.mxu0 0
  %2807 = vmatmul.mubr.bf16.gmra.mrb[0].mxu0 %v1487
  %v2808 = vpop.f32.mrb[0].mxu0
  %v2809 = vadd.f32 0.0, %v2808
  %v2810 = vpop.f32.mrb[0].mxu0
  %v2811 = vadd.f32 0.0, %v2810
  %v2812 = vpop.f32.mrb[0].mxu0
  %v2813 = vadd.f32 0.0, %v2812
  %v2814 = vpop.f32.mrb[0].mxu0
  %v2815 = vadd.f32 0.0, %v2814
  %2816 = vmatprep.mubr.bf16.mxu0 0
  %2817 = vmatmul.mubr.bf16.gmra.mrb[0].mxu0 %v1490
  %v2818 = vpop.f32.mrb[0].mxu0
  %v2819 = vadd.f32 0.0, %v2818
  %v2820 = vpop.f32.mrb[0].mxu0
  %v2821 = vadd.f32 0.0, %v2820
  %v2822 = vpop.f32.mrb[0].mxu0
  %v2823 = vadd.f32 0.0, %v2822
  %v2824 = vpop.f32.mrb[0].mxu0
  %v2825 = vadd.f32 0.0, %v2824
  %2826 = vmatprep.mubr.bf16.mxu0 0
  %2827 = vmatmul.mubr.bf16.gmra.mrb[0].mxu0 %v1493
  %v2828 = vpop.f32.mrb[0].mxu0
  %v2829 = vadd.f32 0.0, %v2828
  %v2830 = vpop.f32.mrb[0].mxu0
  %v2831 = vadd.f32 0.0, %v2830
  %v2832 = vpop.f32.mrb[0].mxu0
  %v2833 = vadd.f32 0.0, %v2832
  %v2834 = vpop.f32.mrb[0].mxu0
  %v2835 = vadd.f32 0.0, %v2834
  %2836 = vmatprep.mubr.bf16.mxu0 0
  %2837 = vmatmul.mubr.bf16.gmra.mrb[0].mxu0 %v1496
  %v2838 = vpop.f32.mrb[0].mxu0
  %v2839 = vadd.f32 0.0, %v2838
  %v2840 = vpop.f32.mrb[0].mxu0
  %v2841 = vadd.f32 0.0, %v2840
  %v2842 = vpop.f32.mrb[0].mxu0
  %v2843 = vadd.f32 0.0, %v2842
  %v2844 = vpop.f32.mrb[0].mxu0
  %v2845 = vadd.f32 0.0, %v2844
  %2846 = vmatprep.mubr.bf16.mxu0 0
  %2847 = vmatmul.mubr.bf16.gmra.mrb[0].mxu0 %v1499
  %v2848 = vpop.f32.mrb[0].mxu0
  %v2849 = vadd.f32 0.0, %v2848
  %v2850 = vpop.f32.mrb[0].mxu0
  %v2851 = vadd.f32 0.0, %v2850
  %v2852 = vpop.f32.mrb[0].mxu0
  %v2853 = vadd.f32 0.0, %v2852
  %v2854 = vpop.f32.mrb[0].mxu0
  %v2855 = vadd.f32 0.0, %v2854
  %2856 = vmatprep.mubr.bf16.mxu0 0
  %2857 = vmatmul.mubr.bf16.gmra.mrb[0].mxu0 %v1502
  %v2858 = vpop.f32.mrb[0].mxu0
  %v2859 = vadd.f32 0.0, %v2858
  %v2860 = vpop.f32.mrb[0].mxu0
  %v2861 = vadd.f32 0.0, %v2860
  %v2862 = vpop.f32.mrb[0].mxu0
  %v2863 = vadd.f32 0.0, %v2862
  %v2864 = vpop.f32.mrb[0].mxu0
  %v2865 = vadd.f32 0.0, %v2864
  %2866 = vmatprep.mubr.bf16.mxu0 0
  %2867 = vmatmul.mubr.bf16.gmra.mrb[0].mxu0 %v1505
  %v2868 = vpop.f32.mrb[0].mxu0
  %v2869 = vadd.f32 0.0, %v2868
  %v2870 = vpop.f32.mrb[0].mxu0
  %v2871 = vadd.f32 0.0, %v2870
  %v2872 = vpop.f32.mrb[0].mxu0
  %v2873 = vadd.f32 0.0, %v2872
  %v2874 = vpop.f32.mrb[0].mxu0
  %v2875 = vadd.f32 0.0, %v2874
  %2876 = vmatprep.mubr.bf16.mxu0 0
  %2877 = vmatmul.mubr.bf16.gmra.mrb[0].mxu0 %v1508
  %v2878 = vpop.f32.mrb[0].mxu0
  %v2879 = vadd.f32 0.0, %v2878
  %v2880 = vpop.f32.mrb[0].mxu0
  %v2881 = vadd.f32 0.0, %v2880
  %v2882 = vpop.f32.mrb[0].mxu0
  %v2883 = vadd.f32 0.0, %v2882
  %v2884 = vpop.f32.mrb[0].mxu0
  %v2885 = vadd.f32 0.0, %v2884
  %2886 = vmatprep.mubr.bf16.mxu0 0
  %2887 = vmatmul.mubr.bf16.gmra.mrb[0].mxu0 %v1511
  %v2888 = vpop.f32.mrb[0].mxu0
  %v2889 = vadd.f32 0.0, %v2888
  %v2890 = vpop.f32.mrb[0].mxu0
  %v2891 = vadd.f32 0.0, %v2890
  %v2892 = vpop.f32.mrb[0].mxu0
  %v2893 = vadd.f32 0.0, %v2892
  %v2894 = vpop.f32.mrb[0].mxu0
  %v2895 = vadd.f32 0.0, %v2894
  %2896 = vmatprep.mubr.bf16.mxu0 0
  %2897 = vmatmul.mubr.bf16.gmra.mrb[0].mxu0 %v1514
  %v2898 = vpop.f32.mrb[0].mxu0
  %v2899 = vadd.f32 0.0, %v2898
  %v2900 = vpop.f32.mrb[0].mxu0
  %v2901 = vadd.f32 0.0, %v2900
  %v2902 = vpop.f32.mrb[0].mxu0
  %v2903 = vadd.f32 0.0, %v2902
  %v2904 = vpop.f32.mrb[0].mxu0
  %v2905 = vadd.f32 0.0, %v2904
  %2906 = vmatprep.mubr.bf16.mxu0 0
  %2907 = vmatmul.mubr.bf16.gmra.mrb[0].mxu0 %v1517
  %v2908 = vpop.f32.mrb[0].mxu0
  %v2909 = vadd.f32 0.0, %v2908
  %v2910 = vpop.f32.mrb[0].mxu0
  %v2911 = vadd.f32 0.0, %v2910
  %v2912 = vpop.f32.mrb[0].mxu0
  %v2913 = vadd.f32 0.0, %v2912
  %v2914 = vpop.f32.mrb[0].mxu0
  %v2915 = vadd.f32 0.0, %v2914
  %2916 = vmatprep.mubr.bf16.mxu0 0
  %2917 = vmatmul.mubr.bf16.gmra.mrb[0].mxu0 %v1520
  %v2918 = vpop.f32.mrb[0].mxu0
  %v2919 = vadd.f32 0.0, %v2918
  %v2920 = vpop.f32.mrb[0].mxu0
  %v2921 = vadd.f32 0.0, %v2920
  %v2922 = vpop.f32.mrb[0].mxu0
  %v2923 = vadd.f32 0.0, %v2922
  %v2924 = vpop.f32.mrb[0].mxu0
  %v2925 = vadd.f32 0.0, %v2924
  %2926 = vmatprep.mubr.bf16.mxu0 0
  %2927 = vmatmul.mubr.bf16.gmra.mrb[0].mxu0 %v1523
  %v2928 = vpop.f32.mrb[0].mxu0
  %v2929 = vadd.f32 0.0, %v2928
  %v2930 = vpop.f32.mrb[0].mxu0
  %v2931 = vadd.f32 0.0, %v2930
  %v2932 = vpop.f32.mrb[0].mxu0
  %v2933 = vadd.f32 0.0, %v2932
  %v2934 = vpop.f32.mrb[0].mxu0
  %v2935 = vadd.f32 0.0, %v2934
  %2936 = vdwg.mxu0
  %v2937 = vld [vmem:[%s8] sm:$0xff]
  %v2938 = vld [vmem:[%s8 + $0x8] sm:$0xff]
  %v2939 = vld [vmem:[%s8 + $0x10] sm:$0xff]
  %v2940 = vld [vmem:[%s8 + $0x18] sm:$0xff]
  %v2941 = vld [vmem:[%s8 + $0x20] sm:$0xff]
  %v2942 = vld [vmem:[%s8 + $0x28] sm:$0xff]
  %v2943 = vld [vmem:[%s8 + $0x30] sm:$0xff]
  %v2944 = vld [vmem:[%s8 + $0x38] sm:$0xff]
  %v2945 = vld [vmem:[%s8 + $0x40] sm:$0xff]
  %v2946 = vld [vmem:[%s8 + $0x48] sm:$0xff]
  %v2947 = vld [vmem:[%s8 + $0x50] sm:$0xff]
  %v2948 = vld [vmem:[%s8 + $0x58] sm:$0xff]
  %v2949 = vld [vmem:[%s8 + $0x60] sm:$0xff]
  %v2950 = vld [vmem:[%s8 + $0x68] sm:$0xff]
  %v2951 = vld [vmem:[%s8 + $0x70] sm:$0xff]
  %v2952 = vld [vmem:[%s8 + $0x78] sm:$0xff]
  %v3017 = vunpack.c.l.b16 %v117
  %v3018 = vunpack.c.l.b16 %v118
  %v3019 = vunpack.c.l.b16 %v119
  %v3020 = vunpack.c.l.b16 %v120
  %v3021 = vunpack.c.l.b16 %v121
  %v3022 = vunpack.c.l.b16 %v122
  %v3023 = vunpack.c.l.b16 %v123
  %v3024 = vunpack.c.l.b16 %v124
  %v3025 = vunpack.c.l.b16 %v125
  %v3026 = vunpack.c.l.b16 %v126
  %v3027 = vunpack.c.l.b16 %v127
  %v3028 = vunpack.c.l.b16 %v128
  %v3029 = vunpack.c.l.b16 %v129
  %v3030 = vunpack.c.l.b16 %v130
  %v3031 = vunpack.c.l.b16 %v131
  %v3032 = vunpack.c.l.b16 %v132
  %v3033 = vunpack.c.l.b16 %v133
  %v3034 = vunpack.c.l.b16 %v134
  %v3035 = vunpack.c.l.b16 %v135
  %v3036 = vunpack.c.l.b16 %v136
  %v3037 = vunpack.c.l.b16 %v137
  %v3038 = vunpack.c.l.b16 %v138
  %v3039 = vunpack.c.l.b16 %v139
  %v3040 = vunpack.c.l.b16 %v140
  %v3041 = vunpack.c.l.b16 %v141
  %v3042 = vunpack.c.l.b16 %v142
  %v3043 = vunpack.c.l.b16 %v143
  %v3044 = vunpack.c.l.b16 %v144
  %v3045 = vunpack.c.l.b16 %v145
  %v3046 = vunpack.c.l.b16 %v146
  %v3047 = vunpack.c.l.b16 %v147
  %v3048 = vunpack.c.l.b16 %v148
  %v3049 = vunpack.c.l.b16 %v149
  %v3050 = vunpack.c.l.b16 %v150
  %v3051 = vunpack.c.l.b16 %v151
  %v3052 = vunpack.c.l.b16 %v152
  %v3053 = vunpack.c.l.b16 %v153
  %v3054 = vunpack.c.l.b16 %v154
  %v3055 = vunpack.c.l.b16 %v155
  %v3056 = vunpack.c.l.b16 %v156
  %v3057 = vunpack.c.l.b16 %v157
  %v3058 = vunpack.c.l.b16 %v158
  %v3059 = vunpack.c.l.b16 %v159
  %v3060 = vunpack.c.l.b16 %v160
  %v3061 = vunpack.c.l.b16 %v161
  %v3062 = vunpack.c.l.b16 %v162
  %v3063 = vunpack.c.l.b16 %v163
  %v3064 = vunpack.c.l.b16 %v164
  %v3065 = vunpack.c.l.b16 %v165
  %v3066 = vunpack.c.l.b16 %v166
  %v3067 = vunpack.c.l.b16 %v167
  %v3068 = vunpack.c.l.b16 %v168
  %v3069 = vunpack.c.l.b16 %v169
  %v3070 = vunpack.c.l.b16 %v170
  %v3071 = vunpack.c.l.b16 %v171
  %v3072 = vunpack.c.l.b16 %v172
  %v3073 = vunpack.c.l.b16 %v173
  %v3074 = vunpack.c.l.b16 %v174
  %v3075 = vunpack.c.l.b16 %v175
  %v3076 = vunpack.c.l.b16 %v176
  %v3077 = vunpack.c.l.b16 %v177
  %v3078 = vunpack.c.l.b16 %v178
  %v3079 = vunpack.c.l.b16 %v179
  %v3080 = vunpack.c.l.b16 %v180
  %v3081 = vpack.c.b16 %v3018, %v3017
  %v3082 = vpack.c.b16 %v3020, %v3019
  %v3083 = vpack.c.b16 %v3022, %v3021
  %v3084 = vpack.c.b16 %v3024, %v3023
  %v3085 = vpack.c.b16 %v3026, %v3025
  %v3086 = vpack.c.b16 %v3028, %v3027
  %v3087 = vpack.c.b16 %v3030, %v3029
  %v3088 = vpack.c.b16 %v3032, %v3031
  %v3089 = vpack.c.b16 %v3034, %v3033
  %v3090 = vpack.c.b16 %v3036, %v3035
  %v3091 = vpack.c.b16 %v3038, %v3037
  %v3092 = vpack.c.b16 %v3040, %v3039
  %v3093 = vpack.c.b16 %v3042, %v3041
  %v3094 = vpack.c.b16 %v3044, %v3043
  %v3095 = vpack.c.b16 %v3046, %v3045
  %v3096 = vpack.c.b16 %v3048, %v3047
  %v3097 = vpack.c.b16 %v3050, %v3049
  %v3098 = vpack.c.b16 %v3052, %v3051
  %v3099 = vpack.c.b16 %v3054, %v3053
  %v3100 = vpack.c.b16 %v3056, %v3055
  %v3101 = vpack.c.b16 %v3058, %v3057
  %v3102 = vpack.c.b16 %v3060, %v3059
  %v3103 = vpack.c.b16 %v3062, %v3061
  %v3104 = vpack.c.b16 %v3064, %v3063
  %v3105 = vpack.c.b16 %v3066, %v3065
  %v3106 = vpack.c.b16 %v3068, %v3067
  %v3107 = vpack.c.b16 %v3070, %v3069
  %v3108 = vpack.c.b16 %v3072, %v3071
  %v3109 = vpack.c.b16 %v3074, %v3073
  %v3110 = vpack.c.b16 %v3076, %v3075
  %v3111 = vpack.c.b16 %v3078, %v3077
  %v3112 = vpack.c.b16 %v3080, %v3079
  %v3129 = vunpack.c.l.b16 %v2937
  %v3130 = vunpack.c.h.b16 %v2937
  %v3131 = vunpack.c.l.b16 %v2938
  %v3132 = vunpack.c.h.b16 %v2938
  %v3133 = vunpack.c.l.b16 %v2939
  %v3134 = vunpack.c.h.b16 %v2939
  %v3135 = vunpack.c.l.b16 %v2940
  %v3136 = vunpack.c.h.b16 %v2940
  %v3137 = vunpack.c.l.b16 %v2941
  %v3138 = vunpack.c.h.b16 %v2941
  %v3139 = vunpack.c.l.b16 %v2942
  %v3140 = vunpack.c.h.b16 %v2942
  %v3141 = vunpack.c.l.b16 %v2943
  %v3142 = vunpack.c.h.b16 %v2943
  %v3143 = vunpack.c.l.b16 %v2944
  %v3144 = vunpack.c.h.b16 %v2944
  %v3145 = vunpack.c.l.b16 %v2945
  %v3146 = vunpack.c.h.b16 %v2945
  %v3147 = vunpack.c.l.b16 %v2946
  %v3148 = vunpack.c.h.b16 %v2946
  %v3149 = vunpack.c.l.b16 %v2947
  %v3150 = vunpack.c.h.b16 %v2947
  %v3151 = vunpack.c.l.b16 %v2948
  %v3152 = vunpack.c.h.b16 %v2948
  %v3153 = vunpack.c.l.b16 %v2949
  %v3154 = vunpack.c.h.b16 %v2949
  %v3155 = vunpack.c.l.b16 %v2950
  %v3156 = vunpack.c.h.b16 %v2950
  %v3157 = vunpack.c.l.b16 %v2951
  %v3158 = vunpack.c.h.b16 %v2951
  %v3159 = vunpack.c.l.b16 %v2952
  %v3160 = vunpack.c.h.b16 %v2952
  %v3161 = vpack.c.b16 %v3137, %v3129
  %v3162 = vpack.c.b16 %v3138, %v3130
  %v3163 = vpack.c.b16 %v3139, %v3131
  %v3164 = vpack.c.b16 %v3140, %v3132
  %v3165 = vpack.c.b16 %v3141, %v3133
  %v3166 = vpack.c.b16 %v3142, %v3134
  %v3167 = vpack.c.b16 %v3143, %v3135
  %v3168 = vpack.c.b16 %v3144, %v3136
  %v3169 = vpack.c.b16 %v3153, %v3145
  %v3170 = vpack.c.b16 %v3154, %v3146
  %v3171 = vpack.c.b16 %v3155, %v3147
  %v3172 = vpack.c.b16 %v3156, %v3148
  %v3173 = vpack.c.b16 %v3157, %v3149
  %v3174 = vpack.c.b16 %v3158, %v3150
  %v3175 = vpack.c.b16 %v3159, %v3151
  %v3176 = vpack.c.b16 %v3160, %v3152
  %v3194 = vsel %vm1428, %v3081, 0
  %v3197 = vsel %vm1428, %v3082, 0
  %v3200 = vsel %vm1428, %v3083, 0
  %v3203 = vsel %vm1428, %v3084, 0
  %v3206 = vsel %vm1428, %v3085, 0
  %v3209 = vsel %vm1428, %v3086, 0
  %v3212 = vsel %vm1428, %v3087, 0
  %v3215 = vsel %vm1428, %v3088, 0
  %v3218 = vsel %vm1428, %v3089, 0
  %v3221 = vsel %vm1428, %v3090, 0
  %v3224 = vsel %vm1428, %v3091, 0
  %v3227 = vsel %vm1428, %v3092, 0
  %v3230 = vsel %vm1428, %v3093, 0
  %v3233 = vsel %vm1428, %v3094, 0
  %v3236 = vsel %vm1428, %v3095, 0
  %v3239 = vsel %vm1428, %v3096, 0
  %v3242 = vsel %vm1428, %v3097, 0
  %v3245 = vsel %vm1428, %v3098, 0
  %v3248 = vsel %vm1428, %v3099, 0
  %v3251 = vsel %vm1428, %v3100, 0
  %v3254 = vsel %vm1428, %v3101, 0
  %v3257 = vsel %vm1428, %v3102, 0
  %v3260 = vsel %vm1428, %v3103, 0
  %v3263 = vsel %vm1428, %v3104, 0
  %v3266 = vsel %vm1428, %v3105, 0
  %v3269 = vsel %vm1428, %v3106, 0
  %v3272 = vsel %vm1428, %v3107, 0
  %v3275 = vsel %vm1428, %v3108, 0
  %v3278 = vsel %vm1428, %v3109, 0
  %v3281 = vsel %vm1428, %v3110, 0
  %v3284 = vsel %vm1428, %v3111, 0
  %v3287 = vsel %vm1428, %v3112, 0
  %3289 = vmatprep.subr.bf16.mxu0 %v3162
  %3290 = vmatpush1.bf16.msra.mxu0 %v3161
  %3291 = vmatprep.subr.bf16.mxu0 %v3170
  %3292 = vmatpush1.bf16.msra.mxu0 %v3169
  %3293 = vmatprep.subr.bf16.mxu0 0
  %3294 = vmatpush1.bf16.msra.mxu0 0
  %3295 = vmatprep.subr.bf16.mxu0 0
  %3296 = vmatpush1.bf16.msra.mxu0 0
  %3297 = vmatprep.subr.bf16.mxu0 0
  %3298 = vmatpush1.bf16.msra.mxu0 0
  %3299 = vmatprep.subr.bf16.mxu0 0
  %3300 = vmatpush1.bf16.msra.mxu0 0
  %3301 = vmatprep.subr.bf16.mxu0 0
  %3302 = vmatpush1.bf16.msra.mxu0 0
  %3303 = vmatprep.subr.bf16.mxu0 0
  %3304 = vmatpush1.bf16.msra.mxu0 0
  %3305 = vmatprep.subr.bf16.mxu0 0
  %3306 = vmatpush1.bf16.msra.mxu0 0
  %3307 = vmatprep.subr.bf16.mxu0 0
  %3308 = vmatpush1.bf16.msra.mxu0 0
  %3309 = vmatprep.subr.bf16.mxu0 0
  %3310 = vmatpush1.bf16.msra.mxu0 0
  %3311 = vmatprep.subr.bf16.mxu0 0
  %3312 = vmatpush1.bf16.msra.mxu0 0
  %3313 = vmatprep.subr.bf16.mxu0 0
  %3314 = vmatpush1.bf16.msra.mxu0 0
  %3315 = vmatprep.subr.bf16.mxu0 0
  %3316 = vmatpush1.bf16.msra.mxu0 0
  %3317 = vmatprep.subr.bf16.mxu0 0
  %3318 = vmatpush1.bf16.msra.mxu0 0
  %3319 = vmatprep.subr.bf16.mxu0 0
  %3320 = vmatpush1.bf16.msra.mxu0 0
  %3321 = vmatprep.mubr.bf16.mxu0 0
  %3322 = vmatmul.mubr.bf16.gmra.mrb[0].mxu0 %v3194
  %v3323 = vpop.f32.mrb[0].mxu0
  %v3324 = vadd.f32 0.0, %v3323
  %v3325 = vpop.f32.mrb[0].mxu0
  %v3326 = vadd.f32 0.0, %v3325
  %v3327 = vpop.f32.mrb[0].mxu0
  %v3328 = vadd.f32 0.0, %v3327
  %v3329 = vpop.f32.mrb[0].mxu0
  %v3330 = vadd.f32 0.0, %v3329
  %3331 = vmatprep.mubr.bf16.mxu0 0
  %3332 = vmatmul.mubr.bf16.gmra.mrb[0].mxu0 %v3197
  %v3333 = vpop.f32.mrb[0].mxu0
  %v3334 = vadd.f32 0.0, %v3333
  %v3335 = vpop.f32.mrb[0].mxu0
  %v3336 = vadd.f32 0.0, %v3335
  %v3337 = vpop.f32.mrb[0].mxu0
  %v3338 = vadd.f32 0.0, %v3337
  %v3339 = vpop.f32.mrb[0].mxu0
  %v3340 = vadd.f32 0.0, %v3339
  %3341 = vmatprep.mubr.bf16.mxu0 0
  %3342 = vmatmul.mubr.bf16.gmra.mrb[0].mxu0 %v3200
  %v3343 = vpop.f32.mrb[0].mxu0
  %v3344 = vadd.f32 0.0, %v3343
  %v3345 = vpop.f32.mrb[0].mxu0
  %v3346 = vadd.f32 0.0, %v3345
  %v3347 = vpop.f32.mrb[0].mxu0
  %v3348 = vadd.f32 0.0, %v3347
  %v3349 = vpop.f32.mrb[0].mxu0
  %v3350 = vadd.f32 0.0, %v3349
  %3351 = vmatprep.mubr.bf16.mxu0 0
  %3352 = vmatmul.mubr.bf16.gmra.mrb[0].mxu0 %v3203
  %v3353 = vpop.f32.mrb[0].mxu0
  %v3354 = vadd.f32 0.0, %v3353
  %v3355 = vpop.f32.mrb[0].mxu0
  %v3356 = vadd.f32 0.0, %v3355
  %v3357 = vpop.f32.mrb[0].mxu0
  %v3358 = vadd.f32 0.0, %v3357
  %v3359 = vpop.f32.mrb[0].mxu0
  %v3360 = vadd.f32 0.0, %v3359
  %3361 = vmatprep.mubr.bf16.mxu0 0
  %3362 = vmatmul.mubr.bf16.gmra.mrb[0].mxu0 %v3206
  %v3363 = vpop.f32.mrb[0].mxu0
  %v3364 = vadd.f32 0.0, %v3363
  %v3365 = vpop.f32.mrb[0].mxu0
  %v3366 = vadd.f32 0.0, %v3365
  %v3367 = vpop.f32.mrb[0].mxu0
  %v3368 = vadd.f32 0.0, %v3367
  %v3369 = vpop.f32.mrb[0].mxu0
  %v3370 = vadd.f32 0.0, %v3369
  %3371 = vmatprep.mubr.bf16.mxu0 0
  %3372 = vmatmul.mubr.bf16.gmra.mrb[0].mxu0 %v3209
  %v3373 = vpop.f32.mrb[0].mxu0
  %v3374 = vadd.f32 0.0, %v3373
  %v3375 = vpop.f32.mrb[0].mxu0
  %v3376 = vadd.f32 0.0, %v3375
  %v3377 = vpop.f32.mrb[0].mxu0
  %v3378 = vadd.f32 0.0, %v3377
  %v3379 = vpop.f32.mrb[0].mxu0
  %v3380 = vadd.f32 0.0, %v3379
  %3381 = vmatprep.mubr.bf16.mxu0 0
  %3382 = vmatmul.mubr.bf16.gmra.mrb[0].mxu0 %v3212
  %v3383 = vpop.f32.mrb[0].mxu0
  %v3384 = vadd.f32 0.0, %v3383
  %v3385 = vpop.f32.mrb[0].mxu0
  %v3386 = vadd.f32 0.0, %v3385
  %v3387 = vpop.f32.mrb[0].mxu0
  %v3388 = vadd.f32 0.0, %v3387
  %v3389 = vpop.f32.mrb[0].mxu0
  %v3390 = vadd.f32 0.0, %v3389
  %3391 = vmatprep.mubr.bf16.mxu0 0
  %3392 = vmatmul.mubr.bf16.gmra.mrb[0].mxu0 %v3215
  %v3393 = vpop.f32.mrb[0].mxu0
  %v3394 = vadd.f32 0.0, %v3393
  %v3395 = vpop.f32.mrb[0].mxu0
  %v3396 = vadd.f32 0.0, %v3395
  %v3397 = vpop.f32.mrb[0].mxu0
  %v3398 = vadd.f32 0.0, %v3397
  %v3399 = vpop.f32.mrb[0].mxu0
  %v3400 = vadd.f32 0.0, %v3399
  %3401 = vmatprep.mubr.bf16.mxu0 0
  %3402 = vmatmul.mubr.bf16.gmra.mrb[0].mxu0 %v3218
  %v3403 = vpop.f32.mrb[0].mxu0
  %v3404 = vadd.f32 0.0, %v3403
  %v3405 = vpop.f32.mrb[0].mxu0
  %v3406 = vadd.f32 0.0, %v3405
  %v3407 = vpop.f32.mrb[0].mxu0
  %v3408 = vadd.f32 0.0, %v3407
  %v3409 = vpop.f32.mrb[0].mxu0
  %v3410 = vadd.f32 0.0, %v3409
  %3411 = vmatprep.mubr.bf16.mxu0 0
  %3412 = vmatmul.mubr.bf16.gmra.mrb[0].mxu0 %v3221
  %v3413 = vpop.f32.mrb[0].mxu0
  %v3414 = vadd.f32 0.0, %v3413
  %v3415 = vpop.f32.mrb[0].mxu0
  %v3416 = vadd.f32 0.0, %v3415
  %v3417 = vpop.f32.mrb[0].mxu0
  %v3418 = vadd.f32 0.0, %v3417
  %v3419 = vpop.f32.mrb[0].mxu0
  %v3420 = vadd.f32 0.0, %v3419
  %3421 = vmatprep.mubr.bf16.mxu0 0
  %3422 = vmatmul.mubr.bf16.gmra.mrb[0].mxu0 %v3224
  %v3423 = vpop.f32.mrb[0].mxu0
  %v3424 = vadd.f32 0.0, %v3423
  %v3425 = vpop.f32.mrb[0].mxu0
  %v3426 = vadd.f32 0.0, %v3425
  %v3427 = vpop.f32.mrb[0].mxu0
  %v3428 = vadd.f32 0.0, %v3427
  %v3429 = vpop.f32.mrb[0].mxu0
  %v3430 = vadd.f32 0.0, %v3429
  %3431 = vmatprep.mubr.bf16.mxu0 0
  %3432 = vmatmul.mubr.bf16.gmra.mrb[0].mxu0 %v3227
  %v3433 = vpop.f32.mrb[0].mxu0
  %v3434 = vadd.f32 0.0, %v3433
  %v3435 = vpop.f32.mrb[0].mxu0
  %v3436 = vadd.f32 0.0, %v3435
  %v3437 = vpop.f32.mrb[0].mxu0
  %v3438 = vadd.f32 0.0, %v3437
  %v3439 = vpop.f32.mrb[0].mxu0
  %v3440 = vadd.f32 0.0, %v3439
  %3441 = vmatprep.mubr.bf16.mxu0 0
  %3442 = vmatmul.mubr.bf16.gmra.mrb[0].mxu0 %v3230
  %v3443 = vpop.f32.mrb[0].mxu0
  %v3444 = vadd.f32 0.0, %v3443
  %v3445 = vpop.f32.mrb[0].mxu0
  %v3446 = vadd.f32 0.0, %v3445
  %v3447 = vpop.f32.mrb[0].mxu0
  %v3448 = vadd.f32 0.0, %v3447
  %v3449 = vpop.f32.mrb[0].mxu0
  %v3450 = vadd.f32 0.0, %v3449
  %3451 = vmatprep.mubr.bf16.mxu0 0
  %3452 = vmatmul.mubr.bf16.gmra.mrb[0].mxu0 %v3233
  %v3453 = vpop.f32.mrb[0].mxu0
  %v3454 = vadd.f32 0.0, %v3453
  %v3455 = vpop.f32.mrb[0].mxu0
  %v3456 = vadd.f32 0.0, %v3455
  %v3457 = vpop.f32.mrb[0].mxu0
  %v3458 = vadd.f32 0.0, %v3457
  %v3459 = vpop.f32.mrb[0].mxu0
  %v3460 = vadd.f32 0.0, %v3459
  %3461 = vmatprep.mubr.bf16.mxu0 0
  %3462 = vmatmul.mubr.bf16.gmra.mrb[0].mxu0 %v3236
  %v3463 = vpop.f32.mrb[0].mxu0
  %v3464 = vadd.f32 0.0, %v3463
  %v3465 = vpop.f32.mrb[0].mxu0
  %v3466 = vadd.f32 0.0, %v3465
  %v3467 = vpop.f32.mrb[0].mxu0
  %v3468 = vadd.f32 0.0, %v3467
  %v3469 = vpop.f32.mrb[0].mxu0
  %v3470 = vadd.f32 0.0, %v3469
  %3471 = vmatprep.mubr.bf16.mxu0 0
  %3472 = vmatmul.mubr.bf16.gmra.mrb[0].mxu0 %v3239
  %v3473 = vpop.f32.mrb[0].mxu0
  %v3474 = vadd.f32 0.0, %v3473
  %v3475 = vpop.f32.mrb[0].mxu0
  %v3476 = vadd.f32 0.0, %v3475
  %v3477 = vpop.f32.mrb[0].mxu0
  %v3478 = vadd.f32 0.0, %v3477
  %v3479 = vpop.f32.mrb[0].mxu0
  %v3480 = vadd.f32 0.0, %v3479
  %3481 = vmatprep.mubr.bf16.mxu0 0
  %3482 = vmatmul.mubr.bf16.gmra.mrb[0].mxu0 %v3242
  %v3483 = vpop.f32.mrb[0].mxu0
  %v3484 = vadd.f32 0.0, %v3483
  %v3485 = vpop.f32.mrb[0].mxu0
  %v3486 = vadd.f32 0.0, %v3485
  %v3487 = vpop.f32.mrb[0].mxu0
  %v3488 = vadd.f32 0.0, %v3487
  %v3489 = vpop.f32.mrb[0].mxu0
  %v3490 = vadd.f32 0.0, %v3489
  %3491 = vmatprep.mubr.bf16.mxu0 0
  %3492 = vmatmul.mubr.bf16.gmra.mrb[0].mxu0 %v3245
  %v3493 = vpop.f32.mrb[0].mxu0
  %v3494 = vadd.f32 0.0, %v3493
  %v3495 = vpop.f32.mrb[0].mxu0
  %v3496 = vadd.f32 0.0, %v3495
  %v3497 = vpop.f32.mrb[0].mxu0
  %v3498 = vadd.f32 0.0, %v3497
  %v3499 = vpop.f32.mrb[0].mxu0
  %v3500 = vadd.f32 0.0, %v3499
  %3501 = vmatprep.mubr.bf16.mxu0 0
  %3502 = vmatmul.mubr.bf16.gmra.mrb[0].mxu0 %v3248
  %v3503 = vpop.f32.mrb[0].mxu0
  %v3504 = vadd.f32 0.0, %v3503
  %v3505 = vpop.f32.mrb[0].mxu0
  %v3506 = vadd.f32 0.0, %v3505
  %v3507 = vpop.f32.mrb[0].mxu0
  %v3508 = vadd.f32 0.0, %v3507
  %v3509 = vpop.f32.mrb[0].mxu0
  %v3510 = vadd.f32 0.0, %v3509
  %3511 = vmatprep.mubr.bf16.mxu0 0
  %3512 = vmatmul.mubr.bf16.gmra.mrb[0].mxu0 %v3251
  %v3513 = vpop.f32.mrb[0].mxu0
  %v3514 = vadd.f32 0.0, %v3513
  %v3515 = vpop.f32.mrb[0].mxu0
  %v3516 = vadd.f32 0.0, %v3515
  %v3517 = vpop.f32.mrb[0].mxu0
  %v3518 = vadd.f32 0.0, %v3517
  %v3519 = vpop.f32.mrb[0].mxu0
  %v3520 = vadd.f32 0.0, %v3519
  %3521 = vmatprep.mubr.bf16.mxu0 0
  %3522 = vmatmul.mubr.bf16.gmra.mrb[0].mxu0 %v3254
  %v3523 = vpop.f32.mrb[0].mxu0
  %v3524 = vadd.f32 0.0, %v3523
  %v3525 = vpop.f32.mrb[0].mxu0
  %v3526 = vadd.f32 0.0, %v3525
  %v3527 = vpop.f32.mrb[0].mxu0
  %v3528 = vadd.f32 0.0, %v3527
  %v3529 = vpop.f32.mrb[0].mxu0
  %v3530 = vadd.f32 0.0, %v3529
  %3531 = vmatprep.mubr.bf16.mxu0 0
  %3532 = vmatmul.mubr.bf16.gmra.mrb[0].mxu0 %v3257
  %v3533 = vpop.f32.mrb[0].mxu0
  %v3534 = vadd.f32 0.0, %v3533
  %v3535 = vpop.f32.mrb[0].mxu0
  %v3536 = vadd.f32 0.0, %v3535
  %v3537 = vpop.f32.mrb[0].mxu0
  %v3538 = vadd.f32 0.0, %v3537
  %v3539 = vpop.f32.mrb[0].mxu0
  %v3540 = vadd.f32 0.0, %v3539
  %3541 = vmatprep.mubr.bf16.mxu0 0
  %3542 = vmatmul.mubr.bf16.gmra.mrb[0].mxu0 %v3260
  %v3543 = vpop.f32.mrb[0].mxu0
  %v3544 = vadd.f32 0.0, %v3543
  %v3545 = vpop.f32.mrb[0].mxu0
  %v3546 = vadd.f32 0.0, %v3545
  %v3547 = vpop.f32.mrb[0].mxu0
  %v3548 = vadd.f32 0.0, %v3547
  %v3549 = vpop.f32.mrb[0].mxu0
  %v3550 = vadd.f32 0.0, %v3549
  %3551 = vmatprep.mubr.bf16.mxu0 0
  %3552 = vmatmul.mubr.bf16.gmra.mrb[0].mxu0 %v3263
  %v3553 = vpop.f32.mrb[0].mxu0
  %v3554 = vadd.f32 0.0, %v3553
  %v3555 = vpop.f32.mrb[0].mxu0
  %v3556 = vadd.f32 0.0, %v3555
  %v3557 = vpop.f32.mrb[0].mxu0
  %v3558 = vadd.f32 0.0, %v3557
  %v3559 = vpop.f32.mrb[0].mxu0
  %v3560 = vadd.f32 0.0, %v3559
  %3561 = vmatprep.mubr.bf16.mxu0 0
  %3562 = vmatmul.mubr.bf16.gmra.mrb[0].mxu0 %v3266
  %v3563 = vpop.f32.mrb[0].mxu0
  %v3564 = vadd.f32 0.0, %v3563
  %v3565 = vpop.f32.mrb[0].mxu0
  %v3566 = vadd.f32 0.0, %v3565
  %v3567 = vpop.f32.mrb[0].mxu0
  %v3568 = vadd.f32 0.0, %v3567
  %v3569 = vpop.f32.mrb[0].mxu0
  %v3570 = vadd.f32 0.0, %v3569
  %3571 = vmatprep.mubr.bf16.mxu0 0
  %3572 = vmatmul.mubr.bf16.gmra.mrb[0].mxu0 %v3269
  %v3573 = vpop.f32.mrb[0].mxu0
  %v3574 = vadd.f32 0.0, %v3573
  %v3575 = vpop.f32.mrb[0].mxu0
  %v3576 = vadd.f32 0.0, %v3575
  %v3577 = vpop.f32.mrb[0].mxu0
  %v3578 = vadd.f32 0.0, %v3577
  %v3579 = vpop.f32.mrb[0].mxu0
  %v3580 = vadd.f32 0.0, %v3579
  %3581 = vmatprep.mubr.bf16.mxu0 0
  %3582 = vmatmul.mubr.bf16.gmra.mrb[0].mxu0 %v3272
  %v3583 = vpop.f32.mrb[0].mxu0
  %v3584 = vadd.f32 0.0, %v3583
  %v3585 = vpop.f32.mrb[0].mxu0
  %v3586 = vadd.f32 0.0, %v3585
  %v3587 = vpop.f32.mrb[0].mxu0
  %v3588 = vadd.f32 0.0, %v3587
  %v3589 = vpop.f32.mrb[0].mxu0
  %v3590 = vadd.f32 0.0, %v3589
  %3591 = vmatprep.mubr.bf16.mxu0 0
  %3592 = vmatmul.mubr.bf16.gmra.mrb[0].mxu0 %v3275
  %v3593 = vpop.f32.mrb[0].mxu0
  %v3594 = vadd.f32 0.0, %v3593
  %v3595 = vpop.f32.mrb[0].mxu0
  %v3596 = vadd.f32 0.0, %v3595
  %v3597 = vpop.f32.mrb[0].mxu0
  %v3598 = vadd.f32 0.0, %v3597
  %v3599 = vpop.f32.mrb[0].mxu0
  %v3600 = vadd.f32 0.0, %v3599
  %3601 = vmatprep.mubr.bf16.mxu0 0
  %3602 = vmatmul.mubr.bf16.gmra.mrb[0].mxu0 %v3278
  %v3603 = vpop.f32.mrb[0].mxu0
  %v3604 = vadd.f32 0.0, %v3603
  %v3605 = vpop.f32.mrb[0].mxu0
  %v3606 = vadd.f32 0.0, %v3605
  %v3607 = vpop.f32.mrb[0].mxu0
  %v3608 = vadd.f32 0.0, %v3607
  %v3609 = vpop.f32.mrb[0].mxu0
  %v3610 = vadd.f32 0.0, %v3609
  %3611 = vmatprep.mubr.bf16.mxu0 0
  %3612 = vmatmul.mubr.bf16.gmra.mrb[0].mxu0 %v3281
  %v3613 = vpop.f32.mrb[0].mxu0
  %v3614 = vadd.f32 0.0, %v3613
  %v3615 = vpop.f32.mrb[0].mxu0
  %v3616 = vadd.f32 0.0, %v3615
  %v3617 = vpop.f32.mrb[0].mxu0
  %v3618 = vadd.f32 0.0, %v3617
  %v3619 = vpop.f32.mrb[0].mxu0
  %v3620 = vadd.f32 0.0, %v3619
  %3621 = vmatprep.mubr.bf16.mxu0 0
  %3622 = vmatmul.mubr.bf16.gmra.mrb[0].mxu0 %v3284
  %v3623 = vpop.f32.mrb[0].mxu0
  %v3624 = vadd.f32 0.0, %v3623
  %v3625 = vpop.f32.mrb[0].mxu0
  %v3626 = vadd.f32 0.0, %v3625
  %v3627 = vpop.f32.mrb[0].mxu0
  %v3628 = vadd.f32 0.0, %v3627
  %v3629 = vpop.f32.mrb[0].mxu0
  %v3630 = vadd.f32 0.0, %v3629
  %3631 = vmatprep.mubr.bf16.mxu0 0
  %3632 = vmatmul.mubr.bf16.gmra.mrb[0].mxu0 %v3287
  %v3633 = vpop.f32.mrb[0].mxu0
  %v3634 = vadd.f32 0.0, %v3633
  %v3635 = vpop.f32.mrb[0].mxu0
  %v3636 = vadd.f32 0.0, %v3635
  %v3637 = vpop.f32.mrb[0].mxu0
  %v3638 = vadd.f32 0.0, %v3637
  %v3639 = vpop.f32.mrb[0].mxu0
  %v3640 = vadd.f32 0.0, %v3639
  %3641 = vdwg.mxu0
  %3642 = vmatprep.subr.bf16.mxu0 %v3164
  %3643 = vmatpush1.bf16.msra.mxu0 %v3163
  %3644 = vmatprep.subr.bf16.mxu0 %v3172
  %3645 = vmatpush1.bf16.msra.mxu0 %v3171
  %3646 = vmatprep.subr.bf16.mxu0 0
  %3647 = vmatpush1.bf16.msra.mxu0 0
  %3648 = vmatprep.subr.bf16.mxu0 0
  %3649 = vmatpush1.bf16.msra.mxu0 0
  %3650 = vmatprep.subr.bf16.mxu0 0
  %3651 = vmatpush1.bf16.msra.mxu0 0
  %3652 = vmatprep.subr.bf16.mxu0 0
  %3653 = vmatpush1.bf16.msra.mxu0 0
  %3654 = vmatprep.subr.bf16.mxu0 0
  %3655 = vmatpush1.bf16.msra.mxu0 0
  %3656 = vmatprep.subr.bf16.mxu0 0
  %3657 = vmatpush1.bf16.msra.mxu0 0
  %3658 = vmatprep.subr.bf16.mxu0 0
  %3659 = vmatpush1.bf16.msra.mxu0 0
  %3660 = vmatprep.subr.bf16.mxu0 0
  %3661 = vmatpush1.bf16.msra.mxu0 0
  %3662 = vmatprep.subr.bf16.mxu0 0
  %3663 = vmatpush1.bf16.msra.mxu0 0
  %3664 = vmatprep.subr.bf16.mxu0 0
  %3665 = vmatpush1.bf16.msra.mxu0 0
  %3666 = vmatprep.subr.bf16.mxu0 0
  %3667 = vmatpush1.bf16.msra.mxu0 0
  %3668 = vmatprep.subr.bf16.mxu0 0
  %3669 = vmatpush1.bf16.msra.mxu0 0
  %3670 = vmatprep.subr.bf16.mxu0 0
  %3671 = vmatpush1.bf16.msra.mxu0 0
  %3672 = vmatprep.subr.bf16.mxu0 0
  %3673 = vmatpush1.bf16.msra.mxu0 0
  %3674 = vmatprep.mubr.bf16.mxu0 0
  %3675 = vmatmul.mubr.bf16.gmra.mrb[0].mxu0 %v3194
  %v3676 = vpop.f32.mrb[0].mxu0
  %v3677 = vadd.f32 0.0, %v3676
  %v3678 = vpop.f32.mrb[0].mxu0
  %v3679 = vadd.f32 0.0, %v3678
  %v3680 = vpop.f32.mrb[0].mxu0
  %v3681 = vadd.f32 0.0, %v3680
  %v3682 = vpop.f32.mrb[0].mxu0
  %v3683 = vadd.f32 0.0, %v3682
  %3684 = vmatprep.mubr.bf16.mxu0 0
  %3685 = vmatmul.mubr.bf16.gmra.mrb[0].mxu0 %v3197
  %v3686 = vpop.f32.mrb[0].mxu0
  %v3687 = vadd.f32 0.0, %v3686
  %v3688 = vpop.f32.mrb[0].mxu0
  %v3689 = vadd.f32 0.0, %v3688
  %v3690 = vpop.f32.mrb[0].mxu0
  %v3691 = vadd.f32 0.0, %v3690
  %v3692 = vpop.f32.mrb[0].mxu0
  %v3693 = vadd.f32 0.0, %v3692
  %3694 = vmatprep.mubr.bf16.mxu0 0
  %3695 = vmatmul.mubr.bf16.gmra.mrb[0].mxu0 %v3200
  %v3696 = vpop.f32.mrb[0].mxu0
  %v3697 = vadd.f32 0.0, %v3696
  %v3698 = vpop.f32.mrb[0].mxu0
  %v3699 = vadd.f32 0.0, %v3698
  %v3700 = vpop.f32.mrb[0].mxu0
  %v3701 = vadd.f32 0.0, %v3700
  %v3702 = vpop.f32.mrb[0].mxu0
  %v3703 = vadd.f32 0.0, %v3702
  %3704 = vmatprep.mubr.bf16.mxu0 0
  %3705 = vmatmul.mubr.bf16.gmra.mrb[0].mxu0 %v3203
  %v3706 = vpop.f32.mrb[0].mxu0
  %v3707 = vadd.f32 0.0, %v3706
  %v3708 = vpop.f32.mrb[0].mxu0
  %v3709 = vadd.f32 0.0, %v3708
  %v3710 = vpop.f32.mrb[0].mxu0
  %v3711 = vadd.f32 0.0, %v3710
  %v3712 = vpop.f32.mrb[0].mxu0
  %v3713 = vadd.f32 0.0, %v3712
  %3714 = vmatprep.mubr.bf16.mxu0 0
  %3715 = vmatmul.mubr.bf16.gmra.mrb[0].mxu0 %v3206
  %v3716 = vpop.f32.mrb[0].mxu0
  %v3717 = vadd.f32 0.0, %v3716
  %v3718 = vpop.f32.mrb[0].mxu0
  %v3719 = vadd.f32 0.0, %v3718
  %v3720 = vpop.f32.mrb[0].mxu0
  %v3721 = vadd.f32 0.0, %v3720
  %v3722 = vpop.f32.mrb[0].mxu0
  %v3723 = vadd.f32 0.0, %v3722
  %3724 = vmatprep.mubr.bf16.mxu0 0
  %3725 = vmatmul.mubr.bf16.gmra.mrb[0].mxu0 %v3209
  %v3726 = vpop.f32.mrb[0].mxu0
  %v3727 = vadd.f32 0.0, %v3726
  %v3728 = vpop.f32.mrb[0].mxu0
  %v3729 = vadd.f32 0.0, %v3728
  %v3730 = vpop.f32.mrb[0].mxu0
  %v3731 = vadd.f32 0.0, %v3730
  %v3732 = vpop.f32.mrb[0].mxu0
  %v3733 = vadd.f32 0.0, %v3732
  %3734 = vmatprep.mubr.bf16.mxu0 0
  %3735 = vmatmul.mubr.bf16.gmra.mrb[0].mxu0 %v3212
  %v3736 = vpop.f32.mrb[0].mxu0
  %v3737 = vadd.f32 0.0, %v3736
  %v3738 = vpop.f32.mrb[0].mxu0
  %v3739 = vadd.f32 0.0, %v3738
  %v3740 = vpop.f32.mrb[0].mxu0
  %v3741 = vadd.f32 0.0, %v3740
  %v3742 = vpop.f32.mrb[0].mxu0
  %v3743 = vadd.f32 0.0, %v3742
  %3744 = vmatprep.mubr.bf16.mxu0 0
  %3745 = vmatmul.mubr.bf16.gmra.mrb[0].mxu0 %v3215
  %v3746 = vpop.f32.mrb[0].mxu0
  %v3747 = vadd.f32 0.0, %v3746
  %v3748 = vpop.f32.mrb[0].mxu0
  %v3749 = vadd.f32 0.0, %v3748
  %v3750 = vpop.f32.mrb[0].mxu0
  %v3751 = vadd.f32 0.0, %v3750
  %v3752 = vpop.f32.mrb[0].mxu0
  %v3753 = vadd.f32 0.0, %v3752
  %3754 = vmatprep.mubr.bf16.mxu0 0
  %3755 = vmatmul.mubr.bf16.gmra.mrb[0].mxu0 %v3218
  %v3756 = vpop.f32.mrb[0].mxu0
  %v3757 = vadd.f32 0.0, %v3756
  %v3758 = vpop.f32.mrb[0].mxu0
  %v3759 = vadd.f32 0.0, %v3758
  %v3760 = vpop.f32.mrb[0].mxu0
  %v3761 = vadd.f32 0.0, %v3760
  %v3762 = vpop.f32.mrb[0].mxu0
  %v3763 = vadd.f32 0.0, %v3762
  %3764 = vmatprep.mubr.bf16.mxu0 0
  %3765 = vmatmul.mubr.bf16.gmra.mrb[0].mxu0 %v3221
  %v3766 = vpop.f32.mrb[0].mxu0
  %v3767 = vadd.f32 0.0, %v3766
  %v3768 = vpop.f32.mrb[0].mxu0
  %v3769 = vadd.f32 0.0, %v3768
  %v3770 = vpop.f32.mrb[0].mxu0
  %v3771 = vadd.f32 0.0, %v3770
  %v3772 = vpop.f32.mrb[0].mxu0
  %v3773 = vadd.f32 0.0, %v3772
  %3774 = vmatprep.mubr.bf16.mxu0 0
  %3775 = vmatmul.mubr.bf16.gmra.mrb[0].mxu0 %v3224
  %v3776 = vpop.f32.mrb[0].mxu0
  %v3777 = vadd.f32 0.0, %v3776
  %v3778 = vpop.f32.mrb[0].mxu0
  %v3779 = vadd.f32 0.0, %v3778
  %v3780 = vpop.f32.mrb[0].mxu0
  %v3781 = vadd.f32 0.0, %v3780
  %v3782 = vpop.f32.mrb[0].mxu0
  %v3783 = vadd.f32 0.0, %v3782
  %3784 = vmatprep.mubr.bf16.mxu0 0
  %3785 = vmatmul.mubr.bf16.gmra.mrb[0].mxu0 %v3227
  %v3786 = vpop.f32.mrb[0].mxu0
  %v3787 = vadd.f32 0.0, %v3786
  %v3788 = vpop.f32.mrb[0].mxu0
  %v3789 = vadd.f32 0.0, %v3788
  %v3790 = vpop.f32.mrb[0].mxu0
  %v3791 = vadd.f32 0.0, %v3790
  %v3792 = vpop.f32.mrb[0].mxu0
  %v3793 = vadd.f32 0.0, %v3792
  %3794 = vmatprep.mubr.bf16.mxu0 0
  %3795 = vmatmul.mubr.bf16.gmra.mrb[0].mxu0 %v3230
  %v3796 = vpop.f32.mrb[0].mxu0
  %v3797 = vadd.f32 0.0, %v3796
  %v3798 = vpop.f32.mrb[0].mxu0
  %v3799 = vadd.f32 0.0, %v3798
  %v3800 = vpop.f32.mrb[0].mxu0
  %v3801 = vadd.f32 0.0, %v3800
  %v3802 = vpop.f32.mrb[0].mxu0
  %v3803 = vadd.f32 0.0, %v3802
  %3804 = vmatprep.mubr.bf16.mxu0 0
  %3805 = vmatmul.mubr.bf16.gmra.mrb[0].mxu0 %v3233
  %v3806 = vpop.f32.mrb[0].mxu0
  %v3807 = vadd.f32 0.0, %v3806
  %v3808 = vpop.f32.mrb[0].mxu0
  %v3809 = vadd.f32 0.0, %v3808
  %v3810 = vpop.f32.mrb[0].mxu0
  %v3811 = vadd.f32 0.0, %v3810
  %v3812 = vpop.f32.mrb[0].mxu0
  %v3813 = vadd.f32 0.0, %v3812
  %3814 = vmatprep.mubr.bf16.mxu0 0
  %3815 = vmatmul.mubr.bf16.gmra.mrb[0].mxu0 %v3236
  %v3816 = vpop.f32.mrb[0].mxu0
  %v3817 = vadd.f32 0.0, %v3816
  %v3818 = vpop.f32.mrb[0].mxu0
  %v3819 = vadd.f32 0.0, %v3818
  %v3820 = vpop.f32.mrb[0].mxu0
  %v3821 = vadd.f32 0.0, %v3820
  %v3822 = vpop.f32.mrb[0].mxu0
  %v3823 = vadd.f32 0.0, %v3822
  %3824 = vmatprep.mubr.bf16.mxu0 0
  %3825 = vmatmul.mubr.bf16.gmra.mrb[0].mxu0 %v3239
  %v3826 = vpop.f32.mrb[0].mxu0
  %v3827 = vadd.f32 0.0, %v3826
  %v3828 = vpop.f32.mrb[0].mxu0
  %v3829 = vadd.f32 0.0, %v3828
  %v3830 = vpop.f32.mrb[0].mxu0
  %v3831 = vadd.f32 0.0, %v3830
  %v3832 = vpop.f32.mrb[0].mxu0
  %v3833 = vadd.f32 0.0, %v3832
  %3834 = vmatprep.mubr.bf16.mxu0 0
  %3835 = vmatmul.mubr.bf16.gmra.mrb[0].mxu0 %v3242
  %v3836 = vpop.f32.mrb[0].mxu0
  %v3837 = vadd.f32 0.0, %v3836
  %v3838 = vpop.f32.mrb[0].mxu0
  %v3839 = vadd.f32 0.0, %v3838
  %v3840 = vpop.f32.mrb[0].mxu0
  %v3841 = vadd.f32 0.0, %v3840
  %v3842 = vpop.f32.mrb[0].mxu0
  %v3843 = vadd.f32 0.0, %v3842
  %3844 = vmatprep.mubr.bf16.mxu0 0
  %3845 = vmatmul.mubr.bf16.gmra.mrb[0].mxu0 %v3245
  %v3846 = vpop.f32.mrb[0].mxu0
  %v3847 = vadd.f32 0.0, %v3846
  %v3848 = vpop.f32.mrb[0].mxu0
  %v3849 = vadd.f32 0.0, %v3848
  %v3850 = vpop.f32.mrb[0].mxu0
  %v3851 = vadd.f32 0.0, %v3850
  %v3852 = vpop.f32.mrb[0].mxu0
  %v3853 = vadd.f32 0.0, %v3852
  %3854 = vmatprep.mubr.bf16.mxu0 0
  %3855 = vmatmul.mubr.bf16.gmra.mrb[0].mxu0 %v3248
  %v3856 = vpop.f32.mrb[0].mxu0
  %v3857 = vadd.f32 0.0, %v3856
  %v3858 = vpop.f32.mrb[0].mxu0
  %v3859 = vadd.f32 0.0, %v3858
  %v3860 = vpop.f32.mrb[0].mxu0
  %v3861 = vadd.f32 0.0, %v3860
  %v3862 = vpop.f32.mrb[0].mxu0
  %v3863 = vadd.f32 0.0, %v3862
  %3864 = vmatprep.mubr.bf16.mxu0 0
  %3865 = vmatmul.mubr.bf16.gmra.mrb[0].mxu0 %v3251
  %v3866 = vpop.f32.mrb[0].mxu0
  %v3867 = vadd.f32 0.0, %v3866
  %v3868 = vpop.f32.mrb[0].mxu0
  %v3869 = vadd.f32 0.0, %v3868
  %v3870 = vpop.f32.mrb[0].mxu0
  %v3871 = vadd.f32 0.0, %v3870
  %v3872 = vpop.f32.mrb[0].mxu0
  %v3873 = vadd.f32 0.0, %v3872
  %3874 = vmatprep.mubr.bf16.mxu0 0
  %3875 = vmatmul.mubr.bf16.gmra.mrb[0].mxu0 %v3254
  %v3876 = vpop.f32.mrb[0].mxu0
  %v3877 = vadd.f32 0.0, %v3876
  %v3878 = vpop.f32.mrb[0].mxu0
  %v3879 = vadd.f32 0.0, %v3878
  %v3880 = vpop.f32.mrb[0].mxu0
  %v3881 = vadd.f32 0.0, %v3880
  %v3882 = vpop.f32.mrb[0].mxu0
  %v3883 = vadd.f32 0.0, %v3882
  %3884 = vmatprep.mubr.bf16.mxu0 0
  %3885 = vmatmul.mubr.bf16.gmra.mrb[0].mxu0 %v3257
  %v3886 = vpop.f32.mrb[0].mxu0
  %v3887 = vadd.f32 0.0, %v3886
  %v3888 = vpop.f32.mrb[0].mxu0
  %v3889 = vadd.f32 0.0, %v3888
  %v3890 = vpop.f32.mrb[0].mxu0
  %v3891 = vadd.f32 0.0, %v3890
  %v3892 = vpop.f32.mrb[0].mxu0
  %v3893 = vadd.f32 0.0, %v3892
  %3894 = vmatprep.mubr.bf16.mxu0 0
  %3895 = vmatmul.mubr.bf16.gmra.mrb[0].mxu0 %v3260
  %v3896 = vpop.f32.mrb[0].mxu0
  %v3897 = vadd.f32 0.0, %v3896
  %v3898 = vpop.f32.mrb[0].mxu0
  %v3899 = vadd.f32 0.0, %v3898
  %v3900 = vpop.f32.mrb[0].mxu0
  %v3901 = vadd.f32 0.0, %v3900
  %v3902 = vpop.f32.mrb[0].mxu0
  %v3903 = vadd.f32 0.0, %v3902
  %3904 = vmatprep.mubr.bf16.mxu0 0
  %3905 = vmatmul.mubr.bf16.gmra.mrb[0].mxu0 %v3263
  %v3906 = vpop.f32.mrb[0].mxu0
  %v3907 = vadd.f32 0.0, %v3906
  %v3908 = vpop.f32.mrb[0].mxu0
  %v3909 = vadd.f32 0.0, %v3908
  %v3910 = vpop.f32.mrb[0].mxu0
  %v3911 = vadd.f32 0.0, %v3910
  %v3912 = vpop.f32.mrb[0].mxu0
  %v3913 = vadd.f32 0.0, %v3912
  %3914 = vmatprep.mubr.bf16.mxu0 0
  %3915 = vmatmul.mubr.bf16.gmra.mrb[0].mxu0 %v3266
  %v3916 = vpop.f32.mrb[0].mxu0
  %v3917 = vadd.f32 0.0, %v3916
  %v3918 = vpop.f32.mrb[0].mxu0
  %v3919 = vadd.f32 0.0, %v3918
  %v3920 = vpop.f32.mrb[0].mxu0
  %v3921 = vadd.f32 0.0, %v3920
  %v3922 = vpop.f32.mrb[0].mxu0
  %v3923 = vadd.f32 0.0, %v3922
  %3924 = vmatprep.mubr.bf16.mxu0 0
  %3925 = vmatmul.mubr.bf16.gmra.mrb[0].mxu0 %v3269
  %v3926 = vpop.f32.mrb[0].mxu0
  %v3927 = vadd.f32 0.0, %v3926
  %v3928 = vpop.f32.mrb[0].mxu0
  %v3929 = vadd.f32 0.0, %v3928
  %v3930 = vpop.f32.mrb[0].mxu0
  %v3931 = vadd.f32 0.0, %v3930
  %v3932 = vpop.f32.mrb[0].mxu0
  %v3933 = vadd.f32 0.0, %v3932
  %3934 = vmatprep.mubr.bf16.mxu0 0
  %3935 = vmatmul.mubr.bf16.gmra.mrb[0].mxu0 %v3272
  %v3936 = vpop.f32.mrb[0].mxu0
  %v3937 = vadd.f32 0.0, %v3936
  %v3938 = vpop.f32.mrb[0].mxu0
  %v3939 = vadd.f32 0.0, %v3938
  %v3940 = vpop.f32.mrb[0].mxu0
  %v3941 = vadd.f32 0.0, %v3940
  %v3942 = vpop.f32.mrb[0].mxu0
  %v3943 = vadd.f32 0.0, %v3942
  %3944 = vmatprep.mubr.bf16.mxu0 0
  %3945 = vmatmul.mubr.bf16.gmra.mrb[0].mxu0 %v3275
  %v3946 = vpop.f32.mrb[0].mxu0
  %v3947 = vadd.f32 0.0, %v3946
  %v3948 = vpop.f32.mrb[0].mxu0
  %v3949 = vadd.f32 0.0, %v3948
  %v3950 = vpop.f32.mrb[0].mxu0
  %v3951 = vadd.f32 0.0, %v3950
  %v3952 = vpop.f32.mrb[0].mxu0
  %v3953 = vadd.f32 0.0, %v3952
  %3954 = vmatprep.mubr.bf16.mxu0 0
  %3955 = vmatmul.mubr.bf16.gmra.mrb[0].mxu0 %v3278
  %v3956 = vpop.f32.mrb[0].mxu0
  %v3957 = vadd.f32 0.0, %v3956
  %v3958 = vpop.f32.mrb[0].mxu0
  %v3959 = vadd.f32 0.0, %v3958
  %v3960 = vpop.f32.mrb[0].mxu0
  %v3961 = vadd.f32 0.0, %v3960
  %v3962 = vpop.f32.mrb[0].mxu0
  %v3963 = vadd.f32 0.0, %v3962
  %3964 = vmatprep.mubr.bf16.mxu0 0
  %3965 = vmatmul.mubr.bf16.gmra.mrb[0].mxu0 %v3281
  %v3966 = vpop.f32.mrb[0].mxu0
  %v3967 = vadd.f32 0.0, %v3966
  %v3968 = vpop.f32.mrb[0].mxu0
  %v3969 = vadd.f32 0.0, %v3968
  %v3970 = vpop.f32.mrb[0].mxu0
  %v3971 = vadd.f32 0.0, %v3970
  %v3972 = vpop.f32.mrb[0].mxu0
  %v3973 = vadd.f32 0.0, %v3972
  %3974 = vmatprep.mubr.bf16.mxu0 0
  %3975 = vmatmul.mubr.bf16.gmra.mrb[0].mxu0 %v3284
  %v3976 = vpop.f32.mrb[0].mxu0
  %v3977 = vadd.f32 0.0, %v3976
  %v3978 = vpop.f32.mrb[0].mxu0
  %v3979 = vadd.f32 0.0, %v3978
  %v3980 = vpop.f32.mrb[0].mxu0
  %v3981 = vadd.f32 0.0, %v3980
  %v3982 = vpop.f32.mrb[0].mxu0
  %v3983 = vadd.f32 0.0, %v3982
  %3984 = vmatprep.mubr.bf16.mxu0 0
  %3985 = vmatmul.mubr.bf16.gmra.mrb[0].mxu0 %v3287
  %v3986 = vpop.f32.mrb[0].mxu0
  %v3987 = vadd.f32 0.0, %v3986
  %v3988 = vpop.f32.mrb[0].mxu0
  %v3989 = vadd.f32 0.0, %v3988
  %v3990 = vpop.f32.mrb[0].mxu0
  %v3991 = vadd.f32 0.0, %v3990
  %v3992 = vpop.f32.mrb[0].mxu0
  %v3993 = vadd.f32 0.0, %v3992
  %3994 = vdwg.mxu0
  %3995 = vmatprep.subr.bf16.mxu0 %v3166
  %3996 = vmatpush1.bf16.msra.mxu0 %v3165
  %3997 = vmatprep.subr.bf16.mxu0 %v3174
  %3998 = vmatpush1.bf16.msra.mxu0 %v3173
  %3999 = vmatprep.subr.bf16.mxu0 0
  %4000 = vmatpush1.bf16.msra.mxu0 0
  %4001 = vmatprep.subr.bf16.mxu0 0
  %4002 = vmatpush1.bf16.msra.mxu0 0
  %4003 = vmatprep.subr.bf16.mxu0 0
  %4004 = vmatpush1.bf16.msra.mxu0 0
  %4005 = vmatprep.subr.bf16.mxu0 0
  %4006 = vmatpush1.bf16.msra.mxu0 0
  %4007 = vmatprep.subr.bf16.mxu0 0
  %4008 = vmatpush1.bf16.msra.mxu0 0
  %4009 = vmatprep.subr.bf16.mxu0 0
  %4010 = vmatpush1.bf16.msra.mxu0 0
  %4011 = vmatprep.subr.bf16.mxu0 0
  %4012 = vmatpush1.bf16.msra.mxu0 0
  %4013 = vmatprep.subr.bf16.mxu0 0
  %4014 = vmatpush1.bf16.msra.mxu0 0
  %4015 = vmatprep.subr.bf16.mxu0 0
  %4016 = vmatpush1.bf16.msra.mxu0 0
  %4017 = vmatprep.subr.bf16.mxu0 0
  %4018 = vmatpush1.bf16.msra.mxu0 0
  %4019 = vmatprep.subr.bf16.mxu0 0
  %4020 = vmatpush1.bf16.msra.mxu0 0
  %4021 = vmatprep.subr.bf16.mxu0 0
  %4022 = vmatpush1.bf16.msra.mxu0 0
  %4023 = vmatprep.subr.bf16.mxu0 0
  %4024 = vmatpush1.bf16.msra.mxu0 0
  %4025 = vmatprep.subr.bf16.mxu0 0
  %4026 = vmatpush1.bf16.msra.mxu0 0
  %4027 = vmatprep.mubr.bf16.mxu0 0
  %4028 = vmatmul.mubr.bf16.gmra.mrb[0].mxu0 %v3194
  %v4029 = vpop.f32.mrb[0].mxu0
  %v4030 = vadd.f32 0.0, %v4029
  %v4031 = vpop.f32.mrb[0].mxu0
  %v4032 = vadd.f32 0.0, %v4031
  %v4033 = vpop.f32.mrb[0].mxu0
  %v4034 = vadd.f32 0.0, %v4033
  %v4035 = vpop.f32.mrb[0].mxu0
  %v4036 = vadd.f32 0.0, %v4035
  %4037 = vmatprep.mubr.bf16.mxu0 0
  %4038 = vmatmul.mubr.bf16.gmra.mrb[0].mxu0 %v3197
  %v4039 = vpop.f32.mrb[0].mxu0
  %v4040 = vadd.f32 0.0, %v4039
  %v4041 = vpop.f32.mrb[0].mxu0
  %v4042 = vadd.f32 0.0, %v4041
  %v4043 = vpop.f32.mrb[0].mxu0
  %v4044 = vadd.f32 0.0, %v4043
  %v4045 = vpop.f32.mrb[0].mxu0
  %v4046 = vadd.f32 0.0, %v4045
  %4047 = vmatprep.mubr.bf16.mxu0 0
  %4048 = vmatmul.mubr.bf16.gmra.mrb[0].mxu0 %v3200
  %v4049 = vpop.f32.mrb[0].mxu0
  %v4050 = vadd.f32 0.0, %v4049
  %v4051 = vpop.f32.mrb[0].mxu0
  %v4052 = vadd.f32 0.0, %v4051
  %v4053 = vpop.f32.mrb[0].mxu0
  %v4054 = vadd.f32 0.0, %v4053
  %v4055 = vpop.f32.mrb[0].mxu0
  %v4056 = vadd.f32 0.0, %v4055
  %4057 = vmatprep.mubr.bf16.mxu0 0
  %4058 = vmatmul.mubr.bf16.gmra.mrb[0].mxu0 %v3203
  %v4059 = vpop.f32.mrb[0].mxu0
  %v4060 = vadd.f32 0.0, %v4059
  %v4061 = vpop.f32.mrb[0].mxu0
  %v4062 = vadd.f32 0.0, %v4061
  %v4063 = vpop.f32.mrb[0].mxu0
  %v4064 = vadd.f32 0.0, %v4063
  %v4065 = vpop.f32.mrb[0].mxu0
  %v4066 = vadd.f32 0.0, %v4065
  %4067 = vmatprep.mubr.bf16.mxu0 0
  %4068 = vmatmul.mubr.bf16.gmra.mrb[0].mxu0 %v3206
  %v4069 = vpop.f32.mrb[0].mxu0
  %v4070 = vadd.f32 0.0, %v4069
  %v4071 = vpop.f32.mrb[0].mxu0
  %v4072 = vadd.f32 0.0, %v4071
  %v4073 = vpop.f32.mrb[0].mxu0
  %v4074 = vadd.f32 0.0, %v4073
  %v4075 = vpop.f32.mrb[0].mxu0
  %v4076 = vadd.f32 0.0, %v4075
  %4077 = vmatprep.mubr.bf16.mxu0 0
  %4078 = vmatmul.mubr.bf16.gmra.mrb[0].mxu0 %v3209
  %v4079 = vpop.f32.mrb[0].mxu0
  %v4080 = vadd.f32 0.0, %v4079
  %v4081 = vpop.f32.mrb[0].mxu0
  %v4082 = vadd.f32 0.0, %v4081
  %v4083 = vpop.f32.mrb[0].mxu0
  %v4084 = vadd.f32 0.0, %v4083
  %v4085 = vpop.f32.mrb[0].mxu0
  %v4086 = vadd.f32 0.0, %v4085
  %4087 = vmatprep.mubr.bf16.mxu0 0
  %4088 = vmatmul.mubr.bf16.gmra.mrb[0].mxu0 %v3212
  %v4089 = vpop.f32.mrb[0].mxu0
  %v4090 = vadd.f32 0.0, %v4089
  %v4091 = vpop.f32.mrb[0].mxu0
  %v4092 = vadd.f32 0.0, %v4091
  %v4093 = vpop.f32.mrb[0].mxu0
  %v4094 = vadd.f32 0.0, %v4093
  %v4095 = vpop.f32.mrb[0].mxu0
  %v4096 = vadd.f32 0.0, %v4095
  %4097 = vmatprep.mubr.bf16.mxu0 0
  %4098 = vmatmul.mubr.bf16.gmra.mrb[0].mxu0 %v3215
  %v4099 = vpop.f32.mrb[0].mxu0
  %v4100 = vadd.f32 0.0, %v4099
  %v4101 = vpop.f32.mrb[0].mxu0
  %v4102 = vadd.f32 0.0, %v4101
  %v4103 = vpop.f32.mrb[0].mxu0
  %v4104 = vadd.f32 0.0, %v4103
  %v4105 = vpop.f32.mrb[0].mxu0
  %v4106 = vadd.f32 0.0, %v4105
  %4107 = vmatprep.mubr.bf16.mxu0 0
  %4108 = vmatmul.mubr.bf16.gmra.mrb[0].mxu0 %v3218
  %v4109 = vpop.f32.mrb[0].mxu0
  %v4110 = vadd.f32 0.0, %v4109
  %v4111 = vpop.f32.mrb[0].mxu0
  %v4112 = vadd.f32 0.0, %v4111
  %v4113 = vpop.f32.mrb[0].mxu0
  %v4114 = vadd.f32 0.0, %v4113
  %v4115 = vpop.f32.mrb[0].mxu0
  %v4116 = vadd.f32 0.0, %v4115
  %4117 = vmatprep.mubr.bf16.mxu0 0
  %4118 = vmatmul.mubr.bf16.gmra.mrb[0].mxu0 %v3221
  %v4119 = vpop.f32.mrb[0].mxu0
  %v4120 = vadd.f32 0.0, %v4119
  %v4121 = vpop.f32.mrb[0].mxu0
  %v4122 = vadd.f32 0.0, %v4121
  %v4123 = vpop.f32.mrb[0].mxu0
  %v4124 = vadd.f32 0.0, %v4123
  %v4125 = vpop.f32.mrb[0].mxu0
  %v4126 = vadd.f32 0.0, %v4125
  %4127 = vmatprep.mubr.bf16.mxu0 0
  %4128 = vmatmul.mubr.bf16.gmra.mrb[0].mxu0 %v3224
  %v4129 = vpop.f32.mrb[0].mxu0
  %v4130 = vadd.f32 0.0, %v4129
  %v4131 = vpop.f32.mrb[0].mxu0
  %v4132 = vadd.f32 0.0, %v4131
  %v4133 = vpop.f32.mrb[0].mxu0
  %v4134 = vadd.f32 0.0, %v4133
  %v4135 = vpop.f32.mrb[0].mxu0
  %v4136 = vadd.f32 0.0, %v4135
  %4137 = vmatprep.mubr.bf16.mxu0 0
  %4138 = vmatmul.mubr.bf16.gmra.mrb[0].mxu0 %v3227
  %v4139 = vpop.f32.mrb[0].mxu0
  %v4140 = vadd.f32 0.0, %v4139
  %v4141 = vpop.f32.mrb[0].mxu0
  %v4142 = vadd.f32 0.0, %v4141
  %v4143 = vpop.f32.mrb[0].mxu0
  %v4144 = vadd.f32 0.0, %v4143
  %v4145 = vpop.f32.mrb[0].mxu0
  %v4146 = vadd.f32 0.0, %v4145
  %4147 = vmatprep.mubr.bf16.mxu0 0
  %4148 = vmatmul.mubr.bf16.gmra.mrb[0].mxu0 %v3230
  %v4149 = vpop.f32.mrb[0].mxu0
  %v4150 = vadd.f32 0.0, %v4149
  %v4151 = vpop.f32.mrb[0].mxu0
  %v4152 = vadd.f32 0.0, %v4151
  %v4153 = vpop.f32.mrb[0].mxu0
  %v4154 = vadd.f32 0.0, %v4153
  %v4155 = vpop.f32.mrb[0].mxu0
  %v4156 = vadd.f32 0.0, %v4155
  %4157 = vmatprep.mubr.bf16.mxu0 0
  %4158 = vmatmul.mubr.bf16.gmra.mrb[0].mxu0 %v3233
  %v4159 = vpop.f32.mrb[0].mxu0
  %v4160 = vadd.f32 0.0, %v4159
  %v4161 = vpop.f32.mrb[0].mxu0
  %v4162 = vadd.f32 0.0, %v4161
  %v4163 = vpop.f32.mrb[0].mxu0
  %v4164 = vadd.f32 0.0, %v4163
  %v4165 = vpop.f32.mrb[0].mxu0
  %v4166 = vadd.f32 0.0, %v4165
  %4167 = vmatprep.mubr.bf16.mxu0 0
  %4168 = vmatmul.mubr.bf16.gmra.mrb[0].mxu0 %v3236
  %v4169 = vpop.f32.mrb[0].mxu0
  %v4170 = vadd.f32 0.0, %v4169
  %v4171 = vpop.f32.mrb[0].mxu0
  %v4172 = vadd.f32 0.0, %v4171
  %v4173 = vpop.f32.mrb[0].mxu0
  %v4174 = vadd.f32 0.0, %v4173
  %v4175 = vpop.f32.mrb[0].mxu0
  %v4176 = vadd.f32 0.0, %v4175
  %4177 = vmatprep.mubr.bf16.mxu0 0
  %4178 = vmatmul.mubr.bf16.gmra.mrb[0].mxu0 %v3239
  %v4179 = vpop.f32.mrb[0].mxu0
  %v4180 = vadd.f32 0.0, %v4179
  %v4181 = vpop.f32.mrb[0].mxu0
  %v4182 = vadd.f32 0.0, %v4181
  %v4183 = vpop.f32.mrb[0].mxu0
  %v4184 = vadd.f32 0.0, %v4183
  %v4185 = vpop.f32.mrb[0].mxu0
  %v4186 = vadd.f32 0.0, %v4185
  %4187 = vmatprep.mubr.bf16.mxu0 0
  %4188 = vmatmul.mubr.bf16.gmra.mrb[0].mxu0 %v3242
  %v4189 = vpop.f32.mrb[0].mxu0
  %v4190 = vadd.f32 0.0, %v4189
  %v4191 = vpop.f32.mrb[0].mxu0
  %v4192 = vadd.f32 0.0, %v4191
  %v4193 = vpop.f32.mrb[0].mxu0
  %v4194 = vadd.f32 0.0, %v4193
  %v4195 = vpop.f32.mrb[0].mxu0
  %v4196 = vadd.f32 0.0, %v4195
  %4197 = vmatprep.mubr.bf16.mxu0 0
  %4198 = vmatmul.mubr.bf16.gmra.mrb[0].mxu0 %v3245
  %v4199 = vpop.f32.mrb[0].mxu0
  %v4200 = vadd.f32 0.0, %v4199
  %v4201 = vpop.f32.mrb[0].mxu0
  %v4202 = vadd.f32 0.0, %v4201
  %v4203 = vpop.f32.mrb[0].mxu0
  %v4204 = vadd.f32 0.0, %v4203
  %v4205 = vpop.f32.mrb[0].mxu0
  %v4206 = vadd.f32 0.0, %v4205
  %4207 = vmatprep.mubr.bf16.mxu0 0
  %4208 = vmatmul.mubr.bf16.gmra.mrb[0].mxu0 %v3248
  %v4209 = vpop.f32.mrb[0].mxu0
  %v4210 = vadd.f32 0.0, %v4209
  %v4211 = vpop.f32.mrb[0].mxu0
  %v4212 = vadd.f32 0.0, %v4211
  %v4213 = vpop.f32.mrb[0].mxu0
  %v4214 = vadd.f32 0.0, %v4213
  %v4215 = vpop.f32.mrb[0].mxu0
  %v4216 = vadd.f32 0.0, %v4215
  %4217 = vmatprep.mubr.bf16.mxu0 0
  %4218 = vmatmul.mubr.bf16.gmra.mrb[0].mxu0 %v3251
  %v4219 = vpop.f32.mrb[0].mxu0
  %v4220 = vadd.f32 0.0, %v4219
  %v4221 = vpop.f32.mrb[0].mxu0
  %v4222 = vadd.f32 0.0, %v4221
  %v4223 = vpop.f32.mrb[0].mxu0
  %v4224 = vadd.f32 0.0, %v4223
  %v4225 = vpop.f32.mrb[0].mxu0
  %v4226 = vadd.f32 0.0, %v4225
  %4227 = vmatprep.mubr.bf16.mxu0 0
  %4228 = vmatmul.mubr.bf16.gmra.mrb[0].mxu0 %v3254
  %v4229 = vpop.f32.mrb[0].mxu0
  %v4230 = vadd.f32 0.0, %v4229
  %v4231 = vpop.f32.mrb[0].mxu0
  %v4232 = vadd.f32 0.0, %v4231
  %v4233 = vpop.f32.mrb[0].mxu0
  %v4234 = vadd.f32 0.0, %v4233
  %v4235 = vpop.f32.mrb[0].mxu0
  %v4236 = vadd.f32 0.0, %v4235
  %4237 = vmatprep.mubr.bf16.mxu0 0
  %4238 = vmatmul.mubr.bf16.gmra.mrb[0].mxu0 %v3257
  %v4239 = vpop.f32.mrb[0].mxu0
  %v4240 = vadd.f32 0.0, %v4239
  %v4241 = vpop.f32.mrb[0].mxu0
  %v4242 = vadd.f32 0.0, %v4241
  %v4243 = vpop.f32.mrb[0].mxu0
  %v4244 = vadd.f32 0.0, %v4243
  %v4245 = vpop.f32.mrb[0].mxu0
  %v4246 = vadd.f32 0.0, %v4245
  %4247 = vmatprep.mubr.bf16.mxu0 0
  %4248 = vmatmul.mubr.bf16.gmra.mrb[0].mxu0 %v3260
  %v4249 = vpop.f32.mrb[0].mxu0
  %v4250 = vadd.f32 0.0, %v4249
  %v4251 = vpop.f32.mrb[0].mxu0
  %v4252 = vadd.f32 0.0, %v4251
  %v4253 = vpop.f32.mrb[0].mxu0
  %v4254 = vadd.f32 0.0, %v4253
  %v4255 = vpop.f32.mrb[0].mxu0
  %v4256 = vadd.f32 0.0, %v4255
  %4257 = vmatprep.mubr.bf16.mxu0 0
  %4258 = vmatmul.mubr.bf16.gmra.mrb[0].mxu0 %v3263
  %v4259 = vpop.f32.mrb[0].mxu0
  %v4260 = vadd.f32 0.0, %v4259
  %v4261 = vpop.f32.mrb[0].mxu0
  %v4262 = vadd.f32 0.0, %v4261
  %v4263 = vpop.f32.mrb[0].mxu0
  %v4264 = vadd.f32 0.0, %v4263
  %v4265 = vpop.f32.mrb[0].mxu0
  %v4266 = vadd.f32 0.0, %v4265
  %4267 = vmatprep.mubr.bf16.mxu0 0
  %4268 = vmatmul.mubr.bf16.gmra.mrb[0].mxu0 %v3266
  %v4269 = vpop.f32.mrb[0].mxu0
  %v4270 = vadd.f32 0.0, %v4269
  %v4271 = vpop.f32.mrb[0].mxu0
  %v4272 = vadd.f32 0.0, %v4271
  %v4273 = vpop.f32.mrb[0].mxu0
  %v4274 = vadd.f32 0.0, %v4273
  %v4275 = vpop.f32.mrb[0].mxu0
  %v4276 = vadd.f32 0.0, %v4275
  %4277 = vmatprep.mubr.bf16.mxu0 0
  %4278 = vmatmul.mubr.bf16.gmra.mrb[0].mxu0 %v3269
  %v4279 = vpop.f32.mrb[0].mxu0
  %v4280 = vadd.f32 0.0, %v4279
  %v4281 = vpop.f32.mrb[0].mxu0
  %v4282 = vadd.f32 0.0, %v4281
  %v4283 = vpop.f32.mrb[0].mxu0
  %v4284 = vadd.f32 0.0, %v4283
  %v4285 = vpop.f32.mrb[0].mxu0
  %v4286 = vadd.f32 0.0, %v4285
  %4287 = vmatprep.mubr.bf16.mxu0 0
  %4288 = vmatmul.mubr.bf16.gmra.mrb[0].mxu0 %v3272
  %v4289 = vpop.f32.mrb[0].mxu0
  %v4290 = vadd.f32 0.0, %v4289
  %v4291 = vpop.f32.mrb[0].mxu0
  %v4292 = vadd.f32 0.0, %v4291
  %v4293 = vpop.f32.mrb[0].mxu0
  %v4294 = vadd.f32 0.0, %v4293
  %v4295 = vpop.f32.mrb[0].mxu0
  %v4296 = vadd.f32 0.0, %v4295
  %4297 = vmatprep.mubr.bf16.mxu0 0
  %4298 = vmatmul.mubr.bf16.gmra.mrb[0].mxu0 %v3275
  %v4299 = vpop.f32.mrb[0].mxu0
  %v4300 = vadd.f32 0.0, %v4299
  %v4301 = vpop.f32.mrb[0].mxu0
  %v4302 = vadd.f32 0.0, %v4301
  %v4303 = vpop.f32.mrb[0].mxu0
  %v4304 = vadd.f32 0.0, %v4303
  %v4305 = vpop.f32.mrb[0].mxu0
  %v4306 = vadd.f32 0.0, %v4305
  %4307 = vmatprep.mubr.bf16.mxu0 0
  %4308 = vmatmul.mubr.bf16.gmra.mrb[0].mxu0 %v3278
  %v4309 = vpop.f32.mrb[0].mxu0
  %v4310 = vadd.f32 0.0, %v4309
  %v4311 = vpop.f32.mrb[0].mxu0
  %v4312 = vadd.f32 0.0, %v4311
  %v4313 = vpop.f32.mrb[0].mxu0
  %v4314 = vadd.f32 0.0, %v4313
  %v4315 = vpop.f32.mrb[0].mxu0
  %v4316 = vadd.f32 0.0, %v4315
  %4317 = vmatprep.mubr.bf16.mxu0 0
  %4318 = vmatmul.mubr.bf16.gmra.mrb[0].mxu0 %v3281
  %v4319 = vpop.f32.mrb[0].mxu0
  %v4320 = vadd.f32 0.0, %v4319
  %v4321 = vpop.f32.mrb[0].mxu0
  %v4322 = vadd.f32 0.0, %v4321
  %v4323 = vpop.f32.mrb[0].mxu0
  %v4324 = vadd.f32 0.0, %v4323
  %v4325 = vpop.f32.mrb[0].mxu0
  %v4326 = vadd.f32 0.0, %v4325
  %4327 = vmatprep.mubr.bf16.mxu0 0
  %4328 = vmatmul.mubr.bf16.gmra.mrb[0].mxu0 %v3284
  %v4329 = vpop.f32.mrb[0].mxu0
  %v4330 = vadd.f32 0.0, %v4329
  %v4331 = vpop.f32.mrb[0].mxu0
  %v4332 = vadd.f32 0.0, %v4331
  %v4333 = vpop.f32.mrb[0].mxu0
  %v4334 = vadd.f32 0.0, %v4333
  %v4335 = vpop.f32.mrb[0].mxu0
  %v4336 = vadd.f32 0.0, %v4335
  %4337 = vmatprep.mubr.bf16.mxu0 0
  %4338 = vmatmul.mubr.bf16.gmra.mrb[0].mxu0 %v3287
  %v4339 = vpop.f32.mrb[0].mxu0
  %v4340 = vadd.f32 0.0, %v4339
  %v4341 = vpop.f32.mrb[0].mxu0
  %v4342 = vadd.f32 0.0, %v4341
  %v4343 = vpop.f32.mrb[0].mxu0
  %v4344 = vadd.f32 0.0, %v4343
  %v4345 = vpop.f32.mrb[0].mxu0
  %v4346 = vadd.f32 0.0, %v4345
  %4347 = vdwg.mxu0
  %4348 = vmatprep.subr.bf16.mxu0 %v3168
  %4349 = vmatpush1.bf16.msra.mxu0 %v3167
  %4350 = vmatprep.subr.bf16.mxu0 %v3176
  %4351 = vmatpush1.bf16.msra.mxu0 %v3175
  %4352 = vmatprep.subr.bf16.mxu0 0
  %4353 = vmatpush1.bf16.msra.mxu0 0
  %4354 = vmatprep.subr.bf16.mxu0 0
  %4355 = vmatpush1.bf16.msra.mxu0 0
  %4356 = vmatprep.subr.bf16.mxu0 0
  %4357 = vmatpush1.bf16.msra.mxu0 0
  %4358 = vmatprep.subr.bf16.mxu0 0
  %4359 = vmatpush1.bf16.msra.mxu0 0
  %4360 = vmatprep.subr.bf16.mxu0 0
  %4361 = vmatpush1.bf16.msra.mxu0 0
  %4362 = vmatprep.subr.bf16.mxu0 0
  %4363 = vmatpush1.bf16.msra.mxu0 0
  %4364 = vmatprep.subr.bf16.mxu0 0
  %4365 = vmatpush1.bf16.msra.mxu0 0
  %4366 = vmatprep.subr.bf16.mxu0 0
  %4367 = vmatpush1.bf16.msra.mxu0 0
  %4368 = vmatprep.subr.bf16.mxu0 0
  %4369 = vmatpush1.bf16.msra.mxu0 0
  %4370 = vmatprep.subr.bf16.mxu0 0
  %4371 = vmatpush1.bf16.msra.mxu0 0
  %4372 = vmatprep.subr.bf16.mxu0 0
  %4373 = vmatpush1.bf16.msra.mxu0 0
  %4374 = vmatprep.subr.bf16.mxu0 0
  %4375 = vmatpush1.bf16.msra.mxu0 0
  %4376 = vmatprep.subr.bf16.mxu0 0
  %4377 = vmatpush1.bf16.msra.mxu0 0
  %4378 = vmatprep.subr.bf16.mxu0 0
  %4379 = vmatpush1.bf16.msra.mxu0 0
  %4380 = vmatprep.mubr.bf16.mxu0 0
  %4381 = vmatmul.mubr.bf16.gmra.mrb[0].mxu0 %v3194
  %v4382 = vpop.f32.mrb[0].mxu0
  %v4383 = vadd.f32 0.0, %v4382
  %v4384 = vpop.f32.mrb[0].mxu0
  %v4385 = vadd.f32 0.0, %v4384
  %v4386 = vpop.f32.mrb[0].mxu0
  %v4387 = vadd.f32 0.0, %v4386
  %v4388 = vpop.f32.mrb[0].mxu0
  %v4389 = vadd.f32 0.0, %v4388
  %4390 = vmatprep.mubr.bf16.mxu0 0
  %4391 = vmatmul.mubr.bf16.gmra.mrb[0].mxu0 %v3197
  %v4392 = vpop.f32.mrb[0].mxu0
  %v4393 = vadd.f32 0.0, %v4392
  %v4394 = vpop.f32.mrb[0].mxu0
  %v4395 = vadd.f32 0.0, %v4394
  %v4396 = vpop.f32.mrb[0].mxu0
  %v4397 = vadd.f32 0.0, %v4396
  %v4398 = vpop.f32.mrb[0].mxu0
  %v4399 = vadd.f32 0.0, %v4398
  %4400 = vmatprep.mubr.bf16.mxu0 0
  %4401 = vmatmul.mubr.bf16.gmra.mrb[0].mxu0 %v3200
  %v4402 = vpop.f32.mrb[0].mxu0
  %v4403 = vadd.f32 0.0, %v4402
  %v4404 = vpop.f32.mrb[0].mxu0
  %v4405 = vadd.f32 0.0, %v4404
  %v4406 = vpop.f32.mrb[0].mxu0
  %v4407 = vadd.f32 0.0, %v4406
  %v4408 = vpop.f32.mrb[0].mxu0
  %v4409 = vadd.f32 0.0, %v4408
  %4410 = vmatprep.mubr.bf16.mxu0 0
  %4411 = vmatmul.mubr.bf16.gmra.mrb[0].mxu0 %v3203
  %v4412 = vpop.f32.mrb[0].mxu0
  %v4413 = vadd.f32 0.0, %v4412
  %v4414 = vpop.f32.mrb[0].mxu0
  %v4415 = vadd.f32 0.0, %v4414
  %v4416 = vpop.f32.mrb[0].mxu0
  %v4417 = vadd.f32 0.0, %v4416
  %v4418 = vpop.f32.mrb[0].mxu0
  %v4419 = vadd.f32 0.0, %v4418
  %4420 = vmatprep.mubr.bf16.mxu0 0
  %4421 = vmatmul.mubr.bf16.gmra.mrb[0].mxu0 %v3206
  %v4422 = vpop.f32.mrb[0].mxu0
  %v4423 = vadd.f32 0.0, %v4422
  %v4424 = vpop.f32.mrb[0].mxu0
  %v4425 = vadd.f32 0.0, %v4424
  %v4426 = vpop.f32.mrb[0].mxu0
  %v4427 = vadd.f32 0.0, %v4426
  %v4428 = vpop.f32.mrb[0].mxu0
  %v4429 = vadd.f32 0.0, %v4428
  %4430 = vmatprep.mubr.bf16.mxu0 0
  %4431 = vmatmul.mubr.bf16.gmra.mrb[0].mxu0 %v3209
  %v4432 = vpop.f32.mrb[0].mxu0
  %v4433 = vadd.f32 0.0, %v4432
  %v4434 = vpop.f32.mrb[0].mxu0
  %v4435 = vadd.f32 0.0, %v4434
  %v4436 = vpop.f32.mrb[0].mxu0
  %v4437 = vadd.f32 0.0, %v4436
  %v4438 = vpop.f32.mrb[0].mxu0
  %v4439 = vadd.f32 0.0, %v4438
  %4440 = vmatprep.mubr.bf16.mxu0 0
  %4441 = vmatmul.mubr.bf16.gmra.mrb[0].mxu0 %v3212
  %v4442 = vpop.f32.mrb[0].mxu0
  %v4443 = vadd.f32 0.0, %v4442
  %v4444 = vpop.f32.mrb[0].mxu0
  %v4445 = vadd.f32 0.0, %v4444
  %v4446 = vpop.f32.mrb[0].mxu0
  %v4447 = vadd.f32 0.0, %v4446
  %v4448 = vpop.f32.mrb[0].mxu0
  %v4449 = vadd.f32 0.0, %v4448
  %4450 = vmatprep.mubr.bf16.mxu0 0
  %4451 = vmatmul.mubr.bf16.gmra.mrb[0].mxu0 %v3215
  %v4452 = vpop.f32.mrb[0].mxu0
  %v4453 = vadd.f32 0.0, %v4452
  %v4454 = vpop.f32.mrb[0].mxu0
  %v4455 = vadd.f32 0.0, %v4454
  %v4456 = vpop.f32.mrb[0].mxu0
  %v4457 = vadd.f32 0.0, %v4456
  %v4458 = vpop.f32.mrb[0].mxu0
  %v4459 = vadd.f32 0.0, %v4458
  %4460 = vmatprep.mubr.bf16.mxu0 0
  %4461 = vmatmul.mubr.bf16.gmra.mrb[0].mxu0 %v3218
  %v4462 = vpop.f32.mrb[0].mxu0
  %v4463 = vadd.f32 0.0, %v4462
  %v4464 = vpop.f32.mrb[0].mxu0
  %v4465 = vadd.f32 0.0, %v4464
  %v4466 = vpop.f32.mrb[0].mxu0
  %v4467 = vadd.f32 0.0, %v4466
  %v4468 = vpop.f32.mrb[0].mxu0
  %v4469 = vadd.f32 0.0, %v4468
  %4470 = vmatprep.mubr.bf16.mxu0 0
  %4471 = vmatmul.mubr.bf16.gmra.mrb[0].mxu0 %v3221
  %v4472 = vpop.f32.mrb[0].mxu0
  %v4473 = vadd.f32 0.0, %v4472
  %v4474 = vpop.f32.mrb[0].mxu0
  %v4475 = vadd.f32 0.0, %v4474
  %v4476 = vpop.f32.mrb[0].mxu0
  %v4477 = vadd.f32 0.0, %v4476
  %v4478 = vpop.f32.mrb[0].mxu0
  %v4479 = vadd.f32 0.0, %v4478
  %4480 = vmatprep.mubr.bf16.mxu0 0
  %4481 = vmatmul.mubr.bf16.gmra.mrb[0].mxu0 %v3224
  %v4482 = vpop.f32.mrb[0].mxu0
  %v4483 = vadd.f32 0.0, %v4482
  %v4484 = vpop.f32.mrb[0].mxu0
  %v4485 = vadd.f32 0.0, %v4484
  %v4486 = vpop.f32.mrb[0].mxu0
  %v4487 = vadd.f32 0.0, %v4486
  %v4488 = vpop.f32.mrb[0].mxu0
  %v4489 = vadd.f32 0.0, %v4488
  %4490 = vmatprep.mubr.bf16.mxu0 0
  %4491 = vmatmul.mubr.bf16.gmra.mrb[0].mxu0 %v3227
  %v4492 = vpop.f32.mrb[0].mxu0
  %v4493 = vadd.f32 0.0, %v4492
  %v4494 = vpop.f32.mrb[0].mxu0
  %v4495 = vadd.f32 0.0, %v4494
  %v4496 = vpop.f32.mrb[0].mxu0
  %v4497 = vadd.f32 0.0, %v4496
  %v4498 = vpop.f32.mrb[0].mxu0
  %v4499 = vadd.f32 0.0, %v4498
  %4500 = vmatprep.mubr.bf16.mxu0 0
  %4501 = vmatmul.mubr.bf16.gmra.mrb[0].mxu0 %v3230
  %v4502 = vpop.f32.mrb[0].mxu0
  %v4503 = vadd.f32 0.0, %v4502
  %v4504 = vpop.f32.mrb[0].mxu0
  %v4505 = vadd.f32 0.0, %v4504
  %v4506 = vpop.f32.mrb[0].mxu0
  %v4507 = vadd.f32 0.0, %v4506
  %v4508 = vpop.f32.mrb[0].mxu0
  %v4509 = vadd.f32 0.0, %v4508
  %4510 = vmatprep.mubr.bf16.mxu0 0
  %4511 = vmatmul.mubr.bf16.gmra.mrb[0].mxu0 %v3233
  %v4512 = vpop.f32.mrb[0].mxu0
  %v4513 = vadd.f32 0.0, %v4512
  %v4514 = vpop.f32.mrb[0].mxu0
  %v4515 = vadd.f32 0.0, %v4514
  %v4516 = vpop.f32.mrb[0].mxu0
  %v4517 = vadd.f32 0.0, %v4516
  %v4518 = vpop.f32.mrb[0].mxu0
  %v4519 = vadd.f32 0.0, %v4518
  %4520 = vmatprep.mubr.bf16.mxu0 0
  %4521 = vmatmul.mubr.bf16.gmra.mrb[0].mxu0 %v3236
  %v4522 = vpop.f32.mrb[0].mxu0
  %v4523 = vadd.f32 0.0, %v4522
  %v4524 = vpop.f32.mrb[0].mxu0
  %v4525 = vadd.f32 0.0, %v4524
  %v4526 = vpop.f32.mrb[0].mxu0
  %v4527 = vadd.f32 0.0, %v4526
  %v4528 = vpop.f32.mrb[0].mxu0
  %v4529 = vadd.f32 0.0, %v4528
  %4530 = vmatprep.mubr.bf16.mxu0 0
  %4531 = vmatmul.mubr.bf16.gmra.mrb[0].mxu0 %v3239
  %v4532 = vpop.f32.mrb[0].mxu0
  %v4533 = vadd.f32 0.0, %v4532
  %v4534 = vpop.f32.mrb[0].mxu0
  %v4535 = vadd.f32 0.0, %v4534
  %v4536 = vpop.f32.mrb[0].mxu0
  %v4537 = vadd.f32 0.0, %v4536
  %v4538 = vpop.f32.mrb[0].mxu0
  %v4539 = vadd.f32 0.0, %v4538
  %4540 = vmatprep.mubr.bf16.mxu0 0
  %4541 = vmatmul.mubr.bf16.gmra.mrb[0].mxu0 %v3242
  %v4542 = vpop.f32.mrb[0].mxu0
  %v4543 = vadd.f32 0.0, %v4542
  %v4544 = vpop.f32.mrb[0].mxu0
  %v4545 = vadd.f32 0.0, %v4544
  %v4546 = vpop.f32.mrb[0].mxu0
  %v4547 = vadd.f32 0.0, %v4546
  %v4548 = vpop.f32.mrb[0].mxu0
  %v4549 = vadd.f32 0.0, %v4548
  %4550 = vmatprep.mubr.bf16.mxu0 0
  %4551 = vmatmul.mubr.bf16.gmra.mrb[0].mxu0 %v3245
  %v4552 = vpop.f32.mrb[0].mxu0
  %v4553 = vadd.f32 0.0, %v4552
  %v4554 = vpop.f32.mrb[0].mxu0
  %v4555 = vadd.f32 0.0, %v4554
  %v4556 = vpop.f32.mrb[0].mxu0
  %v4557 = vadd.f32 0.0, %v4556
  %v4558 = vpop.f32.mrb[0].mxu0
  %v4559 = vadd.f32 0.0, %v4558
  %4560 = vmatprep.mubr.bf16.mxu0 0
  %4561 = vmatmul.mubr.bf16.gmra.mrb[0].mxu0 %v3248
  %v4562 = vpop.f32.mrb[0].mxu0
  %v4563 = vadd.f32 0.0, %v4562
  %v4564 = vpop.f32.mrb[0].mxu0
  %v4565 = vadd.f32 0.0, %v4564
  %v4566 = vpop.f32.mrb[0].mxu0
  %v4567 = vadd.f32 0.0, %v4566
  %v4568 = vpop.f32.mrb[0].mxu0
  %v4569 = vadd.f32 0.0, %v4568
  %4570 = vmatprep.mubr.bf16.mxu0 0
  %4571 = vmatmul.mubr.bf16.gmra.mrb[0].mxu0 %v3251
  %v4572 = vpop.f32.mrb[0].mxu0
  %v4573 = vadd.f32 0.0, %v4572
  %v4574 = vpop.f32.mrb[0].mxu0
  %v4575 = vadd.f32 0.0, %v4574
  %v4576 = vpop.f32.mrb[0].mxu0
  %v4577 = vadd.f32 0.0, %v4576
  %v4578 = vpop.f32.mrb[0].mxu0
  %v4579 = vadd.f32 0.0, %v4578
  %4580 = vmatprep.mubr.bf16.mxu0 0
  %4581 = vmatmul.mubr.bf16.gmra.mrb[0].mxu0 %v3254
  %v4582 = vpop.f32.mrb[0].mxu0
  %v4583 = vadd.f32 0.0, %v4582
  %v4584 = vpop.f32.mrb[0].mxu0
  %v4585 = vadd.f32 0.0, %v4584
  %v4586 = vpop.f32.mrb[0].mxu0
  %v4587 = vadd.f32 0.0, %v4586
  %v4588 = vpop.f32.mrb[0].mxu0
  %v4589 = vadd.f32 0.0, %v4588
  %4590 = vmatprep.mubr.bf16.mxu0 0
  %4591 = vmatmul.mubr.bf16.gmra.mrb[0].mxu0 %v3257
  %v4592 = vpop.f32.mrb[0].mxu0
  %v4593 = vadd.f32 0.0, %v4592
  %v4594 = vpop.f32.mrb[0].mxu0
  %v4595 = vadd.f32 0.0, %v4594
  %v4596 = vpop.f32.mrb[0].mxu0
  %v4597 = vadd.f32 0.0, %v4596
  %v4598 = vpop.f32.mrb[0].mxu0
  %v4599 = vadd.f32 0.0, %v4598
  %4600 = vmatprep.mubr.bf16.mxu0 0
  %4601 = vmatmul.mubr.bf16.gmra.mrb[0].mxu0 %v3260
  %v4602 = vpop.f32.mrb[0].mxu0
  %v4603 = vadd.f32 0.0, %v4602
  %v4604 = vpop.f32.mrb[0].mxu0
  %v4605 = vadd.f32 0.0, %v4604
  %v4606 = vpop.f32.mrb[0].mxu0
  %v4607 = vadd.f32 0.0, %v4606
  %v4608 = vpop.f32.mrb[0].mxu0
  %v4609 = vadd.f32 0.0, %v4608
  %4610 = vmatprep.mubr.bf16.mxu0 0
  %4611 = vmatmul.mubr.bf16.gmra.mrb[0].mxu0 %v3263
  %v4612 = vpop.f32.mrb[0].mxu0
  %v4613 = vadd.f32 0.0, %v4612
  %v4614 = vpop.f32.mrb[0].mxu0
  %v4615 = vadd.f32 0.0, %v4614
  %v4616 = vpop.f32.mrb[0].mxu0
  %v4617 = vadd.f32 0.0, %v4616
  %v4618 = vpop.f32.mrb[0].mxu0
  %v4619 = vadd.f32 0.0, %v4618
  %4620 = vmatprep.mubr.bf16.mxu0 0
  %4621 = vmatmul.mubr.bf16.gmra.mrb[0].mxu0 %v3266
  %v4622 = vpop.f32.mrb[0].mxu0
  %v4623 = vadd.f32 0.0, %v4622
  %v4624 = vpop.f32.mrb[0].mxu0
  %v4625 = vadd.f32 0.0, %v4624
  %v4626 = vpop.f32.mrb[0].mxu0
  %v4627 = vadd.f32 0.0, %v4626
  %v4628 = vpop.f32.mrb[0].mxu0
  %v4629 = vadd.f32 0.0, %v4628
  %4630 = vmatprep.mubr.bf16.mxu0 0
  %4631 = vmatmul.mubr.bf16.gmra.mrb[0].mxu0 %v3269
  %v4632 = vpop.f32.mrb[0].mxu0
  %v4633 = vadd.f32 0.0, %v4632
  %v4634 = vpop.f32.mrb[0].mxu0
  %v4635 = vadd.f32 0.0, %v4634
  %v4636 = vpop.f32.mrb[0].mxu0
  %v4637 = vadd.f32 0.0, %v4636
  %v4638 = vpop.f32.mrb[0].mxu0
  %v4639 = vadd.f32 0.0, %v4638
  %4640 = vmatprep.mubr.bf16.mxu0 0
  %4641 = vmatmul.mubr.bf16.gmra.mrb[0].mxu0 %v3272
  %v4642 = vpop.f32.mrb[0].mxu0
  %v4643 = vadd.f32 0.0, %v4642
  %v4644 = vpop.f32.mrb[0].mxu0
  %v4645 = vadd.f32 0.0, %v4644
  %v4646 = vpop.f32.mrb[0].mxu0
  %v4647 = vadd.f32 0.0, %v4646
  %v4648 = vpop.f32.mrb[0].mxu0
  %v4649 = vadd.f32 0.0, %v4648
  %4650 = vmatprep.mubr.bf16.mxu0 0
  %4651 = vmatmul.mubr.bf16.gmra.mrb[0].mxu0 %v3275
  %v4652 = vpop.f32.mrb[0].mxu0
  %v4653 = vadd.f32 0.0, %v4652
  %v4654 = vpop.f32.mrb[0].mxu0
  %v4655 = vadd.f32 0.0, %v4654
  %v4656 = vpop.f32.mrb[0].mxu0
  %v4657 = vadd.f32 0.0, %v4656
  %v4658 = vpop.f32.mrb[0].mxu0
  %v4659 = vadd.f32 0.0, %v4658
  %4660 = vmatprep.mubr.bf16.mxu0 0
  %4661 = vmatmul.mubr.bf16.gmra.mrb[0].mxu0 %v3278
  %v4662 = vpop.f32.mrb[0].mxu0
  %v4663 = vadd.f32 0.0, %v4662
  %v4664 = vpop.f32.mrb[0].mxu0
  %v4665 = vadd.f32 0.0, %v4664
  %v4666 = vpop.f32.mrb[0].mxu0
  %v4667 = vadd.f32 0.0, %v4666
  %v4668 = vpop.f32.mrb[0].mxu0
  %v4669 = vadd.f32 0.0, %v4668
  %4670 = vmatprep.mubr.bf16.mxu0 0
  %4671 = vmatmul.mubr.bf16.gmra.mrb[0].mxu0 %v3281
  %v4672 = vpop.f32.mrb[0].mxu0
  %v4673 = vadd.f32 0.0, %v4672
  %v4674 = vpop.f32.mrb[0].mxu0
  %v4675 = vadd.f32 0.0, %v4674
  %v4676 = vpop.f32.mrb[0].mxu0
  %v4677 = vadd.f32 0.0, %v4676
  %v4678 = vpop.f32.mrb[0].mxu0
  %v4679 = vadd.f32 0.0, %v4678
  %4680 = vmatprep.mubr.bf16.mxu0 0
  %4681 = vmatmul.mubr.bf16.gmra.mrb[0].mxu0 %v3284
  %v4682 = vpop.f32.mrb[0].mxu0
  %v4683 = vadd.f32 0.0, %v4682
  %v4684 = vpop.f32.mrb[0].mxu0
  %v4685 = vadd.f32 0.0, %v4684
  %v4686 = vpop.f32.mrb[0].mxu0
  %v4687 = vadd.f32 0.0, %v4686
  %v4688 = vpop.f32.mrb[0].mxu0
  %v4689 = vadd.f32 0.0, %v4688
  %4690 = vmatprep.mubr.bf16.mxu0 0
  %4691 = vmatmul.mubr.bf16.gmra.mrb[0].mxu0 %v3287
  %v4692 = vpop.f32.mrb[0].mxu0
  %v4693 = vadd.f32 0.0, %v4692
  %v4694 = vpop.f32.mrb[0].mxu0
  %v4695 = vadd.f32 0.0, %v4694
  %v4696 = vpop.f32.mrb[0].mxu0
  %v4697 = vadd.f32 0.0, %v4696
  %v4698 = vpop.f32.mrb[0].mxu0
  %v4699 = vadd.f32 0.0, %v4698
  %4700 = vdwg.mxu0
  %v4701 = vmul.f32 %v1560, %v3324
  %v4702 = vmul.f32 %v1562, %v3326
  %v4703 = vmul.f32 %v1913, %v3677
  %v4704 = vmul.f32 %v1915, %v3679
  %v4705 = vmul.f32 %v2266, %v4030
  %v4706 = vmul.f32 %v2268, %v4032
  %v4707 = vmul.f32 %v2619, %v4383
  %v4708 = vmul.f32 %v2621, %v4385
  %v4709 = vmul.f32 %v1564, %v3328
  %v4710 = vmul.f32 %v1566, %v3330
  %v4711 = vmul.f32 %v1917, %v3681
  %v4712 = vmul.f32 %v1919, %v3683
  %v4713 = vmul.f32 %v2270, %v4034
  %v4714 = vmul.f32 %v2272, %v4036
  %v4715 = vmul.f32 %v2623, %v4387
  %v4716 = vmul.f32 %v2625, %v4389
  %v4717 = vmul.f32 %v1570, %v3334
  %v4718 = vmul.f32 %v1572, %v3336
  %v4719 = vmul.f32 %v1923, %v3687
  %v4720 = vmul.f32 %v1925, %v3689
  %v4721 = vmul.f32 %v2276, %v4040
  %v4722 = vmul.f32 %v2278, %v4042
  %v4723 = vmul.f32 %v2629, %v4393
  %v4724 = vmul.f32 %v2631, %v4395
  %v4725 = vmul.f32 %v1574, %v3338
  %v4726 = vmul.f32 %v1576, %v3340
  %v4727 = vmul.f32 %v1927, %v3691
  %v4728 = vmul.f32 %v1929, %v3693
  %v4729 = vmul.f32 %v2280, %v4044
  %v4730 = vmul.f32 %v2282, %v4046
  %v4731 = vmul.f32 %v2633, %v4397
  %v4732 = vmul.f32 %v2635, %v4399
  %v4733 = vmul.f32 %v1580, %v3344
  %v4734 = vmul.f32 %v1582, %v3346
  %v4735 = vmul.f32 %v1933, %v3697
  %v4736 = vmul.f32 %v1935, %v3699
  %v4737 = vmul.f32 %v2286, %v4050
  %v4738 = vmul.f32 %v2288, %v4052
  %v4739 = vmul.f32 %v2639, %v4403
  %v4740 = vmul.f32 %v2641, %v4405
  %v4741 = vmul.f32 %v1584, %v3348
  %v4742 = vmul.f32 %v1586, %v3350
  %v4743 = vmul.f32 %v1937, %v3701
  %v4744 = vmul.f32 %v1939, %v3703
  %v4745 = vmul.f32 %v2290, %v4054
  %v4746 = vmul.f32 %v2292, %v4056
  %v4747 = vmul.f32 %v2643, %v4407
  %v4748 = vmul.f32 %v2645, %v4409
  %v4749 = vmul.f32 %v1590, %v3354
  %v4750 = vmul.f32 %v1592, %v3356
  %v4751 = vmul.f32 %v1943, %v3707
  %v4752 = vmul.f32 %v1945, %v3709
  %v4753 = vmul.f32 %v2296, %v4060
  %v4754 = vmul.f32 %v2298, %v4062
  %v4755 = vmul.f32 %v2649, %v4413
  %v4756 = vmul.f32 %v2651, %v4415
  %v4757 = vmul.f32 %v1594, %v3358
  %v4758 = vmul.f32 %v1596, %v3360
  %v4759 = vmul.f32 %v1947, %v3711
  %v4760 = vmul.f32 %v1949, %v3713
  %v4761 = vmul.f32 %v2300, %v4064
  %v4762 = vmul.f32 %v2302, %v4066
  %v4763 = vmul.f32 %v2653, %v4417
  %v4764 = vmul.f32 %v2655, %v4419
  %v4765 = vmul.f32 %v1600, %v3364
  %v4766 = vmul.f32 %v1602, %v3366
  %v4767 = vmul.f32 %v1953, %v3717
  %v4768 = vmul.f32 %v1955, %v3719
  %v4769 = vmul.f32 %v2306, %v4070
  %v4770 = vmul.f32 %v2308, %v4072
  %v4771 = vmul.f32 %v2659, %v4423
  %v4772 = vmul.f32 %v2661, %v4425
  %v4773 = vmul.f32 %v1604, %v3368
  %v4774 = vmul.f32 %v1606, %v3370
  %v4775 = vmul.f32 %v1957, %v3721
  %v4776 = vmul.f32 %v1959, %v3723
  %v4777 = vmul.f32 %v2310, %v4074
  %v4778 = vmul.f32 %v2312, %v4076
  %v4779 = vmul.f32 %v2663, %v4427
  %v4780 = vmul.f32 %v2665, %v4429
  %v4781 = vmul.f32 %v1610, %v3374
  %v4782 = vmul.f32 %v1612, %v3376
  %v4783 = vmul.f32 %v1963, %v3727
  %v4784 = vmul.f32 %v1965, %v3729
  %v4785 = vmul.f32 %v2316, %v4080
  %v4786 = vmul.f32 %v2318, %v4082
  %v4787 = vmul.f32 %v2669, %v4433
  %v4788 = vmul.f32 %v2671, %v4435
  %v4789 = vmul.f32 %v1614, %v3378
  %v4790 = vmul.f32 %v1616, %v3380
  %v4791 = vmul.f32 %v1967, %v3731
  %v4792 = vmul.f32 %v1969, %v3733
  %v4793 = vmul.f32 %v2320, %v4084
  %v4794 = vmul.f32 %v2322, %v4086
  %v4795 = vmul.f32 %v2673, %v4437
  %v4796 = vmul.f32 %v2675, %v4439
  %v4797 = vmul.f32 %v1620, %v3384
  %v4798 = vmul.f32 %v1622, %v3386
  %v4799 = vmul.f32 %v1973, %v3737
  %v4800 = vmul.f32 %v1975, %v3739
  %v4801 = vmul.f32 %v2326, %v4090
  %v4802 = vmul.f32 %v2328, %v4092
  %v4803 = vmul.f32 %v2679, %v4443
  %v4804 = vmul.f32 %v2681, %v4445
  %v4805 = vmul.f32 %v1624, %v3388
  %v4806 = vmul.f32 %v1626, %v3390
  %v4807 = vmul.f32 %v1977, %v3741
  %v4808 = vmul.f32 %v1979, %v3743
  %v4809 = vmul.f32 %v2330, %v4094
  %v4810 = vmul.f32 %v2332, %v4096
  %v4811 = vmul.f32 %v2683, %v4447
  %v4812 = vmul.f32 %v2685, %v4449
  %v4813 = vmul.f32 %v1630, %v3394
  %v4814 = vmul.f32 %v1632, %v3396
  %v4815 = vmul.f32 %v1983, %v3747
  %v4816 = vmul.f32 %v1985, %v3749
  %v4817 = vmul.f32 %v2336, %v4100
  %v4818 = vmul.f32 %v2338, %v4102
  %v4819 = vmul.f32 %v2689, %v4453
  %v4820 = vmul.f32 %v2691, %v4455
  %v4821 = vmul.f32 %v1634, %v3398
  %v4822 = vmul.f32 %v1636, %v3400
  %v4823 = vmul.f32 %v1987, %v3751
  %v4824 = vmul.f32 %v1989, %v3753
  %v4825 = vmul.f32 %v2340, %v4104
  %v4826 = vmul.f32 %v2342, %v4106
  %v4827 = vmul.f32 %v2693, %v4457
  %v4828 = vmul.f32 %v2695, %v4459
  %v4829 = vmul.f32 %v1640, %v3404
  %v4830 = vmul.f32 %v1642, %v3406
  %v4831 = vmul.f32 %v1993, %v3757
  %v4832 = vmul.f32 %v1995, %v3759
  %v4833 = vmul.f32 %v2346, %v4110
  %v4834 = vmul.f32 %v2348, %v4112
  %v4835 = vmul.f32 %v2699, %v4463
  %v4836 = vmul.f32 %v2701, %v4465
  %v4837 = vmul.f32 %v1644, %v3408
  %v4838 = vmul.f32 %v1646, %v3410
  %v4839 = vmul.f32 %v1997, %v3761
  %v4840 = vmul.f32 %v1999, %v3763
  %v4841 = vmul.f32 %v2350, %v4114
  %v4842 = vmul.f32 %v2352, %v4116
  %v4843 = vmul.f32 %v2703, %v4467
  %v4844 = vmul.f32 %v2705, %v4469
  %v4845 = vmul.f32 %v1650, %v3414
  %v4846 = vmul.f32 %v1652, %v3416
  %v4847 = vmul.f32 %v2003, %v3767
  %v4848 = vmul.f32 %v2005, %v3769
  %v4849 = vmul.f32 %v2356, %v4120
  %v4850 = vmul.f32 %v2358, %v4122
  %v4851 = vmul.f32 %v2709, %v4473
  %v4852 = vmul.f32 %v2711, %v4475
  %v4853 = vmul.f32 %v1654, %v3418
  %v4854 = vmul.f32 %v1656, %v3420
  %v4855 = vmul.f32 %v2007, %v3771
  %v4856 = vmul.f32 %v2009, %v3773
  %v4857 = vmul.f32 %v2360, %v4124
  %v4858 = vmul.f32 %v2362, %v4126
  %v4859 = vmul.f32 %v2713, %v4477
  %v4860 = vmul.f32 %v2715, %v4479
  %v4861 = vmul.f32 %v1660, %v3424
  %v4862 = vmul.f32 %v1662, %v3426
  %v4863 = vmul.f32 %v2013, %v3777
  %v4864 = vmul.f32 %v2015, %v3779
  %v4865 = vmul.f32 %v2366, %v4130
  %v4866 = vmul.f32 %v2368, %v4132
  %v4867 = vmul.f32 %v2719, %v4483
  %v4868 = vmul.f32 %v2721, %v4485
  %v4869 = vmul.f32 %v1664, %v3428
  %v4870 = vmul.f32 %v1666, %v3430
  %v4871 = vmul.f32 %v2017, %v3781
  %v4872 = vmul.f32 %v2019, %v3783
  %v4873 = vmul.f32 %v2370, %v4134
  %v4874 = vmul.f32 %v2372, %v4136
  %v4875 = vmul.f32 %v2723, %v4487
  %v4876 = vmul.f32 %v2725, %v4489
  %v4877 = vmul.f32 %v1670, %v3434
  %v4878 = vmul.f32 %v1672, %v3436
  %v4879 = vmul.f32 %v2023, %v3787
  %v4880 = vmul.f32 %v2025, %v3789
  %v4881 = vmul.f32 %v2376, %v4140
  %v4882 = vmul.f32 %v2378, %v4142
  %v4883 = vmul.f32 %v2729, %v4493
  %v4884 = vmul.f32 %v2731, %v4495
  %v4885 = vmul.f32 %v1674, %v3438
  %v4886 = vmul.f32 %v1676, %v3440
  %v4887 = vmul.f32 %v2027, %v3791
  %v4888 = vmul.f32 %v2029, %v3793
  %v4889 = vmul.f32 %v2380, %v4144
  %v4890 = vmul.f32 %v2382, %v4146
  %v4891 = vmul.f32 %v2733, %v4497
  %v4892 = vmul.f32 %v2735, %v4499
  %v4893 = vmul.f32 %v1680, %v3444
  %v4894 = vmul.f32 %v1682, %v3446
  %v4895 = vmul.f32 %v2033, %v3797
  %v4896 = vmul.f32 %v2035, %v3799
  %v4897 = vmul.f32 %v2386, %v4150
  %v4898 = vmul.f32 %v2388, %v4152
  %v4899 = vmul.f32 %v2739, %v4503
  %v4900 = vmul.f32 %v2741, %v4505
  %v4901 = vmul.f32 %v1684, %v3448
  %v4902 = vmul.f32 %v1686, %v3450
  %v4903 = vmul.f32 %v2037, %v3801
  %v4904 = vmul.f32 %v2039, %v3803
  %v4905 = vmul.f32 %v2390, %v4154
  %v4906 = vmul.f32 %v2392, %v4156
  %v4907 = vmul.f32 %v2743, %v4507
  %v4908 = vmul.f32 %v2745, %v4509
  %v4909 = vmul.f32 %v1690, %v3454
  %v4910 = vmul.f32 %v1692, %v3456
  %v4911 = vmul.f32 %v2043, %v3807
  %v4912 = vmul.f32 %v2045, %v3809
  %v4913 = vmul.f32 %v2396, %v4160
  %v4914 = vmul.f32 %v2398, %v4162
  %v4915 = vmul.f32 %v2749, %v4513
  %v4916 = vmul.f32 %v2751, %v4515
  %v4917 = vmul.f32 %v1694, %v3458
  %v4918 = vmul.f32 %v1696, %v3460
  %v4919 = vmul.f32 %v2047, %v3811
  %v4920 = vmul.f32 %v2049, %v3813
  %v4921 = vmul.f32 %v2400, %v4164
  %v4922 = vmul.f32 %v2402, %v4166
  %v4923 = vmul.f32 %v2753, %v4517
  %v4924 = vmul.f32 %v2755, %v4519
  %v4925 = vmul.f32 %v1700, %v3464
  %v4926 = vmul.f32 %v1702, %v3466
  %v4927 = vmul.f32 %v2053, %v3817
  %v4928 = vmul.f32 %v2055, %v3819
  %v4929 = vmul.f32 %v2406, %v4170
  %v4930 = vmul.f32 %v2408, %v4172
  %v4931 = vmul.f32 %v2759, %v4523
  %v4932 = vmul.f32 %v2761, %v4525
  %v4933 = vmul.f32 %v1704, %v3468
  %v4934 = vmul.f32 %v1706, %v3470
  %v4935 = vmul.f32 %v2057, %v3821
  %v4936 = vmul.f32 %v2059, %v3823
  %v4937 = vmul.f32 %v2410, %v4174
  %v4938 = vmul.f32 %v2412, %v4176
  %v4939 = vmul.f32 %v2763, %v4527
  %v4940 = vmul.f32 %v2765, %v4529
  %v4941 = vmul.f32 %v1710, %v3474
  %v4942 = vmul.f32 %v1712, %v3476
  %v4943 = vmul.f32 %v2063, %v3827
  %v4944 = vmul.f32 %v2065, %v3829
  %v4945 = vmul.f32 %v2416, %v4180
  %v4946 = vmul.f32 %v2418, %v4182
  %v4947 = vmul.f32 %v2769, %v4533
  %v4948 = vmul.f32 %v2771, %v4535
  %v4949 = vmul.f32 %v1714, %v3478
  %v4950 = vmul.f32 %v1716, %v3480
  %v4951 = vmul.f32 %v2067, %v3831
  %v4952 = vmul.f32 %v2069, %v3833
  %v4953 = vmul.f32 %v2420, %v4184
  %v4954 = vmul.f32 %v2422, %v4186
  %v4955 = vmul.f32 %v2773, %v4537
  %v4956 = vmul.f32 %v2775, %v4539
  %v4957 = vmul.f32 %v1720, %v3484
  %v4958 = vmul.f32 %v1722, %v3486
  %v4959 = vmul.f32 %v2073, %v3837
  %v4960 = vmul.f32 %v2075, %v3839
  %v4961 = vmul.f32 %v2426, %v4190
  %v4962 = vmul.f32 %v2428, %v4192
  %v4963 = vmul.f32 %v2779, %v4543
  %v4964 = vmul.f32 %v2781, %v4545
  %v4965 = vmul.f32 %v1724, %v3488
  %v4966 = vmul.f32 %v1726, %v3490
  %v4967 = vmul.f32 %v2077, %v3841
  %v4968 = vmul.f32 %v2079, %v3843
  %v4969 = vmul.f32 %v2430, %v4194
  %v4970 = vmul.f32 %v2432, %v4196
  %v4971 = vmul.f32 %v2783, %v4547
  %v4972 = vmul.f32 %v2785, %v4549
  %v4973 = vmul.f32 %v1730, %v3494
  %v4974 = vmul.f32 %v1732, %v3496
  %v4975 = vmul.f32 %v2083, %v3847
  %v4976 = vmul.f32 %v2085, %v3849
  %v4977 = vmul.f32 %v2436, %v4200
  %v4978 = vmul.f32 %v2438, %v4202
  %v4979 = vmul.f32 %v2789, %v4553
  %v4980 = vmul.f32 %v2791, %v4555
  %v4981 = vmul.f32 %v1734, %v3498
  %v4982 = vmul.f32 %v1736, %v3500
  %v4983 = vmul.f32 %v2087, %v3851
  %v4984 = vmul.f32 %v2089, %v3853
  %v4985 = vmul.f32 %v2440, %v4204
  %v4986 = vmul.f32 %v2442, %v4206
  %v4987 = vmul.f32 %v2793, %v4557
  %v4988 = vmul.f32 %v2795, %v4559
  %v4989 = vmul.f32 %v1740, %v3504
  %v4990 = vmul.f32 %v1742, %v3506
  %v4991 = vmul.f32 %v2093, %v3857
  %v4992 = vmul.f32 %v2095, %v3859
  %v4993 = vmul.f32 %v2446, %v4210
  %v4994 = vmul.f32 %v2448, %v4212
  %v4995 = vmul.f32 %v2799, %v4563
  %v4996 = vmul.f32 %v2801, %v4565
  %v4997 = vmul.f32 %v1744, %v3508
  %v4998 = vmul.f32 %v1746, %v3510
  %v4999 = vmul.f32 %v2097, %v3861
  %v5000 = vmul.f32 %v2099, %v3863
  %v5001 = vmul.f32 %v2450, %v4214
  %v5002 = vmul.f32 %v2452, %v4216
  %v5003 = vmul.f32 %v2803, %v4567
  %v5004 = vmul.f32 %v2805, %v4569
  %v5005 = vmul.f32 %v1750, %v3514
  %v5006 = vmul.f32 %v1752, %v3516
  %v5007 = vmul.f32 %v2103, %v3867
  %v5008 = vmul.f32 %v2105, %v3869
  %v5009 = vmul.f32 %v2456, %v4220
  %v5010 = vmul.f32 %v2458, %v4222
  %v5011 = vmul.f32 %v2809, %v4573
  %v5012 = vmul.f32 %v2811, %v4575
  %v5013 = vmul.f32 %v1754, %v3518
  %v5014 = vmul.f32 %v1756, %v3520
  %v5015 = vmul.f32 %v2107, %v3871
  %v5016 = vmul.f32 %v2109, %v3873
  %v5017 = vmul.f32 %v2460, %v4224
  %v5018 = vmul.f32 %v2462, %v4226
  %v5019 = vmul.f32 %v2813, %v4577
  %v5020 = vmul.f32 %v2815, %v4579
  %v5021 = vmul.f32 %v1760, %v3524
  %v5022 = vmul.f32 %v1762, %v3526
  %v5023 = vmul.f32 %v2113, %v3877
  %v5024 = vmul.f32 %v2115, %v3879
  %v5025 = vmul.f32 %v2466, %v4230
  %v5026 = vmul.f32 %v2468, %v4232
  %v5027 = vmul.f32 %v2819, %v4583
  %v5028 = vmul.f32 %v2821, %v4585
  %v5029 = vmul.f32 %v1764, %v3528
  %v5030 = vmul.f32 %v1766, %v3530
  %v5031 = vmul.f32 %v2117, %v3881
  %v5032 = vmul.f32 %v2119, %v3883
  %v5033 = vmul.f32 %v2470, %v4234
  %v5034 = vmul.f32 %v2472, %v4236
  %v5035 = vmul.f32 %v2823, %v4587
  %v5036 = vmul.f32 %v2825, %v4589
  %v5037 = vmul.f32 %v1770, %v3534
  %v5038 = vmul.f32 %v1772, %v3536
  %v5039 = vmul.f32 %v2123, %v3887
  %v5040 = vmul.f32 %v2125, %v3889
  %v5041 = vmul.f32 %v2476, %v4240
  %v5042 = vmul.f32 %v2478, %v4242
  %v5043 = vmul.f32 %v2829, %v4593
  %v5044 = vmul.f32 %v2831, %v4595
  %v5045 = vmul.f32 %v1774, %v3538
  %v5046 = vmul.f32 %v1776, %v3540
  %v5047 = vmul.f32 %v2127, %v3891
  %v5048 = vmul.f32 %v2129, %v3893
  %v5049 = vmul.f32 %v2480, %v4244
  %v5050 = vmul.f32 %v2482, %v4246
  %v5051 = vmul.f32 %v2833, %v4597
  %v5052 = vmul.f32 %v2835, %v4599
  %v5053 = vmul.f32 %v1780, %v3544
  %v5054 = vmul.f32 %v1782, %v3546
  %v5055 = vmul.f32 %v2133, %v3897
  %v5056 = vmul.f32 %v2135, %v3899
  %v5057 = vmul.f32 %v2486, %v4250
  %v5058 = vmul.f32 %v2488, %v4252
  %v5059 = vmul.f32 %v2839, %v4603
  %v5060 = vmul.f32 %v2841, %v4605
  %v5061 = vmul.f32 %v1784, %v3548
  %v5062 = vmul.f32 %v1786, %v3550
  %v5063 = vmul.f32 %v2137, %v3901
  %v5064 = vmul.f32 %v2139, %v3903
  %v5065 = vmul.f32 %v2490, %v4254
  %v5066 = vmul.f32 %v2492, %v4256
  %v5067 = vmul.f32 %v2843, %v4607
  %v5068 = vmul.f32 %v2845, %v4609
  %v5069 = vmul.f32 %v1790, %v3554
  %v5070 = vmul.f32 %v1792, %v3556
  %v5071 = vmul.f32 %v2143, %v3907
  %v5072 = vmul.f32 %v2145, %v3909
  %v5073 = vmul.f32 %v2496, %v4260
  %v5074 = vmul.f32 %v2498, %v4262
  %v5075 = vmul.f32 %v2849, %v4613
  %v5076 = vmul.f32 %v2851, %v4615
  %v5077 = vmul.f32 %v1794, %v3558
  %v5078 = vmul.f32 %v1796, %v3560
  %v5079 = vmul.f32 %v2147, %v3911
  %v5080 = vmul.f32 %v2149, %v3913
  %v5081 = vmul.f32 %v2500, %v4264
  %v5082 = vmul.f32 %v2502, %v4266
  %v5083 = vmul.f32 %v2853, %v4617
  %v5084 = vmul.f32 %v2855, %v4619
  %v5085 = vmul.f32 %v1800, %v3564
  %v5086 = vmul.f32 %v1802, %v3566
  %v5087 = vmul.f32 %v2153, %v3917
  %v5088 = vmul.f32 %v2155, %v3919
  %v5089 = vmul.f32 %v2506, %v4270
  %v5090 = vmul.f32 %v2508, %v4272
  %v5091 = vmul.f32 %v2859, %v4623
  %v5092 = vmul.f32 %v2861, %v4625
  %v5093 = vmul.f32 %v1804, %v3568
  %v5094 = vmul.f32 %v1806, %v3570
  %v5095 = vmul.f32 %v2157, %v3921
  %v5096 = vmul.f32 %v2159, %v3923
  %v5097 = vmul.f32 %v2510, %v4274
  %v5098 = vmul.f32 %v2512, %v4276
  %v5099 = vmul.f32 %v2863, %v4627
  %v5100 = vmul.f32 %v2865, %v4629
  %v5101 = vmul.f32 %v1810, %v3574
  %v5102 = vmul.f32 %v1812, %v3576
  %v5103 = vmul.f32 %v2163, %v3927
  %v5104 = vmul.f32 %v2165, %v3929
  %v5105 = vmul.f32 %v2516, %v4280
  %v5106 = vmul.f32 %v2518, %v4282
  %v5107 = vmul.f32 %v2869, %v4633
  %v5108 = vmul.f32 %v2871, %v4635
  %v5109 = vmul.f32 %v1814, %v3578
  %v5110 = vmul.f32 %v1816, %v3580
  %v5111 = vmul.f32 %v2167, %v3931
  %v5112 = vmul.f32 %v2169, %v3933
  %v5113 = vmul.f32 %v2520, %v4284
  %v5114 = vmul.f32 %v2522, %v4286
  %v5115 = vmul.f32 %v2873, %v4637
  %v5116 = vmul.f32 %v2875, %v4639
  %v5117 = vmul.f32 %v1820, %v3584
  %v5118 = vmul.f32 %v1822, %v3586
  %v5119 = vmul.f32 %v2173, %v3937
  %v5120 = vmul.f32 %v2175, %v3939
  %v5121 = vmul.f32 %v2526, %v4290
  %v5122 = vmul.f32 %v2528, %v4292
  %v5123 = vmul.f32 %v2879, %v4643
  %v5124 = vmul.f32 %v2881, %v4645
  %v5125 = vmul.f32 %v1824, %v3588
  %v5126 = vmul.f32 %v1826, %v3590
  %v5127 = vmul.f32 %v2177, %v3941
  %v5128 = vmul.f32 %v2179, %v3943
  %v5129 = vmul.f32 %v2530, %v4294
  %v5130 = vmul.f32 %v2532, %v4296
  %v5131 = vmul.f32 %v2883, %v4647
  %v5132 = vmul.f32 %v2885, %v4649
  %v5133 = vmul.f32 %v1830, %v3594
  %v5134 = vmul.f32 %v1832, %v3596
  %v5135 = vmul.f32 %v2183, %v3947
  %v5136 = vmul.f32 %v2185, %v3949
  %v5137 = vmul.f32 %v2536, %v4300
  %v5138 = vmul.f32 %v2538, %v4302
  %v5139 = vmul.f32 %v2889, %v4653
  %v5140 = vmul.f32 %v2891, %v4655
  %v5141 = vmul.f32 %v1834, %v3598
  %v5142 = vmul.f32 %v1836, %v3600
  %v5143 = vmul.f32 %v2187, %v3951
  %v5144 = vmul.f32 %v2189, %v3953
  %v5145 = vmul.f32 %v2540, %v4304
  %v5146 = vmul.f32 %v2542, %v4306
  %v5147 = vmul.f32 %v2893, %v4657
  %v5148 = vmul.f32 %v2895, %v4659
  %v5149 = vmul.f32 %v1840, %v3604
  %v5150 = vmul.f32 %v1842, %v3606
  %v5151 = vmul.f32 %v2193, %v3957
  %v5152 = vmul.f32 %v2195, %v3959
  %v5153 = vmul.f32 %v2546, %v4310
  %v5154 = vmul.f32 %v2548, %v4312
  %v5155 = vmul.f32 %v2899, %v4663
  %v5156 = vmul.f32 %v2901, %v4665
  %v5157 = vmul.f32 %v1844, %v3608
  %v5158 = vmul.f32 %v1846, %v3610
  %v5159 = vmul.f32 %v2197, %v3961
  %v5160 = vmul.f32 %v2199, %v3963
  %v5161 = vmul.f32 %v2550, %v4314
  %v5162 = vmul.f32 %v2552, %v4316
  %v5163 = vmul.f32 %v2903, %v4667
  %v5164 = vmul.f32 %v2905, %v4669
  %v5165 = vmul.f32 %v1850, %v3614
  %v5166 = vmul.f32 %v1852, %v3616
  %v5167 = vmul.f32 %v2203, %v3967
  %v5168 = vmul.f32 %v2205, %v3969
  %v5169 = vmul.f32 %v2556, %v4320
  %v5170 = vmul.f32 %v2558, %v4322
  %v5171 = vmul.f32 %v2909, %v4673
  %v5172 = vmul.f32 %v2911, %v4675
  %v5173 = vmul.f32 %v1854, %v3618
  %v5174 = vmul.f32 %v1856, %v3620
  %v5175 = vmul.f32 %v2207, %v3971
  %v5176 = vmul.f32 %v2209, %v3973
  %v5177 = vmul.f32 %v2560, %v4324
  %v5178 = vmul.f32 %v2562, %v4326
  %v5179 = vmul.f32 %v2913, %v4677
  %v5180 = vmul.f32 %v2915, %v4679
  %v5181 = vmul.f32 %v1860, %v3624
  %v5182 = vmul.f32 %v1862, %v3626
  %v5183 = vmul.f32 %v2213, %v3977
  %v5184 = vmul.f32 %v2215, %v3979
  %v5185 = vmul.f32 %v2566, %v4330
  %v5186 = vmul.f32 %v2568, %v4332
  %v5187 = vmul.f32 %v2919, %v4683
  %v5188 = vmul.f32 %v2921, %v4685
  %v5189 = vmul.f32 %v1864, %v3628
  %v5190 = vmul.f32 %v1866, %v3630
  %v5191 = vmul.f32 %v2217, %v3981
  %v5192 = vmul.f32 %v2219, %v3983
  %v5193 = vmul.f32 %v2570, %v4334
  %v5194 = vmul.f32 %v2572, %v4336
  %v5195 = vmul.f32 %v2923, %v4687
  %v5196 = vmul.f32 %v2925, %v4689
  %v5197 = vmul.f32 %v1870, %v3634
  %v5198 = vmul.f32 %v1872, %v3636
  %v5199 = vmul.f32 %v2223, %v3987
  %v5200 = vmul.f32 %v2225, %v3989
  %v5201 = vmul.f32 %v2576, %v4340
  %v5202 = vmul.f32 %v2578, %v4342
  %v5203 = vmul.f32 %v2929, %v4693
  %v5204 = vmul.f32 %v2931, %v4695
  %v5205 = vmul.f32 %v1874, %v3638
  %v5206 = vmul.f32 %v1876, %v3640
  %v5207 = vmul.f32 %v2227, %v3991
  %v5208 = vmul.f32 %v2229, %v3993
  %v5209 = vmul.f32 %v2580, %v4344
  %v5210 = vmul.f32 %v2582, %v4346
  %v5211 = vmul.f32 %v2933, %v4697
  %v5212 = vmul.f32 %v2935, %v4699
  %v5213 = vpack.c.bf16 %v4709, %v4701
  %v5214 = vpack.c.bf16 %v4710, %v4702
  %v5215 = vpack.c.bf16 %v4711, %v4703
  %v5216 = vpack.c.bf16 %v4712, %v4704
  %v5217 = vpack.c.bf16 %v4713, %v4705
  %v5218 = vpack.c.bf16 %v4714, %v4706
  %v5219 = vpack.c.bf16 %v4715, %v4707
  %v5220 = vpack.c.bf16 %v4716, %v4708
  %v5221 = vpack.c.bf16 %v4725, %v4717
  %v5222 = vpack.c.bf16 %v4726, %v4718
  %v5223 = vpack.c.bf16 %v4727, %v4719
  %v5224 = vpack.c.bf16 %v4728, %v4720
  %v5225 = vpack.c.bf16 %v4729, %v4721
  %v5226 = vpack.c.bf16 %v4730, %v4722
  %v5227 = vpack.c.bf16 %v4731, %v4723
  %v5228 = vpack.c.bf16 %v4732, %v4724
  %v5229 = vpack.c.bf16 %v4741, %v4733
  %v5230 = vpack.c.bf16 %v4742, %v4734
  %v5231 = vpack.c.bf16 %v4743, %v4735
  %v5232 = vpack.c.bf16 %v4744, %v4736
  %v5233 = vpack.c.bf16 %v4745, %v4737
  %v5234 = vpack.c.bf16 %v4746, %v4738
  %v5235 = vpack.c.bf16 %v4747, %v4739
  %v5236 = vpack.c.bf16 %v4748, %v4740
  %v5237 = vpack.c.bf16 %v4757, %v4749
  %v5238 = vpack.c.bf16 %v4758, %v4750
  %v5239 = vpack.c.bf16 %v4759, %v4751
  %v5240 = vpack.c.bf16 %v4760, %v4752
  %v5241 = vpack.c.bf16 %v4761, %v4753
  %v5242 = vpack.c.bf16 %v4762, %v4754
  %v5243 = vpack.c.bf16 %v4763, %v4755
  %v5244 = vpack.c.bf16 %v4764, %v4756
  %v5245 = vpack.c.bf16 %v4773, %v4765
  %v5246 = vpack.c.bf16 %v4774, %v4766
  %v5247 = vpack.c.bf16 %v4775, %v4767
  %v5248 = vpack.c.bf16 %v4776, %v4768
  %v5249 = vpack.c.bf16 %v4777, %v4769
  %v5250 = vpack.c.bf16 %v4778, %v4770
  %v5251 = vpack.c.bf16 %v4779, %v4771
  %v5252 = vpack.c.bf16 %v4780, %v4772
  %v5253 = vpack.c.bf16 %v4789, %v4781
  %v5254 = vpack.c.bf16 %v4790, %v4782
  %v5255 = vpack.c.bf16 %v4791, %v4783
  %v5256 = vpack.c.bf16 %v4792, %v4784
  %v5257 = vpack.c.bf16 %v4793, %v4785
  %v5258 = vpack.c.bf16 %v4794, %v4786
  %v5259 = vpack.c.bf16 %v4795, %v4787
  %v5260 = vpack.c.bf16 %v4796, %v4788
  %v5261 = vpack.c.bf16 %v4805, %v4797
  %v5262 = vpack.c.bf16 %v4806, %v4798
  %v5263 = vpack.c.bf16 %v4807, %v4799
  %v5264 = vpack.c.bf16 %v4808, %v4800
  %v5265 = vpack.c.bf16 %v4809, %v4801
  %v5266 = vpack.c.bf16 %v4810, %v4802
  %v5267 = vpack.c.bf16 %v4811, %v4803
  %v5268 = vpack.c.bf16 %v4812, %v4804
  %v5269 = vpack.c.bf16 %v4821, %v4813
  %v5270 = vpack.c.bf16 %v4822, %v4814
  %v5271 = vpack.c.bf16 %v4823, %v4815
  %v5272 = vpack.c.bf16 %v4824, %v4816
  %v5273 = vpack.c.bf16 %v4825, %v4817
  %v5274 = vpack.c.bf16 %v4826, %v4818
  %v5275 = vpack.c.bf16 %v4827, %v4819
  %v5276 = vpack.c.bf16 %v4828, %v4820
  %v5277 = vpack.c.bf16 %v4837, %v4829
  %v5278 = vpack.c.bf16 %v4838, %v4830
  %v5279 = vpack.c.bf16 %v4839, %v4831
  %v5280 = vpack.c.bf16 %v4840, %v4832
  %v5281 = vpack.c.bf16 %v4841, %v4833
  %v5282 = vpack.c.bf16 %v4842, %v4834
  %v5283 = vpack.c.bf16 %v4843, %v4835
  %v5284 = vpack.c.bf16 %v4844, %v4836
  %v5285 = vpack.c.bf16 %v4853, %v4845
  %v5286 = vpack.c.bf16 %v4854, %v4846
  %v5287 = vpack.c.bf16 %v4855, %v4847
  %v5288 = vpack.c.bf16 %v4856, %v4848
  %v5289 = vpack.c.bf16 %v4857, %v4849
  %v5290 = vpack.c.bf16 %v4858, %v4850
  %v5291 = vpack.c.bf16 %v4859, %v4851
  %v5292 = vpack.c.bf16 %v4860, %v4852
  %v5293 = vpack.c.bf16 %v4869, %v4861
  %v5294 = vpack.c.bf16 %v4870, %v4862
  %v5295 = vpack.c.bf16 %v4871, %v4863
  %v5296 = vpack.c.bf16 %v4872, %v4864
  %v5297 = vpack.c.bf16 %v4873, %v4865
  %v5298 = vpack.c.bf16 %v4874, %v4866
  %v5299 = vpack.c.bf16 %v4875, %v4867
  %v5300 = vpack.c.bf16 %v4876, %v4868
  %v5301 = vpack.c.bf16 %v4885, %v4877
  %v5302 = vpack.c.bf16 %v4886, %v4878
  %v5303 = vpack.c.bf16 %v4887, %v4879
  %v5304 = vpack.c.bf16 %v4888, %v4880
  %v5305 = vpack.c.bf16 %v4889, %v4881
  %v5306 = vpack.c.bf16 %v4890, %v4882
  %v5307 = vpack.c.bf16 %v4891, %v4883
  %v5308 = vpack.c.bf16 %v4892, %v4884
  %v5309 = vpack.c.bf16 %v4901, %v4893
  %v5310 = vpack.c.bf16 %v4902, %v4894
  %v5311 = vpack.c.bf16 %v4903, %v4895
  %v5312 = vpack.c.bf16 %v4904, %v4896
  %v5313 = vpack.c.bf16 %v4905, %v4897
  %v5314 = vpack.c.bf16 %v4906, %v4898
  %v5315 = vpack.c.bf16 %v4907, %v4899
  %v5316 = vpack.c.bf16 %v4908, %v4900
  %v5317 = vpack.c.bf16 %v4917, %v4909
  %v5318 = vpack.c.bf16 %v4918, %v4910
  %v5319 = vpack.c.bf16 %v4919, %v4911
  %v5320 = vpack.c.bf16 %v4920, %v4912
  %v5321 = vpack.c.bf16 %v4921, %v4913
  %v5322 = vpack.c.bf16 %v4922, %v4914
  %v5323 = vpack.c.bf16 %v4923, %v4915
  %v5324 = vpack.c.bf16 %v4924, %v4916
  %v5325 = vpack.c.bf16 %v4933, %v4925
  %v5326 = vpack.c.bf16 %v4934, %v4926
  %v5327 = vpack.c.bf16 %v4935, %v4927
  %v5328 = vpack.c.bf16 %v4936, %v4928
  %v5329 = vpack.c.bf16 %v4937, %v4929
  %v5330 = vpack.c.bf16 %v4938, %v4930
  %v5331 = vpack.c.bf16 %v4939, %v4931
  %v5332 = vpack.c.bf16 %v4940, %v4932
  %v5333 = vpack.c.bf16 %v4949, %v4941
  %v5334 = vpack.c.bf16 %v4950, %v4942
  %v5335 = vpack.c.bf16 %v4951, %v4943
  %v5336 = vpack.c.bf16 %v4952, %v4944
  %v5337 = vpack.c.bf16 %v4953, %v4945
  %v5338 = vpack.c.bf16 %v4954, %v4946
  %v5339 = vpack.c.bf16 %v4955, %v4947
  %v5340 = vpack.c.bf16 %v4956, %v4948
  %v5341 = vpack.c.bf16 %v4965, %v4957
  %v5342 = vpack.c.bf16 %v4966, %v4958
  %v5343 = vpack.c.bf16 %v4967, %v4959
  %v5344 = vpack.c.bf16 %v4968, %v4960
  %v5345 = vpack.c.bf16 %v4969, %v4961
  %v5346 = vpack.c.bf16 %v4970, %v4962
  %v5347 = vpack.c.bf16 %v4971, %v4963
  %v5348 = vpack.c.bf16 %v4972, %v4964
  %v5349 = vpack.c.bf16 %v4981, %v4973
  %v5350 = vpack.c.bf16 %v4982, %v4974
  %v5351 = vpack.c.bf16 %v4983, %v4975
  %v5352 = vpack.c.bf16 %v4984, %v4976
  %v5353 = vpack.c.bf16 %v4985, %v4977
  %v5354 = vpack.c.bf16 %v4986, %v4978
  %v5355 = vpack.c.bf16 %v4987, %v4979
  %v5356 = vpack.c.bf16 %v4988, %v4980
  %v5357 = vpack.c.bf16 %v4997, %v4989
  %v5358 = vpack.c.bf16 %v4998, %v4990
  %v5359 = vpack.c.bf16 %v4999, %v4991
  %v5360 = vpack.c.bf16 %v5000, %v4992
  %v5361 = vpack.c.bf16 %v5001, %v4993
  %v5362 = vpack.c.bf16 %v5002, %v4994
  %v5363 = vpack.c.bf16 %v5003, %v4995
  %v5364 = vpack.c.bf16 %v5004, %v4996
  %v5365 = vpack.c.bf16 %v5013, %v5005
  %v5366 = vpack.c.bf16 %v5014, %v5006
  %v5367 = vpack.c.bf16 %v5015, %v5007
  %v5368 = vpack.c.bf16 %v5016, %v5008
  %v5369 = vpack.c.bf16 %v5017, %v5009
  %v5370 = vpack.c.bf16 %v5018, %v5010
  %v5371 = vpack.c.bf16 %v5019, %v5011
  %v5372 = vpack.c.bf16 %v5020, %v5012
  %v5373 = vpack.c.bf16 %v5029, %v5021
  %v5374 = vpack.c.bf16 %v5030, %v5022
  %v5375 = vpack.c.bf16 %v5031, %v5023
  %v5376 = vpack.c.bf16 %v5032, %v5024
  %v5377 = vpack.c.bf16 %v5033, %v5025
  %v5378 = vpack.c.bf16 %v5034, %v5026
  %v5379 = vpack.c.bf16 %v5035, %v5027
  %v5380 = vpack.c.bf16 %v5036, %v5028
  %v5381 = vpack.c.bf16 %v5045, %v5037
  %v5382 = vpack.c.bf16 %v5046, %v5038
  %v5383 = vpack.c.bf16 %v5047, %v5039
  %v5384 = vpack.c.bf16 %v5048, %v5040
  %v5385 = vpack.c.bf16 %v5049, %v5041
  %v5386 = vpack.c.bf16 %v5050, %v5042
  %v5387 = vpack.c.bf16 %v5051, %v5043
  %v5388 = vpack.c.bf16 %v5052, %v5044
  %v5389 = vpack.c.bf16 %v5061, %v5053
  %v5390 = vpack.c.bf16 %v5062, %v5054
  %v5391 = vpack.c.bf16 %v5063, %v5055
  %v5392 = vpack.c.bf16 %v5064, %v5056
  %v5393 = vpack.c.bf16 %v5065, %v5057
  %v5394 = vpack.c.bf16 %v5066, %v5058
  %v5395 = vpack.c.bf16 %v5067, %v5059
  %v5396 = vpack.c.bf16 %v5068, %v5060
  %v5397 = vpack.c.bf16 %v5077, %v5069
  %v5398 = vpack.c.bf16 %v5078, %v5070
  %v5399 = vpack.c.bf16 %v5079, %v5071
  %v5400 = vpack.c.bf16 %v5080, %v5072
  %v5401 = vpack.c.bf16 %v5081, %v5073
  %v5402 = vpack.c.bf16 %v5082, %v5074
  %v5403 = vpack.c.bf16 %v5083, %v5075
  %v5404 = vpack.c.bf16 %v5084, %v5076
  %v5405 = vpack.c.bf16 %v5093, %v5085
  %v5406 = vpack.c.bf16 %v5094, %v5086
  %v5407 = vpack.c.bf16 %v5095, %v5087
  %v5408 = vpack.c.bf16 %v5096, %v5088
  %v5409 = vpack.c.bf16 %v5097, %v5089
  %v5410 = vpack.c.bf16 %v5098, %v5090
  %v5411 = vpack.c.bf16 %v5099, %v5091
  %v5412 = vpack.c.bf16 %v5100, %v5092
  %v5413 = vpack.c.bf16 %v5109, %v5101
  %v5414 = vpack.c.bf16 %v5110, %v5102
  %v5415 = vpack.c.bf16 %v5111, %v5103
  %v5416 = vpack.c.bf16 %v5112, %v5104
  %v5417 = vpack.c.bf16 %v5113, %v5105
  %v5418 = vpack.c.bf16 %v5114, %v5106
  %v5419 = vpack.c.bf16 %v5115, %v5107
  %v5420 = vpack.c.bf16 %v5116, %v5108
  %v5421 = vpack.c.bf16 %v5125, %v5117
  %v5422 = vpack.c.bf16 %v5126, %v5118
  %v5423 = vpack.c.bf16 %v5127, %v5119
  %v5424 = vpack.c.bf16 %v5128, %v5120
  %v5425 = vpack.c.bf16 %v5129, %v5121
  %v5426 = vpack.c.bf16 %v5130, %v5122
  %v5427 = vpack.c.bf16 %v5131, %v5123
  %v5428 = vpack.c.bf16 %v5132, %v5124
  %v5429 = vpack.c.bf16 %v5141, %v5133
  %v5430 = vpack.c.bf16 %v5142, %v5134
  %v5431 = vpack.c.bf16 %v5143, %v5135
  %v5432 = vpack.c.bf16 %v5144, %v5136
  %v5433 = vpack.c.bf16 %v5145, %v5137
  %v5434 = vpack.c.bf16 %v5146, %v5138
  %v5435 = vpack.c.bf16 %v5147, %v5139
  %v5436 = vpack.c.bf16 %v5148, %v5140
  %v5437 = vpack.c.bf16 %v5157, %v5149
  %v5438 = vpack.c.bf16 %v5158, %v5150
  %v5439 = vpack.c.bf16 %v5159, %v5151
  %v5440 = vpack.c.bf16 %v5160, %v5152
  %v5441 = vpack.c.bf16 %v5161, %v5153
  %v5442 = vpack.c.bf16 %v5162, %v5154
  %v5443 = vpack.c.bf16 %v5163, %v5155
  %v5444 = vpack.c.bf16 %v5164, %v5156
  %v5445 = vpack.c.bf16 %v5173, %v5165
  %v5446 = vpack.c.bf16 %v5174, %v5166
  %v5447 = vpack.c.bf16 %v5175, %v5167
  %v5448 = vpack.c.bf16 %v5176, %v5168
  %v5449 = vpack.c.bf16 %v5177, %v5169
  %v5450 = vpack.c.bf16 %v5178, %v5170
  %v5451 = vpack.c.bf16 %v5179, %v5171
  %v5452 = vpack.c.bf16 %v5180, %v5172
  %v5453 = vpack.c.bf16 %v5189, %v5181
  %v5454 = vpack.c.bf16 %v5190, %v5182
  %v5455 = vpack.c.bf16 %v5191, %v5183
  %v5456 = vpack.c.bf16 %v5192, %v5184
  %v5457 = vpack.c.bf16 %v5193, %v5185
  %v5458 = vpack.c.bf16 %v5194, %v5186
  %v5459 = vpack.c.bf16 %v5195, %v5187
  %v5460 = vpack.c.bf16 %v5196, %v5188
  %v5461 = vpack.c.bf16 %v5205, %v5197
  %v5462 = vpack.c.bf16 %v5206, %v5198
  %v5463 = vpack.c.bf16 %v5207, %v5199
  %v5464 = vpack.c.bf16 %v5208, %v5200
  %v5465 = vpack.c.bf16 %v5209, %v5201
  %v5466 = vpack.c.bf16 %v5210, %v5202
  %v5467 = vpack.c.bf16 %v5211, %v5203
  %v5468 = vpack.c.bf16 %v5212, %v5204
  %v5469 = vld [vmem:[%s9] sm:$0xf]
  %v5470 = vld [vmem:[%s9 + $0x4] sm:$0xf]
  %v5471 = vld [vmem:[%s9 + $0x8] sm:$0xf]
  %v5472 = vld [vmem:[%s9 + $0xc] sm:$0xf]
  %v5473 = vld [vmem:[%s9 + $0x10] sm:$0xf]
  %v5474 = vld [vmem:[%s9 + $0x14] sm:$0xf]
  %v5475 = vld [vmem:[%s9 + $0x18] sm:$0xf]
  %v5476 = vld [vmem:[%s9 + $0x1c] sm:$0xf]
  %v5477 = vld [vmem:[%s9 + $0x20] sm:$0xf]
  %v5478 = vld [vmem:[%s9 + $0x24] sm:$0xf]
  %v5479 = vld [vmem:[%s9 + $0x28] sm:$0xf]
  %v5480 = vld [vmem:[%s9 + $0x2c] sm:$0xf]
  %v5481 = vld [vmem:[%s9 + $0x30] sm:$0xf]
  %v5482 = vld [vmem:[%s9 + $0x34] sm:$0xf]
  %v5483 = vld [vmem:[%s9 + $0x38] sm:$0xf]
  %v5484 = vld [vmem:[%s9 + $0x3c] sm:$0xf]
  %v5485 = vld [vmem:[%s9 + $0x40] sm:$0xf]
  %v5486 = vld [vmem:[%s9 + $0x44] sm:$0xf]
  %v5487 = vld [vmem:[%s9 + $0x48] sm:$0xf]
  %v5488 = vld [vmem:[%s9 + $0x4c] sm:$0xf]
  %v5489 = vld [vmem:[%s9 + $0x50] sm:$0xf]
  %v5490 = vld [vmem:[%s9 + $0x54] sm:$0xf]
  %v5491 = vld [vmem:[%s9 + $0x58] sm:$0xf]
  %v5492 = vld [vmem:[%s9 + $0x5c] sm:$0xf]
  %v5493 = vld [vmem:[%s9 + $0x60] sm:$0xf]
  %v5494 = vld [vmem:[%s9 + $0x64] sm:$0xf]
  %v5495 = vld [vmem:[%s9 + $0x68] sm:$0xf]
  %v5496 = vld [vmem:[%s9 + $0x6c] sm:$0xf]
  %v5497 = vld [vmem:[%s9 + $0x70] sm:$0xf]
  %v5498 = vld [vmem:[%s9 + $0x74] sm:$0xf]
  %v5499 = vld [vmem:[%s9 + $0x78] sm:$0xf]
  %v5500 = vld [vmem:[%s9 + $0x7c] sm:$0xf]
  %v5501 = vld [vmem:[%s9 + $0x80] sm:$0xf]
  %v5502 = vld [vmem:[%s9 + $0x84] sm:$0xf]
  %v5503 = vld [vmem:[%s9 + $0x88] sm:$0xf]
  %v5504 = vld [vmem:[%s9 + $0x8c] sm:$0xf]
  %v5505 = vld [vmem:[%s9 + $0x90] sm:$0xf]
  %v5506 = vld [vmem:[%s9 + $0x94] sm:$0xf]
  %v5507 = vld [vmem:[%s9 + $0x98] sm:$0xf]
  %v5508 = vld [vmem:[%s9 + $0x9c] sm:$0xf]
  %v5509 = vld [vmem:[%s9 + $0xa0] sm:$0xf]
  %v5510 = vld [vmem:[%s9 + $0xa4] sm:$0xf]
  %v5511 = vld [vmem:[%s9 + $0xa8] sm:$0xf]
  %v5512 = vld [vmem:[%s9 + $0xac] sm:$0xf]
  %v5513 = vld [vmem:[%s9 + $0xb0] sm:$0xf]
  %v5514 = vld [vmem:[%s9 + $0xb4] sm:$0xf]
  %v5515 = vld [vmem:[%s9 + $0xb8] sm:$0xf]
  %v5516 = vld [vmem:[%s9 + $0xbc] sm:$0xf]
  %v5517 = vld [vmem:[%s9 + $0xc0] sm:$0xf]
  %v5518 = vld [vmem:[%s9 + $0xc4] sm:$0xf]
  %v5519 = vld [vmem:[%s9 + $0xc8] sm:$0xf]
  %v5520 = vld [vmem:[%s9 + $0xcc] sm:$0xf]
  %v5521 = vld [vmem:[%s9 + $0xd0] sm:$0xf]
  %v5522 = vld [vmem:[%s9 + $0xd4] sm:$0xf]
  %v5523 = vld [vmem:[%s9 + $0xd8] sm:$0xf]
  %v5524 = vld [vmem:[%s9 + $0xdc] sm:$0xf]
  %v5525 = vld [vmem:[%s9 + $0xe0] sm:$0xf]
  %v5526 = vld [vmem:[%s9 + $0xe4] sm:$0xf]
  %v5527 = vld [vmem:[%s9 + $0xe8] sm:$0xf]
  %v5528 = vld [vmem:[%s9 + $0xec] sm:$0xf]
  %v5529 = vld [vmem:[%s9 + $0xf0] sm:$0xf]
  %v5530 = vld [vmem:[%s9 + $0xf4] sm:$0xf]
  %v5531 = vld [vmem:[%s9 + $0xf8] sm:$0xf]
  %v5532 = vld [vmem:[%s9 + $0xfc] sm:$0xf]
  %v5533 = vld [vmem:[%s9 + $0x100] sm:$0xf]
  %v5534 = vld [vmem:[%s9 + $0x104] sm:$0xf]
  %v5535 = vld [vmem:[%s9 + $0x108] sm:$0xf]
  %v5536 = vld [vmem:[%s9 + $0x10c] sm:$0xf]
  %v5537 = vld [vmem:[%s9 + $0x110] sm:$0xf]
  %v5538 = vld [vmem:[%s9 + $0x114] sm:$0xf]
  %v5539 = vld [vmem:[%s9 + $0x118] sm:$0xf]
  %v5540 = vld [vmem:[%s9 + $0x11c] sm:$0xf]
  %v5541 = vld [vmem:[%s9 + $0x120] sm:$0xf]
  %v5542 = vld [vmem:[%s9 + $0x124] sm:$0xf]
  %v5543 = vld [vmem:[%s9 + $0x128] sm:$0xf]
  %v5544 = vld [vmem:[%s9 + $0x12c] sm:$0xf]
  %v5545 = vld [vmem:[%s9 + $0x130] sm:$0xf]
  %v5546 = vld [vmem:[%s9 + $0x134] sm:$0xf]
  %v5547 = vld [vmem:[%s9 + $0x138] sm:$0xf]
  %v5548 = vld [vmem:[%s9 + $0x13c] sm:$0xf]
  %v5549 = vld [vmem:[%s9 + $0x140] sm:$0xf]
  %v5550 = vld [vmem:[%s9 + $0x144] sm:$0xf]
  %v5551 = vld [vmem:[%s9 + $0x148] sm:$0xf]
  %v5552 = vld [vmem:[%s9 + $0x14c] sm:$0xf]
  %v5553 = vld [vmem:[%s9 + $0x150] sm:$0xf]
  %v5554 = vld [vmem:[%s9 + $0x154] sm:$0xf]
  %v5555 = vld [vmem:[%s9 + $0x158] sm:$0xf]
  %v5556 = vld [vmem:[%s9 + $0x15c] sm:$0xf]
  %v5557 = vld [vmem:[%s9 + $0x160] sm:$0xf]
  %v5558 = vld [vmem:[%s9 + $0x164] sm:$0xf]
  %v5559 = vld [vmem:[%s9 + $0x168] sm:$0xf]
  %v5560 = vld [vmem:[%s9 + $0x16c] sm:$0xf]
  %v5561 = vld [vmem:[%s9 + $0x170] sm:$0xf]
  %v5562 = vld [vmem:[%s9 + $0x174] sm:$0xf]
  %v5563 = vld [vmem:[%s9 + $0x178] sm:$0xf]
  %v5564 = vld [vmem:[%s9 + $0x17c] sm:$0xf]
  %v5565 = vld [vmem:[%s9 + $0x180] sm:$0xf]
  %v5566 = vld [vmem:[%s9 + $0x184] sm:$0xf]
  %v5567 = vld [vmem:[%s9 + $0x188] sm:$0xf]
  %v5568 = vld [vmem:[%s9 + $0x18c] sm:$0xf]
  %v5569 = vld [vmem:[%s9 + $0x190] sm:$0xf]
  %v5570 = vld [vmem:[%s9 + $0x194] sm:$0xf]
  %v5571 = vld [vmem:[%s9 + $0x198] sm:$0xf]
  %v5572 = vld [vmem:[%s9 + $0x19c] sm:$0xf]
  %v5573 = vld [vmem:[%s9 + $0x1a0] sm:$0xf]
  %v5574 = vld [vmem:[%s9 + $0x1a4] sm:$0xf]
  %v5575 = vld [vmem:[%s9 + $0x1a8] sm:$0xf]
  %v5576 = vld [vmem:[%s9 + $0x1ac] sm:$0xf]
  %v5577 = vld [vmem:[%s9 + $0x1b0] sm:$0xf]
  %v5578 = vld [vmem:[%s9 + $0x1b4] sm:$0xf]
  %v5579 = vld [vmem:[%s9 + $0x1b8] sm:$0xf]
  %v5580 = vld [vmem:[%s9 + $0x1bc] sm:$0xf]
  %v5581 = vld [vmem:[%s9 + $0x1c0] sm:$0xf]
  %v5582 = vld [vmem:[%s9 + $0x1c4] sm:$0xf]
  %v5583 = vld [vmem:[%s9 + $0x1c8] sm:$0xf]
  %v5584 = vld [vmem:[%s9 + $0x1cc] sm:$0xf]
  %v5585 = vld [vmem:[%s9 + $0x1d0] sm:$0xf]
  %v5586 = vld [vmem:[%s9 + $0x1d4] sm:$0xf]
  %v5587 = vld [vmem:[%s9 + $0x1d8] sm:$0xf]
  %v5588 = vld [vmem:[%s9 + $0x1dc] sm:$0xf]
  %v5589 = vld [vmem:[%s9 + $0x1e0] sm:$0xf]
  %v5590 = vld [vmem:[%s9 + $0x1e4] sm:$0xf]
  %v5591 = vld [vmem:[%s9 + $0x1e8] sm:$0xf]
  %v5592 = vld [vmem:[%s9 + $0x1ec] sm:$0xf]
  %v5593 = vld [vmem:[%s9 + $0x1f0] sm:$0xf]
  %v5594 = vld [vmem:[%s9 + $0x1f4] sm:$0xf]
  %v5595 = vld [vmem:[%s9 + $0x1f8] sm:$0xf]
  %v5596 = vld [vmem:[%s9 + $0x1fc] sm:$0xf]
  %v5597 = vld [vmem:[%s10] sm:$0xf]
  %v5598 = vld [vmem:[%s10 + $0x4] sm:$0xf]
  %v5599 = vld [vmem:[%s10 + $0x8] sm:$0xf]
  %v5600 = vld [vmem:[%s10 + $0xc] sm:$0xf]
  %v5605 = vunpack.c.l.b16 %v5597
  %v5606 = vunpack.c.l.b16 %v5598
  %v5607 = vunpack.c.l.b16 %v5599
  %v5608 = vunpack.c.l.b16 %v5600
  %v5609 = vpack.c.b16 %v5606, %v5605
  %v5610 = vpack.c.b16 %v5608, %v5607
  %5613 = vmatprep.subr.bf16.mxu0 0
  %5614 = vmatpush1.bf16.msra.mxu0 %v5609
  %5615 = vmatprep.subr.bf16.mxu0 0
  %5616 = vmatpush1.bf16.msra.mxu0 %v5610
  %5617 = vmatprep.subr.bf16.mxu0 0
  %5618 = vmatpush1.bf16.msra.mxu0 0
  %5619 = vmatprep.subr.bf16.mxu0 0
  %5620 = vmatpush1.bf16.msra.mxu0 0
  %5621 = vmatprep.subr.bf16.mxu0 0
  %5622 = vmatpush1.bf16.msra.mxu0 0
  %5623 = vmatprep.subr.bf16.mxu0 0
  %5624 = vmatpush1.bf16.msra.mxu0 0
  %5625 = vmatprep.subr.bf16.mxu0 0
  %5626 = vmatpush1.bf16.msra.mxu0 0
  %5627 = vmatprep.subr.bf16.mxu0 0
  %5628 = vmatpush1.bf16.msra.mxu0 0
  %5629 = vmatprep.subr.bf16.mxu0 0
  %5630 = vmatpush1.bf16.msra.mxu0 0
  %5631 = vmatprep.subr.bf16.mxu0 0
  %5632 = vmatpush1.bf16.msra.mxu0 0
  %5633 = vmatprep.subr.bf16.mxu0 0
  %5634 = vmatpush1.bf16.msra.mxu0 0
  %5635 = vmatprep.subr.bf16.mxu0 0
  %5636 = vmatpush1.bf16.msra.mxu0 0
  %5637 = vmatprep.subr.bf16.mxu0 0
  %5638 = vmatpush1.bf16.msra.mxu0 0
  %5639 = vmatprep.subr.bf16.mxu0 0
  %5640 = vmatpush1.bf16.msra.mxu0 0
  %5641 = vmatprep.subr.bf16.mxu0 0
  %5642 = vmatpush1.bf16.msra.mxu0 0
  %5643 = vmatprep.subr.bf16.mxu0 0
  %5644 = vmatpush1.bf16.msra.mxu0 0
  %5645 = vmatprep.mubr.bf16.mxu0 0
  %5646 = vmatmul.mubr.bf16.gmra.mrb[0].mxu0 %v3194
  %v5647 = vpop.f32.mrb[0].mxu0
  %v5648 = vadd.f32 0.0, %v5647
  %v5649 = vpop.f32.mrb[0].mxu0
  %v5650 = vpop.f32.mrb[0].mxu0
  %v5651 = vadd.f32 0.0, %v5650
  %v5652 = vpop.f32.mrb[0].mxu0
  %5653 = vmatprep.mubr.bf16.mxu0 0
  %5654 = vmatmul.mubr.bf16.gmra.mrb[0].mxu0 %v3197
  %v5655 = vpop.f32.mrb[0].mxu0
  %v5656 = vadd.f32 0.0, %v5655
  %v5657 = vpop.f32.mrb[0].mxu0
  %v5658 = vpop.f32.mrb[0].mxu0
  %v5659 = vadd.f32 0.0, %v5658
  %v5660 = vpop.f32.mrb[0].mxu0
  %5661 = vmatprep.mubr.bf16.mxu0 0
  %5662 = vmatmul.mubr.bf16.gmra.mrb[0].mxu0 %v3200
  %v5663 = vpop.f32.mrb[0].mxu0
  %v5664 = vadd.f32 0.0, %v5663
  %v5665 = vpop.f32.mrb[0].mxu0
  %v5666 = vpop.f32.mrb[0].mxu0
  %v5667 = vadd.f32 0.0, %v5666
  %v5668 = vpop.f32.mrb[0].mxu0
  %5669 = vmatprep.mubr.bf16.mxu0 0
  %5670 = vmatmul.mubr.bf16.gmra.mrb[0].mxu0 %v3203
  %v5671 = vpop.f32.mrb[0].mxu0
  %v5672 = vadd.f32 0.0, %v5671
  %v5673 = vpop.f32.mrb[0].mxu0
  %v5674 = vpop.f32.mrb[0].mxu0
  %v5675 = vadd.f32 0.0, %v5674
  %v5676 = vpop.f32.mrb[0].mxu0
  %5677 = vmatprep.mubr.bf16.mxu0 0
  %5678 = vmatmul.mubr.bf16.gmra.mrb[0].mxu0 %v3206
  %v5679 = vpop.f32.mrb[0].mxu0
  %v5680 = vadd.f32 0.0, %v5679
  %v5681 = vpop.f32.mrb[0].mxu0
  %v5682 = vpop.f32.mrb[0].mxu0
  %v5683 = vadd.f32 0.0, %v5682
  %v5684 = vpop.f32.mrb[0].mxu0
  %5685 = vmatprep.mubr.bf16.mxu0 0
  %5686 = vmatmul.mubr.bf16.gmra.mrb[0].mxu0 %v3209
  %v5687 = vpop.f32.mrb[0].mxu0
  %v5688 = vadd.f32 0.0, %v5687
  %v5689 = vpop.f32.mrb[0].mxu0
  %v5690 = vpop.f32.mrb[0].mxu0
  %v5691 = vadd.f32 0.0, %v5690
  %v5692 = vpop.f32.mrb[0].mxu0
  %5693 = vmatprep.mubr.bf16.mxu0 0
  %5694 = vmatmul.mubr.bf16.gmra.mrb[0].mxu0 %v3212
  %v5695 = vpop.f32.mrb[0].mxu0
  %v5696 = vadd.f32 0.0, %v5695
  %v5697 = vpop.f32.mrb[0].mxu0
  %v5698 = vpop.f32.mrb[0].mxu0
  %v5699 = vadd.f32 0.0, %v5698
  %v5700 = vpop.f32.mrb[0].mxu0
  %5701 = vmatprep.mubr.bf16.mxu0 0
  %5702 = vmatmul.mubr.bf16.gmra.mrb[0].mxu0 %v3215
  %v5703 = vpop.f32.mrb[0].mxu0
  %v5704 = vadd.f32 0.0, %v5703
  %v5705 = vpop.f32.mrb[0].mxu0
  %v5706 = vpop.f32.mrb[0].mxu0
  %v5707 = vadd.f32 0.0, %v5706
  %v5708 = vpop.f32.mrb[0].mxu0
  %5709 = vmatprep.mubr.bf16.mxu0 0
  %5710 = vmatmul.mubr.bf16.gmra.mrb[0].mxu0 %v3218
  %v5711 = vpop.f32.mrb[0].mxu0
  %v5712 = vadd.f32 0.0, %v5711
  %v5713 = vpop.f32.mrb[0].mxu0
  %v5714 = vpop.f32.mrb[0].mxu0
  %v5715 = vadd.f32 0.0, %v5714
  %v5716 = vpop.f32.mrb[0].mxu0
  %5717 = vmatprep.mubr.bf16.mxu0 0
  %5718 = vmatmul.mubr.bf16.gmra.mrb[0].mxu0 %v3221
  %v5719 = vpop.f32.mrb[0].mxu0
  %v5720 = vadd.f32 0.0, %v5719
  %v5721 = vpop.f32.mrb[0].mxu0
  %v5722 = vpop.f32.mrb[0].mxu0
  %v5723 = vadd.f32 0.0, %v5722
  %v5724 = vpop.f32.mrb[0].mxu0
  %5725 = vmatprep.mubr.bf16.mxu0 0
  %5726 = vmatmul.mubr.bf16.gmra.mrb[0].mxu0 %v3224
  %v5727 = vpop.f32.mrb[0].mxu0
  %v5728 = vadd.f32 0.0, %v5727
  %v5729 = vpop.f32.mrb[0].mxu0
  %v5730 = vpop.f32.mrb[0].mxu0
  %v5731 = vadd.f32 0.0, %v5730
  %v5732 = vpop.f32.mrb[0].mxu0
  %5733 = vmatprep.mubr.bf16.mxu0 0
  %5734 = vmatmul.mubr.bf16.gmra.mrb[0].mxu0 %v3227
  %v5735 = vpop.f32.mrb[0].mxu0
  %v5736 = vadd.f32 0.0, %v5735
  %v5737 = vpop.f32.mrb[0].mxu0
  %v5738 = vpop.f32.mrb[0].mxu0
  %v5739 = vadd.f32 0.0, %v5738
  %v5740 = vpop.f32.mrb[0].mxu0
  %5741 = vmatprep.mubr.bf16.mxu0 0
  %5742 = vmatmul.mubr.bf16.gmra.mrb[0].mxu0 %v3230
  %v5743 = vpop.f32.mrb[0].mxu0
  %v5744 = vadd.f32 0.0, %v5743
  %v5745 = vpop.f32.mrb[0].mxu0
  %v5746 = vpop.f32.mrb[0].mxu0
  %v5747 = vadd.f32 0.0, %v5746
  %v5748 = vpop.f32.mrb[0].mxu0
  %5749 = vmatprep.mubr.bf16.mxu0 0
  %5750 = vmatmul.mubr.bf16.gmra.mrb[0].mxu0 %v3233
  %v5751 = vpop.f32.mrb[0].mxu0
  %v5752 = vadd.f32 0.0, %v5751
  %v5753 = vpop.f32.mrb[0].mxu0
  %v5754 = vpop.f32.mrb[0].mxu0
  %v5755 = vadd.f32 0.0, %v5754
  %v5756 = vpop.f32.mrb[0].mxu0
  %5757 = vmatprep.mubr.bf16.mxu0 0
  %5758 = vmatmul.mubr.bf16.gmra.mrb[0].mxu0 %v3236
  %v5759 = vpop.f32.mrb[0].mxu0
  %v5760 = vadd.f32 0.0, %v5759
  %v5761 = vpop.f32.mrb[0].mxu0
  %v5762 = vpop.f32.mrb[0].mxu0
  %v5763 = vadd.f32 0.0, %v5762
  %v5764 = vpop.f32.mrb[0].mxu0
  %5765 = vmatprep.mubr.bf16.mxu0 0
  %5766 = vmatmul.mubr.bf16.gmra.mrb[0].mxu0 %v3239
  %v5767 = vpop.f32.mrb[0].mxu0
  %v5768 = vadd.f32 0.0, %v5767
  %v5769 = vpop.f32.mrb[0].mxu0
  %v5770 = vpop.f32.mrb[0].mxu0
  %v5771 = vadd.f32 0.0, %v5770
  %v5772 = vpop.f32.mrb[0].mxu0
  %5773 = vmatprep.mubr.bf16.mxu0 0
  %5774 = vmatmul.mubr.bf16.gmra.mrb[0].mxu0 %v3242
  %v5775 = vpop.f32.mrb[0].mxu0
  %v5776 = vadd.f32 0.0, %v5775
  %v5777 = vpop.f32.mrb[0].mxu0
  %v5778 = vpop.f32.mrb[0].mxu0
  %v5779 = vadd.f32 0.0, %v5778
  %v5780 = vpop.f32.mrb[0].mxu0
  %5781 = vmatprep.mubr.bf16.mxu0 0
  %5782 = vmatmul.mubr.bf16.gmra.mrb[0].mxu0 %v3245
  %v5783 = vpop.f32.mrb[0].mxu0
  %v5784 = vadd.f32 0.0, %v5783
  %v5785 = vpop.f32.mrb[0].mxu0
  %v5786 = vpop.f32.mrb[0].mxu0
  %v5787 = vadd.f32 0.0, %v5786
  %v5788 = vpop.f32.mrb[0].mxu0
  %5789 = vmatprep.mubr.bf16.mxu0 0
  %5790 = vmatmul.mubr.bf16.gmra.mrb[0].mxu0 %v3248
  %v5791 = vpop.f32.mrb[0].mxu0
  %v5792 = vadd.f32 0.0, %v5791
  %v5793 = vpop.f32.mrb[0].mxu0
  %v5794 = vpop.f32.mrb[0].mxu0
  %v5795 = vadd.f32 0.0, %v5794
  %v5796 = vpop.f32.mrb[0].mxu0
  %5797 = vmatprep.mubr.bf16.mxu0 0
  %5798 = vmatmul.mubr.bf16.gmra.mrb[0].mxu0 %v3251
  %v5799 = vpop.f32.mrb[0].mxu0
  %v5800 = vadd.f32 0.0, %v5799
  %v5801 = vpop.f32.mrb[0].mxu0
  %v5802 = vpop.f32.mrb[0].mxu0
  %v5803 = vadd.f32 0.0, %v5802
  %v5804 = vpop.f32.mrb[0].mxu0
  %5805 = vmatprep.mubr.bf16.mxu0 0
  %5806 = vmatmul.mubr.bf16.gmra.mrb[0].mxu0 %v3254
  %v5807 = vpop.f32.mrb[0].mxu0
  %v5808 = vadd.f32 0.0, %v5807
  %v5809 = vpop.f32.mrb[0].mxu0
  %v5810 = vpop.f32.mrb[0].mxu0
  %v5811 = vadd.f32 0.0, %v5810
  %v5812 = vpop.f32.mrb[0].mxu0
  %5813 = vmatprep.mubr.bf16.mxu0 0
  %5814 = vmatmul.mubr.bf16.gmra.mrb[0].mxu0 %v3257
  %v5815 = vpop.f32.mrb[0].mxu0
  %v5816 = vadd.f32 0.0, %v5815
  %v5817 = vpop.f32.mrb[0].mxu0
  %v5818 = vpop.f32.mrb[0].mxu0
  %v5819 = vadd.f32 0.0, %v5818
  %v5820 = vpop.f32.mrb[0].mxu0
  %5821 = vmatprep.mubr.bf16.mxu0 0
  %5822 = vmatmul.mubr.bf16.gmra.mrb[0].mxu0 %v3260
  %v5823 = vpop.f32.mrb[0].mxu0
  %v5824 = vadd.f32 0.0, %v5823
  %v5825 = vpop.f32.mrb[0].mxu0
  %v5826 = vpop.f32.mrb[0].mxu0
  %v5827 = vadd.f32 0.0, %v5826
  %v5828 = vpop.f32.mrb[0].mxu0
  %5829 = vmatprep.mubr.bf16.mxu0 0
  %5830 = vmatmul.mubr.bf16.gmra.mrb[0].mxu0 %v3263
  %v5831 = vpop.f32.mrb[0].mxu0
  %v5832 = vadd.f32 0.0, %v5831
  %v5833 = vpop.f32.mrb[0].mxu0
  %v5834 = vpop.f32.mrb[0].mxu0
  %v5835 = vadd.f32 0.0, %v5834
  %v5836 = vpop.f32.mrb[0].mxu0
  %5837 = vmatprep.mubr.bf16.mxu0 0
  %5838 = vmatmul.mubr.bf16.gmra.mrb[0].mxu0 %v3266
  %v5839 = vpop.f32.mrb[0].mxu0
  %v5840 = vadd.f32 0.0, %v5839
  %v5841 = vpop.f32.mrb[0].mxu0
  %v5842 = vpop.f32.mrb[0].mxu0
  %v5843 = vadd.f32 0.0, %v5842
  %v5844 = vpop.f32.mrb[0].mxu0
  %5845 = vmatprep.mubr.bf16.mxu0 0
  %5846 = vmatmul.mubr.bf16.gmra.mrb[0].mxu0 %v3269
  %v5847 = vpop.f32.mrb[0].mxu0
  %v5848 = vadd.f32 0.0, %v5847
  %v5849 = vpop.f32.mrb[0].mxu0
  %v5850 = vpop.f32.mrb[0].mxu0
  %v5851 = vadd.f32 0.0, %v5850
  %v5852 = vpop.f32.mrb[0].mxu0
  %5853 = vmatprep.mubr.bf16.mxu0 0
  %5854 = vmatmul.mubr.bf16.gmra.mrb[0].mxu0 %v3272
  %v5855 = vpop.f32.mrb[0].mxu0
  %v5856 = vadd.f32 0.0, %v5855
  %v5857 = vpop.f32.mrb[0].mxu0
  %v5858 = vpop.f32.mrb[0].mxu0
  %v5859 = vadd.f32 0.0, %v5858
  %v5860 = vpop.f32.mrb[0].mxu0
  %5861 = vmatprep.mubr.bf16.mxu0 0
  %5862 = vmatmul.mubr.bf16.gmra.mrb[0].mxu0 %v3275
  %v5863 = vpop.f32.mrb[0].mxu0
  %v5864 = vadd.f32 0.0, %v5863
  %v5865 = vpop.f32.mrb[0].mxu0
  %v5866 = vpop.f32.mrb[0].mxu0
  %v5867 = vadd.f32 0.0, %v5866
  %v5868 = vpop.f32.mrb[0].mxu0
  %5869 = vmatprep.mubr.bf16.mxu0 0
  %5870 = vmatmul.mubr.bf16.gmra.mrb[0].mxu0 %v3278
  %v5871 = vpop.f32.mrb[0].mxu0
  %v5872 = vadd.f32 0.0, %v5871
  %v5873 = vpop.f32.mrb[0].mxu0
  %v5874 = vpop.f32.mrb[0].mxu0
  %v5875 = vadd.f32 0.0, %v5874
  %v5876 = vpop.f32.mrb[0].mxu0
  %5877 = vmatprep.mubr.bf16.mxu0 0
  %5878 = vmatmul.mubr.bf16.gmra.mrb[0].mxu0 %v3281
  %v5879 = vpop.f32.mrb[0].mxu0
  %v5880 = vadd.f32 0.0, %v5879
  %v5881 = vpop.f32.mrb[0].mxu0
  %v5882 = vpop.f32.mrb[0].mxu0
  %v5883 = vadd.f32 0.0, %v5882
  %v5884 = vpop.f32.mrb[0].mxu0
  %5885 = vmatprep.mubr.bf16.mxu0 0
  %5886 = vmatmul.mubr.bf16.gmra.mrb[0].mxu0 %v3284
  %v5887 = vpop.f32.mrb[0].mxu0
  %v5888 = vadd.f32 0.0, %v5887
  %v5889 = vpop.f32.mrb[0].mxu0
  %v5890 = vpop.f32.mrb[0].mxu0
  %v5891 = vadd.f32 0.0, %v5890
  %v5892 = vpop.f32.mrb[0].mxu0
  %5893 = vmatprep.mubr.bf16.mxu0 0
  %5894 = vmatmul.mubr.bf16.gmra.mrb[0].mxu0 %v3287
  %v5895 = vpop.f32.mrb[0].mxu0
  %v5896 = vadd.f32 0.0, %v5895
  %v5897 = vpop.f32.mrb[0].mxu0
  %v5898 = vpop.f32.mrb[0].mxu0
  %v5899 = vadd.f32 0.0, %v5898
  %v5900 = vpop.f32.mrb[0].mxu0
  %5901 = vdwg.mxu0
  %v6030 = vunpack.c.l.b16 %v5469
  %v6031 = vunpack.c.l.b16 %v5470
  %v6032 = vunpack.c.l.b16 %v5471
  %v6033 = vunpack.c.l.b16 %v5472
  %v6034 = vunpack.c.l.b16 %v5473
  %v6035 = vunpack.c.l.b16 %v5474
  %v6036 = vunpack.c.l.b16 %v5475
  %v6037 = vunpack.c.l.b16 %v5476
  %v6038 = vunpack.c.l.b16 %v5477
  %v6039 = vunpack.c.l.b16 %v5478
  %v6040 = vunpack.c.l.b16 %v5479
  %v6041 = vunpack.c.l.b16 %v5480
  %v6042 = vunpack.c.l.b16 %v5481
  %v6043 = vunpack.c.l.b16 %v5482
  %v6044 = vunpack.c.l.b16 %v5483
  %v6045 = vunpack.c.l.b16 %v5484
  %v6046 = vunpack.c.l.b16 %v5485
  %v6047 = vunpack.c.l.b16 %v5486
  %v6048 = vunpack.c.l.b16 %v5487
  %v6049 = vunpack.c.l.b16 %v5488
  %v6050 = vunpack.c.l.b16 %v5489
  %v6051 = vunpack.c.l.b16 %v5490
  %v6052 = vunpack.c.l.b16 %v5491
  %v6053 = vunpack.c.l.b16 %v5492
  %v6054 = vunpack.c.l.b16 %v5493
  %v6055 = vunpack.c.l.b16 %v5494
  %v6056 = vunpack.c.l.b16 %v5495
  %v6057 = vunpack.c.l.b16 %v5496
  %v6058 = vunpack.c.l.b16 %v5497
  %v6059 = vunpack.c.l.b16 %v5498
  %v6060 = vunpack.c.l.b16 %v5499
  %v6061 = vunpack.c.l.b16 %v5500
  %v6062 = vunpack.c.l.b16 %v5501
  %v6063 = vunpack.c.l.b16 %v5502
  %v6064 = vunpack.c.l.b16 %v5503
  %v6065 = vunpack.c.l.b16 %v5504
  %v6066 = vunpack.c.l.b16 %v5505
  %v6067 = vunpack.c.l.b16 %v5506
  %v6068 = vunpack.c.l.b16 %v5507
  %v6069 = vunpack.c.l.b16 %v5508
  %v6070 = vunpack.c.l.b16 %v5509
  %v6071 = vunpack.c.l.b16 %v5510
  %v6072 = vunpack.c.l.b16 %v5511
  %v6073 = vunpack.c.l.b16 %v5512
  %v6074 = vunpack.c.l.b16 %v5513
  %v6075 = vunpack.c.l.b16 %v5514
  %v6076 = vunpack.c.l.b16 %v5515
  %v6077 = vunpack.c.l.b16 %v5516
  %v6078 = vunpack.c.l.b16 %v5517
  %v6079 = vunpack.c.l.b16 %v5518
  %v6080 = vunpack.c.l.b16 %v5519
  %v6081 = vunpack.c.l.b16 %v5520
  %v6082 = vunpack.c.l.b16 %v5521
  %v6083 = vunpack.c.l.b16 %v5522
  %v6084 = vunpack.c.l.b16 %v5523
  %v6085 = vunpack.c.l.b16 %v5524
  %v6086 = vunpack.c.l.b16 %v5525
  %v6087 = vunpack.c.l.b16 %v5526
  %v6088 = vunpack.c.l.b16 %v5527
  %v6089 = vunpack.c.l.b16 %v5528
  %v6090 = vunpack.c.l.b16 %v5529
  %v6091 = vunpack.c.l.b16 %v5530
  %v6092 = vunpack.c.l.b16 %v5531
  %v6093 = vunpack.c.l.b16 %v5532
  %v6094 = vunpack.c.l.b16 %v5533
  %v6095 = vunpack.c.l.b16 %v5534
  %v6096 = vunpack.c.l.b16 %v5535
  %v6097 = vunpack.c.l.b16 %v5536
  %v6098 = vunpack.c.l.b16 %v5537
  %v6099 = vunpack.c.l.b16 %v5538
  %v6100 = vunpack.c.l.b16 %v5539
  %v6101 = vunpack.c.l.b16 %v5540
  %v6102 = vunpack.c.l.b16 %v5541
  %v6103 = vunpack.c.l.b16 %v5542
  %v6104 = vunpack.c.l.b16 %v5543
  %v6105 = vunpack.c.l.b16 %v5544
  %v6106 = vunpack.c.l.b16 %v5545
  %v6107 = vunpack.c.l.b16 %v5546
  %v6108 = vunpack.c.l.b16 %v5547
  %v6109 = vunpack.c.l.b16 %v5548
  %v6110 = vunpack.c.l.b16 %v5549
  %v6111 = vunpack.c.l.b16 %v5550
  %v6112 = vunpack.c.l.b16 %v5551
  %v6113 = vunpack.c.l.b16 %v5552
  %v6114 = vunpack.c.l.b16 %v5553
  %v6115 = vunpack.c.l.b16 %v5554
  %v6116 = vunpack.c.l.b16 %v5555
  %v6117 = vunpack.c.l.b16 %v5556
  %v6118 = vunpack.c.l.b16 %v5557
  %v6119 = vunpack.c.l.b16 %v5558
  %v6120 = vunpack.c.l.b16 %v5559
  %v6121 = vunpack.c.l.b16 %v5560
  %v6122 = vunpack.c.l.b16 %v5561
  %v6123 = vunpack.c.l.b16 %v5562
  %v6124 = vunpack.c.l.b16 %v5563
  %v6125 = vunpack.c.l.b16 %v5564
  %v6126 = vunpack.c.l.b16 %v5565
  %v6127 = vunpack.c.l.b16 %v5566
  %v6128 = vunpack.c.l.b16 %v5567
  %v6129 = vunpack.c.l.b16 %v5568
  %v6130 = vunpack.c.l.b16 %v5569
  %v6131 = vunpack.c.l.b16 %v5570
  %v6132 = vunpack.c.l.b16 %v5571
  %v6133 = vunpack.c.l.b16 %v5572
  %v6134 = vunpack.c.l.b16 %v5573
  %v6135 = vunpack.c.l.b16 %v5574
  %v6136 = vunpack.c.l.b16 %v5575
  %v6137 = vunpack.c.l.b16 %v5576
  %v6138 = vunpack.c.l.b16 %v5577
  %v6139 = vunpack.c.l.b16 %v5578
  %v6140 = vunpack.c.l.b16 %v5579
  %v6141 = vunpack.c.l.b16 %v5580
  %v6142 = vunpack.c.l.b16 %v5581
  %v6143 = vunpack.c.l.b16 %v5582
  %v6144 = vunpack.c.l.b16 %v5583
  %v6145 = vunpack.c.l.b16 %v5584
  %v6146 = vunpack.c.l.b16 %v5585
  %v6147 = vunpack.c.l.b16 %v5586
  %v6148 = vunpack.c.l.b16 %v5587
  %v6149 = vunpack.c.l.b16 %v5588
  %v6150 = vunpack.c.l.b16 %v5589
  %v6151 = vunpack.c.l.b16 %v5590
  %v6152 = vunpack.c.l.b16 %v5591
  %v6153 = vunpack.c.l.b16 %v5592
  %v6154 = vunpack.c.l.b16 %v5593
  %v6155 = vunpack.c.l.b16 %v5594
  %v6156 = vunpack.c.l.b16 %v5595
  %v6157 = vunpack.c.l.b16 %v5596
  %v6158 = vpack.c.b16 %v6031, %v6030
  %v6159 = vpack.c.b16 %v6033, %v6032
  %v6160 = vpack.c.b16 %v6035, %v6034
  %v6161 = vpack.c.b16 %v6037, %v6036
  %v6162 = vpack.c.b16 %v6039, %v6038
  %v6163 = vpack.c.b16 %v6041, %v6040
  %v6164 = vpack.c.b16 %v6043, %v6042
  %v6165 = vpack.c.b16 %v6045, %v6044
  %v6166 = vpack.c.b16 %v6047, %v6046
  %v6167 = vpack.c.b16 %v6049, %v6048
  %v6168 = vpack.c.b16 %v6051, %v6050
  %v6169 = vpack.c.b16 %v6053, %v6052
  %v6170 = vpack.c.b16 %v6055, %v6054
  %v6171 = vpack.c.b16 %v6057, %v6056
  %v6172 = vpack.c.b16 %v6059, %v6058
  %v6173 = vpack.c.b16 %v6061, %v6060
  %v6174 = vpack.c.b16 %v6063, %v6062
  %v6175 = vpack.c.b16 %v6065, %v6064
  %v6176 = vpack.c.b16 %v6067, %v6066
  %v6177 = vpack.c.b16 %v6069, %v6068
  %v6178 = vpack.c.b16 %v6071, %v6070
  %v6179 = vpack.c.b16 %v6073, %v6072
  %v6180 = vpack.c.b16 %v6075, %v6074
  %v6181 = vpack.c.b16 %v6077, %v6076
  %v6182 = vpack.c.b16 %v6079, %v6078
  %v6183 = vpack.c.b16 %v6081, %v6080
  %v6184 = vpack.c.b16 %v6083, %v6082
  %v6185 = vpack.c.b16 %v6085, %v6084
  %v6186 = vpack.c.b16 %v6087, %v6086
  %v6187 = vpack.c.b16 %v6089, %v6088
  %v6188 = vpack.c.b16 %v6091, %v6090
  %v6189 = vpack.c.b16 %v6093, %v6092
  %v6190 = vpack.c.b16 %v6095, %v6094
  %v6191 = vpack.c.b16 %v6097, %v6096
  %v6192 = vpack.c.b16 %v6099, %v6098
  %v6193 = vpack.c.b16 %v6101, %v6100
  %v6194 = vpack.c.b16 %v6103, %v6102
  %v6195 = vpack.c.b16 %v6105, %v6104
  %v6196 = vpack.c.b16 %v6107, %v6106
  %v6197 = vpack.c.b16 %v6109, %v6108
  %v6198 = vpack.c.b16 %v6111, %v6110
  %v6199 = vpack.c.b16 %v6113, %v6112
  %v6200 = vpack.c.b16 %v6115, %v6114
  %v6201 = vpack.c.b16 %v6117, %v6116
  %v6202 = vpack.c.b16 %v6119, %v6118
  %v6203 = vpack.c.b16 %v6121, %v6120
  %v6204 = vpack.c.b16 %v6123, %v6122
  %v6205 = vpack.c.b16 %v6125, %v6124
  %v6206 = vpack.c.b16 %v6127, %v6126
  %v6207 = vpack.c.b16 %v6129, %v6128
  %v6208 = vpack.c.b16 %v6131, %v6130
  %v6209 = vpack.c.b16 %v6133, %v6132
  %v6210 = vpack.c.b16 %v6135, %v6134
  %v6211 = vpack.c.b16 %v6137, %v6136
  %v6212 = vpack.c.b16 %v6139, %v6138
  %v6213 = vpack.c.b16 %v6141, %v6140
  %v6214 = vpack.c.b16 %v6143, %v6142
  %v6215 = vpack.c.b16 %v6145, %v6144
  %v6216 = vpack.c.b16 %v6147, %v6146
  %v6217 = vpack.c.b16 %v6149, %v6148
  %v6218 = vpack.c.b16 %v6151, %v6150
  %v6219 = vpack.c.b16 %v6153, %v6152
  %v6220 = vpack.c.b16 %v6155, %v6154
  %v6221 = vpack.c.b16 %v6157, %v6156
  %6286 = vmatprep.subr.bf16.mxu0 0
  %6287 = vmatpush1.bf16.msra.mxu0 %v6158
  %6288 = vmatprep.subr.bf16.mxu0 0
  %6289 = vmatpush1.bf16.msra.mxu0 %v6159
  %6290 = vmatprep.subr.bf16.mxu0 0
  %6291 = vmatpush1.bf16.msra.mxu0 %v6160
  %6292 = vmatprep.subr.bf16.mxu0 0
  %6293 = vmatpush1.bf16.msra.mxu0 %v6161
  %6294 = vmatprep.subr.bf16.mxu0 0
  %6295 = vmatpush1.bf16.msra.mxu0 %v6162
  %6296 = vmatprep.subr.bf16.mxu0 0
  %6297 = vmatpush1.bf16.msra.mxu0 %v6163
  %6298 = vmatprep.subr.bf16.mxu0 0
  %6299 = vmatpush1.bf16.msra.mxu0 %v6164
  %6300 = vmatprep.subr.bf16.mxu0 0
  %6301 = vmatpush1.bf16.msra.mxu0 %v6165
  %6302 = vmatprep.subr.bf16.mxu0 0
  %6303 = vmatpush1.bf16.msra.mxu0 %v6166
  %6304 = vmatprep.subr.bf16.mxu0 0
  %6305 = vmatpush1.bf16.msra.mxu0 %v6167
  %6306 = vmatprep.subr.bf16.mxu0 0
  %6307 = vmatpush1.bf16.msra.mxu0 %v6168
  %6308 = vmatprep.subr.bf16.mxu0 0
  %6309 = vmatpush1.bf16.msra.mxu0 %v6169
  %6310 = vmatprep.subr.bf16.mxu0 0
  %6311 = vmatpush1.bf16.msra.mxu0 %v6170
  %6312 = vmatprep.subr.bf16.mxu0 0
  %6313 = vmatpush1.bf16.msra.mxu0 %v6171
  %6314 = vmatprep.subr.bf16.mxu0 0
  %6315 = vmatpush1.bf16.msra.mxu0 %v6172
  %6316 = vmatprep.subr.bf16.mxu0 0
  %6317 = vmatpush1.bf16.msra.mxu0 %v6173
  %6318 = vmatprep.mubr.bf16.mxu0 %v5214
  %6319 = vmatmul.mubr.bf16.gmra.mrb[0].mxu0 %v5213
  %v6320 = vpop.f32.mrb[0].mxu0
  %v6321 = vadd.f32 %v5648, %v6320
  %v6322 = vpop.f32.mrb[0].mxu0
  %v6323 = vpop.f32.mrb[0].mxu0
  %v6324 = vadd.f32 %v5651, %v6323
  %v6325 = vpop.f32.mrb[0].mxu0
  %6326 = vmatprep.mubr.bf16.mxu0 %v5222
  %6327 = vmatmul.mubr.bf16.gmra.mrb[0].mxu0 %v5221
  %v6328 = vpop.f32.mrb[0].mxu0
  %v6329 = vadd.f32 %v5656, %v6328
  %v6330 = vpop.f32.mrb[0].mxu0
  %v6331 = vpop.f32.mrb[0].mxu0
  %v6332 = vadd.f32 %v5659, %v6331
  %v6333 = vpop.f32.mrb[0].mxu0
  %6334 = vmatprep.mubr.bf16.mxu0 %v5230
  %6335 = vmatmul.mubr.bf16.gmra.mrb[0].mxu0 %v5229
  %v6336 = vpop.f32.mrb[0].mxu0
  %v6337 = vadd.f32 %v5664, %v6336
  %v6338 = vpop.f32.mrb[0].mxu0
  %v6339 = vpop.f32.mrb[0].mxu0
  %v6340 = vadd.f32 %v5667, %v6339
  %v6341 = vpop.f32.mrb[0].mxu0
  %6342 = vmatprep.mubr.bf16.mxu0 %v5238
  %6343 = vmatmul.mubr.bf16.gmra.mrb[0].mxu0 %v5237
  %v6344 = vpop.f32.mrb[0].mxu0
  %v6345 = vadd.f32 %v5672, %v6344
  %v6346 = vpop.f32.mrb[0].mxu0
  %v6347 = vpop.f32.mrb[0].mxu0
  %v6348 = vadd.f32 %v5675, %v6347
  %v6349 = vpop.f32.mrb[0].mxu0
  %6350 = vmatprep.mubr.bf16.mxu0 %v5246
  %6351 = vmatmul.mubr.bf16.gmra.mrb[0].mxu0 %v5245
  %v6352 = vpop.f32.mrb[0].mxu0
  %v6353 = vadd.f32 %v5680, %v6352
  %v6354 = vpop.f32.mrb[0].mxu0
  %v6355 = vpop.f32.mrb[0].mxu0
  %v6356 = vadd.f32 %v5683, %v6355
  %v6357 = vpop.f32.mrb[0].mxu0
  %6358 = vmatprep.mubr.bf16.mxu0 %v5254
  %6359 = vmatmul.mubr.bf16.gmra.mrb[0].mxu0 %v5253
  %v6360 = vpop.f32.mrb[0].mxu0
  %v6361 = vadd.f32 %v5688, %v6360
  %v6362 = vpop.f32.mrb[0].mxu0
  %v6363 = vpop.f32.mrb[0].mxu0
  %v6364 = vadd.f32 %v5691, %v6363
  %v6365 = vpop.f32.mrb[0].mxu0
  %6366 = vmatprep.mubr.bf16.mxu0 %v5262
  %6367 = vmatmul.mubr.bf16.gmra.mrb[0].mxu0 %v5261
  %v6368 = vpop.f32.mrb[0].mxu0
  %v6369 = vadd.f32 %v5696, %v6368
  %v6370 = vpop.f32.mrb[0].mxu0
  %v6371 = vpop.f32.mrb[0].mxu0
  %v6372 = vadd.f32 %v5699, %v6371
  %v6373 = vpop.f32.mrb[0].mxu0
  %6374 = vmatprep.mubr.bf16.mxu0 %v5270
  %6375 = vmatmul.mubr.bf16.gmra.mrb[0].mxu0 %v5269
  %v6376 = vpop.f32.mrb[0].mxu0
  %v6377 = vadd.f32 %v5704, %v6376
  %v6378 = vpop.f32.mrb[0].mxu0
  %v6379 = vpop.f32.mrb[0].mxu0
  %v6380 = vadd.f32 %v5707, %v6379
  %v6381 = vpop.f32.mrb[0].mxu0
  %6382 = vmatprep.mubr.bf16.mxu0 %v5278
  %6383 = vmatmul.mubr.bf16.gmra.mrb[0].mxu0 %v5277
  %v6384 = vpop.f32.mrb[0].mxu0
  %v6385 = vadd.f32 %v5712, %v6384
  %v6386 = vpop.f32.mrb[0].mxu0
  %v6387 = vpop.f32.mrb[0].mxu0
  %v6388 = vadd.f32 %v5715, %v6387
  %v6389 = vpop.f32.mrb[0].mxu0
  %6390 = vmatprep.mubr.bf16.mxu0 %v5286
  %6391 = vmatmul.mubr.bf16.gmra.mrb[0].mxu0 %v5285
  %v6392 = vpop.f32.mrb[0].mxu0
  %v6393 = vadd.f32 %v5720, %v6392
  %v6394 = vpop.f32.mrb[0].mxu0
  %v6395 = vpop.f32.mrb[0].mxu0
  %v6396 = vadd.f32 %v5723, %v6395
  %v6397 = vpop.f32.mrb[0].mxu0
  %6398 = vmatprep.mubr.bf16.mxu0 %v5294
  %6399 = vmatmul.mubr.bf16.gmra.mrb[0].mxu0 %v5293
  %v6400 = vpop.f32.mrb[0].mxu0
  %v6401 = vadd.f32 %v5728, %v6400
  %v6402 = vpop.f32.mrb[0].mxu0
  %v6403 = vpop.f32.mrb[0].mxu0
  %v6404 = vadd.f32 %v5731, %v6403
  %v6405 = vpop.f32.mrb[0].mxu0
  %6406 = vmatprep.mubr.bf16.mxu0 %v5302
  %6407 = vmatmul.mubr.bf16.gmra.mrb[0].mxu0 %v5301
  %v6408 = vpop.f32.mrb[0].mxu0
  %v6409 = vadd.f32 %v5736, %v6408
  %v6410 = vpop.f32.mrb[0].mxu0
  %v6411 = vpop.f32.mrb[0].mxu0
  %v6412 = vadd.f32 %v5739, %v6411
  %v6413 = vpop.f32.mrb[0].mxu0
  %6414 = vmatprep.mubr.bf16.mxu0 %v5310
  %6415 = vmatmul.mubr.bf16.gmra.mrb[0].mxu0 %v5309
  %v6416 = vpop.f32.mrb[0].mxu0
  %v6417 = vadd.f32 %v5744, %v6416
  %v6418 = vpop.f32.mrb[0].mxu0
  %v6419 = vpop.f32.mrb[0].mxu0
  %v6420 = vadd.f32 %v5747, %v6419
  %v6421 = vpop.f32.mrb[0].mxu0
  %6422 = vmatprep.mubr.bf16.mxu0 %v5318
  %6423 = vmatmul.mubr.bf16.gmra.mrb[0].mxu0 %v5317
  %v6424 = vpop.f32.mrb[0].mxu0
  %v6425 = vadd.f32 %v5752, %v6424
  %v6426 = vpop.f32.mrb[0].mxu0
  %v6427 = vpop.f32.mrb[0].mxu0
  %v6428 = vadd.f32 %v5755, %v6427
  %v6429 = vpop.f32.mrb[0].mxu0
  %6430 = vmatprep.mubr.bf16.mxu0 %v5326
  %6431 = vmatmul.mubr.bf16.gmra.mrb[0].mxu0 %v5325
  %v6432 = vpop.f32.mrb[0].mxu0
  %v6433 = vadd.f32 %v5760, %v6432
  %v6434 = vpop.f32.mrb[0].mxu0
  %v6435 = vpop.f32.mrb[0].mxu0
  %v6436 = vadd.f32 %v5763, %v6435
  %v6437 = vpop.f32.mrb[0].mxu0
  %6438 = vmatprep.mubr.bf16.mxu0 %v5334
  %6439 = vmatmul.mubr.bf16.gmra.mrb[0].mxu0 %v5333
  %v6440 = vpop.f32.mrb[0].mxu0
  %v6441 = vadd.f32 %v5768, %v6440
  %v6442 = vpop.f32.mrb[0].mxu0
  %v6443 = vpop.f32.mrb[0].mxu0
  %v6444 = vadd.f32 %v5771, %v6443
  %v6445 = vpop.f32.mrb[0].mxu0
  %6446 = vmatprep.mubr.bf16.mxu0 %v5342
  %6447 = vmatmul.mubr.bf16.gmra.mrb[0].mxu0 %v5341
  %v6448 = vpop.f32.mrb[0].mxu0
  %v6449 = vadd.f32 %v5776, %v6448
  %v6450 = vpop.f32.mrb[0].mxu0
  %v6451 = vpop.f32.mrb[0].mxu0
  %v6452 = vadd.f32 %v5779, %v6451
  %v6453 = vpop.f32.mrb[0].mxu0
  %6454 = vmatprep.mubr.bf16.mxu0 %v5350
  %6455 = vmatmul.mubr.bf16.gmra.mrb[0].mxu0 %v5349
  %v6456 = vpop.f32.mrb[0].mxu0
  %v6457 = vadd.f32 %v5784, %v6456
  %v6458 = vpop.f32.mrb[0].mxu0
  %v6459 = vpop.f32.mrb[0].mxu0
  %v6460 = vadd.f32 %v5787, %v6459
  %v6461 = vpop.f32.mrb[0].mxu0
  %6462 = vmatprep.mubr.bf16.mxu0 %v5358
  %6463 = vmatmul.mubr.bf16.gmra.mrb[0].mxu0 %v5357
  %v6464 = vpop.f32.mrb[0].mxu0
  %v6465 = vadd.f32 %v5792, %v6464
  %v6466 = vpop.f32.mrb[0].mxu0
  %v6467 = vpop.f32.mrb[0].mxu0
  %v6468 = vadd.f32 %v5795, %v6467
  %v6469 = vpop.f32.mrb[0].mxu0
  %6470 = vmatprep.mubr.bf16.mxu0 %v5366
  %6471 = vmatmul.mubr.bf16.gmra.mrb[0].mxu0 %v5365
  %v6472 = vpop.f32.mrb[0].mxu0
  %v6473 = vadd.f32 %v5800, %v6472
  %v6474 = vpop.f32.mrb[0].mxu0
  %v6475 = vpop.f32.mrb[0].mxu0
  %v6476 = vadd.f32 %v5803, %v6475
  %v6477 = vpop.f32.mrb[0].mxu0
  %6478 = vmatprep.mubr.bf16.mxu0 %v5374
  %6479 = vmatmul.mubr.bf16.gmra.mrb[0].mxu0 %v5373
  %v6480 = vpop.f32.mrb[0].mxu0
  %v6481 = vadd.f32 %v5808, %v6480
  %v6482 = vpop.f32.mrb[0].mxu0
  %v6483 = vpop.f32.mrb[0].mxu0
  %v6484 = vadd.f32 %v5811, %v6483
  %v6485 = vpop.f32.mrb[0].mxu0
  %6486 = vmatprep.mubr.bf16.mxu0 %v5382
  %6487 = vmatmul.mubr.bf16.gmra.mrb[0].mxu0 %v5381
  %v6488 = vpop.f32.mrb[0].mxu0
  %v6489 = vadd.f32 %v5816, %v6488
  %v6490 = vpop.f32.mrb[0].mxu0
  %v6491 = vpop.f32.mrb[0].mxu0
  %v6492 = vadd.f32 %v5819, %v6491
  %v6493 = vpop.f32.mrb[0].mxu0
  %6494 = vmatprep.mubr.bf16.mxu0 %v5390
  %6495 = vmatmul.mubr.bf16.gmra.mrb[0].mxu0 %v5389
  %v6496 = vpop.f32.mrb[0].mxu0
  %v6497 = vadd.f32 %v5824, %v6496
  %v6498 = vpop.f32.mrb[0].mxu0
  %v6499 = vpop.f32.mrb[0].mxu0
  %v6500 = vadd.f32 %v5827, %v6499
  %v6501 = vpop.f32.mrb[0].mxu0
  %6502 = vmatprep.mubr.bf16.mxu0 %v5398
  %6503 = vmatmul.mubr.bf16.gmra.mrb[0].mxu0 %v5397
  %v6504 = vpop.f32.mrb[0].mxu0
  %v6505 = vadd.f32 %v5832, %v6504
  %v6506 = vpop.f32.mrb[0].mxu0
  %v6507 = vpop.f32.mrb[0].mxu0
  %v6508 = vadd.f32 %v5835, %v6507
  %v6509 = vpop.f32.mrb[0].mxu0
  %6510 = vmatprep.mubr.bf16.mxu0 %v5406
  %6511 = vmatmul.mubr.bf16.gmra.mrb[0].mxu0 %v5405
  %v6512 = vpop.f32.mrb[0].mxu0
  %v6513 = vadd.f32 %v5840, %v6512
  %v6514 = vpop.f32.mrb[0].mxu0
  %v6515 = vpop.f32.mrb[0].mxu0
  %v6516 = vadd.f32 %v5843, %v6515
  %v6517 = vpop.f32.mrb[0].mxu0
  %6518 = vmatprep.mubr.bf16.mxu0 %v5414
  %6519 = vmatmul.mubr.bf16.gmra.mrb[0].mxu0 %v5413
  %v6520 = vpop.f32.mrb[0].mxu0
  %v6521 = vadd.f32 %v5848, %v6520
  %v6522 = vpop.f32.mrb[0].mxu0
  %v6523 = vpop.f32.mrb[0].mxu0
  %v6524 = vadd.f32 %v5851, %v6523
  %v6525 = vpop.f32.mrb[0].mxu0
  %6526 = vmatprep.mubr.bf16.mxu0 %v5422
  %6527 = vmatmul.mubr.bf16.gmra.mrb[0].mxu0 %v5421
  %v6528 = vpop.f32.mrb[0].mxu0
  %v6529 = vadd.f32 %v5856, %v6528
  %v6530 = vpop.f32.mrb[0].mxu0
  %v6531 = vpop.f32.mrb[0].mxu0
  %v6532 = vadd.f32 %v5859, %v6531
  %v6533 = vpop.f32.mrb[0].mxu0
  %6534 = vmatprep.mubr.bf16.mxu0 %v5430
  %6535 = vmatmul.mubr.bf16.gmra.mrb[0].mxu0 %v5429
  %v6536 = vpop.f32.mrb[0].mxu0
  %v6537 = vadd.f32 %v5864, %v6536
  %v6538 = vpop.f32.mrb[0].mxu0
  %v6539 = vpop.f32.mrb[0].mxu0
  %v6540 = vadd.f32 %v5867, %v6539
  %v6541 = vpop.f32.mrb[0].mxu0
  %6542 = vmatprep.mubr.bf16.mxu0 %v5438
  %6543 = vmatmul.mubr.bf16.gmra.mrb[0].mxu0 %v5437
  %v6544 = vpop.f32.mrb[0].mxu0
  %v6545 = vadd.f32 %v5872, %v6544
  %v6546 = vpop.f32.mrb[0].mxu0
  %v6547 = vpop.f32.mrb[0].mxu0
  %v6548 = vadd.f32 %v5875, %v6547
  %v6549 = vpop.f32.mrb[0].mxu0
  %6550 = vmatprep.mubr.bf16.mxu0 %v5446
  %6551 = vmatmul.mubr.bf16.gmra.mrb[0].mxu0 %v5445
  %v6552 = vpop.f32.mrb[0].mxu0
  %v6553 = vadd.f32 %v5880, %v6552
  %v6554 = vpop.f32.mrb[0].mxu0
  %v6555 = vpop.f32.mrb[0].mxu0
  %v6556 = vadd.f32 %v5883, %v6555
  %v6557 = vpop.f32.mrb[0].mxu0
  %6558 = vmatprep.mubr.bf16.mxu0 %v5454
  %6559 = vmatmul.mubr.bf16.gmra.mrb[0].mxu0 %v5453
  %v6560 = vpop.f32.mrb[0].mxu0
  %v6561 = vadd.f32 %v5888, %v6560
  %v6562 = vpop.f32.mrb[0].mxu0
  %v6563 = vpop.f32.mrb[0].mxu0
  %v6564 = vadd.f32 %v5891, %v6563
  %v6565 = vpop.f32.mrb[0].mxu0
  %6566 = vmatprep.mubr.bf16.mxu0 %v5462
  %6567 = vmatmul.mubr.bf16.gmra.mrb[0].mxu0 %v5461
  %v6568 = vpop.f32.mrb[0].mxu0
  %v6569 = vadd.f32 %v5896, %v6568
  %v6570 = vpop.f32.mrb[0].mxu0
  %v6571 = vpop.f32.mrb[0].mxu0
  %v6572 = vadd.f32 %v5899, %v6571
  %v6573 = vpop.f32.mrb[0].mxu0
  %6574 = vdwg.mxu0
  %6575 = vmatprep.subr.bf16.mxu0 0
  %6576 = vmatpush1.bf16.msra.mxu0 %v6174
  %6577 = vmatprep.subr.bf16.mxu0 0
  %6578 = vmatpush1.bf16.msra.mxu0 %v6175
  %6579 = vmatprep.subr.bf16.mxu0 0
  %6580 = vmatpush1.bf16.msra.mxu0 %v6176
  %6581 = vmatprep.subr.bf16.mxu0 0
  %6582 = vmatpush1.bf16.msra.mxu0 %v6177
  %6583 = vmatprep.subr.bf16.mxu0 0
  %6584 = vmatpush1.bf16.msra.mxu0 %v6178
  %6585 = vmatprep.subr.bf16.mxu0 0
  %6586 = vmatpush1.bf16.msra.mxu0 %v6179
  %6587 = vmatprep.subr.bf16.mxu0 0
  %6588 = vmatpush1.bf16.msra.mxu0 %v6180
  %6589 = vmatprep.subr.bf16.mxu0 0
  %6590 = vmatpush1.bf16.msra.mxu0 %v6181
  %6591 = vmatprep.subr.bf16.mxu0 0
  %6592 = vmatpush1.bf16.msra.mxu0 %v6182
  %6593 = vmatprep.subr.bf16.mxu0 0
  %6594 = vmatpush1.bf16.msra.mxu0 %v6183
  %6595 = vmatprep.subr.bf16.mxu0 0
  %6596 = vmatpush1.bf16.msra.mxu0 %v6184
  %6597 = vmatprep.subr.bf16.mxu0 0
  %6598 = vmatpush1.bf16.msra.mxu0 %v6185
  %6599 = vmatprep.subr.bf16.mxu0 0
  %6600 = vmatpush1.bf16.msra.mxu0 %v6186
  %6601 = vmatprep.subr.bf16.mxu0 0
  %6602 = vmatpush1.bf16.msra.mxu0 %v6187
  %6603 = vmatprep.subr.bf16.mxu0 0
  %6604 = vmatpush1.bf16.msra.mxu0 %v6188
  %6605 = vmatprep.subr.bf16.mxu0 0
  %6606 = vmatpush1.bf16.msra.mxu0 %v6189
  %6607 = vmatprep.mubr.bf16.mxu0 %v5216
  %6608 = vmatmul.mubr.bf16.gmra.mrb[0].mxu0 %v5215
  %v6609 = vpop.f32.mrb[0].mxu0
  %v6610 = vadd.f32 %v6321, %v6609
  %v6611 = vpop.f32.mrb[0].mxu0
  %v6612 = vpop.f32.mrb[0].mxu0
  %v6613 = vadd.f32 %v6324, %v6612
  %v6614 = vpop.f32.mrb[0].mxu0
  %6615 = vmatprep.mubr.bf16.mxu0 %v5224
  %6616 = vmatmul.mubr.bf16.gmra.mrb[0].mxu0 %v5223
  %v6617 = vpop.f32.mrb[0].mxu0
  %v6618 = vadd.f32 %v6329, %v6617
  %v6619 = vpop.f32.mrb[0].mxu0
  %v6620 = vpop.f32.mrb[0].mxu0
  %v6621 = vadd.f32 %v6332, %v6620
  %v6622 = vpop.f32.mrb[0].mxu0
  %6623 = vmatprep.mubr.bf16.mxu0 %v5232
  %6624 = vmatmul.mubr.bf16.gmra.mrb[0].mxu0 %v5231
  %v6625 = vpop.f32.mrb[0].mxu0
  %v6626 = vadd.f32 %v6337, %v6625
  %v6627 = vpop.f32.mrb[0].mxu0
  %v6628 = vpop.f32.mrb[0].mxu0
  %v6629 = vadd.f32 %v6340, %v6628
  %v6630 = vpop.f32.mrb[0].mxu0
  %6631 = vmatprep.mubr.bf16.mxu0 %v5240
  %6632 = vmatmul.mubr.bf16.gmra.mrb[0].mxu0 %v5239
  %v6633 = vpop.f32.mrb[0].mxu0
  %v6634 = vadd.f32 %v6345, %v6633
  %v6635 = vpop.f32.mrb[0].mxu0
  %v6636 = vpop.f32.mrb[0].mxu0
  %v6637 = vadd.f32 %v6348, %v6636
  %v6638 = vpop.f32.mrb[0].mxu0
  %6639 = vmatprep.mubr.bf16.mxu0 %v5248
  %6640 = vmatmul.mubr.bf16.gmra.mrb[0].mxu0 %v5247
  %v6641 = vpop.f32.mrb[0].mxu0
  %v6642 = vadd.f32 %v6353, %v6641
  %v6643 = vpop.f32.mrb[0].mxu0
  %v6644 = vpop.f32.mrb[0].mxu0
  %v6645 = vadd.f32 %v6356, %v6644
  %v6646 = vpop.f32.mrb[0].mxu0
  %6647 = vmatprep.mubr.bf16.mxu0 %v5256
  %6648 = vmatmul.mubr.bf16.gmra.mrb[0].mxu0 %v5255
  %v6649 = vpop.f32.mrb[0].mxu0
  %v6650 = vadd.f32 %v6361, %v6649
  %v6651 = vpop.f32.mrb[0].mxu0
  %v6652 = vpop.f32.mrb[0].mxu0
  %v6653 = vadd.f32 %v6364, %v6652
  %v6654 = vpop.f32.mrb[0].mxu0
  %6655 = vmatprep.mubr.bf16.mxu0 %v5264
  %6656 = vmatmul.mubr.bf16.gmra.mrb[0].mxu0 %v5263
  %v6657 = vpop.f32.mrb[0].mxu0
  %v6658 = vadd.f32 %v6369, %v6657
  %v6659 = vpop.f32.mrb[0].mxu0
  %v6660 = vpop.f32.mrb[0].mxu0
  %v6661 = vadd.f32 %v6372, %v6660
  %v6662 = vpop.f32.mrb[0].mxu0
  %6663 = vmatprep.mubr.bf16.mxu0 %v5272
  %6664 = vmatmul.mubr.bf16.gmra.mrb[0].mxu0 %v5271
  %v6665 = vpop.f32.mrb[0].mxu0
  %v6666 = vadd.f32 %v6377, %v6665
  %v6667 = vpop.f32.mrb[0].mxu0
  %v6668 = vpop.f32.mrb[0].mxu0
  %v6669 = vadd.f32 %v6380, %v6668
  %v6670 = vpop.f32.mrb[0].mxu0
  %6671 = vmatprep.mubr.bf16.mxu0 %v5280
  %6672 = vmatmul.mubr.bf16.gmra.mrb[0].mxu0 %v5279
  %v6673 = vpop.f32.mrb[0].mxu0
  %v6674 = vadd.f32 %v6385, %v6673
  %v6675 = vpop.f32.mrb[0].mxu0
  %v6676 = vpop.f32.mrb[0].mxu0
  %v6677 = vadd.f32 %v6388, %v6676
  %v6678 = vpop.f32.mrb[0].mxu0
  %6679 = vmatprep.mubr.bf16.mxu0 %v5288
  %6680 = vmatmul.mubr.bf16.gmra.mrb[0].mxu0 %v5287
  %v6681 = vpop.f32.mrb[0].mxu0
  %v6682 = vadd.f32 %v6393, %v6681
  %v6683 = vpop.f32.mrb[0].mxu0
  %v6684 = vpop.f32.mrb[0].mxu0
  %v6685 = vadd.f32 %v6396, %v6684
  %v6686 = vpop.f32.mrb[0].mxu0
  %6687 = vmatprep.mubr.bf16.mxu0 %v5296
  %6688 = vmatmul.mubr.bf16.gmra.mrb[0].mxu0 %v5295
  %v6689 = vpop.f32.mrb[0].mxu0
  %v6690 = vadd.f32 %v6401, %v6689
  %v6691 = vpop.f32.mrb[0].mxu0
  %v6692 = vpop.f32.mrb[0].mxu0
  %v6693 = vadd.f32 %v6404, %v6692
  %v6694 = vpop.f32.mrb[0].mxu0
  %6695 = vmatprep.mubr.bf16.mxu0 %v5304
  %6696 = vmatmul.mubr.bf16.gmra.mrb[0].mxu0 %v5303
  %v6697 = vpop.f32.mrb[0].mxu0
  %v6698 = vadd.f32 %v6409, %v6697
  %v6699 = vpop.f32.mrb[0].mxu0
  %v6700 = vpop.f32.mrb[0].mxu0
  %v6701 = vadd.f32 %v6412, %v6700
  %v6702 = vpop.f32.mrb[0].mxu0
  %6703 = vmatprep.mubr.bf16.mxu0 %v5312
  %6704 = vmatmul.mubr.bf16.gmra.mrb[0].mxu0 %v5311
  %v6705 = vpop.f32.mrb[0].mxu0
  %v6706 = vadd.f32 %v6417, %v6705
  %v6707 = vpop.f32.mrb[0].mxu0
  %v6708 = vpop.f32.mrb[0].mxu0
  %v6709 = vadd.f32 %v6420, %v6708
  %v6710 = vpop.f32.mrb[0].mxu0
  %6711 = vmatprep.mubr.bf16.mxu0 %v5320
  %6712 = vmatmul.mubr.bf16.gmra.mrb[0].mxu0 %v5319
  %v6713 = vpop.f32.mrb[0].mxu0
  %v6714 = vadd.f32 %v6425, %v6713
  %v6715 = vpop.f32.mrb[0].mxu0
  %v6716 = vpop.f32.mrb[0].mxu0
  %v6717 = vadd.f32 %v6428, %v6716
  %v6718 = vpop.f32.mrb[0].mxu0
  %6719 = vmatprep.mubr.bf16.mxu0 %v5328
  %6720 = vmatmul.mubr.bf16.gmra.mrb[0].mxu0 %v5327
  %v6721 = vpop.f32.mrb[0].mxu0
  %v6722 = vadd.f32 %v6433, %v6721
  %v6723 = vpop.f32.mrb[0].mxu0
  %v6724 = vpop.f32.mrb[0].mxu0
  %v6725 = vadd.f32 %v6436, %v6724
  %v6726 = vpop.f32.mrb[0].mxu0
  %6727 = vmatprep.mubr.bf16.mxu0 %v5336
  %6728 = vmatmul.mubr.bf16.gmra.mrb[0].mxu0 %v5335
  %v6729 = vpop.f32.mrb[0].mxu0
  %v6730 = vadd.f32 %v6441, %v6729
  %v6731 = vpop.f32.mrb[0].mxu0
  %v6732 = vpop.f32.mrb[0].mxu0
  %v6733 = vadd.f32 %v6444, %v6732
  %v6734 = vpop.f32.mrb[0].mxu0
  %6735 = vmatprep.mubr.bf16.mxu0 %v5344
  %6736 = vmatmul.mubr.bf16.gmra.mrb[0].mxu0 %v5343
  %v6737 = vpop.f32.mrb[0].mxu0
  %v6738 = vadd.f32 %v6449, %v6737
  %v6739 = vpop.f32.mrb[0].mxu0
  %v6740 = vpop.f32.mrb[0].mxu0
  %v6741 = vadd.f32 %v6452, %v6740
  %v6742 = vpop.f32.mrb[0].mxu0
  %6743 = vmatprep.mubr.bf16.mxu0 %v5352
  %6744 = vmatmul.mubr.bf16.gmra.mrb[0].mxu0 %v5351
  %v6745 = vpop.f32.mrb[0].mxu0
  %v6746 = vadd.f32 %v6457, %v6745
  %v6747 = vpop.f32.mrb[0].mxu0
  %v6748 = vpop.f32.mrb[0].mxu0
  %v6749 = vadd.f32 %v6460, %v6748
  %v6750 = vpop.f32.mrb[0].mxu0
  %6751 = vmatprep.mubr.bf16.mxu0 %v5360
  %6752 = vmatmul.mubr.bf16.gmra.mrb[0].mxu0 %v5359
  %v6753 = vpop.f32.mrb[0].mxu0
  %v6754 = vadd.f32 %v6465, %v6753
  %v6755 = vpop.f32.mrb[0].mxu0
  %v6756 = vpop.f32.mrb[0].mxu0
  %v6757 = vadd.f32 %v6468, %v6756
  %v6758 = vpop.f32.mrb[0].mxu0
  %6759 = vmatprep.mubr.bf16.mxu0 %v5368
  %6760 = vmatmul.mubr.bf16.gmra.mrb[0].mxu0 %v5367
  %v6761 = vpop.f32.mrb[0].mxu0
  %v6762 = vadd.f32 %v6473, %v6761
  %v6763 = vpop.f32.mrb[0].mxu0
  %v6764 = vpop.f32.mrb[0].mxu0
  %v6765 = vadd.f32 %v6476, %v6764
  %v6766 = vpop.f32.mrb[0].mxu0
  %6767 = vmatprep.mubr.bf16.mxu0 %v5376
  %6768 = vmatmul.mubr.bf16.gmra.mrb[0].mxu0 %v5375
  %v6769 = vpop.f32.mrb[0].mxu0
  %v6770 = vadd.f32 %v6481, %v6769
  %v6771 = vpop.f32.mrb[0].mxu0
  %v6772 = vpop.f32.mrb[0].mxu0
  %v6773 = vadd.f32 %v6484, %v6772
  %v6774 = vpop.f32.mrb[0].mxu0
  %6775 = vmatprep.mubr.bf16.mxu0 %v5384
  %6776 = vmatmul.mubr.bf16.gmra.mrb[0].mxu0 %v5383
  %v6777 = vpop.f32.mrb[0].mxu0
  %v6778 = vadd.f32 %v6489, %v6777
  %v6779 = vpop.f32.mrb[0].mxu0
  %v6780 = vpop.f32.mrb[0].mxu0
  %v6781 = vadd.f32 %v6492, %v6780
  %v6782 = vpop.f32.mrb[0].mxu0
  %6783 = vmatprep.mubr.bf16.mxu0 %v5392
  %6784 = vmatmul.mubr.bf16.gmra.mrb[0].mxu0 %v5391
  %v6785 = vpop.f32.mrb[0].mxu0
  %v6786 = vadd.f32 %v6497, %v6785
  %v6787 = vpop.f32.mrb[0].mxu0
  %v6788 = vpop.f32.mrb[0].mxu0
  %v6789 = vadd.f32 %v6500, %v6788
  %v6790 = vpop.f32.mrb[0].mxu0
  %6791 = vmatprep.mubr.bf16.mxu0 %v5400
  %6792 = vmatmul.mubr.bf16.gmra.mrb[0].mxu0 %v5399
  %v6793 = vpop.f32.mrb[0].mxu0
  %v6794 = vadd.f32 %v6505, %v6793
  %v6795 = vpop.f32.mrb[0].mxu0
  %v6796 = vpop.f32.mrb[0].mxu0
  %v6797 = vadd.f32 %v6508, %v6796
  %v6798 = vpop.f32.mrb[0].mxu0
  %6799 = vmatprep.mubr.bf16.mxu0 %v5408
  %6800 = vmatmul.mubr.bf16.gmra.mrb[0].mxu0 %v5407
  %v6801 = vpop.f32.mrb[0].mxu0
  %v6802 = vadd.f32 %v6513, %v6801
  %v6803 = vpop.f32.mrb[0].mxu0
  %v6804 = vpop.f32.mrb[0].mxu0
  %v6805 = vadd.f32 %v6516, %v6804
  %v6806 = vpop.f32.mrb[0].mxu0
  %6807 = vmatprep.mubr.bf16.mxu0 %v5416
  %6808 = vmatmul.mubr.bf16.gmra.mrb[0].mxu0 %v5415
  %v6809 = vpop.f32.mrb[0].mxu0
  %v6810 = vadd.f32 %v6521, %v6809
  %v6811 = vpop.f32.mrb[0].mxu0
  %v6812 = vpop.f32.mrb[0].mxu0
  %v6813 = vadd.f32 %v6524, %v6812
  %v6814 = vpop.f32.mrb[0].mxu0
  %6815 = vmatprep.mubr.bf16.mxu0 %v5424
  %6816 = vmatmul.mubr.bf16.gmra.mrb[0].mxu0 %v5423
  %v6817 = vpop.f32.mrb[0].mxu0
  %v6818 = vadd.f32 %v6529, %v6817
  %v6819 = vpop.f32.mrb[0].mxu0
  %v6820 = vpop.f32.mrb[0].mxu0
  %v6821 = vadd.f32 %v6532, %v6820
  %v6822 = vpop.f32.mrb[0].mxu0
  %6823 = vmatprep.mubr.bf16.mxu0 %v5432
  %6824 = vmatmul.mubr.bf16.gmra.mrb[0].mxu0 %v5431
  %v6825 = vpop.f32.mrb[0].mxu0
  %v6826 = vadd.f32 %v6537, %v6825
  %v6827 = vpop.f32.mrb[0].mxu0
  %v6828 = vpop.f32.mrb[0].mxu0
  %v6829 = vadd.f32 %v6540, %v6828
  %v6830 = vpop.f32.mrb[0].mxu0
  %6831 = vmatprep.mubr.bf16.mxu0 %v5440
  %6832 = vmatmul.mubr.bf16.gmra.mrb[0].mxu0 %v5439
  %v6833 = vpop.f32.mrb[0].mxu0
  %v6834 = vadd.f32 %v6545, %v6833
  %v6835 = vpop.f32.mrb[0].mxu0
  %v6836 = vpop.f32.mrb[0].mxu0
  %v6837 = vadd.f32 %v6548, %v6836
  %v6838 = vpop.f32.mrb[0].mxu0
  %6839 = vmatprep.mubr.bf16.mxu0 %v5448
  %6840 = vmatmul.mubr.bf16.gmra.mrb[0].mxu0 %v5447
  %v6841 = vpop.f32.mrb[0].mxu0
  %v6842 = vadd.f32 %v6553, %v6841
  %v6843 = vpop.f32.mrb[0].mxu0
  %v6844 = vpop.f32.mrb[0].mxu0
  %v6845 = vadd.f32 %v6556, %v6844
  %v6846 = vpop.f32.mrb[0].mxu0
  %6847 = vmatprep.mubr.bf16.mxu0 %v5456
  %6848 = vmatmul.mubr.bf16.gmra.mrb[0].mxu0 %v5455
  %v6849 = vpop.f32.mrb[0].mxu0
  %v6850 = vadd.f32 %v6561, %v6849
  %v6851 = vpop.f32.mrb[0].mxu0
  %v6852 = vpop.f32.mrb[0].mxu0
  %v6853 = vadd.f32 %v6564, %v6852
  %v6854 = vpop.f32.mrb[0].mxu0
  %6855 = vmatprep.mubr.bf16.mxu0 %v5464
  %6856 = vmatmul.mubr.bf16.gmra.mrb[0].mxu0 %v5463
  %v6857 = vpop.f32.mrb[0].mxu0
  %v6858 = vadd.f32 %v6569, %v6857
  %v6859 = vpop.f32.mrb[0].mxu0
  %v6860 = vpop.f32.mrb[0].mxu0
  %v6861 = vadd.f32 %v6572, %v6860
  %v6862 = vpop.f32.mrb[0].mxu0
  %6863 = vdwg.mxu0
  %6864 = vmatprep.subr.bf16.mxu0 0
  %6865 = vmatpush1.bf16.msra.mxu0 %v6190
  %6866 = vmatprep.subr.bf16.mxu0 0
  %6867 = vmatpush1.bf16.msra.mxu0 %v6191
  %6868 = vmatprep.subr.bf16.mxu0 0
  %6869 = vmatpush1.bf16.msra.mxu0 %v6192
  %6870 = vmatprep.subr.bf16.mxu0 0
  %6871 = vmatpush1.bf16.msra.mxu0 %v6193
  %6872 = vmatprep.subr.bf16.mxu0 0
  %6873 = vmatpush1.bf16.msra.mxu0 %v6194
  %6874 = vmatprep.subr.bf16.mxu0 0
  %6875 = vmatpush1.bf16.msra.mxu0 %v6195
  %6876 = vmatprep.subr.bf16.mxu0 0
  %6877 = vmatpush1.bf16.msra.mxu0 %v6196
  %6878 = vmatprep.subr.bf16.mxu0 0
  %6879 = vmatpush1.bf16.msra.mxu0 %v6197
  %6880 = vmatprep.subr.bf16.mxu0 0
  %6881 = vmatpush1.bf16.msra.mxu0 %v6198
  %6882 = vmatprep.subr.bf16.mxu0 0
  %6883 = vmatpush1.bf16.msra.mxu0 %v6199
  %6884 = vmatprep.subr.bf16.mxu0 0
  %6885 = vmatpush1.bf16.msra.mxu0 %v6200
  %6886 = vmatprep.subr.bf16.mxu0 0
  %6887 = vmatpush1.bf16.msra.mxu0 %v6201
  %6888 = vmatprep.subr.bf16.mxu0 0
  %6889 = vmatpush1.bf16.msra.mxu0 %v6202
  %6890 = vmatprep.subr.bf16.mxu0 0
  %6891 = vmatpush1.bf16.msra.mxu0 %v6203
  %6892 = vmatprep.subr.bf16.mxu0 0
  %6893 = vmatpush1.bf16.msra.mxu0 %v6204
  %6894 = vmatprep.subr.bf16.mxu0 0
  %6895 = vmatpush1.bf16.msra.mxu0 %v6205
  %6896 = vmatprep.mubr.bf16.mxu0 %v5218
  %6897 = vmatmul.mubr.bf16.gmra.mrb[0].mxu0 %v5217
  %v6898 = vpop.f32.mrb[0].mxu0
  %v6899 = vadd.f32 %v6610, %v6898
  %v6900 = vpop.f32.mrb[0].mxu0
  %v6901 = vpop.f32.mrb[0].mxu0
  %v6902 = vadd.f32 %v6613, %v6901
  %v6903 = vpop.f32.mrb[0].mxu0
  %6904 = vmatprep.mubr.bf16.mxu0 %v5226
  %6905 = vmatmul.mubr.bf16.gmra.mrb[0].mxu0 %v5225
  %v6906 = vpop.f32.mrb[0].mxu0
  %v6907 = vadd.f32 %v6618, %v6906
  %v6908 = vpop.f32.mrb[0].mxu0
  %v6909 = vpop.f32.mrb[0].mxu0
  %v6910 = vadd.f32 %v6621, %v6909
  %v6911 = vpop.f32.mrb[0].mxu0
  %6912 = vmatprep.mubr.bf16.mxu0 %v5234
  %6913 = vmatmul.mubr.bf16.gmra.mrb[0].mxu0 %v5233
  %v6914 = vpop.f32.mrb[0].mxu0
  %v6915 = vadd.f32 %v6626, %v6914
  %v6916 = vpop.f32.mrb[0].mxu0
  %v6917 = vpop.f32.mrb[0].mxu0
  %v6918 = vadd.f32 %v6629, %v6917
  %v6919 = vpop.f32.mrb[0].mxu0
  %6920 = vmatprep.mubr.bf16.mxu0 %v5242
  %6921 = vmatmul.mubr.bf16.gmra.mrb[0].mxu0 %v5241
  %v6922 = vpop.f32.mrb[0].mxu0
  %v6923 = vadd.f32 %v6634, %v6922
  %v6924 = vpop.f32.mrb[0].mxu0
  %v6925 = vpop.f32.mrb[0].mxu0
  %v6926 = vadd.f32 %v6637, %v6925
  %v6927 = vpop.f32.mrb[0].mxu0
  %6928 = vmatprep.mubr.bf16.mxu0 %v5250
  %6929 = vmatmul.mubr.bf16.gmra.mrb[0].mxu0 %v5249
  %v6930 = vpop.f32.mrb[0].mxu0
  %v6931 = vadd.f32 %v6642, %v6930
  %v6932 = vpop.f32.mrb[0].mxu0
  %v6933 = vpop.f32.mrb[0].mxu0
  %v6934 = vadd.f32 %v6645, %v6933
  %v6935 = vpop.f32.mrb[0].mxu0
  %6936 = vmatprep.mubr.bf16.mxu0 %v5258
  %6937 = vmatmul.mubr.bf16.gmra.mrb[0].mxu0 %v5257
  %v6938 = vpop.f32.mrb[0].mxu0
  %v6939 = vadd.f32 %v6650, %v6938
  %v6940 = vpop.f32.mrb[0].mxu0
  %v6941 = vpop.f32.mrb[0].mxu0
  %v6942 = vadd.f32 %v6653, %v6941
  %v6943 = vpop.f32.mrb[0].mxu0
  %6944 = vmatprep.mubr.bf16.mxu0 %v5266
  %6945 = vmatmul.mubr.bf16.gmra.mrb[0].mxu0 %v5265
  %v6946 = vpop.f32.mrb[0].mxu0
  %v6947 = vadd.f32 %v6658, %v6946
  %v6948 = vpop.f32.mrb[0].mxu0
  %v6949 = vpop.f32.mrb[0].mxu0
  %v6950 = vadd.f32 %v6661, %v6949
  %v6951 = vpop.f32.mrb[0].mxu0
  %6952 = vmatprep.mubr.bf16.mxu0 %v5274
  %6953 = vmatmul.mubr.bf16.gmra.mrb[0].mxu0 %v5273
  %v6954 = vpop.f32.mrb[0].mxu0
  %v6955 = vadd.f32 %v6666, %v6954
  %v6956 = vpop.f32.mrb[0].mxu0
  %v6957 = vpop.f32.mrb[0].mxu0
  %v6958 = vadd.f32 %v6669, %v6957
  %v6959 = vpop.f32.mrb[0].mxu0
  %6960 = vmatprep.mubr.bf16.mxu0 %v5282
  %6961 = vmatmul.mubr.bf16.gmra.mrb[0].mxu0 %v5281
  %v6962 = vpop.f32.mrb[0].mxu0
  %v6963 = vadd.f32 %v6674, %v6962
  %v6964 = vpop.f32.mrb[0].mxu0
  %v6965 = vpop.f32.mrb[0].mxu0
  %v6966 = vadd.f32 %v6677, %v6965
  %v6967 = vpop.f32.mrb[0].mxu0
  %6968 = vmatprep.mubr.bf16.mxu0 %v5290
  %6969 = vmatmul.mubr.bf16.gmra.mrb[0].mxu0 %v5289
  %v6970 = vpop.f32.mrb[0].mxu0
  %v6971 = vadd.f32 %v6682, %v6970
  %v6972 = vpop.f32.mrb[0].mxu0
  %v6973 = vpop.f32.mrb[0].mxu0
  %v6974 = vadd.f32 %v6685, %v6973
  %v6975 = vpop.f32.mrb[0].mxu0
  %6976 = vmatprep.mubr.bf16.mxu0 %v5298
  %6977 = vmatmul.mubr.bf16.gmra.mrb[0].mxu0 %v5297
  %v6978 = vpop.f32.mrb[0].mxu0
  %v6979 = vadd.f32 %v6690, %v6978
  %v6980 = vpop.f32.mrb[0].mxu0
  %v6981 = vpop.f32.mrb[0].mxu0
  %v6982 = vadd.f32 %v6693, %v6981
  %v6983 = vpop.f32.mrb[0].mxu0
  %6984 = vmatprep.mubr.bf16.mxu0 %v5306
  %6985 = vmatmul.mubr.bf16.gmra.mrb[0].mxu0 %v5305
  %v6986 = vpop.f32.mrb[0].mxu0
  %v6987 = vadd.f32 %v6698, %v6986
  %v6988 = vpop.f32.mrb[0].mxu0
  %v6989 = vpop.f32.mrb[0].mxu0
  %v6990 = vadd.f32 %v6701, %v6989
  %v6991 = vpop.f32.mrb[0].mxu0
  %6992 = vmatprep.mubr.bf16.mxu0 %v5314
  %6993 = vmatmul.mubr.bf16.gmra.mrb[0].mxu0 %v5313
  %v6994 = vpop.f32.mrb[0].mxu0
  %v6995 = vadd.f32 %v6706, %v6994
  %v6996 = vpop.f32.mrb[0].mxu0
  %v6997 = vpop.f32.mrb[0].mxu0
  %v6998 = vadd.f32 %v6709, %v6997
  %v6999 = vpop.f32.mrb[0].mxu0
  %7000 = vmatprep.mubr.bf16.mxu0 %v5322
  %7001 = vmatmul.mubr.bf16.gmra.mrb[0].mxu0 %v5321
  %v7002 = vpop.f32.mrb[0].mxu0
  %v7003 = vadd.f32 %v6714, %v7002
  %v7004 = vpop.f32.mrb[0].mxu0
  %v7005 = vpop.f32.mrb[0].mxu0
  %v7006 = vadd.f32 %v6717, %v7005
  %v7007 = vpop.f32.mrb[0].mxu0
  %7008 = vmatprep.mubr.bf16.mxu0 %v5330
  %7009 = vmatmul.mubr.bf16.gmra.mrb[0].mxu0 %v5329
  %v7010 = vpop.f32.mrb[0].mxu0
  %v7011 = vadd.f32 %v6722, %v7010
  %v7012 = vpop.f32.mrb[0].mxu0
  %v7013 = vpop.f32.mrb[0].mxu0
  %v7014 = vadd.f32 %v6725, %v7013
  %v7015 = vpop.f32.mrb[0].mxu0
  %7016 = vmatprep.mubr.bf16.mxu0 %v5338
  %7017 = vmatmul.mubr.bf16.gmra.mrb[0].mxu0 %v5337
  %v7018 = vpop.f32.mrb[0].mxu0
  %v7019 = vadd.f32 %v6730, %v7018
  %v7020 = vpop.f32.mrb[0].mxu0
  %v7021 = vpop.f32.mrb[0].mxu0
  %v7022 = vadd.f32 %v6733, %v7021
  %v7023 = vpop.f32.mrb[0].mxu0
  %7024 = vmatprep.mubr.bf16.mxu0 %v5346
  %7025 = vmatmul.mubr.bf16.gmra.mrb[0].mxu0 %v5345
  %v7026 = vpop.f32.mrb[0].mxu0
  %v7027 = vadd.f32 %v6738, %v7026
  %v7028 = vpop.f32.mrb[0].mxu0
  %v7029 = vpop.f32.mrb[0].mxu0
  %v7030 = vadd.f32 %v6741, %v7029
  %v7031 = vpop.f32.mrb[0].mxu0
  %7032 = vmatprep.mubr.bf16.mxu0 %v5354
  %7033 = vmatmul.mubr.bf16.gmra.mrb[0].mxu0 %v5353
  %v7034 = vpop.f32.mrb[0].mxu0
  %v7035 = vadd.f32 %v6746, %v7034
  %v7036 = vpop.f32.mrb[0].mxu0
  %v7037 = vpop.f32.mrb[0].mxu0
  %v7038 = vadd.f32 %v6749, %v7037
  %v7039 = vpop.f32.mrb[0].mxu0
  %7040 = vmatprep.mubr.bf16.mxu0 %v5362
  %7041 = vmatmul.mubr.bf16.gmra.mrb[0].mxu0 %v5361
  %v7042 = vpop.f32.mrb[0].mxu0
  %v7043 = vadd.f32 %v6754, %v7042
  %v7044 = vpop.f32.mrb[0].mxu0
  %v7045 = vpop.f32.mrb[0].mxu0
  %v7046 = vadd.f32 %v6757, %v7045
  %v7047 = vpop.f32.mrb[0].mxu0
  %7048 = vmatprep.mubr.bf16.mxu0 %v5370
  %7049 = vmatmul.mubr.bf16.gmra.mrb[0].mxu0 %v5369
  %v7050 = vpop.f32.mrb[0].mxu0
  %v7051 = vadd.f32 %v6762, %v7050
  %v7052 = vpop.f32.mrb[0].mxu0
  %v7053 = vpop.f32.mrb[0].mxu0
  %v7054 = vadd.f32 %v6765, %v7053
  %v7055 = vpop.f32.mrb[0].mxu0
  %7056 = vmatprep.mubr.bf16.mxu0 %v5378
  %7057 = vmatmul.mubr.bf16.gmra.mrb[0].mxu0 %v5377
  %v7058 = vpop.f32.mrb[0].mxu0
  %v7059 = vadd.f32 %v6770, %v7058
  %v7060 = vpop.f32.mrb[0].mxu0
  %v7061 = vpop.f32.mrb[0].mxu0
  %v7062 = vadd.f32 %v6773, %v7061
  %v7063 = vpop.f32.mrb[0].mxu0
  %7064 = vmatprep.mubr.bf16.mxu0 %v5386
  %7065 = vmatmul.mubr.bf16.gmra.mrb[0].mxu0 %v5385
  %v7066 = vpop.f32.mrb[0].mxu0
  %v7067 = vadd.f32 %v6778, %v7066
  %v7068 = vpop.f32.mrb[0].mxu0
  %v7069 = vpop.f32.mrb[0].mxu0
  %v7070 = vadd.f32 %v6781, %v7069
  %v7071 = vpop.f32.mrb[0].mxu0
  %7072 = vmatprep.mubr.bf16.mxu0 %v5394
  %7073 = vmatmul.mubr.bf16.gmra.mrb[0].mxu0 %v5393
  %v7074 = vpop.f32.mrb[0].mxu0
  %v7075 = vadd.f32 %v6786, %v7074
  %v7076 = vpop.f32.mrb[0].mxu0
  %v7077 = vpop.f32.mrb[0].mxu0
  %v7078 = vadd.f32 %v6789, %v7077
  %v7079 = vpop.f32.mrb[0].mxu0
  %7080 = vmatprep.mubr.bf16.mxu0 %v5402
  %7081 = vmatmul.mubr.bf16.gmra.mrb[0].mxu0 %v5401
  %v7082 = vpop.f32.mrb[0].mxu0
  %v7083 = vadd.f32 %v6794, %v7082
  %v7084 = vpop.f32.mrb[0].mxu0
  %v7085 = vpop.f32.mrb[0].mxu0
  %v7086 = vadd.f32 %v6797, %v7085
  %v7087 = vpop.f32.mrb[0].mxu0
  %7088 = vmatprep.mubr.bf16.mxu0 %v5410
  %7089 = vmatmul.mubr.bf16.gmra.mrb[0].mxu0 %v5409
  %v7090 = vpop.f32.mrb[0].mxu0
  %v7091 = vadd.f32 %v6802, %v7090
  %v7092 = vpop.f32.mrb[0].mxu0
  %v7093 = vpop.f32.mrb[0].mxu0
  %v7094 = vadd.f32 %v6805, %v7093
  %v7095 = vpop.f32.mrb[0].mxu0
  %7096 = vmatprep.mubr.bf16.mxu0 %v5418
  %7097 = vmatmul.mubr.bf16.gmra.mrb[0].mxu0 %v5417
  %v7098 = vpop.f32.mrb[0].mxu0
  %v7099 = vadd.f32 %v6810, %v7098
  %v7100 = vpop.f32.mrb[0].mxu0
  %v7101 = vpop.f32.mrb[0].mxu0
  %v7102 = vadd.f32 %v6813, %v7101
  %v7103 = vpop.f32.mrb[0].mxu0
  %7104 = vmatprep.mubr.bf16.mxu0 %v5426
  %7105 = vmatmul.mubr.bf16.gmra.mrb[0].mxu0 %v5425
  %v7106 = vpop.f32.mrb[0].mxu0
  %v7107 = vadd.f32 %v6818, %v7106
  %v7108 = vpop.f32.mrb[0].mxu0
  %v7109 = vpop.f32.mrb[0].mxu0
  %v7110 = vadd.f32 %v6821, %v7109
  %v7111 = vpop.f32.mrb[0].mxu0
  %7112 = vmatprep.mubr.bf16.mxu0 %v5434
  %7113 = vmatmul.mubr.bf16.gmra.mrb[0].mxu0 %v5433
  %v7114 = vpop.f32.mrb[0].mxu0
  %v7115 = vadd.f32 %v6826, %v7114
  %v7116 = vpop.f32.mrb[0].mxu0
  %v7117 = vpop.f32.mrb[0].mxu0
  %v7118 = vadd.f32 %v6829, %v7117
  %v7119 = vpop.f32.mrb[0].mxu0
  %7120 = vmatprep.mubr.bf16.mxu0 %v5442
  %7121 = vmatmul.mubr.bf16.gmra.mrb[0].mxu0 %v5441
  %v7122 = vpop.f32.mrb[0].mxu0
  %v7123 = vadd.f32 %v6834, %v7122
  %v7124 = vpop.f32.mrb[0].mxu0
  %v7125 = vpop.f32.mrb[0].mxu0
  %v7126 = vadd.f32 %v6837, %v7125
  %v7127 = vpop.f32.mrb[0].mxu0
  %7128 = vmatprep.mubr.bf16.mxu0 %v5450
  %7129 = vmatmul.mubr.bf16.gmra.mrb[0].mxu0 %v5449
  %v7130 = vpop.f32.mrb[0].mxu0
  %v7131 = vadd.f32 %v6842, %v7130
  %v7132 = vpop.f32.mrb[0].mxu0
  %v7133 = vpop.f32.mrb[0].mxu0
  %v7134 = vadd.f32 %v6845, %v7133
  %v7135 = vpop.f32.mrb[0].mxu0
  %7136 = vmatprep.mubr.bf16.mxu0 %v5458
  %7137 = vmatmul.mubr.bf16.gmra.mrb[0].mxu0 %v5457
  %v7138 = vpop.f32.mrb[0].mxu0
  %v7139 = vadd.f32 %v6850, %v7138
  %v7140 = vpop.f32.mrb[0].mxu0
  %v7141 = vpop.f32.mrb[0].mxu0
  %v7142 = vadd.f32 %v6853, %v7141
  %v7143 = vpop.f32.mrb[0].mxu0
  %7144 = vmatprep.mubr.bf16.mxu0 %v5466
  %7145 = vmatmul.mubr.bf16.gmra.mrb[0].mxu0 %v5465
  %v7146 = vpop.f32.mrb[0].mxu0
  %v7147 = vadd.f32 %v6858, %v7146
  %v7148 = vpop.f32.mrb[0].mxu0
  %v7149 = vpop.f32.mrb[0].mxu0
  %v7150 = vadd.f32 %v6861, %v7149
  %v7151 = vpop.f32.mrb[0].mxu0
  %7152 = vdwg.mxu0
  %7153 = vmatprep.subr.bf16.mxu0 0
  %7154 = vmatpush1.bf16.msra.mxu0 %v6206
  %7155 = vmatprep.subr.bf16.mxu0 0
  %7156 = vmatpush1.bf16.msra.mxu0 %v6207
  %7157 = vmatprep.subr.bf16.mxu0 0
  %7158 = vmatpush1.bf16.msra.mxu0 %v6208
  %7159 = vmatprep.subr.bf16.mxu0 0
  %7160 = vmatpush1.bf16.msra.mxu0 %v6209
  %7161 = vmatprep.subr.bf16.mxu0 0
  %7162 = vmatpush1.bf16.msra.mxu0 %v6210
  %7163 = vmatprep.subr.bf16.mxu0 0
  %7164 = vmatpush1.bf16.msra.mxu0 %v6211
  %7165 = vmatprep.subr.bf16.mxu0 0
  %7166 = vmatpush1.bf16.msra.mxu0 %v6212
  %7167 = vmatprep.subr.bf16.mxu0 0
  %7168 = vmatpush1.bf16.msra.mxu0 %v6213
  %7169 = vmatprep.subr.bf16.mxu0 0
  %7170 = vmatpush1.bf16.msra.mxu0 %v6214
  %7171 = vmatprep.subr.bf16.mxu0 0
  %7172 = vmatpush1.bf16.msra.mxu0 %v6215
  %7173 = vmatprep.subr.bf16.mxu0 0
  %7174 = vmatpush1.bf16.msra.mxu0 %v6216
  %7175 = vmatprep.subr.bf16.mxu0 0
  %7176 = vmatpush1.bf16.msra.mxu0 %v6217
  %7177 = vmatprep.subr.bf16.mxu0 0
  %7178 = vmatpush1.bf16.msra.mxu0 %v6218
  %7179 = vmatprep.subr.bf16.mxu0 0
  %7180 = vmatpush1.bf16.msra.mxu0 %v6219
  %7181 = vmatprep.subr.bf16.mxu0 0
  %7182 = vmatpush1.bf16.msra.mxu0 %v6220
  %7183 = vmatprep.subr.bf16.mxu0 0
  %7184 = vmatpush1.bf16.msra.mxu0 %v6221
  %7185 = vmatprep.mubr.bf16.mxu0 %v5220
  %7186 = vmatmul.mubr.bf16.gmra.mrb[0].mxu0 %v5219
  %v7187 = vpop.f32.mrb[0].mxu0
  %v7188 = vadd.f32 %v6899, %v7187
  %v7189 = vpop.f32.mrb[0].mxu0
  %v7190 = vpop.f32.mrb[0].mxu0
  %v7191 = vadd.f32 %v6902, %v7190
  %v7192 = vpop.f32.mrb[0].mxu0
  %7193 = vmatprep.mubr.bf16.mxu0 %v5228
  %7194 = vmatmul.mubr.bf16.gmra.mrb[0].mxu0 %v5227
  %v7195 = vpop.f32.mrb[0].mxu0
  %v7196 = vadd.f32 %v6907, %v7195
  %v7197 = vpop.f32.mrb[0].mxu0
  %v7198 = vpop.f32.mrb[0].mxu0
  %v7199 = vadd.f32 %v6910, %v7198
  %v7200 = vpop.f32.mrb[0].mxu0
  %7201 = vmatprep.mubr.bf16.mxu0 %v5236
  %7202 = vmatmul.mubr.bf16.gmra.mrb[0].mxu0 %v5235
  %v7203 = vpop.f32.mrb[0].mxu0
  %v7204 = vadd.f32 %v6915, %v7203
  %v7205 = vpop.f32.mrb[0].mxu0
  %v7206 = vpop.f32.mrb[0].mxu0
  %v7207 = vadd.f32 %v6918, %v7206
  %v7208 = vpop.f32.mrb[0].mxu0
  %7209 = vmatprep.mubr.bf16.mxu0 %v5244
  %7210 = vmatmul.mubr.bf16.gmra.mrb[0].mxu0 %v5243
  %v7211 = vpop.f32.mrb[0].mxu0
  %v7212 = vadd.f32 %v6923, %v7211
  %v7213 = vpop.f32.mrb[0].mxu0
  %v7214 = vpop.f32.mrb[0].mxu0
  %v7215 = vadd.f32 %v6926, %v7214
  %v7216 = vpop.f32.mrb[0].mxu0
  %7217 = vmatprep.mubr.bf16.mxu0 %v5252
  %7218 = vmatmul.mubr.bf16.gmra.mrb[0].mxu0 %v5251
  %v7219 = vpop.f32.mrb[0].mxu0
  %v7220 = vadd.f32 %v6931, %v7219
  %v7221 = vpop.f32.mrb[0].mxu0
  %v7222 = vpop.f32.mrb[0].mxu0
  %v7223 = vadd.f32 %v6934, %v7222
  %v7224 = vpop.f32.mrb[0].mxu0
  %7225 = vmatprep.mubr.bf16.mxu0 %v5260
  %7226 = vmatmul.mubr.bf16.gmra.mrb[0].mxu0 %v5259
  %v7227 = vpop.f32.mrb[0].mxu0
  %v7228 = vadd.f32 %v6939, %v7227
  %v7229 = vpop.f32.mrb[0].mxu0
  %v7230 = vpop.f32.mrb[0].mxu0
  %v7231 = vadd.f32 %v6942, %v7230
  %v7232 = vpop.f32.mrb[0].mxu0
  %7233 = vmatprep.mubr.bf16.mxu0 %v5268
  %7234 = vmatmul.mubr.bf16.gmra.mrb[0].mxu0 %v5267
  %v7235 = vpop.f32.mrb[0].mxu0
  %v7236 = vadd.f32 %v6947, %v7235
  %v7237 = vpop.f32.mrb[0].mxu0
  %v7238 = vpop.f32.mrb[0].mxu0
  %v7239 = vadd.f32 %v6950, %v7238
  %v7240 = vpop.f32.mrb[0].mxu0
  %7241 = vmatprep.mubr.bf16.mxu0 %v5276
  %7242 = vmatmul.mubr.bf16.gmra.mrb[0].mxu0 %v5275
  %v7243 = vpop.f32.mrb[0].mxu0
  %v7244 = vadd.f32 %v6955, %v7243
  %v7245 = vpop.f32.mrb[0].mxu0
  %v7246 = vpop.f32.mrb[0].mxu0
  %v7247 = vadd.f32 %v6958, %v7246
  %v7248 = vpop.f32.mrb[0].mxu0
  %7249 = vmatprep.mubr.bf16.mxu0 %v5284
  %7250 = vmatmul.mubr.bf16.gmra.mrb[0].mxu0 %v5283
  %v7251 = vpop.f32.mrb[0].mxu0
  %v7252 = vadd.f32 %v6963, %v7251
  %v7253 = vpop.f32.mrb[0].mxu0
  %v7254 = vpop.f32.mrb[0].mxu0
  %v7255 = vadd.f32 %v6966, %v7254
  %v7256 = vpop.f32.mrb[0].mxu0
  %7257 = vmatprep.mubr.bf16.mxu0 %v5292
  %7258 = vmatmul.mubr.bf16.gmra.mrb[0].mxu0 %v5291
  %v7259 = vpop.f32.mrb[0].mxu0
  %v7260 = vadd.f32 %v6971, %v7259
  %v7261 = vpop.f32.mrb[0].mxu0
  %v7262 = vpop.f32.mrb[0].mxu0
  %v7263 = vadd.f32 %v6974, %v7262
  %v7264 = vpop.f32.mrb[0].mxu0
  %7265 = vmatprep.mubr.bf16.mxu0 %v5300
  %7266 = vmatmul.mubr.bf16.gmra.mrb[0].mxu0 %v5299
  %v7267 = vpop.f32.mrb[0].mxu0
  %v7268 = vadd.f32 %v6979, %v7267
  %v7269 = vpop.f32.mrb[0].mxu0
  %v7270 = vpop.f32.mrb[0].mxu0
  %v7271 = vadd.f32 %v6982, %v7270
  %v7272 = vpop.f32.mrb[0].mxu0
  %7273 = vmatprep.mubr.bf16.mxu0 %v5308
  %7274 = vmatmul.mubr.bf16.gmra.mrb[0].mxu0 %v5307
  %v7275 = vpop.f32.mrb[0].mxu0
  %v7276 = vadd.f32 %v6987, %v7275
  %v7277 = vpop.f32.mrb[0].mxu0
  %v7278 = vpop.f32.mrb[0].mxu0
  %v7279 = vadd.f32 %v6990, %v7278
  %v7280 = vpop.f32.mrb[0].mxu0
  %7281 = vmatprep.mubr.bf16.mxu0 %v5316
  %7282 = vmatmul.mubr.bf16.gmra.mrb[0].mxu0 %v5315
  %v7283 = vpop.f32.mrb[0].mxu0
  %v7284 = vadd.f32 %v6995, %v7283
  %v7285 = vpop.f32.mrb[0].mxu0
  %v7286 = vpop.f32.mrb[0].mxu0
  %v7287 = vadd.f32 %v6998, %v7286
  %v7288 = vpop.f32.mrb[0].mxu0
  %7289 = vmatprep.mubr.bf16.mxu0 %v5324
  %7290 = vmatmul.mubr.bf16.gmra.mrb[0].mxu0 %v5323
  %v7291 = vpop.f32.mrb[0].mxu0
  %v7292 = vadd.f32 %v7003, %v7291
  %v7293 = vpop.f32.mrb[0].mxu0
  %v7294 = vpop.f32.mrb[0].mxu0
  %v7295 = vadd.f32 %v7006, %v7294
  %v7296 = vpop.f32.mrb[0].mxu0
  %7297 = vmatprep.mubr.bf16.mxu0 %v5332
  %7298 = vmatmul.mubr.bf16.gmra.mrb[0].mxu0 %v5331
  %v7299 = vpop.f32.mrb[0].mxu0
  %v7300 = vadd.f32 %v7011, %v7299
  %v7301 = vpop.f32.mrb[0].mxu0
  %v7302 = vpop.f32.mrb[0].mxu0
  %v7303 = vadd.f32 %v7014, %v7302
  %v7304 = vpop.f32.mrb[0].mxu0
  %7305 = vmatprep.mubr.bf16.mxu0 %v5340
  %7306 = vmatmul.mubr.bf16.gmra.mrb[0].mxu0 %v5339
  %v7307 = vpop.f32.mrb[0].mxu0
  %v7308 = vadd.f32 %v7019, %v7307
  %v7309 = vpop.f32.mrb[0].mxu0
  %v7310 = vpop.f32.mrb[0].mxu0
  %v7311 = vadd.f32 %v7022, %v7310
  %v7312 = vpop.f32.mrb[0].mxu0
  %7313 = vmatprep.mubr.bf16.mxu0 %v5348
  %7314 = vmatmul.mubr.bf16.gmra.mrb[0].mxu0 %v5347
  %v7315 = vpop.f32.mrb[0].mxu0
  %v7316 = vadd.f32 %v7027, %v7315
  %v7317 = vpop.f32.mrb[0].mxu0
  %v7318 = vpop.f32.mrb[0].mxu0
  %v7319 = vadd.f32 %v7030, %v7318
  %v7320 = vpop.f32.mrb[0].mxu0
  %7321 = vmatprep.mubr.bf16.mxu0 %v5356
  %7322 = vmatmul.mubr.bf16.gmra.mrb[0].mxu0 %v5355
  %v7323 = vpop.f32.mrb[0].mxu0
  %v7324 = vadd.f32 %v7035, %v7323
  %v7325 = vpop.f32.mrb[0].mxu0
  %v7326 = vpop.f32.mrb[0].mxu0
  %v7327 = vadd.f32 %v7038, %v7326
  %v7328 = vpop.f32.mrb[0].mxu0
  %7329 = vmatprep.mubr.bf16.mxu0 %v5364
  %7330 = vmatmul.mubr.bf16.gmra.mrb[0].mxu0 %v5363
  %v7331 = vpop.f32.mrb[0].mxu0
  %v7332 = vadd.f32 %v7043, %v7331
  %v7333 = vpop.f32.mrb[0].mxu0
  %v7334 = vpop.f32.mrb[0].mxu0
  %v7335 = vadd.f32 %v7046, %v7334
  %v7336 = vpop.f32.mrb[0].mxu0
  %7337 = vmatprep.mubr.bf16.mxu0 %v5372
  %7338 = vmatmul.mubr.bf16.gmra.mrb[0].mxu0 %v5371
  %v7339 = vpop.f32.mrb[0].mxu0
  %v7340 = vadd.f32 %v7051, %v7339
  %v7341 = vpop.f32.mrb[0].mxu0
  %v7342 = vpop.f32.mrb[0].mxu0
  %v7343 = vadd.f32 %v7054, %v7342
  %v7344 = vpop.f32.mrb[0].mxu0
  %7345 = vmatprep.mubr.bf16.mxu0 %v5380
  %7346 = vmatmul.mubr.bf16.gmra.mrb[0].mxu0 %v5379
  %v7347 = vpop.f32.mrb[0].mxu0
  %v7348 = vadd.f32 %v7059, %v7347
  %v7349 = vpop.f32.mrb[0].mxu0
  %v7350 = vpop.f32.mrb[0].mxu0
  %v7351 = vadd.f32 %v7062, %v7350
  %v7352 = vpop.f32.mrb[0].mxu0
  %7353 = vmatprep.mubr.bf16.mxu0 %v5388
  %7354 = vmatmul.mubr.bf16.gmra.mrb[0].mxu0 %v5387
  %v7355 = vpop.f32.mrb[0].mxu0
  %v7356 = vadd.f32 %v7067, %v7355
  %v7357 = vpop.f32.mrb[0].mxu0
  %v7358 = vpop.f32.mrb[0].mxu0
  %v7359 = vadd.f32 %v7070, %v7358
  %v7360 = vpop.f32.mrb[0].mxu0
  %7361 = vmatprep.mubr.bf16.mxu0 %v5396
  %7362 = vmatmul.mubr.bf16.gmra.mrb[0].mxu0 %v5395
  %v7363 = vpop.f32.mrb[0].mxu0
  %v7364 = vadd.f32 %v7075, %v7363
  %v7365 = vpop.f32.mrb[0].mxu0
  %v7366 = vpop.f32.mrb[0].mxu0
  %v7367 = vadd.f32 %v7078, %v7366
  %v7368 = vpop.f32.mrb[0].mxu0
  %7369 = vmatprep.mubr.bf16.mxu0 %v5404
  %7370 = vmatmul.mubr.bf16.gmra.mrb[0].mxu0 %v5403
  %v7371 = vpop.f32.mrb[0].mxu0
  %v7372 = vadd.f32 %v7083, %v7371
  %v7373 = vpop.f32.mrb[0].mxu0
  %v7374 = vpop.f32.mrb[0].mxu0
  %v7375 = vadd.f32 %v7086, %v7374
  %v7376 = vpop.f32.mrb[0].mxu0
  %7377 = vmatprep.mubr.bf16.mxu0 %v5412
  %7378 = vmatmul.mubr.bf16.gmra.mrb[0].mxu0 %v5411
  %v7379 = vpop.f32.mrb[0].mxu0
  %v7380 = vadd.f32 %v7091, %v7379
  %v7381 = vpop.f32.mrb[0].mxu0
  %v7382 = vpop.f32.mrb[0].mxu0
  %v7383 = vadd.f32 %v7094, %v7382
  %v7384 = vpop.f32.mrb[0].mxu0
  %7385 = vmatprep.mubr.bf16.mxu0 %v5420
  %7386 = vmatmul.mubr.bf16.gmra.mrb[0].mxu0 %v5419
  %v7387 = vpop.f32.mrb[0].mxu0
  %v7388 = vadd.f32 %v7099, %v7387
  %v7389 = vpop.f32.mrb[0].mxu0
  %v7390 = vpop.f32.mrb[0].mxu0
  %v7391 = vadd.f32 %v7102, %v7390
  %v7392 = vpop.f32.mrb[0].mxu0
  %7393 = vmatprep.mubr.bf16.mxu0 %v5428
  %7394 = vmatmul.mubr.bf16.gmra.mrb[0].mxu0 %v5427
  %v7395 = vpop.f32.mrb[0].mxu0
  %v7396 = vadd.f32 %v7107, %v7395
  %v7397 = vpop.f32.mrb[0].mxu0
  %v7398 = vpop.f32.mrb[0].mxu0
  %v7399 = vadd.f32 %v7110, %v7398
  %v7400 = vpop.f32.mrb[0].mxu0
  %7401 = vmatprep.mubr.bf16.mxu0 %v5436
  %7402 = vmatmul.mubr.bf16.gmra.mrb[0].mxu0 %v5435
  %v7403 = vpop.f32.mrb[0].mxu0
  %v7404 = vadd.f32 %v7115, %v7403
  %v7405 = vpop.f32.mrb[0].mxu0
  %v7406 = vpop.f32.mrb[0].mxu0
  %v7407 = vadd.f32 %v7118, %v7406
  %v7408 = vpop.f32.mrb[0].mxu0
  %7409 = vmatprep.mubr.bf16.mxu0 %v5444
  %7410 = vmatmul.mubr.bf16.gmra.mrb[0].mxu0 %v5443
  %v7411 = vpop.f32.mrb[0].mxu0
  %v7412 = vadd.f32 %v7123, %v7411
  %v7413 = vpop.f32.mrb[0].mxu0
  %v7414 = vpop.f32.mrb[0].mxu0
  %v7415 = vadd.f32 %v7126, %v7414
  %v7416 = vpop.f32.mrb[0].mxu0
  %7417 = vmatprep.mubr.bf16.mxu0 %v5452
  %7418 = vmatmul.mubr.bf16.gmra.mrb[0].mxu0 %v5451
  %v7419 = vpop.f32.mrb[0].mxu0
  %v7420 = vadd.f32 %v7131, %v7419
  %v7421 = vpop.f32.mrb[0].mxu0
  %v7422 = vpop.f32.mrb[0].mxu0
  %v7423 = vadd.f32 %v7134, %v7422
  %v7424 = vpop.f32.mrb[0].mxu0
  %7425 = vmatprep.mubr.bf16.mxu0 %v5460
  %7426 = vmatmul.mubr.bf16.gmra.mrb[0].mxu0 %v5459
  %v7427 = vpop.f32.mrb[0].mxu0
  %v7428 = vadd.f32 %v7139, %v7427
  %v7429 = vpop.f32.mrb[0].mxu0
  %v7430 = vpop.f32.mrb[0].mxu0
  %v7431 = vadd.f32 %v7142, %v7430
  %v7432 = vpop.f32.mrb[0].mxu0
  %7433 = vmatprep.mubr.bf16.mxu0 %v5468
  %7434 = vmatmul.mubr.bf16.gmra.mrb[0].mxu0 %v5467
  %v7435 = vpop.f32.mrb[0].mxu0
  %v7436 = vadd.f32 %v7147, %v7435
  %v7437 = vpop.f32.mrb[0].mxu0
  %v7438 = vpop.f32.mrb[0].mxu0
  %v7439 = vadd.f32 %v7150, %v7438
  %v7440 = vpop.f32.mrb[0].mxu0
  %7441 = vdwg.mxu0
  %v7442 = vpack.c.bf16 %v7191, %v7188
  %v7443 = vpack.c.bf16 %v7199, %v7196
  %v7444 = vpack.c.bf16 %v7207, %v7204
  %v7445 = vpack.c.bf16 %v7215, %v7212
  %v7446 = vpack.c.bf16 %v7223, %v7220
  %v7447 = vpack.c.bf16 %v7231, %v7228
  %v7448 = vpack.c.bf16 %v7239, %v7236
  %v7449 = vpack.c.bf16 %v7247, %v7244
  %v7450 = vpack.c.bf16 %v7255, %v7252
  %v7451 = vpack.c.bf16 %v7263, %v7260
  %v7452 = vpack.c.bf16 %v7271, %v7268
  %v7453 = vpack.c.bf16 %v7279, %v7276
  %v7454 = vpack.c.bf16 %v7287, %v7284
  %v7455 = vpack.c.bf16 %v7295, %v7292
  %v7456 = vpack.c.bf16 %v7303, %v7300
  %v7457 = vpack.c.bf16 %v7311, %v7308
  %v7458 = vpack.c.bf16 %v7319, %v7316
  %v7459 = vpack.c.bf16 %v7327, %v7324
  %v7460 = vpack.c.bf16 %v7335, %v7332
  %v7461 = vpack.c.bf16 %v7343, %v7340
  %v7462 = vpack.c.bf16 %v7351, %v7348
  %v7463 = vpack.c.bf16 %v7359, %v7356
  %v7464 = vpack.c.bf16 %v7367, %v7364
  %v7465 = vpack.c.bf16 %v7375, %v7372
  %v7466 = vpack.c.bf16 %v7383, %v7380
  %v7467 = vpack.c.bf16 %v7391, %v7388
  %v7468 = vpack.c.bf16 %v7399, %v7396
  %v7469 = vpack.c.bf16 %v7407, %v7404
  %v7470 = vpack.c.bf16 %v7415, %v7412
  %v7471 = vpack.c.bf16 %v7423, %v7420
  %v7472 = vpack.c.bf16 %v7431, %v7428
  %v7473 = vpack.c.bf16 %v7439, %v7436
  %v7474 = vld [vmem:[%s11] sm:$0xf]
  %v7475 = vld [vmem:[%s11 + $0x4] sm:$0xf]
  %v7476 = vld [vmem:[%s11 + $0x8] sm:$0xf]
  %v7477 = vld [vmem:[%s11 + $0xc] sm:$0xf]
  %v7478 = vld [vmem:[%s11 + $0x10] sm:$0xf]
  %v7479 = vld [vmem:[%s11 + $0x14] sm:$0xf]
  %v7480 = vld [vmem:[%s11 + $0x18] sm:$0xf]
  %v7481 = vld [vmem:[%s11 + $0x1c] sm:$0xf]
  %v7482 = vld [vmem:[%s11 + $0x20] sm:$0xf]
  %v7483 = vld [vmem:[%s11 + $0x24] sm:$0xf]
  %v7484 = vld [vmem:[%s11 + $0x28] sm:$0xf]
  %v7485 = vld [vmem:[%s11 + $0x2c] sm:$0xf]
  %v7486 = vld [vmem:[%s11 + $0x30] sm:$0xf]
  %v7487 = vld [vmem:[%s11 + $0x34] sm:$0xf]
  %v7488 = vld [vmem:[%s11 + $0x38] sm:$0xf]
  %v7489 = vld [vmem:[%s11 + $0x3c] sm:$0xf]
  %v7490 = vld [vmem:[%s12] sm:$0x1]
  %v7492 = vlaneseq
  %v7493 = vshrl.u32 %v7492, 7
  %v7494 = vsub.s32 0, %v7493
  %v7495 = vrot.slane %v7490, %v7494
  %v7513 = vunpack.c.l.b16 %v7474
  %v7514 = vunpack.c.l.b16 %v7475
  %v7515 = vunpack.c.l.b16 %v7476
  %v7516 = vunpack.c.l.b16 %v7477
  %v7517 = vunpack.c.l.b16 %v7478
  %v7518 = vunpack.c.l.b16 %v7479
  %v7519 = vunpack.c.l.b16 %v7480
  %v7520 = vunpack.c.l.b16 %v7481
  %v7521 = vunpack.c.l.b16 %v7482
  %v7522 = vunpack.c.l.b16 %v7483
  %v7523 = vunpack.c.l.b16 %v7484
  %v7524 = vunpack.c.l.b16 %v7485
  %v7525 = vunpack.c.l.b16 %v7486
  %v7526 = vunpack.c.l.b16 %v7487
  %v7527 = vunpack.c.l.b16 %v7488
  %v7528 = vunpack.c.l.b16 %v7489
  %v7529 = vpack.c.b16 %v7514, %v7513
  %v7530 = vpack.c.b16 %v7516, %v7515
  %v7531 = vpack.c.b16 %v7518, %v7517
  %v7532 = vpack.c.b16 %v7520, %v7519
  %v7533 = vpack.c.b16 %v7522, %v7521
  %v7534 = vpack.c.b16 %v7524, %v7523
  %v7535 = vpack.c.b16 %v7526, %v7525
  %v7536 = vpack.c.b16 %v7528, %v7527
  %7545 = vmatprep.subr.bf16.mxu0 0
  %7546 = vmatpush1.bf16.msra.mxu0 %v7529
  %7547 = vmatprep.subr.bf16.mxu0 0
  %7548 = vmatpush1.bf16.msra.mxu0 %v7530
  %7549 = vmatprep.subr.bf16.mxu0 0
  %7550 = vmatpush1.bf16.msra.mxu0 %v7531
  %7551 = vmatprep.subr.bf16.mxu0 0
  %7552 = vmatpush1.bf16.msra.mxu0 %v7532
  %7553 = vmatprep.subr.bf16.mxu0 0
  %7554 = vmatpush1.bf16.msra.mxu0 %v7533
  %7555 = vmatprep.subr.bf16.mxu0 0
  %7556 = vmatpush1.bf16.msra.mxu0 %v7534
  %7557 = vmatprep.subr.bf16.mxu0 0
  %7558 = vmatpush1.bf16.msra.mxu0 %v7535
  %7559 = vmatprep.subr.bf16.mxu0 0
  %7560 = vmatpush1.bf16.msra.mxu0 %v7536
  %7561 = vmatprep.subr.bf16.mxu0 0
  %7562 = vmatpush1.bf16.msra.mxu0 0
  %7563 = vmatprep.subr.bf16.mxu0 0
  %7564 = vmatpush1.bf16.msra.mxu0 0
  %7565 = vmatprep.subr.bf16.mxu0 0
  %7566 = vmatpush1.bf16.msra.mxu0 0
  %7567 = vmatprep.subr.bf16.mxu0 0
  %7568 = vmatpush1.bf16.msra.mxu0 0
  %7569 = vmatprep.subr.bf16.mxu0 0
  %7570 = vmatpush1.bf16.msra.mxu0 0
  %7571 = vmatprep.subr.bf16.mxu0 0
  %7572 = vmatpush1.bf16.msra.mxu0 0
  %7573 = vmatprep.subr.bf16.mxu0 0
  %7574 = vmatpush1.bf16.msra.mxu0 0
  %7575 = vmatprep.subr.bf16.mxu0 0
  %7576 = vmatpush1.bf16.msra.mxu0 0
  %7577 = vmatprep.mubr.bf16.mxu0 0
  %7578 = vmatmul.mubr.bf16.gmra.mrb[0].mxu0 %v7442
  %v7579 = vpop.f32.mrb[0].mxu0
  %v7580 = vadd.f32 %v7495, %v7579
  %v7581 = vpop.f32.mrb[0].mxu0
  %v7582 = vpop.f32.mrb[0].mxu0
  %v7583 = vadd.f32 %v7495, %v7582
  %v7584 = vpop.f32.mrb[0].mxu0
  %7585 = vmatprep.mubr.bf16.mxu0 0
  %7586 = vmatmul.mubr.bf16.gmra.mrb[0].mxu0 %v7443
  %v7587 = vpop.f32.mrb[0].mxu0
  %v7588 = vadd.f32 %v7495, %v7587
  %v7589 = vpop.f32.mrb[0].mxu0
  %v7590 = vpop.f32.mrb[0].mxu0
  %v7591 = vadd.f32 %v7495, %v7590
  %v7592 = vpop.f32.mrb[0].mxu0
  %7593 = vmatprep.mubr.bf16.mxu0 0
  %7594 = vmatmul.mubr.bf16.gmra.mrb[0].mxu0 %v7444
  %v7595 = vpop.f32.mrb[0].mxu0
  %v7596 = vadd.f32 %v7495, %v7595
  %v7597 = vpop.f32.mrb[0].mxu0
  %v7598 = vpop.f32.mrb[0].mxu0
  %v7599 = vadd.f32 %v7495, %v7598
  %v7600 = vpop.f32.mrb[0].mxu0
  %7601 = vmatprep.mubr.bf16.mxu0 0
  %7602 = vmatmul.mubr.bf16.gmra.mrb[0].mxu0 %v7445
  %v7603 = vpop.f32.mrb[0].mxu0
  %v7604 = vadd.f32 %v7495, %v7603
  %v7605 = vpop.f32.mrb[0].mxu0
  %v7606 = vpop.f32.mrb[0].mxu0
  %v7607 = vadd.f32 %v7495, %v7606
  %v7608 = vpop.f32.mrb[0].mxu0
  %7609 = vmatprep.mubr.bf16.mxu0 0
  %7610 = vmatmul.mubr.bf16.gmra.mrb[0].mxu0 %v7446
  %v7611 = vpop.f32.mrb[0].mxu0
  %v7612 = vadd.f32 %v7495, %v7611
  %v7613 = vpop.f32.mrb[0].mxu0
  %v7614 = vpop.f32.mrb[0].mxu0
  %v7615 = vadd.f32 %v7495, %v7614
  %v7616 = vpop.f32.mrb[0].mxu0
  %7617 = vmatprep.mubr.bf16.mxu0 0
  %7618 = vmatmul.mubr.bf16.gmra.mrb[0].mxu0 %v7447
  %v7619 = vpop.f32.mrb[0].mxu0
  %v7620 = vadd.f32 %v7495, %v7619
  %v7621 = vpop.f32.mrb[0].mxu0
  %v7622 = vpop.f32.mrb[0].mxu0
  %v7623 = vadd.f32 %v7495, %v7622
  %v7624 = vpop.f32.mrb[0].mxu0
  %7625 = vmatprep.mubr.bf16.mxu0 0
  %7626 = vmatmul.mubr.bf16.gmra.mrb[0].mxu0 %v7448
  %v7627 = vpop.f32.mrb[0].mxu0
  %v7628 = vadd.f32 %v7495, %v7627
  %v7629 = vpop.f32.mrb[0].mxu0
  %v7630 = vpop.f32.mrb[0].mxu0
  %v7631 = vadd.f32 %v7495, %v7630
  %v7632 = vpop.f32.mrb[0].mxu0
  %7633 = vmatprep.mubr.bf16.mxu0 0
  %7634 = vmatmul.mubr.bf16.gmra.mrb[0].mxu0 %v7449
  %v7635 = vpop.f32.mrb[0].mxu0
  %v7636 = vadd.f32 %v7495, %v7635
  %v7637 = vpop.f32.mrb[0].mxu0
  %v7638 = vpop.f32.mrb[0].mxu0
  %v7639 = vadd.f32 %v7495, %v7638
  %v7640 = vpop.f32.mrb[0].mxu0
  %7641 = vmatprep.mubr.bf16.mxu0 0
  %7642 = vmatmul.mubr.bf16.gmra.mrb[0].mxu0 %v7450
  %v7643 = vpop.f32.mrb[0].mxu0
  %v7644 = vadd.f32 %v7495, %v7643
  %v7645 = vpop.f32.mrb[0].mxu0
  %v7646 = vpop.f32.mrb[0].mxu0
  %v7647 = vadd.f32 %v7495, %v7646
  %v7648 = vpop.f32.mrb[0].mxu0
  %7649 = vmatprep.mubr.bf16.mxu0 0
  %7650 = vmatmul.mubr.bf16.gmra.mrb[0].mxu0 %v7451
  %v7651 = vpop.f32.mrb[0].mxu0
  %v7652 = vadd.f32 %v7495, %v7651
  %v7653 = vpop.f32.mrb[0].mxu0
  %v7654 = vpop.f32.mrb[0].mxu0
  %v7655 = vadd.f32 %v7495, %v7654
  %v7656 = vpop.f32.mrb[0].mxu0
  %7657 = vmatprep.mubr.bf16.mxu0 0
  %7658 = vmatmul.mubr.bf16.gmra.mrb[0].mxu0 %v7452
  %v7659 = vpop.f32.mrb[0].mxu0
  %v7660 = vadd.f32 %v7495, %v7659
  %v7661 = vpop.f32.mrb[0].mxu0
  %v7662 = vpop.f32.mrb[0].mxu0
  %v7663 = vadd.f32 %v7495, %v7662
  %v7664 = vpop.f32.mrb[0].mxu0
  %7665 = vmatprep.mubr.bf16.mxu0 0
  %7666 = vmatmul.mubr.bf16.gmra.mrb[0].mxu0 %v7453
  %v7667 = vpop.f32.mrb[0].mxu0
  %v7668 = vadd.f32 %v7495, %v7667
  %v7669 = vpop.f32.mrb[0].mxu0
  %v7670 = vpop.f32.mrb[0].mxu0
  %v7671 = vadd.f32 %v7495, %v7670
  %v7672 = vpop.f32.mrb[0].mxu0
  %7673 = vmatprep.mubr.bf16.mxu0 0
  %7674 = vmatmul.mubr.bf16.gmra.mrb[0].mxu0 %v7454
  %v7675 = vpop.f32.mrb[0].mxu0
  %v7676 = vadd.f32 %v7495, %v7675
  %v7677 = vpop.f32.mrb[0].mxu0
  %v7678 = vpop.f32.mrb[0].mxu0
  %v7679 = vadd.f32 %v7495, %v7678
  %v7680 = vpop.f32.mrb[0].mxu0
  %7681 = vmatprep.mubr.bf16.mxu0 0
  %7682 = vmatmul.mubr.bf16.gmra.mrb[0].mxu0 %v7455
  %v7683 = vpop.f32.mrb[0].mxu0
  %v7684 = vadd.f32 %v7495, %v7683
  %v7685 = vpop.f32.mrb[0].mxu0
  %v7686 = vpop.f32.mrb[0].mxu0
  %v7687 = vadd.f32 %v7495, %v7686
  %v7688 = vpop.f32.mrb[0].mxu0
  %7689 = vmatprep.mubr.bf16.mxu0 0
  %7690 = vmatmul.mubr.bf16.gmra.mrb[0].mxu0 %v7456
  %v7691 = vpop.f32.mrb[0].mxu0
  %v7692 = vadd.f32 %v7495, %v7691
  %v7693 = vpop.f32.mrb[0].mxu0
  %v7694 = vpop.f32.mrb[0].mxu0
  %v7695 = vadd.f32 %v7495, %v7694
  %v7696 = vpop.f32.mrb[0].mxu0
  %7697 = vmatprep.mubr.bf16.mxu0 0
  %7698 = vmatmul.mubr.bf16.gmra.mrb[0].mxu0 %v7457
  %v7699 = vpop.f32.mrb[0].mxu0
  %v7700 = vadd.f32 %v7495, %v7699
  %v7701 = vpop.f32.mrb[0].mxu0
  %v7702 = vpop.f32.mrb[0].mxu0
  %v7703 = vadd.f32 %v7495, %v7702
  %v7704 = vpop.f32.mrb[0].mxu0
  %7705 = vmatprep.mubr.bf16.mxu0 0
  %7706 = vmatmul.mubr.bf16.gmra.mrb[0].mxu0 %v7458
  %v7707 = vpop.f32.mrb[0].mxu0
  %v7708 = vadd.f32 %v7495, %v7707
  %v7709 = vpop.f32.mrb[0].mxu0
  %v7710 = vpop.f32.mrb[0].mxu0
  %v7711 = vadd.f32 %v7495, %v7710
  %v7712 = vpop.f32.mrb[0].mxu0
  %7713 = vmatprep.mubr.bf16.mxu0 0
  %7714 = vmatmul.mubr.bf16.gmra.mrb[0].mxu0 %v7459
  %v7715 = vpop.f32.mrb[0].mxu0
  %v7716 = vadd.f32 %v7495, %v7715
  %v7717 = vpop.f32.mrb[0].mxu0
  %v7718 = vpop.f32.mrb[0].mxu0
  %v7719 = vadd.f32 %v7495, %v7718
  %v7720 = vpop.f32.mrb[0].mxu0
  %7721 = vmatprep.mubr.bf16.mxu0 0
  %7722 = vmatmul.mubr.bf16.gmra.mrb[0].mxu0 %v7460
  %v7723 = vpop.f32.mrb[0].mxu0
  %v7724 = vadd.f32 %v7495, %v7723
  %v7725 = vpop.f32.mrb[0].mxu0
  %v7726 = vpop.f32.mrb[0].mxu0
  %v7727 = vadd.f32 %v7495, %v7726
  %v7728 = vpop.f32.mrb[0].mxu0
  %7729 = vmatprep.mubr.bf16.mxu0 0
  %7730 = vmatmul.mubr.bf16.gmra.mrb[0].mxu0 %v7461
  %v7731 = vpop.f32.mrb[0].mxu0
  %v7732 = vadd.f32 %v7495, %v7731
  %v7733 = vpop.f32.mrb[0].mxu0
  %v7734 = vpop.f32.mrb[0].mxu0
  %v7735 = vadd.f32 %v7495, %v7734
  %v7736 = vpop.f32.mrb[0].mxu0
  %7737 = vmatprep.mubr.bf16.mxu0 0
  %7738 = vmatmul.mubr.bf16.gmra.mrb[0].mxu0 %v7462
  %v7739 = vpop.f32.mrb[0].mxu0
  %v7740 = vadd.f32 %v7495, %v7739
  %v7741 = vpop.f32.mrb[0].mxu0
  %v7742 = vpop.f32.mrb[0].mxu0
  %v7743 = vadd.f32 %v7495, %v7742
  %v7744 = vpop.f32.mrb[0].mxu0
  %7745 = vmatprep.mubr.bf16.mxu0 0
  %7746 = vmatmul.mubr.bf16.gmra.mrb[0].mxu0 %v7463
  %v7747 = vpop.f32.mrb[0].mxu0
  %v7748 = vadd.f32 %v7495, %v7747
  %v7749 = vpop.f32.mrb[0].mxu0
  %v7750 = vpop.f32.mrb[0].mxu0
  %v7751 = vadd.f32 %v7495, %v7750
  %v7752 = vpop.f32.mrb[0].mxu0
  %7753 = vmatprep.mubr.bf16.mxu0 0
  %7754 = vmatmul.mubr.bf16.gmra.mrb[0].mxu0 %v7464
  %v7755 = vpop.f32.mrb[0].mxu0
  %v7756 = vadd.f32 %v7495, %v7755
  %v7757 = vpop.f32.mrb[0].mxu0
  %v7758 = vpop.f32.mrb[0].mxu0
  %v7759 = vadd.f32 %v7495, %v7758
  %v7760 = vpop.f32.mrb[0].mxu0
  %7761 = vmatprep.mubr.bf16.mxu0 0
  %7762 = vmatmul.mubr.bf16.gmra.mrb[0].mxu0 %v7465
  %v7763 = vpop.f32.mrb[0].mxu0
  %v7764 = vadd.f32 %v7495, %v7763
  %v7765 = vpop.f32.mrb[0].mxu0
  %v7766 = vpop.f32.mrb[0].mxu0
  %v7767 = vadd.f32 %v7495, %v7766
  %v7768 = vpop.f32.mrb[0].mxu0
  %7769 = vmatprep.mubr.bf16.mxu0 0
  %7770 = vmatmul.mubr.bf16.gmra.mrb[0].mxu0 %v7466
  %v7771 = vpop.f32.mrb[0].mxu0
  %v7772 = vadd.f32 %v7495, %v7771
  %v7773 = vpop.f32.mrb[0].mxu0
  %v7774 = vpop.f32.mrb[0].mxu0
  %v7775 = vadd.f32 %v7495, %v7774
  %v7776 = vpop.f32.mrb[0].mxu0
  %7777 = vmatprep.mubr.bf16.mxu0 0
  %7778 = vmatmul.mubr.bf16.gmra.mrb[0].mxu0 %v7467
  %v7779 = vpop.f32.mrb[0].mxu0
  %v7780 = vadd.f32 %v7495, %v7779
  %v7781 = vpop.f32.mrb[0].mxu0
  %v7782 = vpop.f32.mrb[0].mxu0
  %v7783 = vadd.f32 %v7495, %v7782
  %v7784 = vpop.f32.mrb[0].mxu0
  %7785 = vmatprep.mubr.bf16.mxu0 0
  %7786 = vmatmul.mubr.bf16.gmra.mrb[0].mxu0 %v7468
  %v7787 = vpop.f32.mrb[0].mxu0
  %v7788 = vadd.f32 %v7495, %v7787
  %v7789 = vpop.f32.mrb[0].mxu0
  %v7790 = vpop.f32.mrb[0].mxu0
  %v7791 = vadd.f32 %v7495, %v7790
  %v7792 = vpop.f32.mrb[0].mxu0
  %7793 = vmatprep.mubr.bf16.mxu0 0
  %7794 = vmatmul.mubr.bf16.gmra.mrb[0].mxu0 %v7469
  %v7795 = vpop.f32.mrb[0].mxu0
  %v7796 = vadd.f32 %v7495, %v7795
  %v7797 = vpop.f32.mrb[0].mxu0
  %v7798 = vpop.f32.mrb[0].mxu0
  %v7799 = vadd.f32 %v7495, %v7798
  %v7800 = vpop.f32.mrb[0].mxu0
  %7801 = vmatprep.mubr.bf16.mxu0 0
  %7802 = vmatmul.mubr.bf16.gmra.mrb[0].mxu0 %v7470
  %v7803 = vpop.f32.mrb[0].mxu0
  %v7804 = vadd.f32 %v7495, %v7803
  %v7805 = vpop.f32.mrb[0].mxu0
  %v7806 = vpop.f32.mrb[0].mxu0
  %v7807 = vadd.f32 %v7495, %v7806
  %v7808 = vpop.f32.mrb[0].mxu0
  %7809 = vmatprep.mubr.bf16.mxu0 0
  %7810 = vmatmul.mubr.bf16.gmra.mrb[0].mxu0 %v7471
  %v7811 = vpop.f32.mrb[0].mxu0
  %v7812 = vadd.f32 %v7495, %v7811
  %v7813 = vpop.f32.mrb[0].mxu0
  %v7814 = vpop.f32.mrb[0].mxu0
  %v7815 = vadd.f32 %v7495, %v7814
  %v7816 = vpop.f32.mrb[0].mxu0
  %7817 = vmatprep.mubr.bf16.mxu0 0
  %7818 = vmatmul.mubr.bf16.gmra.mrb[0].mxu0 %v7472
  %v7819 = vpop.f32.mrb[0].mxu0
  %v7820 = vadd.f32 %v7495, %v7819
  %v7821 = vpop.f32.mrb[0].mxu0
  %v7822 = vpop.f32.mrb[0].mxu0
  %v7823 = vadd.f32 %v7495, %v7822
  %v7824 = vpop.f32.mrb[0].mxu0
  %7825 = vmatprep.mubr.bf16.mxu0 0
  %7826 = vmatmul.mubr.bf16.gmra.mrb[0].mxu0 %v7473
  %v7827 = vpop.f32.mrb[0].mxu0
  %v7828 = vadd.f32 %v7495, %v7827
  %v7829 = vpop.f32.mrb[0].mxu0
  %v7830 = vpop.f32.mrb[0].mxu0
  %v7831 = vadd.f32 %v7495, %v7830
  %v7832 = vpop.f32.mrb[0].mxu0
  %7833 = vdwg.mxu0
  %v7834 = vmax.f32 %v7580, 0.0
  %v7835 = vmax.f32 %v7583, 0.0
  %v7836 = vmax.f32 %v7588, 0.0
  %v7837 = vmax.f32 %v7591, 0.0
  %v7838 = vmax.f32 %v7596, 0.0
  %v7839 = vmax.f32 %v7599, 0.0
  %v7840 = vmax.f32 %v7604, 0.0
  %v7841 = vmax.f32 %v7607, 0.0
  %v7842 = vmax.f32 %v7612, 0.0
  %v7843 = vmax.f32 %v7615, 0.0
  %v7844 = vmax.f32 %v7620, 0.0
  %v7845 = vmax.f32 %v7623, 0.0
  %v7846 = vmax.f32 %v7628, 0.0
  %v7847 = vmax.f32 %v7631, 0.0
  %v7848 = vmax.f32 %v7636, 0.0
  %v7849 = vmax.f32 %v7639, 0.0
  %v7850 = vmax.f32 %v7644, 0.0
  %v7851 = vmax.f32 %v7647, 0.0
  %v7852 = vmax.f32 %v7652, 0.0
  %v7853 = vmax.f32 %v7655, 0.0
  %v7854 = vmax.f32 %v7660, 0.0
  %v7855 = vmax.f32 %v7663, 0.0
  %v7856 = vmax.f32 %v7668, 0.0
  %v7857 = vmax.f32 %v7671, 0.0
  %v7858 = vmax.f32 %v7676, 0.0
  %v7859 = vmax.f32 %v7679, 0.0
  %v7860 = vmax.f32 %v7684, 0.0
  %v7861 = vmax.f32 %v7687, 0.0
  %v7862 = vmax.f32 %v7692, 0.0
  %v7863 = vmax.f32 %v7695, 0.0
  %v7864 = vmax.f32 %v7700, 0.0
  %v7865 = vmax.f32 %v7703, 0.0
  %v7866 = vmax.f32 %v7708, 0.0
  %v7867 = vmax.f32 %v7711, 0.0
  %v7868 = vmax.f32 %v7716, 0.0
  %v7869 = vmax.f32 %v7719, 0.0
  %v7870 = vmax.f32 %v7724, 0.0
  %v7871 = vmax.f32 %v7727, 0.0
  %v7872 = vmax.f32 %v7732, 0.0
  %v7873 = vmax.f32 %v7735, 0.0
  %v7874 = vmax.f32 %v7740, 0.0
  %v7875 = vmax.f32 %v7743, 0.0
  %v7876 = vmax.f32 %v7748, 0.0
  %v7877 = vmax.f32 %v7751, 0.0
  %v7878 = vmax.f32 %v7756, 0.0
  %v7879 = vmax.f32 %v7759, 0.0
  %v7880 = vmax.f32 %v7764, 0.0
  %v7881 = vmax.f32 %v7767, 0.0
  %v7882 = vmax.f32 %v7772, 0.0
  %v7883 = vmax.f32 %v7775, 0.0
  %v7884 = vmax.f32 %v7780, 0.0
  %v7885 = vmax.f32 %v7783, 0.0
  %v7886 = vmax.f32 %v7788, 0.0
  %v7887 = vmax.f32 %v7791, 0.0
  %v7888 = vmax.f32 %v7796, 0.0
  %v7889 = vmax.f32 %v7799, 0.0
  %v7890 = vmax.f32 %v7804, 0.0
  %v7891 = vmax.f32 %v7807, 0.0
  %v7892 = vmax.f32 %v7812, 0.0
  %v7893 = vmax.f32 %v7815, 0.0
  %v7894 = vmax.f32 %v7820, 0.0
  %v7895 = vmax.f32 %v7823, 0.0
  %v7896 = vmax.f32 %v7828, 0.0
  %v7897 = vmax.f32 %v7831, 0.0
  %v7898 = vld [vmem:[%s13] sm:$0x1]
  %v7900 = vlaneseq
  %v7901 = vshrl.u32 %v7900, 7
  %v7902 = vsub.s32 0, %v7901
  %v7903 = vrot.slane %v7898, %v7902
  %v7905 = vmul.f32 %v7834, %v7903
  %v7906 = vmul.f32 %v7835, %v7903
  %v7907 = vmul.f32 %v7836, %v7903
  %v7908 = vmul.f32 %v7837, %v7903
  %v7909 = vmul.f32 %v7838, %v7903
  %v7910 = vmul.f32 %v7839, %v7903
  %v7911 = vmul.f32 %v7840, %v7903
  %v7912 = vmul.f32 %v7841, %v7903
  %v7913 = vmul.f32 %v7842, %v7903
  %v7914 = vmul.f32 %v7843, %v7903
  %v7915 = vmul.f32 %v7844, %v7903
  %v7916 = vmul.f32 %v7845, %v7903
  %v7917 = vmul.f32 %v7846, %v7903
  %v7918 = vmul.f32 %v7847, %v7903
  %v7919 = vmul.f32 %v7848, %v7903
  %v7920 = vmul.f32 %v7849, %v7903
  %v7921 = vmul.f32 %v7850, %v7903
  %v7922 = vmul.f32 %v7851, %v7903
  %v7923 = vmul.f32 %v7852, %v7903
  %v7924 = vmul.f32 %v7853, %v7903
  %v7925 = vmul.f32 %v7854, %v7903
  %v7926 = vmul.f32 %v7855, %v7903
  %v7927 = vmul.f32 %v7856, %v7903
  %v7928 = vmul.f32 %v7857, %v7903
  %v7929 = vmul.f32 %v7858, %v7903
  %v7930 = vmul.f32 %v7859, %v7903
  %v7931 = vmul.f32 %v7860, %v7903
  %v7932 = vmul.f32 %v7861, %v7903
  %v7933 = vmul.f32 %v7862, %v7903
  %v7934 = vmul.f32 %v7863, %v7903
  %v7935 = vmul.f32 %v7864, %v7903
  %v7936 = vmul.f32 %v7865, %v7903
  %v7937 = vmul.f32 %v7866, %v7903
  %v7938 = vmul.f32 %v7867, %v7903
  %v7939 = vmul.f32 %v7868, %v7903
  %v7940 = vmul.f32 %v7869, %v7903
  %v7941 = vmul.f32 %v7870, %v7903
  %v7942 = vmul.f32 %v7871, %v7903
  %v7943 = vmul.f32 %v7872, %v7903
  %v7944 = vmul.f32 %v7873, %v7903
  %v7945 = vmul.f32 %v7874, %v7903
  %v7946 = vmul.f32 %v7875, %v7903
  %v7947 = vmul.f32 %v7876, %v7903
  %v7948 = vmul.f32 %v7877, %v7903
  %v7949 = vmul.f32 %v7878, %v7903
  %v7950 = vmul.f32 %v7879, %v7903
  %v7951 = vmul.f32 %v7880, %v7903
  %v7952 = vmul.f32 %v7881, %v7903
  %v7953 = vmul.f32 %v7882, %v7903
  %v7954 = vmul.f32 %v7883, %v7903
  %v7955 = vmul.f32 %v7884, %v7903
  %v7956 = vmul.f32 %v7885, %v7903
  %v7957 = vmul.f32 %v7886, %v7903
  %v7958 = vmul.f32 %v7887, %v7903
  %v7959 = vmul.f32 %v7888, %v7903
  %v7960 = vmul.f32 %v7889, %v7903
  %v7961 = vmul.f32 %v7890, %v7903
  %v7962 = vmul.f32 %v7891, %v7903
  %v7963 = vmul.f32 %v7892, %v7903
  %v7964 = vmul.f32 %v7893, %v7903
  %v7965 = vmul.f32 %v7894, %v7903
  %v7966 = vmul.f32 %v7895, %v7903
  %v7967 = vmul.f32 %v7896, %v7903
  %v7968 = vmul.f32 %v7897, %v7903
  %v7969 = vsel %vm1428, %v7905, 0.0
  %7970 = vadd.xlane.f32.xlu0 %v7969
  %v7971 = vpop.xlane.xlu0 %7970
  %v7972 = vsel %vm1428, %v7906, 0.0
  %7973 = vadd.xlane.f32.xlu0 %v7972
  %v7974 = vpop.xlane.xlu0 %7973
  %v7975 = vsel %vm1428, %v7907, 0.0
  %7976 = vadd.xlane.f32.xlu0 %v7975
  %v7977 = vpop.xlane.xlu0 %7976
  %v7978 = vsel %vm1428, %v7908, 0.0
  %7979 = vadd.xlane.f32.xlu0 %v7978
  %v7980 = vpop.xlane.xlu0 %7979
  %v7981 = vsel %vm1428, %v7909, 0.0
  %7982 = vadd.xlane.f32.xlu0 %v7981
  %v7983 = vpop.xlane.xlu0 %7982
  %v7984 = vsel %vm1428, %v7910, 0.0
  %7985 = vadd.xlane.f32.xlu0 %v7984
  %v7986 = vpop.xlane.xlu0 %7985
  %v7987 = vsel %vm1428, %v7911, 0.0
  %7988 = vadd.xlane.f32.xlu0 %v7987
  %v7989 = vpop.xlane.xlu0 %7988
  %v7990 = vsel %vm1428, %v7912, 0.0
  %7991 = vadd.xlane.f32.xlu0 %v7990
  %v7992 = vpop.xlane.xlu0 %7991
  %v7993 = vsel %vm1428, %v7913, 0.0
  %7994 = vadd.xlane.f32.xlu0 %v7993
  %v7995 = vpop.xlane.xlu0 %7994
  %v7996 = vsel %vm1428, %v7914, 0.0
  %7997 = vadd.xlane.f32.xlu0 %v7996
  %v7998 = vpop.xlane.xlu0 %7997
  %v7999 = vsel %vm1428, %v7915, 0.0
  %8000 = vadd.xlane.f32.xlu0 %v7999
  %v8001 = vpop.xlane.xlu0 %8000
  %v8002 = vsel %vm1428, %v7916, 0.0
  %8003 = vadd.xlane.f32.xlu0 %v8002
  %v8004 = vpop.xlane.xlu0 %8003
  %v8005 = vsel %vm1428, %v7917, 0.0
  %8006 = vadd.xlane.f32.xlu0 %v8005
  %v8007 = vpop.xlane.xlu0 %8006
  %v8008 = vsel %vm1428, %v7918, 0.0
  %8009 = vadd.xlane.f32.xlu0 %v8008
  %v8010 = vpop.xlane.xlu0 %8009
  %v8011 = vsel %vm1428, %v7919, 0.0
  %8012 = vadd.xlane.f32.xlu0 %v8011
  %v8013 = vpop.xlane.xlu0 %8012
  %v8014 = vsel %vm1428, %v7920, 0.0
  %8015 = vadd.xlane.f32.xlu0 %v8014
  %v8016 = vpop.xlane.xlu0 %8015
  %v8017 = vsel %vm1428, %v7921, 0.0
  %8018 = vadd.xlane.f32.xlu0 %v8017
  %v8019 = vpop.xlane.xlu0 %8018
  %v8020 = vsel %vm1428, %v7922, 0.0
  %8021 = vadd.xlane.f32.xlu0 %v8020
  %v8022 = vpop.xlane.xlu0 %8021
  %v8023 = vsel %vm1428, %v7923, 0.0
  %8024 = vadd.xlane.f32.xlu0 %v8023
  %v8025 = vpop.xlane.xlu0 %8024
  %v8026 = vsel %vm1428, %v7924, 0.0
  %8027 = vadd.xlane.f32.xlu0 %v8026
  %v8028 = vpop.xlane.xlu0 %8027
  %v8029 = vsel %vm1428, %v7925, 0.0
  %8030 = vadd.xlane.f32.xlu0 %v8029
  %v8031 = vpop.xlane.xlu0 %8030
  %v8032 = vsel %vm1428, %v7926, 0.0
  %8033 = vadd.xlane.f32.xlu0 %v8032
  %v8034 = vpop.xlane.xlu0 %8033
  %v8035 = vsel %vm1428, %v7927, 0.0
  %8036 = vadd.xlane.f32.xlu0 %v8035
  %v8037 = vpop.xlane.xlu0 %8036
  %v8038 = vsel %vm1428, %v7928, 0.0
  %8039 = vadd.xlane.f32.xlu0 %v8038
  %v8040 = vpop.xlane.xlu0 %8039
  %v8041 = vsel %vm1428, %v7929, 0.0
  %8042 = vadd.xlane.f32.xlu0 %v8041
  %v8043 = vpop.xlane.xlu0 %8042
  %v8044 = vsel %vm1428, %v7930, 0.0
  %8045 = vadd.xlane.f32.xlu0 %v8044
  %v8046 = vpop.xlane.xlu0 %8045
  %v8047 = vsel %vm1428, %v7931, 0.0
  %8048 = vadd.xlane.f32.xlu0 %v8047
  %v8049 = vpop.xlane.xlu0 %8048
  %v8050 = vsel %vm1428, %v7932, 0.0
  %8051 = vadd.xlane.f32.xlu0 %v8050
  %v8052 = vpop.xlane.xlu0 %8051
  %v8053 = vsel %vm1428, %v7933, 0.0
  %8054 = vadd.xlane.f32.xlu0 %v8053
  %v8055 = vpop.xlane.xlu0 %8054
  %v8056 = vsel %vm1428, %v7934, 0.0
  %8057 = vadd.xlane.f32.xlu0 %v8056
  %v8058 = vpop.xlane.xlu0 %8057
  %v8059 = vsel %vm1428, %v7935, 0.0
  %8060 = vadd.xlane.f32.xlu0 %v8059
  %v8061 = vpop.xlane.xlu0 %8060
  %v8062 = vsel %vm1428, %v7936, 0.0
  %8063 = vadd.xlane.f32.xlu0 %v8062
  %v8064 = vpop.xlane.xlu0 %8063
  %v8065 = vsel %vm1428, %v7937, 0.0
  %8066 = vadd.xlane.f32.xlu0 %v8065
  %v8067 = vpop.xlane.xlu0 %8066
  %v8068 = vsel %vm1428, %v7938, 0.0
  %8069 = vadd.xlane.f32.xlu0 %v8068
  %v8070 = vpop.xlane.xlu0 %8069
  %v8071 = vsel %vm1428, %v7939, 0.0
  %8072 = vadd.xlane.f32.xlu0 %v8071
  %v8073 = vpop.xlane.xlu0 %8072
  %v8074 = vsel %vm1428, %v7940, 0.0
  %8075 = vadd.xlane.f32.xlu0 %v8074
  %v8076 = vpop.xlane.xlu0 %8075
  %v8077 = vsel %vm1428, %v7941, 0.0
  %8078 = vadd.xlane.f32.xlu0 %v8077
  %v8079 = vpop.xlane.xlu0 %8078
  %v8080 = vsel %vm1428, %v7942, 0.0
  %8081 = vadd.xlane.f32.xlu0 %v8080
  %v8082 = vpop.xlane.xlu0 %8081
  %v8083 = vsel %vm1428, %v7943, 0.0
  %8084 = vadd.xlane.f32.xlu0 %v8083
  %v8085 = vpop.xlane.xlu0 %8084
  %v8086 = vsel %vm1428, %v7944, 0.0
  %8087 = vadd.xlane.f32.xlu0 %v8086
  %v8088 = vpop.xlane.xlu0 %8087
  %v8089 = vsel %vm1428, %v7945, 0.0
  %8090 = vadd.xlane.f32.xlu0 %v8089
  %v8091 = vpop.xlane.xlu0 %8090
  %v8092 = vsel %vm1428, %v7946, 0.0
  %8093 = vadd.xlane.f32.xlu0 %v8092
  %v8094 = vpop.xlane.xlu0 %8093
  %v8095 = vsel %vm1428, %v7947, 0.0
  %8096 = vadd.xlane.f32.xlu0 %v8095
  %v8097 = vpop.xlane.xlu0 %8096
  %v8098 = vsel %vm1428, %v7948, 0.0
  %8099 = vadd.xlane.f32.xlu0 %v8098
  %v8100 = vpop.xlane.xlu0 %8099
  %v8101 = vsel %vm1428, %v7949, 0.0
  %8102 = vadd.xlane.f32.xlu0 %v8101
  %v8103 = vpop.xlane.xlu0 %8102
  %v8104 = vsel %vm1428, %v7950, 0.0
  %8105 = vadd.xlane.f32.xlu0 %v8104
  %v8106 = vpop.xlane.xlu0 %8105
  %v8107 = vsel %vm1428, %v7951, 0.0
  %8108 = vadd.xlane.f32.xlu0 %v8107
  %v8109 = vpop.xlane.xlu0 %8108
  %v8110 = vsel %vm1428, %v7952, 0.0
  %8111 = vadd.xlane.f32.xlu0 %v8110
  %v8112 = vpop.xlane.xlu0 %8111
  %v8113 = vsel %vm1428, %v7953, 0.0
  %8114 = vadd.xlane.f32.xlu0 %v8113
  %v8115 = vpop.xlane.xlu0 %8114
  %v8116 = vsel %vm1428, %v7954, 0.0
  %8117 = vadd.xlane.f32.xlu0 %v8116
  %v8118 = vpop.xlane.xlu0 %8117
  %v8119 = vsel %vm1428, %v7955, 0.0
  %8120 = vadd.xlane.f32.xlu0 %v8119
  %v8121 = vpop.xlane.xlu0 %8120
  %v8122 = vsel %vm1428, %v7956, 0.0
  %8123 = vadd.xlane.f32.xlu0 %v8122
  %v8124 = vpop.xlane.xlu0 %8123
  %v8125 = vsel %vm1428, %v7957, 0.0
  %8126 = vadd.xlane.f32.xlu0 %v8125
  %v8127 = vpop.xlane.xlu0 %8126
  %v8128 = vsel %vm1428, %v7958, 0.0
  %8129 = vadd.xlane.f32.xlu0 %v8128
  %v8130 = vpop.xlane.xlu0 %8129
  %v8131 = vsel %vm1428, %v7959, 0.0
  %8132 = vadd.xlane.f32.xlu0 %v8131
  %v8133 = vpop.xlane.xlu0 %8132
  %v8134 = vsel %vm1428, %v7960, 0.0
  %8135 = vadd.xlane.f32.xlu0 %v8134
  %v8136 = vpop.xlane.xlu0 %8135
  %v8137 = vsel %vm1428, %v7961, 0.0
  %8138 = vadd.xlane.f32.xlu0 %v8137
  %v8139 = vpop.xlane.xlu0 %8138
  %v8140 = vsel %vm1428, %v7962, 0.0
  %8141 = vadd.xlane.f32.xlu0 %v8140
  %v8142 = vpop.xlane.xlu0 %8141
  %v8143 = vsel %vm1428, %v7963, 0.0
  %8144 = vadd.xlane.f32.xlu0 %v8143
  %v8145 = vpop.xlane.xlu0 %8144
  %v8146 = vsel %vm1428, %v7964, 0.0
  %8147 = vadd.xlane.f32.xlu0 %v8146
  %v8148 = vpop.xlane.xlu0 %8147
  %v8149 = vsel %vm1428, %v7965, 0.0
  %8150 = vadd.xlane.f32.xlu0 %v8149
  %v8151 = vpop.xlane.xlu0 %8150
  %v8152 = vsel %vm1428, %v7966, 0.0
  %8153 = vadd.xlane.f32.xlu0 %v8152
  %v8154 = vpop.xlane.xlu0 %8153
  %v8155 = vsel %vm1428, %v7967, 0.0
  %8156 = vadd.xlane.f32.xlu0 %v8155
  %v8157 = vpop.xlane.xlu0 %8156
  %v8158 = vsel %vm1428, %v7968, 0.0
  %8159 = vadd.xlane.f32.xlu0 %v8158
  %v8160 = vpop.xlane.xlu0 %8159
  %v8161 = vld [vmem:[#allocation2] sm:$0x1]
  %v8163 = vlaneseq
  %v8164 = vshrl.u32 %v8163, 7
  %v8165 = vsub.s32 0, %v8164
  %v8166 = vrot.slane %v8161, %v8165
  %v8168 = vadd.f32 %v7971, %v8166
  %v8169 = vadd.f32 %v7974, %v8166
  %v8170 = vadd.f32 %v7977, %v8166
  %v8171 = vadd.f32 %v7980, %v8166
  %v8172 = vadd.f32 %v7983, %v8166
  %v8173 = vadd.f32 %v7986, %v8166
  %v8174 = vadd.f32 %v7989, %v8166
  %v8175 = vadd.f32 %v7992, %v8166
  %v8176 = vadd.f32 %v7995, %v8166
  %v8177 = vadd.f32 %v7998, %v8166
  %v8178 = vadd.f32 %v8001, %v8166
  %v8179 = vadd.f32 %v8004, %v8166
  %v8180 = vadd.f32 %v8007, %v8166
  %v8181 = vadd.f32 %v8010, %v8166
  %v8182 = vadd.f32 %v8013, %v8166
  %v8183 = vadd.f32 %v8016, %v8166
  %v8184 = vadd.f32 %v8019, %v8166
  %v8185 = vadd.f32 %v8022, %v8166
  %v8186 = vadd.f32 %v8025, %v8166
  %v8187 = vadd.f32 %v8028, %v8166
  %v8188 = vadd.f32 %v8031, %v8166
  %v8189 = vadd.f32 %v8034, %v8166
  %v8190 = vadd.f32 %v8037, %v8166
  %v8191 = vadd.f32 %v8040, %v8166
  %v8192 = vadd.f32 %v8043, %v8166
  %v8193 = vadd.f32 %v8046, %v8166
  %v8194 = vadd.f32 %v8049, %v8166
  %v8195 = vadd.f32 %v8052, %v8166
  %v8196 = vadd.f32 %v8055, %v8166
  %v8197 = vadd.f32 %v8058, %v8166
  %v8198 = vadd.f32 %v8061, %v8166
  %v8199 = vadd.f32 %v8064, %v8166
  %v8200 = vadd.f32 %v8067, %v8166
  %v8201 = vadd.f32 %v8070, %v8166
  %v8202 = vadd.f32 %v8073, %v8166
  %v8203 = vadd.f32 %v8076, %v8166
  %v8204 = vadd.f32 %v8079, %v8166
  %v8205 = vadd.f32 %v8082, %v8166
  %v8206 = vadd.f32 %v8085, %v8166
  %v8207 = vadd.f32 %v8088, %v8166
  %v8208 = vadd.f32 %v8091, %v8166
  %v8209 = vadd.f32 %v8094, %v8166
  %v8210 = vadd.f32 %v8097, %v8166
  %v8211 = vadd.f32 %v8100, %v8166
  %v8212 = vadd.f32 %v8103, %v8166
  %v8213 = vadd.f32 %v8106, %v8166
  %v8214 = vadd.f32 %v8109, %v8166
  %v8215 = vadd.f32 %v8112, %v8166
  %v8216 = vadd.f32 %v8115, %v8166
  %v8217 = vadd.f32 %v8118, %v8166
  %v8218 = vadd.f32 %v8121, %v8166
  %v8219 = vadd.f32 %v8124, %v8166
  %v8220 = vadd.f32 %v8127, %v8166
  %v8221 = vadd.f32 %v8130, %v8166
  %v8222 = vadd.f32 %v8133, %v8166
  %v8223 = vadd.f32 %v8136, %v8166
  %v8224 = vadd.f32 %v8139, %v8166
  %v8225 = vadd.f32 %v8142, %v8166
  %v8226 = vadd.f32 %v8145, %v8166
  %v8227 = vadd.f32 %v8148, %v8166
  %v8228 = vadd.f32 %v8151, %v8166
  %v8229 = vadd.f32 %v8154, %v8166
  %v8230 = vadd.f32 %v8157, %v8166
  %v8231 = vadd.f32 %v8160, %v8166
  %v8232 = vld [vmem:[%s2] sm:$0xff]
  %v8233 = vld [vmem:[%s2 + $0x8] sm:$0xff]
  %v8234 = vld [vmem:[%s2 + $0x10] sm:$0xff]
  %v8235 = vld [vmem:[%s2 + $0x18] sm:$0xff]
  %v8236 = vld [vmem:[%s2 + $0x20] sm:$0xff]
  %v8237 = vld [vmem:[%s2 + $0x28] sm:$0xff]
  %v8238 = vld [vmem:[%s2 + $0x30] sm:$0xff]
  %v8239 = vld [vmem:[%s2 + $0x38] sm:$0xff]
  %v8240 = vld [vmem:[%s2 + $0x40] sm:$0xff]
  %v8241 = vld [vmem:[%s2 + $0x48] sm:$0xff]
  %v8242 = vld [vmem:[%s2 + $0x50] sm:$0xff]
  %v8243 = vld [vmem:[%s2 + $0x58] sm:$0xff]
  %v8244 = vld [vmem:[%s2 + $0x60] sm:$0xff]
  %v8245 = vld [vmem:[%s2 + $0x68] sm:$0xff]
  %v8246 = vld [vmem:[%s2 + $0x70] sm:$0xff]
  %v8247 = vld [vmem:[%s2 + $0x78] sm:$0xff]
  %v8248 = vld [vmem:[%s2 + $0x80] sm:$0xff]
  %v8249 = vld [vmem:[%s2 + $0x88] sm:$0xff]
  %v8250 = vld [vmem:[%s2 + $0x90] sm:$0xff]
  %v8251 = vld [vmem:[%s2 + $0x98] sm:$0xff]
  %v8252 = vld [vmem:[%s2 + $0xa0] sm:$0xff]
  %v8253 = vld [vmem:[%s2 + $0xa8] sm:$0xff]
  %v8254 = vld [vmem:[%s2 + $0xb0] sm:$0xff]
  %v8255 = vld [vmem:[%s2 + $0xb8] sm:$0xff]
  %v8256 = vld [vmem:[%s2 + $0xc0] sm:$0xff]
  %v8257 = vld [vmem:[%s2 + $0xc8] sm:$0xff]
  %v8258 = vld [vmem:[%s2 + $0xd0] sm:$0xff]
  %v8259 = vld [vmem:[%s2 + $0xd8] sm:$0xff]
  %v8260 = vld [vmem:[%s2 + $0xe0] sm:$0xff]
  %v8261 = vld [vmem:[%s2 + $0xe8] sm:$0xff]
  %v8262 = vld [vmem:[%s2 + $0xf0] sm:$0xff]
  %v8263 = vld [vmem:[%s2 + $0xf8] sm:$0xff]
  %v8264 = vld [vmem:[%s2 + $0x100] sm:$0xff]
  %v8265 = vld [vmem:[%s2 + $0x108] sm:$0xff]
  %v8266 = vld [vmem:[%s2 + $0x110] sm:$0xff]
  %v8267 = vld [vmem:[%s2 + $0x118] sm:$0xff]
  %v8268 = vld [vmem:[%s2 + $0x120] sm:$0xff]
  %v8269 = vld [vmem:[%s2 + $0x128] sm:$0xff]
  %v8270 = vld [vmem:[%s2 + $0x130] sm:$0xff]
  %v8271 = vld [vmem:[%s2 + $0x138] sm:$0xff]
  %v8272 = vld [vmem:[%s2 + $0x140] sm:$0xff]
  %v8273 = vld [vmem:[%s2 + $0x148] sm:$0xff]
  %v8274 = vld [vmem:[%s2 + $0x150] sm:$0xff]
  %v8275 = vld [vmem:[%s2 + $0x158] sm:$0xff]
  %v8276 = vld [vmem:[%s2 + $0x160] sm:$0xff]
  %v8277 = vld [vmem:[%s2 + $0x168] sm:$0xff]
  %v8278 = vld [vmem:[%s2 + $0x170] sm:$0xff]
  %v8279 = vld [vmem:[%s2 + $0x178] sm:$0xff]
  %v8280 = vld [vmem:[%s2 + $0x180] sm:$0xff]
  %v8281 = vld [vmem:[%s2 + $0x188] sm:$0xff]
  %v8282 = vld [vmem:[%s2 + $0x190] sm:$0xff]
  %v8283 = vld [vmem:[%s2 + $0x198] sm:$0xff]
  %v8284 = vld [vmem:[%s2 + $0x1a0] sm:$0xff]
  %v8285 = vld [vmem:[%s2 + $0x1a8] sm:$0xff]
  %v8286 = vld [vmem:[%s2 + $0x1b0] sm:$0xff]
  %v8287 = vld [vmem:[%s2 + $0x1b8] sm:$0xff]
  %v8288 = vld [vmem:[%s2 + $0x1c0] sm:$0xff]
  %v8289 = vld [vmem:[%s2 + $0x1c8] sm:$0xff]
  %v8290 = vld [vmem:[%s2 + $0x1d0] sm:$0xff]
  %v8291 = vld [vmem:[%s2 + $0x1d8] sm:$0xff]
  %v8292 = vld [vmem:[%s2 + $0x1e0] sm:$0xff]
  %v8293 = vld [vmem:[%s2 + $0x1e8] sm:$0xff]
  %v8294 = vld [vmem:[%s2 + $0x1f0] sm:$0xff]
  %v8295 = vld [vmem:[%s2 + $0x1f8] sm:$0xff]
  %8297 = vset.pattern.permute.xlu0 0
  %8298 = vperm.xlu0 %8297, %v8168
  %v8299 = vpop.permute.xlu0 %8298
  %8302 = vset.pattern.permute.xlu0 0
  %8303 = vperm.xlu0 %8302, %v8169
  %v8304 = vpop.permute.xlu0 %8303
  %8307 = vset.pattern.permute.xlu0 0
  %8308 = vperm.xlu0 %8307, %v8170
  %v8309 = vpop.permute.xlu0 %8308
  %8312 = vset.pattern.permute.xlu0 0
  %8313 = vperm.xlu0 %8312, %v8171
  %v8314 = vpop.permute.xlu0 %8313
  %8317 = vset.pattern.permute.xlu0 0
  %8318 = vperm.xlu0 %8317, %v8172
  %v8319 = vpop.permute.xlu0 %8318
  %8322 = vset.pattern.permute.xlu0 0
  %8323 = vperm.xlu0 %8322, %v8173
  %v8324 = vpop.permute.xlu0 %8323
  %8327 = vset.pattern.permute.xlu0 0
  %8328 = vperm.xlu0 %8327, %v8174
  %v8329 = vpop.permute.xlu0 %8328
  %8332 = vset.pattern.permute.xlu0 0
  %8333 = vperm.xlu0 %8332, %v8175
  %v8334 = vpop.permute.xlu0 %8333
  %8337 = vset.pattern.permute.xlu0 0
  %8338 = vperm.xlu0 %8337, %v8176
  %v8339 = vpop.permute.xlu0 %8338
  %8342 = vset.pattern.permute.xlu0 0
  %8343 = vperm.xlu0 %8342, %v8177
  %v8344 = vpop.permute.xlu0 %8343
  %8347 = vset.pattern.permute.xlu0 0
  %8348 = vperm.xlu0 %8347, %v8178
  %v8349 = vpop.permute.xlu0 %8348
  %8352 = vset.pattern.permute.xlu0 0
  %8353 = vperm.xlu0 %8352, %v8179
  %v8354 = vpop.permute.xlu0 %8353
  %8357 = vset.pattern.permute.xlu0 0
  %8358 = vperm.xlu0 %8357, %v8180
  %v8359 = vpop.permute.xlu0 %8358
  %8362 = vset.pattern.permute.xlu0 0
  %8363 = vperm.xlu0 %8362, %v8181
  %v8364 = vpop.permute.xlu0 %8363
  %8367 = vset.pattern.permute.xlu0 0
  %8368 = vperm.xlu0 %8367, %v8182
  %v8369 = vpop.permute.xlu0 %8368
  %8372 = vset.pattern.permute.xlu0 0
  %8373 = vperm.xlu0 %8372, %v8183
  %v8374 = vpop.permute.xlu0 %8373
  %8377 = vset.pattern.permute.xlu0 0
  %8378 = vperm.xlu0 %8377, %v8184
  %v8379 = vpop.permute.xlu0 %8378
  %8382 = vset.pattern.permute.xlu0 0
  %8383 = vperm.xlu0 %8382, %v8185
  %v8384 = vpop.permute.xlu0 %8383
  %8387 = vset.pattern.permute.xlu0 0
  %8388 = vperm.xlu0 %8387, %v8186
  %v8389 = vpop.permute.xlu0 %8388
  %8392 = vset.pattern.permute.xlu0 0
  %8393 = vperm.xlu0 %8392, %v8187
  %v8394 = vpop.permute.xlu0 %8393
  %8397 = vset.pattern.permute.xlu0 0
  %8398 = vperm.xlu0 %8397, %v8188
  %v8399 = vpop.permute.xlu0 %8398
  %8402 = vset.pattern.permute.xlu0 0
  %8403 = vperm.xlu0 %8402, %v8189
  %v8404 = vpop.permute.xlu0 %8403
  %8407 = vset.pattern.permute.xlu0 0
  %8408 = vperm.xlu0 %8407, %v8190
  %v8409 = vpop.permute.xlu0 %8408
  %8412 = vset.pattern.permute.xlu0 0
  %8413 = vperm.xlu0 %8412, %v8191
  %v8414 = vpop.permute.xlu0 %8413
  %8417 = vset.pattern.permute.xlu0 0
  %8418 = vperm.xlu0 %8417, %v8192
  %v8419 = vpop.permute.xlu0 %8418
  %8422 = vset.pattern.permute.xlu0 0
  %8423 = vperm.xlu0 %8422, %v8193
  %v8424 = vpop.permute.xlu0 %8423
  %8427 = vset.pattern.permute.xlu0 0
  %8428 = vperm.xlu0 %8427, %v8194
  %v8429 = vpop.permute.xlu0 %8428
  %8432 = vset.pattern.permute.xlu0 0
  %8433 = vperm.xlu0 %8432, %v8195
  %v8434 = vpop.permute.xlu0 %8433
  %8437 = vset.pattern.permute.xlu0 0
  %8438 = vperm.xlu0 %8437, %v8196
  %v8439 = vpop.permute.xlu0 %8438
  %8442 = vset.pattern.permute.xlu0 0
  %8443 = vperm.xlu0 %8442, %v8197
  %v8444 = vpop.permute.xlu0 %8443
  %8447 = vset.pattern.permute.xlu0 0
  %8448 = vperm.xlu0 %8447, %v8198
  %v8449 = vpop.permute.xlu0 %8448
  %8452 = vset.pattern.permute.xlu0 0
  %8453 = vperm.xlu0 %8452, %v8199
  %v8454 = vpop.permute.xlu0 %8453
  %8457 = vset.pattern.permute.xlu0 0
  %8458 = vperm.xlu0 %8457, %v8200
  %v8459 = vpop.permute.xlu0 %8458
  %8462 = vset.pattern.permute.xlu0 0
  %8463 = vperm.xlu0 %8462, %v8201
  %v8464 = vpop.permute.xlu0 %8463
  %8467 = vset.pattern.permute.xlu0 0
  %8468 = vperm.xlu0 %8467, %v8202
  %v8469 = vpop.permute.xlu0 %8468
  %8472 = vset.pattern.permute.xlu0 0
  %8473 = vperm.xlu0 %8472, %v8203
  %v8474 = vpop.permute.xlu0 %8473
  %8477 = vset.pattern.permute.xlu0 0
  %8478 = vperm.xlu0 %8477, %v8204
  %v8479 = vpop.permute.xlu0 %8478
  %8482 = vset.pattern.permute.xlu0 0
  %8483 = vperm.xlu0 %8482, %v8205
  %v8484 = vpop.permute.xlu0 %8483
  %8487 = vset.pattern.permute.xlu0 0
  %8488 = vperm.xlu0 %8487, %v8206
  %v8489 = vpop.permute.xlu0 %8488
  %8492 = vset.pattern.permute.xlu0 0
  %8493 = vperm.xlu0 %8492, %v8207
  %v8494 = vpop.permute.xlu0 %8493
  %8497 = vset.pattern.permute.xlu0 0
  %8498 = vperm.xlu0 %8497, %v8208
  %v8499 = vpop.permute.xlu0 %8498
  %8502 = vset.pattern.permute.xlu0 0
  %8503 = vperm.xlu0 %8502, %v8209
  %v8504 = vpop.permute.xlu0 %8503
  %8507 = vset.pattern.permute.xlu0 0
  %8508 = vperm.xlu0 %8507, %v8210
  %v8509 = vpop.permute.xlu0 %8508
  %8512 = vset.pattern.permute.xlu0 0
  %8513 = vperm.xlu0 %8512, %v8211
  %v8514 = vpop.permute.xlu0 %8513
  %8517 = vset.pattern.permute.xlu0 0
  %8518 = vperm.xlu0 %8517, %v8212
  %v8519 = vpop.permute.xlu0 %8518
  %8522 = vset.pattern.permute.xlu0 0
  %8523 = vperm.xlu0 %8522, %v8213
  %v8524 = vpop.permute.xlu0 %8523
  %8527 = vset.pattern.permute.xlu0 0
  %8528 = vperm.xlu0 %8527, %v8214
  %v8529 = vpop.permute.xlu0 %8528
  %8532 = vset.pattern.permute.xlu0 0
  %8533 = vperm.xlu0 %8532, %v8215
  %v8534 = vpop.permute.xlu0 %8533
  %8537 = vset.pattern.permute.xlu0 0
  %8538 = vperm.xlu0 %8537, %v8216
  %v8539 = vpop.permute.xlu0 %8538
  %8542 = vset.pattern.permute.xlu0 0
  %8543 = vperm.xlu0 %8542, %v8217
  %v8544 = vpop.permute.xlu0 %8543
  %8547 = vset.pattern.permute.xlu0 0
  %8548 = vperm.xlu0 %8547, %v8218
  %v8549 = vpop.permute.xlu0 %8548
  %8552 = vset.pattern.permute.xlu0 0
  %8553 = vperm.xlu0 %8552, %v8219
  %v8554 = vpop.permute.xlu0 %8553
  %8557 = vset.pattern.permute.xlu0 0
  %8558 = vperm.xlu0 %8557, %v8220
  %v8559 = vpop.permute.xlu0 %8558
  %8562 = vset.pattern.permute.xlu0 0
  %8563 = vperm.xlu0 %8562, %v8221
  %v8564 = vpop.permute.xlu0 %8563
  %8567 = vset.pattern.permute.xlu0 0
  %8568 = vperm.xlu0 %8567, %v8222
  %v8569 = vpop.permute.xlu0 %8568
  %8572 = vset.pattern.permute.xlu0 0
  %8573 = vperm.xlu0 %8572, %v8223
  %v8574 = vpop.permute.xlu0 %8573
  %8577 = vset.pattern.permute.xlu0 0
  %8578 = vperm.xlu0 %8577, %v8224
  %v8579 = vpop.permute.xlu0 %8578
  %8582 = vset.pattern.permute.xlu0 0
  %8583 = vperm.xlu0 %8582, %v8225
  %v8584 = vpop.permute.xlu0 %8583
  %8587 = vset.pattern.permute.xlu0 0
  %8588 = vperm.xlu0 %8587, %v8226
  %v8589 = vpop.permute.xlu0 %8588
  %8592 = vset.pattern.permute.xlu0 0
  %8593 = vperm.xlu0 %8592, %v8227
  %v8594 = vpop.permute.xlu0 %8593
  %8597 = vset.pattern.permute.xlu0 0
  %8598 = vperm.xlu0 %8597, %v8228
  %v8599 = vpop.permute.xlu0 %8598
  %8602 = vset.pattern.permute.xlu0 0
  %8603 = vperm.xlu0 %8602, %v8229
  %v8604 = vpop.permute.xlu0 %8603
  %8607 = vset.pattern.permute.xlu0 0
  %8608 = vperm.xlu0 %8607, %v8230
  %v8609 = vpop.permute.xlu0 %8608
  %8612 = vset.pattern.permute.xlu0 0
  %8613 = vperm.xlu0 %8612, %v8231
  %v8614 = vpop.permute.xlu0 %8613
  %v8616 = vmul.f32 %v8232, %v8299
  %v8617 = vmul.f32 %v8233, %v8304
  %v8618 = vmul.f32 %v8234, %v8309
  %v8619 = vmul.f32 %v8235, %v8314
  %v8620 = vmul.f32 %v8236, %v8319
  %v8621 = vmul.f32 %v8237, %v8324
  %v8622 = vmul.f32 %v8238, %v8329
  %v8623 = vmul.f32 %v8239, %v8334
  %v8624 = vmul.f32 %v8240, %v8339
  %v8625 = vmul.f32 %v8241, %v8344
  %v8626 = vmul.f32 %v8242, %v8349
  %v8627 = vmul.f32 %v8243, %v8354
  %v8628 = vmul.f32 %v8244, %v8359
  %v8629 = vmul.f32 %v8245, %v8364
  %v8630 = vmul.f32 %v8246, %v8369
  %v8631 = vmul.f32 %v8247, %v8374
  %v8632 = vmul.f32 %v8248, %v8379
  %v8633 = vmul.f32 %v8249, %v8384
  %v8634 = vmul.f32 %v8250, %v8389
  %v8635 = vmul.f32 %v8251, %v8394
  %v8636 = vmul.f32 %v8252, %v8399
  %v8637 = vmul.f32 %v8253, %v8404
  %v8638 = vmul.f32 %v8254, %v8409
  %v8639 = vmul.f32 %v8255, %v8414
  %v8640 = vmul.f32 %v8256, %v8419
  %v8641 = vmul.f32 %v8257, %v8424
  %v8642 = vmul.f32 %v8258, %v8429
  %v8643 = vmul.f32 %v8259, %v8434
  %v8644 = vmul.f32 %v8260, %v8439
  %v8645 = vmul.f32 %v8261, %v8444
  %v8646 = vmul.f32 %v8262, %v8449
  %v8647 = vmul.f32 %v8263, %v8454
  %v8648 = vmul.f32 %v8264, %v8459
  %v8649 = vmul.f32 %v8265, %v8464
  %v8650 = vmul.f32 %v8266, %v8469
  %v8651 = vmul.f32 %v8267, %v8474
  %v8652 = vmul.f32 %v8268, %v8479
  %v8653 = vmul.f32 %v8269, %v8484
  %v8654 = vmul.f32 %v8270, %v8489
  %v8655 = vmul.f32 %v8271, %v8494
  %v8656 = vmul.f32 %v8272, %v8499
  %v8657 = vmul.f32 %v8273, %v8504
  %v8658 = vmul.f32 %v8274, %v8509
  %v8659 = vmul.f32 %v8275, %v8514
  %v8660 = vmul.f32 %v8276, %v8519
  %v8661 = vmul.f32 %v8277, %v8524
  %v8662 = vmul.f32 %v8278, %v8529
  %v8663 = vmul.f32 %v8279, %v8534
  %v8664 = vmul.f32 %v8280, %v8539
  %v8665 = vmul.f32 %v8281, %v8544
  %v8666 = vmul.f32 %v8282, %v8549
  %v8667 = vmul.f32 %v8283, %v8554
  %v8668 = vmul.f32 %v8284, %v8559
  %v8669 = vmul.f32 %v8285, %v8564
  %v8670 = vmul.f32 %v8286, %v8569
  %v8671 = vmul.f32 %v8287, %v8574
  %v8672 = vmul.f32 %v8288, %v8579
  %v8673 = vmul.f32 %v8289, %v8584
  %v8674 = vmul.f32 %v8290, %v8589
  %v8675 = vmul.f32 %v8291, %v8594
  %v8676 = vmul.f32 %v8292, %v8599
  %v8677 = vmul.f32 %v8293, %v8604
  %v8678 = vmul.f32 %v8294, %v8609
  %v8679 = vmul.f32 %v8295, %v8614
  %v8680 = vadd.f32 %v7188, %v8616
  %v8681 = vadd.f32 %v7191, %v8617
  %v8682 = vadd.f32 %v7196, %v8618
  %v8683 = vadd.f32 %v7199, %v8619
  %v8684 = vadd.f32 %v7204, %v8620
  %v8685 = vadd.f32 %v7207, %v8621
  %v8686 = vadd.f32 %v7212, %v8622
  %v8687 = vadd.f32 %v7215, %v8623
  %v8688 = vadd.f32 %v7220, %v8624
  %v8689 = vadd.f32 %v7223, %v8625
  %v8690 = vadd.f32 %v7228, %v8626
  %v8691 = vadd.f32 %v7231, %v8627
  %v8692 = vadd.f32 %v7236, %v8628
  %v8693 = vadd.f32 %v7239, %v8629
  %v8694 = vadd.f32 %v7244, %v8630
  %v8695 = vadd.f32 %v7247, %v8631
  %v8696 = vadd.f32 %v7252, %v8632
  %v8697 = vadd.f32 %v7255, %v8633
  %v8698 = vadd.f32 %v7260, %v8634
  %v8699 = vadd.f32 %v7263, %v8635
  %v8700 = vadd.f32 %v7268, %v8636
  %v8701 = vadd.f32 %v7271, %v8637
  %v8702 = vadd.f32 %v7276, %v8638
  %v8703 = vadd.f32 %v7279, %v8639
  %v8704 = vadd.f32 %v7284, %v8640
  %v8705 = vadd.f32 %v7287, %v8641
  %v8706 = vadd.f32 %v7292, %v8642
  %v8707 = vadd.f32 %v7295, %v8643
  %v8708 = vadd.f32 %v7300, %v8644
  %v8709 = vadd.f32 %v7303, %v8645
  %v8710 = vadd.f32 %v7308, %v8646
  %v8711 = vadd.f32 %v7311, %v8647
  %v8712 = vadd.f32 %v7316, %v8648
  %v8713 = vadd.f32 %v7319, %v8649
  %v8714 = vadd.f32 %v7324, %v8650
  %v8715 = vadd.f32 %v7327, %v8651
  %v8716 = vadd.f32 %v7332, %v8652
  %v8717 = vadd.f32 %v7335, %v8653
  %v8718 = vadd.f32 %v7340, %v8654
  %v8719 = vadd.f32 %v7343, %v8655
  %v8720 = vadd.f32 %v7348, %v8656
  %v8721 = vadd.f32 %v7351, %v8657
  %v8722 = vadd.f32 %v7356, %v8658
  %v8723 = vadd.f32 %v7359, %v8659
  %v8724 = vadd.f32 %v7364, %v8660
  %v8725 = vadd.f32 %v7367, %v8661
  %v8726 = vadd.f32 %v7372, %v8662
  %v8727 = vadd.f32 %v7375, %v8663
  %v8728 = vadd.f32 %v7380, %v8664
  %v8729 = vadd.f32 %v7383, %v8665
  %v8730 = vadd.f32 %v7388, %v8666
  %v8731 = vadd.f32 %v7391, %v8667
  %v8732 = vadd.f32 %v7396, %v8668
  %v8733 = vadd.f32 %v7399, %v8669
  %v8734 = vadd.f32 %v7404, %v8670
  %v8735 = vadd.f32 %v7407, %v8671
  %v8736 = vadd.f32 %v7412, %v8672
  %v8737 = vadd.f32 %v7415, %v8673
  %v8738 = vadd.f32 %v7420, %v8674
  %v8739 = vadd.f32 %v7423, %v8675
  %v8740 = vadd.f32 %v7428, %v8676
  %v8741 = vadd.f32 %v7431, %v8677
  %v8742 = vadd.f32 %v7436, %v8678
  %v8743 = vadd.f32 %v7439, %v8679
  %v8744 = vpack.c.bf16 %v8681, %v8680
  %v8745 = vpack.c.bf16 %v8683, %v8682
  %v8746 = vpack.c.bf16 %v8685, %v8684
  %v8747 = vpack.c.bf16 %v8687, %v8686
  %v8748 = vpack.c.bf16 %v8689, %v8688
  %v8749 = vpack.c.bf16 %v8691, %v8690
  %v8750 = vpack.c.bf16 %v8693, %v8692
  %v8751 = vpack.c.bf16 %v8695, %v8694
  %v8752 = vpack.c.bf16 %v8697, %v8696
  %v8753 = vpack.c.bf16 %v8699, %v8698
  %v8754 = vpack.c.bf16 %v8701, %v8700
  %v8755 = vpack.c.bf16 %v8703, %v8702
  %v8756 = vpack.c.bf16 %v8705, %v8704
  %v8757 = vpack.c.bf16 %v8707, %v8706
  %v8758 = vpack.c.bf16 %v8709, %v8708
  %v8759 = vpack.c.bf16 %v8711, %v8710
  %v8760 = vpack.c.bf16 %v8713, %v8712
  %v8761 = vpack.c.bf16 %v8715, %v8714
  %v8762 = vpack.c.bf16 %v8717, %v8716
  %v8763 = vpack.c.bf16 %v8719, %v8718
  %v8764 = vpack.c.bf16 %v8721, %v8720
  %v8765 = vpack.c.bf16 %v8723, %v8722
  %v8766 = vpack.c.bf16 %v8725, %v8724
  %v8767 = vpack.c.bf16 %v8727, %v8726
  %v8768 = vpack.c.bf16 %v8729, %v8728
  %v8769 = vpack.c.bf16 %v8731, %v8730
  %v8770 = vpack.c.bf16 %v8733, %v8732
  %v8771 = vpack.c.bf16 %v8735, %v8734
  %v8772 = vpack.c.bf16 %v8737, %v8736
  %v8773 = vpack.c.bf16 %v8739, %v8738
  %v8774 = vpack.c.bf16 %v8741, %v8740
  %v8775 = vpack.c.bf16 %v8743, %v8742
  %v8808 = vunpack.c.l.b16 %v8744
  %v8809 = vunpack.c.h.b16 %v8744
  %v8810 = vunpack.c.l.b16 %v8745
  %v8811 = vunpack.c.h.b16 %v8745
  %v8812 = vunpack.c.l.b16 %v8746
  %v8813 = vunpack.c.h.b16 %v8746
  %v8814 = vunpack.c.l.b16 %v8747
  %v8815 = vunpack.c.h.b16 %v8747
  %v8816 = vunpack.c.l.b16 %v8748
  %v8817 = vunpack.c.h.b16 %v8748
  %v8818 = vunpack.c.l.b16 %v8749
  %v8819 = vunpack.c.h.b16 %v8749
  %v8820 = vunpack.c.l.b16 %v8750
  %v8821 = vunpack.c.h.b16 %v8750
  %v8822 = vunpack.c.l.b16 %v8751
  %v8823 = vunpack.c.h.b16 %v8751
  %v8824 = vunpack.c.l.b16 %v8752
  %v8825 = vunpack.c.h.b16 %v8752
  %v8826 = vunpack.c.l.b16 %v8753
  %v8827 = vunpack.c.h.b16 %v8753
  %v8828 = vunpack.c.l.b16 %v8754
  %v8829 = vunpack.c.h.b16 %v8754
  %v8830 = vunpack.c.l.b16 %v8755
  %v8831 = vunpack.c.h.b16 %v8755
  %v8832 = vunpack.c.l.b16 %v8756
  %v8833 = vunpack.c.h.b16 %v8756
  %v8834 = vunpack.c.l.b16 %v8757
  %v8835 = vunpack.c.h.b16 %v8757
  %v8836 = vunpack.c.l.b16 %v8758
  %v8837 = vunpack.c.h.b16 %v8758
  %v8838 = vunpack.c.l.b16 %v8759
  %v8839 = vunpack.c.h.b16 %v8759
  %v8840 = vunpack.c.l.b16 %v8760
  %v8841 = vunpack.c.h.b16 %v8760
  %v8842 = vunpack.c.l.b16 %v8761
  %v8843 = vunpack.c.h.b16 %v8761
  %v8844 = vunpack.c.l.b16 %v8762
  %v8845 = vunpack.c.h.b16 %v8762
  %v8846 = vunpack.c.l.b16 %v8763
  %v8847 = vunpack.c.h.b16 %v8763
  %v8848 = vunpack.c.l.b16 %v8764
  %v8849 = vunpack.c.h.b16 %v8764
  %v8850 = vunpack.c.l.b16 %v8765
  %v8851 = vunpack.c.h.b16 %v8765
  %v8852 = vunpack.c.l.b16 %v8766
  %v8853 = vunpack.c.h.b16 %v8766
  %v8854 = vunpack.c.l.b16 %v8767
  %v8855 = vunpack.c.h.b16 %v8767
  %v8856 = vunpack.c.l.b16 %v8768
  %v8857 = vunpack.c.h.b16 %v8768
  %v8858 = vunpack.c.l.b16 %v8769
  %v8859 = vunpack.c.h.b16 %v8769
  %v8860 = vunpack.c.l.b16 %v8770
  %v8861 = vunpack.c.h.b16 %v8770
  %v8862 = vunpack.c.l.b16 %v8771
  %v8863 = vunpack.c.h.b16 %v8771
  %v8864 = vunpack.c.l.b16 %v8772
  %v8865 = vunpack.c.h.b16 %v8772
  %v8866 = vunpack.c.l.b16 %v8773
  %v8867 = vunpack.c.h.b16 %v8773
  %v8868 = vunpack.c.l.b16 %v8774
  %v8869 = vunpack.c.h.b16 %v8774
  %v8870 = vunpack.c.l.b16 %v8775
  %v8871 = vunpack.c.h.b16 %v8775
  %v8872 = vpack.c.b16 %v8808, %v8808
  %v8873 = vpack.c.b16 %v8809, %v8809
  %v8874 = vpack.c.b16 %v8810, %v8810
  %v8875 = vpack.c.b16 %v8811, %v8811
  %v8876 = vpack.c.b16 %v8812, %v8812
  %v8877 = vpack.c.b16 %v8813, %v8813
  %v8878 = vpack.c.b16 %v8814, %v8814
  %v8879 = vpack.c.b16 %v8815, %v8815
  %v8880 = vpack.c.b16 %v8816, %v8816
  %v8881 = vpack.c.b16 %v8817, %v8817
  %v8882 = vpack.c.b16 %v8818, %v8818
  %v8883 = vpack.c.b16 %v8819, %v8819
  %v8884 = vpack.c.b16 %v8820, %v8820
  %v8885 = vpack.c.b16 %v8821, %v8821
  %v8886 = vpack.c.b16 %v8822, %v8822
  %v8887 = vpack.c.b16 %v8823, %v8823
  %v8888 = vpack.c.b16 %v8824, %v8824
  %v8889 = vpack.c.b16 %v8825, %v8825
  %v8890 = vpack.c.b16 %v8826, %v8826
  %v8891 = vpack.c.b16 %v8827, %v8827
  %v8892 = vpack.c.b16 %v8828, %v8828
  %v8893 = vpack.c.b16 %v8829, %v8829
  %v8894 = vpack.c.b16 %v8830, %v8830
  %v8895 = vpack.c.b16 %v8831, %v8831
  %v8896 = vpack.c.b16 %v8832, %v8832
  %v8897 = vpack.c.b16 %v8833, %v8833
  %v8898 = vpack.c.b16 %v8834, %v8834
  %v8899 = vpack.c.b16 %v8835, %v8835
  %v8900 = vpack.c.b16 %v8836, %v8836
  %v8901 = vpack.c.b16 %v8837, %v8837
  %v8902 = vpack.c.b16 %v8838, %v8838
  %v8903 = vpack.c.b16 %v8839, %v8839
  %v8904 = vpack.c.b16 %v8840, %v8840
  %v8905 = vpack.c.b16 %v8841, %v8841
  %v8906 = vpack.c.b16 %v8842, %v8842
  %v8907 = vpack.c.b16 %v8843, %v8843
  %v8908 = vpack.c.b16 %v8844, %v8844
  %v8909 = vpack.c.b16 %v8845, %v8845
  %v8910 = vpack.c.b16 %v8846, %v8846
  %v8911 = vpack.c.b16 %v8847, %v8847
  %v8912 = vpack.c.b16 %v8848, %v8848
  %v8913 = vpack.c.b16 %v8849, %v8849
  %v8914 = vpack.c.b16 %v8850, %v8850
  %v8915 = vpack.c.b16 %v8851, %v8851
  %v8916 = vpack.c.b16 %v8852, %v8852
  %v8917 = vpack.c.b16 %v8853, %v8853
  %v8918 = vpack.c.b16 %v8854, %v8854
  %v8919 = vpack.c.b16 %v8855, %v8855
  %v8920 = vpack.c.b16 %v8856, %v8856
  %v8921 = vpack.c.b16 %v8857, %v8857
  %v8922 = vpack.c.b16 %v8858, %v8858
  %v8923 = vpack.c.b16 %v8859, %v8859
  %v8924 = vpack.c.b16 %v8860, %v8860
  %v8925 = vpack.c.b16 %v8861, %v8861
  %v8926 = vpack.c.b16 %v8862, %v8862
  %v8927 = vpack.c.b16 %v8863, %v8863
  %v8928 = vpack.c.b16 %v8864, %v8864
  %v8929 = vpack.c.b16 %v8865, %v8865
  %v8930 = vpack.c.b16 %v8866, %v8866
  %v8931 = vpack.c.b16 %v8867, %v8867
  %v8932 = vpack.c.b16 %v8868, %v8868
  %v8933 = vpack.c.b16 %v8869, %v8869
  %v8934 = vpack.c.b16 %v8870, %v8870
  %v8935 = vpack.c.b16 %v8871, %v8871
  %9000 = vst [vmem:[%s15] sm:$0xf] %v8872
  %9001 = vst [vmem:[%s15 + $0x4] sm:$0xf] %v8873
  %9002 = vst [vmem:[%s15 + $0x8] sm:$0xf] %v8874
  %9003 = vst [vmem:[%s15 + $0xc] sm:$0xf] %v8875
  %9004 = vst [vmem:[%s15 + $0x10] sm:$0xf] %v8876
  %9005 = vst [vmem:[%s15 + $0x14] sm:$0xf] %v8877
  %9006 = vst [vmem:[%s15 + $0x18] sm:$0xf] %v8878
  %9007 = vst [vmem:[%s15 + $0x1c] sm:$0xf] %v8879
  %9008 = vst [vmem:[%s15 + $0x20] sm:$0xf] %v8880
  %9009 = vst [vmem:[%s15 + $0x24] sm:$0xf] %v8881
  %9010 = vst [vmem:[%s15 + $0x28] sm:$0xf] %v8882
  %9011 = vst [vmem:[%s15 + $0x2c] sm:$0xf] %v8883
  %9012 = vst [vmem:[%s15 + $0x30] sm:$0xf] %v8884
  %9013 = vst [vmem:[%s15 + $0x34] sm:$0xf] %v8885
  %9014 = vst [vmem:[%s15 + $0x38] sm:$0xf] %v8886
  %9015 = vst [vmem:[%s15 + $0x3c] sm:$0xf] %v8887
  %9016 = vst [vmem:[%s15 + $0x40] sm:$0xf] %v8888
  %9017 = vst [vmem:[%s15 + $0x44] sm:$0xf] %v8889
  %9018 = vst [vmem:[%s15 + $0x48] sm:$0xf] %v8890
  %9019 = vst [vmem:[%s15 + $0x4c] sm:$0xf] %v8891
  %9020 = vst [vmem:[%s15 + $0x50] sm:$0xf] %v8892
  %9021 = vst [vmem:[%s15 + $0x54] sm:$0xf] %v8893
  %9022 = vst [vmem:[%s15 + $0x58] sm:$0xf] %v8894
  %9023 = vst [vmem:[%s15 + $0x5c] sm:$0xf] %v8895
  %9024 = vst [vmem:[%s15 + $0x60] sm:$0xf] %v8896
  %9025 = vst [vmem:[%s15 + $0x64] sm:$0xf] %v8897
  %9026 = vst [vmem:[%s15 + $0x68] sm:$0xf] %v8898
  %9027 = vst [vmem:[%s15 + $0x6c] sm:$0xf] %v8899
  %9028 = vst [vmem:[%s15 + $0x70] sm:$0xf] %v8900
  %9029 = vst [vmem:[%s15 + $0x74] sm:$0xf] %v8901
  %9030 = vst [vmem:[%s15 + $0x78] sm:$0xf] %v8902
  %9031 = vst [vmem:[%s15 + $0x7c] sm:$0xf] %v8903
  %9032 = vst [vmem:[%s15 + $0x80] sm:$0xf] %v8904
  %9033 = vst [vmem:[%s15 + $0x84] sm:$0xf] %v8905
  %9034 = vst [vmem:[%s15 + $0x88] sm:$0xf] %v8906
  %9035 = vst [vmem:[%s15 + $0x8c] sm:$0xf] %v8907
  %9036 = vst [vmem:[%s15 + $0x90] sm:$0xf] %v8908
  %9037 = vst [vmem:[%s15 + $0x94] sm:$0xf] %v8909
  %9038 = vst [vmem:[%s15 + $0x98] sm:$0xf] %v8910
  %9039 = vst [vmem:[%s15 + $0x9c] sm:$0xf] %v8911
  %9040 = vst [vmem:[%s15 + $0xa0] sm:$0xf] %v8912
  %9041 = vst [vmem:[%s15 + $0xa4] sm:$0xf] %v8913
  %9042 = vst [vmem:[%s15 + $0xa8] sm:$0xf] %v8914
  %9043 = vst [vmem:[%s15 + $0xac] sm:$0xf] %v8915
  %9044 = vst [vmem:[%s15 + $0xb0] sm:$0xf] %v8916
  %9045 = vst [vmem:[%s15 + $0xb4] sm:$0xf] %v8917
  %9046 = vst [vmem:[%s15 + $0xb8] sm:$0xf] %v8918
  %9047 = vst [vmem:[%s15 + $0xbc] sm:$0xf] %v8919
  %9048 = vst [vmem:[%s15 + $0xc0] sm:$0xf] %v8920
  %9049 = vst [vmem:[%s15 + $0xc4] sm:$0xf] %v8921
  %9050 = vst [vmem:[%s15 + $0xc8] sm:$0xf] %v8922
  %9051 = vst [vmem:[%s15 + $0xcc] sm:$0xf] %v8923
  %9052 = vst [vmem:[%s15 + $0xd0] sm:$0xf] %v8924
  %9053 = vst [vmem:[%s15 + $0xd4] sm:$0xf] %v8925
  %9054 = vst [vmem:[%s15 + $0xd8] sm:$0xf] %v8926
  %9055 = vst [vmem:[%s15 + $0xdc] sm:$0xf] %v8927
  %9056 = vst [vmem:[%s15 + $0xe0] sm:$0xf] %v8928
  %9057 = vst [vmem:[%s15 + $0xe4] sm:$0xf] %v8929
  %9058 = vst [vmem:[%s15 + $0xe8] sm:$0xf] %v8930
  %9059 = vst [vmem:[%s15 + $0xec] sm:$0xf] %v8931
  %9060 = vst [vmem:[%s15 + $0xf0] sm:$0xf] %v8932
  %9061 = vst [vmem:[%s15 + $0xf4] sm:$0xf] %v8933
  %9062 = vst [vmem:[%s15 + $0xf8] sm:$0xf] %v8934
  %9063 = vst [vmem:[%s15 + $0xfc] sm:$0xf] %v8935
  // Predicated region
  $region62: #{egkn_forward.4} parent=0 // pred_check
    _
  $region63: #{egkn_forward.4} parent=0 // pred_check_branch
    %9065 = sbr.rel (0) target = $region65
  $region64: #{egkn_forward.4} parent=0 // pred_region
    _
  $region65: #{egkn_forward.4} parent=0 // pred_fallthru
    _
  // Predicated region
  $region66: #{egkn_forward.4} parent=0 // pred_check
    _
  $region67: #{egkn_forward.4} parent=0 // pred_check_branch
    %9067 = sbr.rel (0) target = $region69
  $region68: #{egkn_forward.4} parent=0 // pred_region
    _
  $region69: #{egkn_forward.4} parent=0 // pred_fallthru
    _

</llo_original>
